<compile_context>
chip_gen: v7x
topology: tpu7x:2x2x1
jax: 0.10.0
libtpu: 0.0.40
codegen_flags: <defaults>
</compile_context>

<pallas_src>
import functools

import jax
import jax.numpy as jnp
from jax.experimental import pallas as pl
from jax.experimental.pallas import tpu as pltpu

BN_EPS = 1e-5


# ----------------------------------------------------------------------------
# Pallas kernel
# ----------------------------------------------------------------------------
def _enhancer_kernel(
    xm_ref, xh0_ref, xh1_ref, xh2_ref,       # TH-row input slab + 3 halo rows
    w1_ref, b1_ref,                          # stage-1 1x1  (C    -> 2*C/4), lane-packed
    w2_ref, b2_ref,                          # stage-2 3x3  (2C/4 -> 2*C/4), block-diag
    w3_ref, b3_ref,                          # stage-3 1x1  (2C/4 -> C),     block-diag
    wf_ref, bf_ref,                          # fusion  1x1  (C    -> C)
    o_ref,
    h1_ref,                                  # VMEM scratch: (th+3, wp, 2*C/4)
    *, th, h, w, wp):
    cdtype = h1_ref.dtype
    c = xm_ref.shape[-1]
    cm = h1_ref.shape[-1]                    # 2 * (C // 4)
    n1 = th * wp                             # pixels produced by this tile (padded width)
    n2 = (th + 3) * wp                       # pixels read by this tile (incl. halo rows)
    r = pl.program_id(1)

    def silu(z):
        return z * jax.nn.sigmoid(z)

    # ---- stage 1: shared-input 1x1 ConvBlock of both branches (lane-packed) ------
    # Main slab and halo rows handled separately; only the C/2-wide activations are
    # written to the scratch (no C-wide input concat / copy).
    xm = xm_ref[0].reshape(th * wp, c)
    h1m = silu(jnp.dot(xm, w1_ref[...], preferred_element_type=jnp.float32)
               + b1_ref[...])
    h1_ref[0:th, :, :] = h1m.reshape(th, wp, cm).astype(cdtype)

    xh = jnp.concatenate([xh0_ref[0, 0], xh1_ref[0, 0], xh2_ref[0, 0]], axis=0)
    h1h = silu(jnp.dot(xh, w1_ref[...], preferred_element_type=jnp.float32)
               + b1_ref[...])
    h1_ref[th:th + 3, :, :] = h1h.reshape(3, wp, cm).astype(cdtype)

    # ---- restore exact zeros at the spatial-padding positions the 3x3 conv reads ----
    # (only pad col 0, pad col W+1, pad row 0 and pad row H+1 ever feed valid outputs).
    zcol = jnp.zeros((th + 3, 1, cm), cdtype)
    h1_ref[:, 0:1, :] = zcol
    h1_ref[:, w + 1:w + 2, :] = zcol

    zrow = jnp.zeros((1, wp, cm), cdtype)

    @pl.when(r == 0)
    def _():
        h1_ref[0:1, :, :] = zrow             # top conv-pad row (first row tile only)

    bot = (h + 1) - r * th                   # window-row index of pad row H+1
    @pl.when((bot >= 0) & (bot < th + 3))
    def _():
        h1_ref[pl.ds(bot, 1), :, :] = zrow   # bottom conv-pad row (last row tile(s))

    # ---- stage 2: 3x3 ConvBlock (padding=1) as 9 shifted matmuls ---------------------
    # On the row-major flattened (row, padded-col) pixel axis, tap (ky, kx) is a single
    # contiguous slice at offset ky*wp + kx (the extra slack row keeps it in range).
    # Dropout2d(0.1) in the texture branch: identity at inference.
    h1f = h1_ref[...].reshape(n2, cm)
    acc = jnp.zeros((n1, cm), jnp.float32)
    for ky in range(3):
        for kx in range(3):
            off = ky * wp + kx
            acc = acc + jnp.dot(h1f[off:off + n1, :], w2_ref[ky, kx],
                                preferred_element_type=jnp.float32)
    h2 = silu(acc + b2_ref[...]).astype(cdtype)

    # ---- stage 3: 1x1 ConvBlock, block-diag == channel concat [shape | texture] ------
    c3 = silu(jnp.dot(h2, w3_ref[...], preferred_element_type=jnp.float32)
              + b3_ref[...]).astype(cdtype)

    # ---- fusion 1x1 ConvBlock (C -> C) ------------------------------------------------
    y = silu(jnp.dot(c3, wf_ref[...], preferred_element_type=jnp.float32)
             + bf_ref[...])

    # Store the full padded-width slab (aligned, unmasked vst); wrapper crops.
    o_ref[0] = y.reshape(th, wp, c).astype(o_ref.dtype)


# ----------------------------------------------------------------------------
# BatchNorm folding / weight packing helpers (eval-mode BN folded into the conv)
# ----------------------------------------------------------------------------
def _fold_bn(p):
    scale = p["gamma"] / jnp.sqrt(p["var"] + BN_EPS)
    bias = (p["beta"] - p["mean"] * scale)[None, :]             # (1, cout)
    return scale, bias


def _fold_1x1(p):
    scale, bias = _fold_bn(p)
    wmat = jnp.transpose(p["w"][:, :, 0, 0] * scale[:, None])   # (cin, cout)
    return wmat, bias


def _fold_3x3(p):
    scale, bias = _fold_bn(p)
    wk = jnp.transpose(p["w"], (2, 3, 1, 0)) * scale            # (3, 3, cin, cout)
    return wk, bias


def _block_diag2(a, b):
    """Block-diagonal stack of two (..., k, n) weights -> (..., 2k, 2n)."""
    za = jnp.zeros(a.shape[:-1] + (b.shape[-1],), a.dtype)
    zb = jnp.zeros(b.shape[:-1] + (a.shape[-1],), b.dtype)
    top = jnp.concatenate([a, za], axis=-1)
    bot = jnp.concatenate([zb, b], axis=-1)
    return jnp.concatenate([top, bot], axis=-2)


# ----------------------------------------------------------------------------
# Wrapper
# ----------------------------------------------------------------------------
def vehicle_feature_enhancer(x_nchw, params, *, row_tile=32,
                             compute_dtype=jnp.bfloat16):
    """Pallas forward pass. x_nchw: (B, C, H, W) -> (B, C, H, W)."""
    B, C, H, W = x_nchw.shape
    assert C % 4 == 0, "channels must be divisible by 4"
    c4 = C // 4
    cm = 2 * c4
    cdtype = jnp.dtype(compute_dtype)
    out_dtype = x_nchw.dtype

    # Fold BN into each conv; pack the two branches into one lane-packed stream.
    ws1, bs1 = _fold_1x1(params["s1"]); wt1, bt1 = _fold_1x1(params["t1"])
    ws2, bs2 = _fold_3x3(params["s2"]); wt2, bt2 = _fold_3x3(params["t2"])
    ws3, bs3 = _fold_1x1(params["s3"]); wt3, bt3 = _fold_1x1(params["t3"])
    wf, bf = _fold_1x1(params["f"])

    w1 = jnp.concatenate([ws1, wt1], axis=1)        # (C, 2c4)  shared input
    b1 = jnp.concatenate([bs1, bt1], axis=1)
    w2 = _block_diag2(ws2, wt2)                     # (3, 3, 2c4, 2c4)
    b2 = jnp.concatenate([bs2, bt2], axis=1)
    w3 = _block_diag2(ws3, wt3)                     # (2c4, C); cols = [shape | texture]
    b3 = jnp.concatenate([bs3, bt3], axis=1)

    w1, w2, w3, wf = [a.astype(cdtype) for a in (w1, w2, w3, wf)]
    b1, b2, b3, bf = [a.astype(jnp.float32) for a in (b1, b2, b3, bf)]
    weights = (w1, b1, w2, b2, w3, b3, wf, bf)
    wbytes = sum(int(a.size) * a.dtype.itemsize for a in weights)

    # Padded width: 1 left conv-pad col + right pad up to a sublane-aligned width.
    itemsize = cdtype.itemsize
    sub = max(8, 32 // itemsize)
    wp = -(-(W + 2) // sub) * sub

    # Row tile: start from row_tile, shrink until the per-step working set fits a
    # conservative VMEM budget (also safe for v7x's 64 MiB VMEM per TensorCore).
    th = max(1, min(int(row_tile), H))

    def _step_bytes(t):
        return (2 * (t + 3) * wp * C * itemsize          # double-buffered input + halos
                + 2 * t * wp * C * out_dtype.itemsize    # double-buffered output
                + (t + 3) * wp * cm * itemsize           # h1 scratch
                + t * wp * (2 * cm + 3 * C) * 4)         # f32 temporaries

    budget = 24 * 2**20
    while th > 8 and _step_bytes(th) > budget:
        th = (th + 1) // 2
    n_r = -(-H // th)
    hp_out = n_r * th
    hp_in = hp_out + 3      # 1 top pad + rows + bottom pad (conv pad + tap slack)

    # NHWC (channels on lanes), compute dtype, spatial zero-padding.
    x_nhwc = jnp.transpose(x_nchw, (0, 2, 3, 1)).astype(cdtype)
    x_pad = jnp.pad(x_nhwc, ((0, 0), (1, hp_in - H - 1), (1, wp - W - 1), (0, 0)))

    grid = (B, n_r)
    x_main_spec = pl.BlockSpec((1, th, wp, C), lambda b, r: (b, r, 0, 0))

    def _halo_spec(k):
        return pl.BlockSpec((1, 1, wp, C),
                            lambda b, r, _k=k: (b, (r + 1) * th + _k, 0, 0))

    def _resident_spec(a):
        # Full-array block + constant index map -> DMA'd once, VMEM-resident.
        return pl.BlockSpec(a.shape, lambda b, r, _nd=a.ndim: (0,) * _nd)

    flops = 2 * B * H * W * (C * cm + 9 * cm * cm + cm * C + C * C)
    transcendentals = B * H * W * 2 * (cm + C)
    bytes_accessed = (int(x_pad.size) * itemsize
                      + B * hp_out * wp * C * out_dtype.itemsize + wbytes)

    vmem_limit = int(min(48 * 2**20,
                         max(32 * 2**20, _step_bytes(th) + wbytes + (8 << 20))))

    out_nhwc = pl.pallas_call(
        functools.partial(_enhancer_kernel, th=th, h=H, w=W, wp=wp),
        grid=grid,
        in_specs=[x_main_spec, _halo_spec(0), _halo_spec(1), _halo_spec(2)]
                 + [_resident_spec(a) for a in weights],
        out_specs=pl.BlockSpec((1, th, wp, C), lambda b, r: (b, r, 0, 0)),
        out_shape=jax.ShapeDtypeStruct((B, hp_out, wp, C), out_dtype),
        scratch_shapes=[pltpu.VMEM((th + 3, wp, cm), cdtype)],
        compiler_params=pltpu.CompilerParams(
            dimension_semantics=("parallel", "parallel"),
            vmem_limit_bytes=vmem_limit),
        cost_estimate=pl.CostEstimate(flops=int(flops),
                                      transcendentals=int(transcendentals),
                                      bytes_accessed=int(bytes_accessed)),
    )(x_pad, x_pad, x_pad, x_pad, *weights)

    # Crop padded rows/cols; fuses with the NHWC -> NCHW output transpose.
    return jnp.transpose(out_nhwc[:, :H, :W, :], (0, 3, 1, 2))


# ----------------------------------------------------------------------------
# Pure-JAX reference (mirrors the PyTorch module, eval mode)
# ----------------------------------------------------------------------------
def _conv_block_ref(x_nhwc, p):
    w = p["w"]
    k = w.shape[2]
    y = jax.lax.conv_general_dilated(
        x_nhwc, jnp.transpose(w, (2, 3, 1, 0)),
        window_strides=(1, 1),
        padding=[(k // 2, k // 2), (k // 2, k // 2)],
        dimension_numbers=("NHWC", "HWIO", "NHWC"),
        precision="highest")
    scale = p["gamma"] / jnp.sqrt(p["var"] + BN_EPS)
    y = y * scale + (p["beta"] - p["mean"] * scale)
    return jax.nn.silu(y)


def vehicle_feature_enhancer_ref(x_nchw, params):
    x = jnp.transpose(x_nchw, (0, 2, 3, 1))
    s = _conv_block_ref(_conv_block_ref(_conv_block_ref(x, params["s1"]),
                                        params["s2"]), params["s3"])
    t = _conv_block_ref(_conv_block_ref(_conv_block_ref(x, params["t1"]),
                                        params["t2"]), params["t3"])
    combined = jnp.concatenate([s, t], axis=-1)
    out = _conv_block_ref(combined, params["f"])
    return jnp.transpose(out, (0, 3, 1, 2))


def _make_conv_block_params(key, cin, cout, ksize):
    kw, kg, kb, km, kv = jax.random.split(key, 5)
    fan_in = cin * ksize * ksize
    return dict(
        w=jax.random.normal(kw, (cout, cin, ksize, ksize), jnp.float32)
          / jnp.sqrt(jnp.float32(fan_in)),
        gamma=1.0 + 0.1 * jax.random.normal(kg, (cout,), jnp.float32),
        beta=0.1 * jax.random.normal(kb, (cout,), jnp.float32),
        mean=0.1 * jax.random.normal(km, (cout,), jnp.float32),
        var=jax.random.uniform(kv, (cout,), jnp.float32, 0.5, 1.5),
    )


if __name__ == "__main__":
    B, C, H, W = 2, 8, 16, 16
    c4, c2 = C // 4, C // 2

    key = jax.random.PRNGKey(0)
    kx, k1, k2, k3, k4, k5, k6, k7 = jax.random.split(key, 8)
    x = jax.random.normal(kx, (B, C, H, W), dtype=jnp.float32)

    params = {
        "s1": _make_conv_block_params(k1, C, c4, 1),
        "s2": _make_conv_block_params(k2, c4, c4, 3),
        "s3": _make_conv_block_params(k3, c4, c2, 1),
        "t1": _make_conv_block_params(k4, C, c4, 1),
        "t2": _make_conv_block_params(k5, c4, c4, 3),
        "t3": _make_conv_block_params(k6, c4, c2, 1),
        "f":  _make_conv_block_params(k7, C, C, 1),
    }

    ref = vehicle_feature_enhancer_ref(x, params)

    # Exactness check: f32 compute path, tight tolerance.
    out_f32 = jax.block_until_ready(
        vehicle_feature_enhancer(x, params, compute_dtype=jnp.float32))
    assert out_f32.shape == (B, C, H, W), out_f32.shape
    err_f32 = float(jnp.max(jnp.abs(out_f32 - ref)))
    assert jnp.allclose(out_f32, ref, atol=2e-3, rtol=2e-3), f"max_err={err_f32}"

    # Default bf16 compute path (f32 accumulation): looser tolerance vs f32 reference.
    out_bf16 = jax.block_until_ready(vehicle_feature_enhancer(x, params))
    assert out_bf16.shape == (B, C, H, W), out_bf16.shape
    err_bf16 = float(jnp.max(jnp.abs(out_bf16 - ref)))
    assert jnp.allclose(out_bf16, ref, atol=6e-2, rtol=6e-2), f"max_err={err_bf16}"

    print("KERNEL_OK")
</pallas_src>

<mosaic_0001>
module attributes {stable_mosaic.version = 11 : i64} {
  func.func @_enhancer_kernel(%arg0: i32, %arg1: i32, %arg2: memref<1x16x24x8xf32, #tpu.memory_space<vmem>>, %arg3: memref<1x1x24x8xf32, #tpu.memory_space<vmem>>, %arg4: memref<1x1x24x8xf32, #tpu.memory_space<vmem>>, %arg5: memref<1x1x24x8xf32, #tpu.memory_space<vmem>>, %arg6: memref<8x4xf32, #tpu.memory_space<vmem>>, %arg7: memref<1x4xf32, #tpu.memory_space<vmem>>, %arg8: memref<3x3x4x4xf32, #tpu.memory_space<vmem>>, %arg9: memref<1x4xf32, #tpu.memory_space<vmem>>, %arg10: memref<4x8xf32, #tpu.memory_space<vmem>>, %arg11: memref<1x8xf32, #tpu.memory_space<vmem>>, %arg12: memref<8x8xf32, #tpu.memory_space<vmem>>, %arg13: memref<1x8xf32, #tpu.memory_space<vmem>>, %arg14: memref<1x16x24x8xf32, #tpu.memory_space<vmem>>, %arg15: memref<19x24x4xf32, #tpu.memory_space<vmem>>) attributes {dimension_semantics = [#tpu.dimension_semantics<parallel>, #tpu.dimension_semantics<parallel>], iteration_bounds = array<i64: 2, 1>, scalar_prefetch = 0 : i64, scratch_operands = 1 : i64, tpu.core_type = #tpu.core_type<tc>, window_params = [{transform_indices = @transform_0, window_bounds = array<i64: 1, 16, 24, 8>}, {transform_indices = @transform_1, window_bounds = array<i64: 1, 1, 24, 8>}, {transform_indices = @transform_2, window_bounds = array<i64: 1, 1, 24, 8>}, {transform_indices = @transform_3, window_bounds = array<i64: 1, 1, 24, 8>}, {pipeline_mode = #tpu.pipeline_mode<synchronous>, transform_indices = @transform_4, window_bounds = array<i64: 8, 4>}, {pipeline_mode = #tpu.pipeline_mode<synchronous>, transform_indices = @transform_5, window_bounds = array<i64: 1, 4>}, {pipeline_mode = #tpu.pipeline_mode<synchronous>, transform_indices = @transform_6, window_bounds = array<i64: 3, 3, 4, 4>}, {pipeline_mode = #tpu.pipeline_mode<synchronous>, transform_indices = @transform_7, window_bounds = array<i64: 1, 4>}, {pipeline_mode = #tpu.pipeline_mode<synchronous>, transform_indices = @transform_8, window_bounds = array<i64: 4, 8>}, {pipeline_mode = #tpu.pipeline_mode<synchronous>, transform_indices = @transform_9, window_bounds = array<i64: 1, 8>}, {pipeline_mode = #tpu.pipeline_mode<synchronous>, transform_indices = @transform_10, window_bounds = array<i64: 8, 8>}, {pipeline_mode = #tpu.pipeline_mode<synchronous>, transform_indices = @transform_11, window_bounds = array<i64: 1, 8>}, {transform_indices = @transform_12, window_bounds = array<i64: 1, 16, 24, 8>}]} {
    %c0 = arith.constant 0 : index
    %c0_0 = arith.constant 0 : index
    %c0_1 = arith.constant 0 : index
    %c0_2 = arith.constant 0 : index
    %0 = vector.load %arg2[%c0, %c0_0, %c0_1, %c0_2] : memref<1x16x24x8xf32, #tpu.memory_space<vmem>>, vector<1x16x24x8xf32>
    %1 = vector.shape_cast %0 : vector<1x16x24x8xf32> to vector<16x24x8xf32>
    %2 = vector.shape_cast %1 : vector<16x24x8xf32> to vector<384x8xf32>
    %c0_3 = arith.constant 0 : index
    %c0_4 = arith.constant 0 : index
    %3 = vector.load %arg6[%c0_3, %c0_4] : memref<8x4xf32, #tpu.memory_space<vmem>>, vector<8x4xf32>
    %cst = arith.constant dense<0.000000e+00> : vector<384x4xf32>
    %4 = tpu.matmul %2, %3, %cst {dimension_numbers = #tpu.dot_dimension_numbers<[1], [0], [0], [1], [0, 0, 1, 1], [], []>} : vector<384x8xf32>, vector<8x4xf32>, vector<384x4xf32> -> vector<384x4xf32>
    %c0_5 = arith.constant 0 : index
    %c0_6 = arith.constant 0 : index
    %5 = vector.load %arg7[%c0_5, %c0_6] : memref<1x4xf32, #tpu.memory_space<vmem>>, vector<1x4xf32>
    %6 = vector.broadcast %5 : vector<1x4xf32> to vector<384x4xf32>
    %7 = arith.addf %4, %6 : vector<384x4xf32>
    %8 = arith.negf %7 : vector<384x4xf32>
    %9 = math.exp %8 : vector<384x4xf32>
    %cst_7 = arith.constant 1.000000e+00 : f32
    %10 = vector.broadcast %cst_7 : f32 to vector<384x4xf32>
    %11 = arith.addf %10, %9 : vector<384x4xf32>
    %12 = arith.divf %10, %11 : vector<384x4xf32>
    %13 = arith.mulf %7, %12 : vector<384x4xf32>
    %14 = vector.shape_cast %13 : vector<384x4xf32> to vector<16x24x4xf32>
    %c0_8 = arith.constant 0 : index
    %c0_9 = arith.constant 0 : index
    %c0_10 = arith.constant 0 : index
    %15 = vector.load %arg15[%c0_8, %c0_9, %c0_10] : memref<19x24x4xf32, #tpu.memory_space<vmem>>, vector<16x24x4xf32>
    tpu.vector_store %arg15[%c0_8, %c0_9, %c0_10], %14 {strides = array<i32>} : memref<19x24x4xf32, #tpu.memory_space<vmem>>, vector<16x24x4xf32>,
    %c0_11 = arith.constant 0 : index
    %c0_12 = arith.constant 0 : index
    %c0_13 = arith.constant 0 : index
    %c0_14 = arith.constant 0 : index
    %16 = vector.load %arg3[%c0_11, %c0_12, %c0_13, %c0_14] : memref<1x1x24x8xf32, #tpu.memory_space<vmem>>, vector<1x1x24x8xf32>
    %17 = vector.shape_cast %16 : vector<1x1x24x8xf32> to vector<24x8xf32>
    %c0_15 = arith.constant 0 : index
    %c0_16 = arith.constant 0 : index
    %c0_17 = arith.constant 0 : index
    %c0_18 = arith.constant 0 : index
    %18 = vector.load %arg4[%c0_15, %c0_16, %c0_17, %c0_18] : memref<1x1x24x8xf32, #tpu.memory_space<vmem>>, vector<1x1x24x8xf32>
    %19 = vector.shape_cast %18 : vector<1x1x24x8xf32> to vector<24x8xf32>
    %c0_19 = arith.constant 0 : index
    %c0_20 = arith.constant 0 : index
    %c0_21 = arith.constant 0 : index
    %c0_22 = arith.constant 0 : index
    %20 = vector.load %arg5[%c0_19, %c0_20, %c0_21, %c0_22] : memref<1x1x24x8xf32, #tpu.memory_space<vmem>>, vector<1x1x24x8xf32>
    %21 = vector.shape_cast %20 : vector<1x1x24x8xf32> to vector<24x8xf32>
    %22 = tpu.concatenate %17, %19, %21 in 0 : vector<24x8xf32>, vector<24x8xf32>, vector<24x8xf32> -> vector<72x8xf32>
    %c0_23 = arith.constant 0 : index
    %c0_24 = arith.constant 0 : index
    %23 = vector.load %arg6[%c0_23, %c0_24] : memref<8x4xf32, #tpu.memory_space<vmem>>, vector<8x4xf32>
    %cst_25 = arith.constant dense<0.000000e+00> : vector<72x4xf32>
    %24 = tpu.matmul %22, %23, %cst_25 {dimension_numbers = #tpu.dot_dimension_numbers<[1], [0], [0], [1], [0, 0, 1, 1], [], []>} : vector<72x8xf32>, vector<8x4xf32>, vector<72x4xf32> -> vector<72x4xf32>
    %c0_26 = arith.constant 0 : index
    %c0_27 = arith.constant 0 : index
    %25 = vector.load %arg7[%c0_26, %c0_27] : memref<1x4xf32, #tpu.memory_space<vmem>>, vector<1x4xf32>
    %26 = vector.broadcast %25 : vector<1x4xf32> to vector<72x4xf32>
    %27 = arith.addf %24, %26 : vector<72x4xf32>
    %28 = arith.negf %27 : vector<72x4xf32>
    %29 = math.exp %28 : vector<72x4xf32>
    %cst_28 = arith.constant 1.000000e+00 : f32
    %30 = vector.broadcast %cst_28 : f32 to vector<72x4xf32>
    %31 = arith.addf %30, %29 : vector<72x4xf32>
    %32 = arith.divf %30, %31 : vector<72x4xf32>
    %33 = arith.mulf %27, %32 : vector<72x4xf32>
    %34 = vector.shape_cast %33 : vector<72x4xf32> to vector<3x24x4xf32>
    %c16 = arith.constant 16 : index
    %c0_29 = arith.constant 0 : index
    %c0_30 = arith.constant 0 : index
    %35 = vector.load %arg15[%c16, %c0_29, %c0_30] : memref<19x24x4xf32, #tpu.memory_space<vmem>>, vector<3x24x4xf32>
    tpu.vector_store %arg15[%c16, %c0_29, %c0_30], %34 {strides = array<i32>} : memref<19x24x4xf32, #tpu.memory_space<vmem>>, vector<3x24x4xf32>,
    %cst_31 = arith.constant 0.000000e+00 : f32
    %36 = vector.broadcast %cst_31 : f32 to vector<19x1x4xf32>
    %c0_32 = arith.constant 0 : index
    %c0_33 = arith.constant 0 : index
    %c0_34 = arith.constant 0 : index
    %37 = vector.load %arg15[%c0_32, %c0_33, %c0_34] : memref<19x24x4xf32, #tpu.memory_space<vmem>>, vector<19x1x4xf32>
    tpu.vector_store %arg15[%c0_32, %c0_33, %c0_34], %36 {strides = array<i32>} : memref<19x24x4xf32, #tpu.memory_space<vmem>>, vector<19x1x4xf32>,
    %c0_35 = arith.constant 0 : index
    %c17 = arith.constant 17 : index
    %c0_36 = arith.constant 0 : index
    %38 = vector.load %arg15[%c0_35, %c17, %c0_36] : memref<19x24x4xf32, #tpu.memory_space<vmem>>, vector<19x1x4xf32>
    tpu.vector_store %arg15[%c0_35, %c17, %c0_36], %36 {strides = array<i32>} : memref<19x24x4xf32, #tpu.memory_space<vmem>>, vector<19x1x4xf32>,
    %cst_37 = arith.constant 0.000000e+00 : f32
    %39 = vector.broadcast %cst_37 : f32 to vector<1x24x4xf32>
    %c0_i32 = arith.constant 0 : i32
    %40 = arith.cmpi eq, %arg1, %c0_i32 : i32
    %41 = arith.extui %40 : i1 to i32
    %c0_i32_38 = arith.constant 0 : i32
    %42 = arith.cmpi ne, %41, %c0_i32_38 : i32
    scf.if %42 {
      %c0_107 = arith.constant 0 : index
      %c0_108 = arith.constant 0 : index
      %c0_109 = arith.constant 0 : index
      %133 = vector.load %arg15[%c0_107, %c0_108, %c0_109] : memref<19x24x4xf32, #tpu.memory_space<vmem>>, vector<1x24x4xf32>
      tpu.vector_store %arg15[%c0_107, %c0_108, %c0_109], %39 {strides = array<i32>} : memref<19x24x4xf32, #tpu.memory_space<vmem>>, vector<1x24x4xf32>,
    } else {
    }
    %c16_i32 = arith.constant 16 : i32
    %43 = arith.muli %arg1, %c16_i32 : i32
    %c17_i32 = arith.constant 17 : i32
    %44 = arith.subi %c17_i32, %43 : i32
    %c0_i32_39 = arith.constant 0 : i32
    %45 = arith.cmpi sge, %44, %c0_i32_39 : i32
    %c19_i32 = arith.constant 19 : i32
    %46 = arith.cmpi slt, %44, %c19_i32 : i32
    %47 = arith.andi %45, %46 : i1
    %48 = arith.extui %47 : i1 to i32
    %c0_i32_40 = arith.constant 0 : i32
    %49 = arith.cmpi ne, %48, %c0_i32_40 : i32
    scf.if %49 {
      %133 = arith.index_cast %44 : i32 to index
      %c0_107 = arith.constant 0 : index
      %c0_108 = arith.constant 0 : index
      %134 = vector.load %arg15[%133, %c0_107, %c0_108] : memref<19x24x4xf32, #tpu.memory_space<vmem>>, vector<1x24x4xf32>
      tpu.vector_store %arg15[%133, %c0_107, %c0_108], %39 {strides = array<i32>} : memref<19x24x4xf32, #tpu.memory_space<vmem>>, vector<1x24x4xf32>,
    } else {
    }
    %c0_41 = arith.constant 0 : index
    %c0_42 = arith.constant 0 : index
    %c0_43 = arith.constant 0 : index
    %50 = vector.load %arg15[%c0_41, %c0_42, %c0_43] : memref<19x24x4xf32, #tpu.memory_space<vmem>>, vector<19x24x4xf32>
    %51 = vector.shape_cast %50 : vector<19x24x4xf32> to vector<456x4xf32>
    %cst_44 = arith.constant 0.000000e+00 : f32
    %52 = vector.broadcast %cst_44 : f32 to vector<384x4xf32>
    %53 = vector.extract_strided_slice %51 {offsets = [0, 0], sizes = [384, 4], strides = [1, 1]} : vector<456x4xf32> to vector<384x4xf32>
    %c0_45 = arith.constant 0 : index
    %c0_46 = arith.constant 0 : index
    %c0_47 = arith.constant 0 : index
    %c0_48 = arith.constant 0 : index
    %54 = vector.load %arg8[%c0_45, %c0_46, %c0_47, %c0_48] : memref<3x3x4x4xf32, #tpu.memory_space<vmem>>, vector<1x1x4x4xf32>
    %55 = vector.shape_cast %54 : vector<1x1x4x4xf32> to vector<4x4xf32>
    %cst_49 = arith.constant dense<0.000000e+00> : vector<384x4xf32>
    %56 = tpu.matmul %53, %55, %cst_49 {dimension_numbers = #tpu.dot_dimension_numbers<[1], [0], [0], [1], [0, 0, 1, 1], [], []>} : vector<384x4xf32>, vector<4x4xf32>, vector<384x4xf32> -> vector<384x4xf32>
    %57 = arith.addf %52, %56 : vector<384x4xf32>
    %58 = vector.extract_strided_slice %51 {offsets = [1, 0], sizes = [384, 4], strides = [1, 1]} : vector<456x4xf32> to vector<384x4xf32>
    %c0_50 = arith.constant 0 : index
    %c1 = arith.constant 1 : index
    %c0_51 = arith.constant 0 : index
    %c0_52 = arith.constant 0 : index
    %59 = vector.load %arg8[%c0_50, %c1, %c0_51, %c0_52] : memref<3x3x4x4xf32, #tpu.memory_space<vmem>>, vector<1x1x4x4xf32>
    %60 = vector.shape_cast %59 : vector<1x1x4x4xf32> to vector<4x4xf32>
    %cst_53 = arith.constant dense<0.000000e+00> : vector<384x4xf32>
    %61 = tpu.matmul %58, %60, %cst_53 {dimension_numbers = #tpu.dot_dimension_numbers<[1], [0], [0], [1], [0, 0, 1, 1], [], []>} : vector<384x4xf32>, vector<4x4xf32>, vector<384x4xf32> -> vector<384x4xf32>
    %62 = arith.addf %57, %61 : vector<384x4xf32>
    %63 = vector.extract_strided_slice %51 {offsets = [2, 0], sizes = [384, 4], strides = [1, 1]} : vector<456x4xf32> to vector<384x4xf32>
    %c0_54 = arith.constant 0 : index
    %c2 = arith.constant 2 : index
    %c0_55 = arith.constant 0 : index
    %c0_56 = arith.constant 0 : index
    %64 = vector.load %arg8[%c0_54, %c2, %c0_55, %c0_56] : memref<3x3x4x4xf32, #tpu.memory_space<vmem>>, vector<1x1x4x4xf32>
    %65 = vector.shape_cast %64 : vector<1x1x4x4xf32> to vector<4x4xf32>
    %cst_57 = arith.constant dense<0.000000e+00> : vector<384x4xf32>
    %66 = tpu.matmul %63, %65, %cst_57 {dimension_numbers = #tpu.dot_dimension_numbers<[1], [0], [0], [1], [0, 0, 1, 1], [], []>} : vector<384x4xf32>, vector<4x4xf32>, vector<384x4xf32> -> vector<384x4xf32>
    %67 = arith.addf %62, %66 : vector<384x4xf32>
    %68 = vector.extract_strided_slice %51 {offsets = [24, 0], sizes = [384, 4], strides = [1, 1]} : vector<456x4xf32> to vector<384x4xf32>
    %c1_58 = arith.constant 1 : index
    %c0_59 = arith.constant 0 : index
    %c0_60 = arith.constant 0 : index
    %c0_61 = arith.constant 0 : index
    %69 = vector.load %arg8[%c1_58, %c0_59, %c0_60, %c0_61] : memref<3x3x4x4xf32, #tpu.memory_space<vmem>>, vector<1x1x4x4xf32>
    %70 = vector.shape_cast %69 : vector<1x1x4x4xf32> to vector<4x4xf32>
    %cst_62 = arith.constant dense<0.000000e+00> : vector<384x4xf32>
    %71 = tpu.matmul %68, %70, %cst_62 {dimension_numbers = #tpu.dot_dimension_numbers<[1], [0], [0], [1], [0, 0, 1, 1], [], []>} : vector<384x4xf32>, vector<4x4xf32>, vector<384x4xf32> -> vector<384x4xf32>
    %72 = arith.addf %67, %71 : vector<384x4xf32>
    %73 = vector.extract_strided_slice %51 {offsets = [25, 0], sizes = [384, 4], strides = [1, 1]} : vector<456x4xf32> to vector<384x4xf32>
    %c1_63 = arith.constant 1 : index
    %c1_64 = arith.constant 1 : index
    %c0_65 = arith.constant 0 : index
    %c0_66 = arith.constant 0 : index
    %74 = vector.load %arg8[%c1_63, %c1_64, %c0_65, %c0_66] : memref<3x3x4x4xf32, #tpu.memory_space<vmem>>, vector<1x1x4x4xf32>
    %75 = vector.shape_cast %74 : vector<1x1x4x4xf32> to vector<4x4xf32>
    %cst_67 = arith.constant dense<0.000000e+00> : vector<384x4xf32>
    %76 = tpu.matmul %73, %75, %cst_67 {dimension_numbers = #tpu.dot_dimension_numbers<[1], [0], [0], [1], [0, 0, 1, 1], [], []>} : vector<384x4xf32>, vector<4x4xf32>, vector<384x4xf32> -> vector<384x4xf32>
    %77 = arith.addf %72, %76 : vector<384x4xf32>
    %78 = vector.extract_strided_slice %51 {offsets = [26, 0], sizes = [384, 4], strides = [1, 1]} : vector<456x4xf32> to vector<384x4xf32>
    %c1_68 = arith.constant 1 : index
    %c2_69 = arith.constant 2 : index
    %c0_70 = arith.constant 0 : index
    %c0_71 = arith.constant 0 : index
    %79 = vector.load %arg8[%c1_68, %c2_69, %c0_70, %c0_71] : memref<3x3x4x4xf32, #tpu.memory_space<vmem>>, vector<1x1x4x4xf32>
    %80 = vector.shape_cast %79 : vector<1x1x4x4xf32> to vector<4x4xf32>
    %cst_72 = arith.constant dense<0.000000e+00> : vector<384x4xf32>
    %81 = tpu.matmul %78, %80, %cst_72 {dimension_numbers = #tpu.dot_dimension_numbers<[1], [0], [0], [1], [0, 0, 1, 1], [], []>} : vector<384x4xf32>, vector<4x4xf32>, vector<384x4xf32> -> vector<384x4xf32>
    %82 = arith.addf %77, %81 : vector<384x4xf32>
    %83 = vector.extract_strided_slice %51 {offsets = [48, 0], sizes = [384, 4], strides = [1, 1]} : vector<456x4xf32> to vector<384x4xf32>
    %c2_73 = arith.constant 2 : index
    %c0_74 = arith.constant 0 : index
    %c0_75 = arith.constant 0 : index
    %c0_76 = arith.constant 0 : index
    %84 = vector.load %arg8[%c2_73, %c0_74, %c0_75, %c0_76] : memref<3x3x4x4xf32, #tpu.memory_space<vmem>>, vector<1x1x4x4xf32>
    %85 = vector.shape_cast %84 : vector<1x1x4x4xf32> to vector<4x4xf32>
    %cst_77 = arith.constant dense<0.000000e+00> : vector<384x4xf32>
    %86 = tpu.matmul %83, %85, %cst_77 {dimension_numbers = #tpu.dot_dimension_numbers<[1], [0], [0], [1], [0, 0, 1, 1], [], []>} : vector<384x4xf32>, vector<4x4xf32>, vector<384x4xf32> -> vector<384x4xf32>
    %87 = arith.addf %82, %86 : vector<384x4xf32>
    %88 = vector.extract_strided_slice %51 {offsets = [49, 0], sizes = [384, 4], strides = [1, 1]} : vector<456x4xf32> to vector<384x4xf32>
    %c2_78 = arith.constant 2 : index
    %c1_79 = arith.constant 1 : index
    %c0_80 = arith.constant 0 : index
    %c0_81 = arith.constant 0 : index
    %89 = vector.load %arg8[%c2_78, %c1_79, %c0_80, %c0_81] : memref<3x3x4x4xf32, #tpu.memory_space<vmem>>, vector<1x1x4x4xf32>
    %90 = vector.shape_cast %89 : vector<1x1x4x4xf32> to vector<4x4xf32>
    %cst_82 = arith.constant dense<0.000000e+00> : vector<384x4xf32>
    %91 = tpu.matmul %88, %90, %cst_82 {dimension_numbers = #tpu.dot_dimension_numbers<[1], [0], [0], [1], [0, 0, 1, 1], [], []>} : vector<384x4xf32>, vector<4x4xf32>, vector<384x4xf32> -> vector<384x4xf32>
    %92 = arith.addf %87, %91 : vector<384x4xf32>
    %93 = vector.extract_strided_slice %51 {offsets = [50, 0], sizes = [384, 4], strides = [1, 1]} : vector<456x4xf32> to vector<384x4xf32>
    %c2_83 = arith.constant 2 : index
    %c2_84 = arith.constant 2 : index
    %c0_85 = arith.constant 0 : index
    %c0_86 = arith.constant 0 : index
    %94 = vector.load %arg8[%c2_83, %c2_84, %c0_85, %c0_86] : memref<3x3x4x4xf32, #tpu.memory_space<vmem>>, vector<1x1x4x4xf32>
    %95 = vector.shape_cast %94 : vector<1x1x4x4xf32> to vector<4x4xf32>
    %cst_87 = arith.constant dense<0.000000e+00> : vector<384x4xf32>
    %96 = tpu.matmul %93, %95, %cst_87 {dimension_numbers = #tpu.dot_dimension_numbers<[1], [0], [0], [1], [0, 0, 1, 1], [], []>} : vector<384x4xf32>, vector<4x4xf32>, vector<384x4xf32> -> vector<384x4xf32>
    %97 = arith.addf %92, %96 : vector<384x4xf32>
    %c0_88 = arith.constant 0 : index
    %c0_89 = arith.constant 0 : index
    %98 = vector.load %arg9[%c0_88, %c0_89] : memref<1x4xf32, #tpu.memory_space<vmem>>, vector<1x4xf32>
    %99 = vector.broadcast %98 : vector<1x4xf32> to vector<384x4xf32>
    %100 = arith.addf %97, %99 : vector<384x4xf32>
    %101 = arith.negf %100 : vector<384x4xf32>
    %102 = math.exp %101 : vector<384x4xf32>
    %cst_90 = arith.constant 1.000000e+00 : f32
    %103 = vector.broadcast %cst_90 : f32 to vector<384x4xf32>
    %104 = arith.addf %103, %102 : vector<384x4xf32>
    %105 = arith.divf %103, %104 : vector<384x4xf32>
    %106 = arith.mulf %100, %105 : vector<384x4xf32>
    %c0_91 = arith.constant 0 : index
    %c0_92 = arith.constant 0 : index
    %107 = vector.load %arg10[%c0_91, %c0_92] : memref<4x8xf32, #tpu.memory_space<vmem>>, vector<4x8xf32>
    %cst_93 = arith.constant dense<0.000000e+00> : vector<384x8xf32>
    %108 = tpu.matmul %106, %107, %cst_93 {dimension_numbers = #tpu.dot_dimension_numbers<[1], [0], [0], [1], [0, 0, 1, 1], [], []>} : vector<384x4xf32>, vector<4x8xf32>, vector<384x8xf32> -> vector<384x8xf32>
    %c0_94 = arith.constant 0 : index
    %c0_95 = arith.constant 0 : index
    %109 = vector.load %arg11[%c0_94, %c0_95] : memref<1x8xf32, #tpu.memory_space<vmem>>, vector<1x8xf32>
    %110 = vector.broadcast %109 : vector<1x8xf32> to vector<384x8xf32>
    %111 = arith.addf %108, %110 : vector<384x8xf32>
    %112 = arith.negf %111 : vector<384x8xf32>
    %113 = math.exp %112 : vector<384x8xf32>
    %cst_96 = arith.constant 1.000000e+00 : f32
    %114 = vector.broadcast %cst_96 : f32 to vector<384x8xf32>
    %115 = arith.addf %114, %113 : vector<384x8xf32>
    %116 = arith.divf %114, %115 : vector<384x8xf32>
    %117 = arith.mulf %111, %116 : vector<384x8xf32>
    %c0_97 = arith.constant 0 : index
    %c0_98 = arith.constant 0 : index
    %118 = vector.load %arg12[%c0_97, %c0_98] : memref<8x8xf32, #tpu.memory_space<vmem>>, vector<8x8xf32>
    %cst_99 = arith.constant dense<0.000000e+00> : vector<384x8xf32>
    %119 = tpu.matmul %117, %118, %cst_99 {dimension_numbers = #tpu.dot_dimension_numbers<[1], [0], [0], [1], [0, 0, 1, 1], [], []>} : vector<384x8xf32>, vector<8x8xf32>, vector<384x8xf32> -> vector<384x8xf32>
    %c0_100 = arith.constant 0 : index
    %c0_101 = arith.constant 0 : index
    %120 = vector.load %arg13[%c0_100, %c0_101] : memref<1x8xf32, #tpu.memory_space<vmem>>, vector<1x8xf32>
    %121 = vector.broadcast %120 : vector<1x8xf32> to vector<384x8xf32>
    %122 = arith.addf %119, %121 : vector<384x8xf32>
    %123 = arith.negf %122 : vector<384x8xf32>
    %124 = math.exp %123 : vector<384x8xf32>
    %cst_102 = arith.constant 1.000000e+00 : f32
    %125 = vector.broadcast %cst_102 : f32 to vector<384x8xf32>
    %126 = arith.addf %125, %124 : vector<384x8xf32>
    %127 = arith.divf %125, %126 : vector<384x8xf32>
    %128 = arith.mulf %122, %127 : vector<384x8xf32>
    %129 = vector.shape_cast %128 : vector<384x8xf32> to vector<16x24x8xf32>
    %c0_103 = arith.constant 0 : index
    %c0_104 = arith.constant 0 : index
    %c0_105 = arith.constant 0 : index
    %c0_106 = arith.constant 0 : index
    %130 = vector.load %arg14[%c0_103, %c0_104, %c0_105, %c0_106] : memref<1x16x24x8xf32, #tpu.memory_space<vmem>>, vector<1x16x24x8xf32>
    %131 = vector.shape_cast %130 : vector<1x16x24x8xf32> to vector<16x24x8xf32>
    %132 = vector.shape_cast %129 : vector<16x24x8xf32> to vector<1x16x24x8xf32>
    tpu.vector_store %arg14[%c0_103, %c0_104, %c0_105, %c0_106], %132 {strides = array<i32>} : memref<1x16x24x8xf32, #tpu.memory_space<vmem>>, vector<1x16x24x8xf32>,
    return
  }
  func.func @transform_0(%arg0: i32, %arg1: i32) -> (i32, i32, i32, i32) {
    %c0_i32 = arith.constant 0 : i32
    %c0_i32_0 = arith.constant 0 : i32
    %c0_i32_1 = arith.constant 0 : i32
    return %arg0, %arg1, %c0_i32, %c0_i32_0 : i32, i32, i32, i32
  }
  func.func @transform_1(%arg0: i32, %arg1: i32) -> (i32, i32, i32, i32) {
    %c1_i32 = arith.constant 1 : i32
    %0 = arith.addi %arg1, %c1_i32 : i32
    %c16_i32 = arith.constant 16 : i32
    %1 = arith.muli %0, %c16_i32 : i32
    %c0_i32 = arith.constant 0 : i32
    %2 = arith.addi %1, %c0_i32 : i32
    %c0_i32_0 = arith.constant 0 : i32
    %c0_i32_1 = arith.constant 0 : i32
    %c0_i32_2 = arith.constant 0 : i32
    return %arg0, %2, %c0_i32_0, %c0_i32_1 : i32, i32, i32, i32
  }
  func.func @transform_2(%arg0: i32, %arg1: i32) -> (i32, i32, i32, i32) {
    %c1_i32 = arith.constant 1 : i32
    %0 = arith.addi %arg1, %c1_i32 : i32
    %c16_i32 = arith.constant 16 : i32
    %1 = arith.muli %0, %c16_i32 : i32
    %c1_i32_0 = arith.constant 1 : i32
    %2 = arith.addi %1, %c1_i32_0 : i32
    %c0_i32 = arith.constant 0 : i32
    %c0_i32_1 = arith.constant 0 : i32
    %c0_i32_2 = arith.constant 0 : i32
    return %arg0, %2, %c0_i32, %c0_i32_1 : i32, i32, i32, i32
  }
  func.func @transform_3(%arg0: i32, %arg1: i32) -> (i32, i32, i32, i32) {
    %c1_i32 = arith.constant 1 : i32
    %0 = arith.addi %arg1, %c1_i32 : i32
    %c16_i32 = arith.constant 16 : i32
    %1 = arith.muli %0, %c16_i32 : i32
    %c2_i32 = arith.constant 2 : i32
    %2 = arith.addi %1, %c2_i32 : i32
    %c0_i32 = arith.constant 0 : i32
    %c0_i32_0 = arith.constant 0 : i32
    %c0_i32_1 = arith.constant 0 : i32
    return %arg0, %2, %c0_i32, %c0_i32_0 : i32, i32, i32, i32
  }
  func.func @transform_4(%arg0: i32, %arg1: i32) -> (i32, i32) {
    %c0_i32 = arith.constant 0 : i32
    %c0_i32_0 = arith.constant 0 : i32
    %c0_i32_1 = arith.constant 0 : i32
    return %c0_i32, %c0_i32_0 : i32, i32
  }
  func.func @transform_5(%arg0: i32, %arg1: i32) -> (i32, i32) {
    %c0_i32 = arith.constant 0 : i32
    %c0_i32_0 = arith.constant 0 : i32
    %c0_i32_1 = arith.constant 0 : i32
    return %c0_i32, %c0_i32_0 : i32, i32
  }
  func.func @transform_6(%arg0: i32, %arg1: i32) -> (i32, i32, i32, i32) {
    %c0_i32 = arith.constant 0 : i32
    %c0_i32_0 = arith.constant 0 : i32
    %c0_i32_1 = arith.constant 0 : i32
    %c0_i32_2 = arith.constant 0 : i32
    %c0_i32_3 = arith.constant 0 : i32
    return %c0_i32, %c0_i32_0, %c0_i32_1, %c0_i32_2 : i32, i32, i32, i32
  }
  func.func @transform_7(%arg0: i32, %arg1: i32) -> (i32, i32) {
    %c0_i32 = arith.constant 0 : i32
    %c0_i32_0 = arith.constant 0 : i32
    %c0_i32_1 = arith.constant 0 : i32
    return %c0_i32, %c0_i32_0 : i32, i32
  }
  func.func @transform_8(%arg0: i32, %arg1: i32) -> (i32, i32) {
    %c0_i32 = arith.constant 0 : i32
    %c0_i32_0 = arith.constant 0 : i32
    %c0_i32_1 = arith.constant 0 : i32
    return %c0_i32, %c0_i32_0 : i32, i32
  }
  func.func @transform_9(%arg0: i32, %arg1: i32) -> (i32, i32) {
    %c0_i32 = arith.constant 0 : i32
    %c0_i32_0 = arith.constant 0 : i32
    %c0_i32_1 = arith.constant 0 : i32
    return %c0_i32, %c0_i32_0 : i32, i32
  }
  func.func @transform_10(%arg0: i32, %arg1: i32) -> (i32, i32) {
    %c0_i32 = arith.constant 0 : i32
    %c0_i32_0 = arith.constant 0 : i32
    %c0_i32_1 = arith.constant 0 : i32
    return %c0_i32, %c0_i32_0 : i32, i32
  }
  func.func @transform_11(%arg0: i32, %arg1: i32) -> (i32, i32) {
    %c0_i32 = arith.constant 0 : i32
    %c0_i32_0 = arith.constant 0 : i32
    %c0_i32_1 = arith.constant 0 : i32
    return %c0_i32, %c0_i32_0 : i32, i32
  }
  func.func @transform_12(%arg0: i32, %arg1: i32) -> (i32, i32, i32, i32) {
    %c0_i32 = arith.constant 0 : i32
    %c0_i32_0 = arith.constant 0 : i32
    %c0_i32_1 = arith.constant 0 : i32
    return %arg0, %arg1, %c0_i32, %c0_i32_0 : i32, i32, i32, i32
  }
}

</mosaic_0001>

<llo_original>
// kernel: tpu_custom_call.1
$region0: #{tpu_custom_call.1}
  #allocation0 [shape = 'u32[]', space=smem, size = 0x4, offset = 0x4, fixed_abs, tag = 'smem constant byte address 0x4 - core index']
  #allocation1 [shape = 'u32[144,128]{1,0:T(1,128)}', space=vmem, size = 0x12000, scoped, tag = 'internal scratch']
  #allocation2 [shape = 'f32[19,24,4]{2,1,0:T(8,128)}', space=vmem, size = 0x39000, scoped, tag = 'scratch operand']
  %s0 = inlined_call_operand.vmem [shape: f32[2,19,24,8], index: 0, kind: input, shape index: {}]
  %s1 = inlined_call_operand.vmem [shape: f32[2,19,24,8], index: 1, kind: input, shape index: {}]
  %s2 = inlined_call_operand.vmem [shape: f32[2,19,24,8], index: 2, kind: input, shape index: {}]
  %s3 = inlined_call_operand.vmem [shape: f32[2,19,24,8], index: 3, kind: input, shape index: {}]
  %s4 = inlined_call_operand.vmem [shape: f32[8,4], index: 4, kind: input, shape index: {}]
  %s5 = inlined_call_operand.vmem [shape: f32[1,4], index: 5, kind: input, shape index: {}]
  %s6 = inlined_call_operand.vmem [shape: f32[3,3,4,4], index: 6, kind: input, shape index: {}]
  %s7 = inlined_call_operand.vmem [shape: f32[1,4], index: 7, kind: input, shape index: {}]
  %s8 = inlined_call_operand.vmem [shape: f32[4,8], index: 8, kind: input, shape index: {}]
  %s9 = inlined_call_operand.vmem [shape: f32[1,8], index: 9, kind: input, shape index: {}]
  %s10 = inlined_call_operand.vmem [shape: f32[8,8], index: 10, kind: input, shape index: {}]
  %s11 = inlined_call_operand.vmem [shape: f32[1,8], index: 11, kind: input, shape index: {}]
  %s12 = inlined_call_operand.vmem [shape: f32[2,16,24,8], index: 12, kind: output, shape index: {}]
  %s13 = sld [smem:[#allocation0]]
  $region89: #{tpu_custom_call.1} parent=0
    _
  %s15 = ssub.s32 1, %s13
  %s16 = scalar_select 0, %s15, %s13
  loop: start=0, step=1, limit=4
  $region2: #{tpu_custom_call.1} parent=0 // loop_pre_header
    _
  $region3: #{tpu_custom_call.1} parent=0 // loop_header
    %s18 = sphi 0, %s22
    %p19 = scmp.ge.s32.totalorder %s18, 4
    %s25 = sphi 0, %s37
    %s26 = sphi 0, %s33
    %s27 = sphi 0, %s25
    %s28 = sphi 0, %s26
    %s29 = sphi 0, %s27
    %s30 = sphi 0, %s28
    %s42 = sphi 0, %s44
    %s45 = sphi 0, %s42
    %s46 = sphi 0, %s45
    %s62 = sphi 0, %s46
    %s74 = sphi 0, %s76
    %s77 = sphi 0, %s74
    %s78 = sphi 0, %s77
    %s94 = sphi 0, %s78
    %s108 = sphi 0, %s110
    %s111 = sphi 0, %s108
    %s112 = sphi 0, %s111
    %s128 = sphi 0, %s112
    %s142 = sphi 0, %s144
    %s145 = sphi 0, %s142
    %s146 = sphi 0, %s145
    %s162 = sphi 0, %s146
    %s166 = sphi 0, %s166
    %s168 = sphi 0, %s166
    %s169 = sphi 0, %s168
    %s183 = sphi 0, %s169
    %s187 = sphi 0, %s187
    %s189 = sphi 0, %s187
    %s190 = sphi 0, %s189
    %s204 = sphi 0, %s190
    %s208 = sphi 0, %s208
    %s210 = sphi 0, %s208
    %s211 = sphi 0, %s210
    %s225 = sphi 0, %s211
    %s229 = sphi 0, %s229
    %s231 = sphi 0, %s229
    %s232 = sphi 0, %s231
    %s246 = sphi 0, %s232
    %s250 = sphi 0, %s250
    %s252 = sphi 0, %s250
    %s253 = sphi 0, %s252
    %s267 = sphi 0, %s253
    %s271 = sphi 0, %s271
    %s273 = sphi 0, %s271
    %s274 = sphi 0, %s273
    %s288 = sphi 0, %s274
    %s292 = sphi 0, %s292
    %s294 = sphi 0, %s292
    %s295 = sphi 0, %s294
    %s309 = sphi 0, %s295
    %s313 = sphi 0, %s313
    %s315 = sphi 0, %s313
    %s316 = sphi 0, %s315
    %s330 = sphi 0, %s316
    %s338 = sphi 0, %s340
    %s341 = sphi 0, %s338
    %s342 = sphi 0, %s341
    %s358 = sphi 0, %s342
  $region4: #{tpu_custom_call.1} parent=0 // loop_header_branch
    %21 = sbr.rel (%p19) target = $region8
  $region5: #{tpu_custom_call.1} parent=0 // loop_body
    %s23 = ssub.s32 %s18, 1
    %s24 = ssub.s32 %s18, 2
    %s31 = sadd.s32 1, %s26
    %p32 = scmp.ge.s32.totalorder %s31, 1
    %s33 = scalar_select %p32, 0, %s31
    %s34 = sadd.s32 1, %s25
    %s35 = scalar_select %p32, %s34, %s25
    %p36 = scmp.ge.s32.totalorder %s35, 2
    %s37 = scalar_select %p36, 0, %s35
    %s38 = ssub.s32 %s25, %s37
    %s39 = ssub.s32 %s26, %s33
    %s40 = sor.u32 %s38, %s39
    %p41 = scmp.eq.s32.totalorder %s40, 0
    %s43 = sadd.s32 %s42, 1
    %s44 = scalar_select %p41, %s42, %s43
    %p47 = pneg %p41
    %p48 = scmp.eq.s32.totalorder %s18, 1
    %p49 = por %p47, %p48
    %p50 = scmp.ne.s32.totalorder %s42, %s45
    %p51 = scmp.eq.s32.totalorder %s18, 0
    %p52 = por %p50, %p51
    %p53 = scmp.ne.s32.totalorder %s42, %s45
    %p54 = scmp.eq.s32.totalorder %s23, 1
    %p55 = por %p53, %p54
    %p56 = scmp.ne.s32.totalorder %s45, %s46
    %p57 = scmp.eq.s32.totalorder %s23, 0
    %p58 = por %p56, %p57
    %p59 = scmp.ne.s32.totalorder %s45, %s46
    %p60 = scmp.eq.s32.totalorder %s24, 1
    %p61 = por %p59, %p60
    %p63 = scmp.ne.s32.totalorder %s46, %s62
    %p64 = scmp.eq.s32.totalorder %s24, 0
    %p65 = por %p63, %p64
    %s66 = sadd.s32 %s26, 1
    %s67 = smul.u32 %s66, 16
    %s68 = sadd.s32 %s33, 1
    %s69 = smul.u32 %s68, 16
    %s70 = ssub.s32 %s25, %s37
    %s71 = ssub.s32 %s67, %s69
    %s72 = sor.u32 %s70, %s71
    %p73 = scmp.eq.s32.totalorder %s72, 0
    %s75 = sadd.s32 %s74, 1
    %s76 = scalar_select %p73, %s74, %s75
    %p79 = pneg %p73
    %p80 = scmp.eq.s32.totalorder %s18, 1
    %p81 = por %p79, %p80
    %p82 = scmp.ne.s32.totalorder %s74, %s77
    %p83 = scmp.eq.s32.totalorder %s18, 0
    %p84 = por %p82, %p83
    %p85 = scmp.ne.s32.totalorder %s74, %s77
    %p86 = scmp.eq.s32.totalorder %s23, 1
    %p87 = por %p85, %p86
    %p88 = scmp.ne.s32.totalorder %s77, %s78
    %p89 = scmp.eq.s32.totalorder %s23, 0
    %p90 = por %p88, %p89
    %p91 = scmp.ne.s32.totalorder %s77, %s78
    %p92 = scmp.eq.s32.totalorder %s24, 1
    %p93 = por %p91, %p92
    %p95 = scmp.ne.s32.totalorder %s78, %s94
    %p96 = scmp.eq.s32.totalorder %s24, 0
    %p97 = por %p95, %p96
    %s98 = sadd.s32 %s26, 1
    %s99 = smul.u32 %s98, 16
    %s100 = sadd.s32 %s99, 1
    %s101 = sadd.s32 %s33, 1
    %s102 = smul.u32 %s101, 16
    %s103 = sadd.s32 %s102, 1
    %s104 = ssub.s32 %s25, %s37
    %s105 = ssub.s32 %s100, %s103
    %s106 = sor.u32 %s104, %s105
    %p107 = scmp.eq.s32.totalorder %s106, 0
    %s109 = sadd.s32 %s108, 1
    %s110 = scalar_select %p107, %s108, %s109
    %p113 = pneg %p107
    %p114 = scmp.eq.s32.totalorder %s18, 1
    %p115 = por %p113, %p114
    %p116 = scmp.ne.s32.totalorder %s108, %s111
    %p117 = scmp.eq.s32.totalorder %s18, 0
    %p118 = por %p116, %p117
    %p119 = scmp.ne.s32.totalorder %s108, %s111
    %p120 = scmp.eq.s32.totalorder %s23, 1
    %p121 = por %p119, %p120
    %p122 = scmp.ne.s32.totalorder %s111, %s112
    %p123 = scmp.eq.s32.totalorder %s23, 0
    %p124 = por %p122, %p123
    %p125 = scmp.ne.s32.totalorder %s111, %s112
    %p126 = scmp.eq.s32.totalorder %s24, 1
    %p127 = por %p125, %p126
    %p129 = scmp.ne.s32.totalorder %s112, %s128
    %p130 = scmp.eq.s32.totalorder %s24, 0
    %p131 = por %p129, %p130
    %s132 = sadd.s32 %s26, 1
    %s133 = smul.u32 %s132, 16
    %s134 = sadd.s32 %s133, 2
    %s135 = sadd.s32 %s33, 1
    %s136 = smul.u32 %s135, 16
    %s137 = sadd.s32 %s136, 2
    %s138 = ssub.s32 %s25, %s37
    %s139 = ssub.s32 %s134, %s137
    %s140 = sor.u32 %s138, %s139
    %p141 = scmp.eq.s32.totalorder %s140, 0
    %s143 = sadd.s32 %s142, 1
    %s144 = scalar_select %p141, %s142, %s143
    %p147 = pneg %p141
    %p148 = scmp.eq.s32.totalorder %s18, 1
    %p149 = por %p147, %p148
    %p150 = scmp.ne.s32.totalorder %s142, %s145
    %p151 = scmp.eq.s32.totalorder %s18, 0
    %p152 = por %p150, %p151
    %p153 = scmp.ne.s32.totalorder %s142, %s145
    %p154 = scmp.eq.s32.totalorder %s23, 1
    %p155 = por %p153, %p154
    %p156 = scmp.ne.s32.totalorder %s145, %s146
    %p157 = scmp.eq.s32.totalorder %s23, 0
    %p158 = por %p156, %p157
    %p159 = scmp.ne.s32.totalorder %s145, %s146
    %p160 = scmp.eq.s32.totalorder %s24, 1
    %p161 = por %p159, %p160
    %p163 = scmp.ne.s32.totalorder %s146, %s162
    %p164 = scmp.eq.s32.totalorder %s24, 0
    %p165 = por %p163, %p164
    %s167 = sadd.s32 %s166, 1
    %p170 = scmp.eq.s32.totalorder %s18, 1
    %p171 = scmp.ne.s32.totalorder %s166, %s168
    %p172 = scmp.eq.s32.totalorder %s18, 0
    %p173 = por %p171, %p172
    %p174 = scmp.ne.s32.totalorder %s166, %s168
    %p175 = scmp.eq.s32.totalorder %s23, 1
    %p176 = por %p174, %p175
    %p177 = scmp.ne.s32.totalorder %s168, %s169
    %p178 = scmp.eq.s32.totalorder %s23, 0
    %p179 = por %p177, %p178
    %p180 = scmp.ne.s32.totalorder %s168, %s169
    %p181 = scmp.eq.s32.totalorder %s24, 1
    %p182 = por %p180, %p181
    %p184 = scmp.ne.s32.totalorder %s169, %s183
    %p185 = scmp.eq.s32.totalorder %s24, 0
    %p186 = por %p184, %p185
    %s188 = sadd.s32 %s187, 1
    %p191 = scmp.eq.s32.totalorder %s18, 1
    %p192 = scmp.ne.s32.totalorder %s187, %s189
    %p193 = scmp.eq.s32.totalorder %s18, 0
    %p194 = por %p192, %p193
    %p195 = scmp.ne.s32.totalorder %s187, %s189
    %p196 = scmp.eq.s32.totalorder %s23, 1
    %p197 = por %p195, %p196
    %p198 = scmp.ne.s32.totalorder %s189, %s190
    %p199 = scmp.eq.s32.totalorder %s23, 0
    %p200 = por %p198, %p199
    %p201 = scmp.ne.s32.totalorder %s189, %s190
    %p202 = scmp.eq.s32.totalorder %s24, 1
    %p203 = por %p201, %p202
    %p205 = scmp.ne.s32.totalorder %s190, %s204
    %p206 = scmp.eq.s32.totalorder %s24, 0
    %p207 = por %p205, %p206
    %s209 = sadd.s32 %s208, 1
    %p212 = scmp.eq.s32.totalorder %s18, 1
    %p213 = scmp.ne.s32.totalorder %s208, %s210
    %p214 = scmp.eq.s32.totalorder %s18, 0
    %p215 = por %p213, %p214
    %p216 = scmp.ne.s32.totalorder %s208, %s210
    %p217 = scmp.eq.s32.totalorder %s23, 1
    %p218 = por %p216, %p217
    %p219 = scmp.ne.s32.totalorder %s210, %s211
    %p220 = scmp.eq.s32.totalorder %s23, 0
    %p221 = por %p219, %p220
    %p222 = scmp.ne.s32.totalorder %s210, %s211
    %p223 = scmp.eq.s32.totalorder %s24, 1
    %p224 = por %p222, %p223
    %p226 = scmp.ne.s32.totalorder %s211, %s225
    %p227 = scmp.eq.s32.totalorder %s24, 0
    %p228 = por %p226, %p227
    %s230 = sadd.s32 %s229, 1
    %p233 = scmp.eq.s32.totalorder %s18, 1
    %p234 = scmp.ne.s32.totalorder %s229, %s231
    %p235 = scmp.eq.s32.totalorder %s18, 0
    %p236 = por %p234, %p235
    %p237 = scmp.ne.s32.totalorder %s229, %s231
    %p238 = scmp.eq.s32.totalorder %s23, 1
    %p239 = por %p237, %p238
    %p240 = scmp.ne.s32.totalorder %s231, %s232
    %p241 = scmp.eq.s32.totalorder %s23, 0
    %p242 = por %p240, %p241
    %p243 = scmp.ne.s32.totalorder %s231, %s232
    %p244 = scmp.eq.s32.totalorder %s24, 1
    %p245 = por %p243, %p244
    %p247 = scmp.ne.s32.totalorder %s232, %s246
    %p248 = scmp.eq.s32.totalorder %s24, 0
    %p249 = por %p247, %p248
    %s251 = sadd.s32 %s250, 1
    %p254 = scmp.eq.s32.totalorder %s18, 1
    %p255 = scmp.ne.s32.totalorder %s250, %s252
    %p256 = scmp.eq.s32.totalorder %s18, 0
    %p257 = por %p255, %p256
    %p258 = scmp.ne.s32.totalorder %s250, %s252
    %p259 = scmp.eq.s32.totalorder %s23, 1
    %p260 = por %p258, %p259
    %p261 = scmp.ne.s32.totalorder %s252, %s253
    %p262 = scmp.eq.s32.totalorder %s23, 0
    %p263 = por %p261, %p262
    %p264 = scmp.ne.s32.totalorder %s252, %s253
    %p265 = scmp.eq.s32.totalorder %s24, 1
    %p266 = por %p264, %p265
    %p268 = scmp.ne.s32.totalorder %s253, %s267
    %p269 = scmp.eq.s32.totalorder %s24, 0
    %p270 = por %p268, %p269
    %s272 = sadd.s32 %s271, 1
    %p275 = scmp.eq.s32.totalorder %s18, 1
    %p276 = scmp.ne.s32.totalorder %s271, %s273
    %p277 = scmp.eq.s32.totalorder %s18, 0
    %p278 = por %p276, %p277
    %p279 = scmp.ne.s32.totalorder %s271, %s273
    %p280 = scmp.eq.s32.totalorder %s23, 1
    %p281 = por %p279, %p280
    %p282 = scmp.ne.s32.totalorder %s273, %s274
    %p283 = scmp.eq.s32.totalorder %s23, 0
    %p284 = por %p282, %p283
    %p285 = scmp.ne.s32.totalorder %s273, %s274
    %p286 = scmp.eq.s32.totalorder %s24, 1
    %p287 = por %p285, %p286
    %p289 = scmp.ne.s32.totalorder %s274, %s288
    %p290 = scmp.eq.s32.totalorder %s24, 0
    %p291 = por %p289, %p290
    %s293 = sadd.s32 %s292, 1
    %p296 = scmp.eq.s32.totalorder %s18, 1
    %p297 = scmp.ne.s32.totalorder %s292, %s294
    %p298 = scmp.eq.s32.totalorder %s18, 0
    %p299 = por %p297, %p298
    %p300 = scmp.ne.s32.totalorder %s292, %s294
    %p301 = scmp.eq.s32.totalorder %s23, 1
    %p302 = por %p300, %p301
    %p303 = scmp.ne.s32.totalorder %s294, %s295
    %p304 = scmp.eq.s32.totalorder %s23, 0
    %p305 = por %p303, %p304
    %p306 = scmp.ne.s32.totalorder %s294, %s295
    %p307 = scmp.eq.s32.totalorder %s24, 1
    %p308 = por %p306, %p307
    %p310 = scmp.ne.s32.totalorder %s295, %s309
    %p311 = scmp.eq.s32.totalorder %s24, 0
    %p312 = por %p310, %p311
    %s314 = sadd.s32 %s313, 1
    %p317 = scmp.eq.s32.totalorder %s18, 1
    %p318 = scmp.ne.s32.totalorder %s313, %s315
    %p319 = scmp.eq.s32.totalorder %s18, 0
    %p320 = por %p318, %p319
    %p321 = scmp.ne.s32.totalorder %s313, %s315
    %p322 = scmp.eq.s32.totalorder %s23, 1
    %p323 = por %p321, %p322
    %p324 = scmp.ne.s32.totalorder %s315, %s316
    %p325 = scmp.eq.s32.totalorder %s23, 0
    %p326 = por %p324, %p325
    %p327 = scmp.ne.s32.totalorder %s315, %s316
    %p328 = scmp.eq.s32.totalorder %s24, 1
    %p329 = por %p327, %p328
    %p331 = scmp.ne.s32.totalorder %s316, %s330
    %p332 = scmp.eq.s32.totalorder %s24, 0
    %p333 = por %p331, %p332
    %s334 = ssub.s32 %s25, %s37
    %s335 = ssub.s32 %s26, %s33
    %s336 = sor.u32 %s334, %s335
    %p337 = scmp.eq.s32.totalorder %s336, 0
    %s339 = sadd.s32 %s338, 1
    %s340 = scalar_select %p337, %s338, %s339
    %p343 = pneg %p337
    %p344 = scmp.eq.s32.totalorder %s18, 1
    %p345 = por %p343, %p344
    %p346 = scmp.ne.s32.totalorder %s338, %s341
    %p347 = scmp.eq.s32.totalorder %s18, 0
    %p348 = por %p346, %p347
    %p349 = scmp.ne.s32.totalorder %s338, %s341
    %p350 = scmp.eq.s32.totalorder %s23, 1
    %p351 = por %p349, %p350
    %p352 = scmp.ne.s32.totalorder %s341, %s342
    %p353 = scmp.eq.s32.totalorder %s23, 0
    %p354 = por %p352, %p353
    %p355 = scmp.ne.s32.totalorder %s341, %s342
    %p356 = scmp.eq.s32.totalorder %s24, 1
    %p357 = por %p355, %p356
    %p359 = scmp.ne.s32.totalorder %s342, %s358
    %p360 = scmp.eq.s32.totalorder %s24, 0
    %p361 = por %p359, %p360
    %p362 = scmp.le.s32.totalorder 1, %s18
    %p363 = scmp.lt.s32.totalorder %s18, 3
    %p364 = pnand %p362, %p363
    %p365 = pneg %p364
    // Predicated region
    $region9: #{tpu_custom_call.1} parent=5 // pred_check
      _
    $region10: #{tpu_custom_call.1} parent=5 // pred_check_branch
      %367 = sbr.rel (%p364) target = $region12
    $region11: #{tpu_custom_call.1} parent=5 // pred_region
      %s368 = ssub.s32 %s18, 1
      // Predicated region
      $region13: #{tpu_custom_call.1} parent=11 // pred_check
        %p369 = pneg %p179
      $region14: #{tpu_custom_call.1} parent=11 // pred_check_branch
        %371 = sbr.rel (%p369) target = $region16
      $region15: #{tpu_custom_call.1} parent=11 // pred_region
        _
      $region16: #{tpu_custom_call.1} parent=11 // pred_fallthru
        _
      // Predicated region
      $region17: #{tpu_custom_call.1} parent=11 // pred_check
        %p372 = pneg %p200
      $region18: #{tpu_custom_call.1} parent=11 // pred_check_branch
        %374 = sbr.rel (%p372) target = $region20
      $region19: #{tpu_custom_call.1} parent=11 // pred_region
        _
      $region20: #{tpu_custom_call.1} parent=11 // pred_fallthru
        _
      // Predicated region
      $region21: #{tpu_custom_call.1} parent=11 // pred_check
        %p375 = pneg %p221
      $region22: #{tpu_custom_call.1} parent=11 // pred_check_branch
        %377 = sbr.rel (%p375) target = $region24
      $region23: #{tpu_custom_call.1} parent=11 // pred_region
        _
      $region24: #{tpu_custom_call.1} parent=11 // pred_fallthru
        _
      // Predicated region
      $region25: #{tpu_custom_call.1} parent=11 // pred_check
        %p378 = pneg %p242
      $region26: #{tpu_custom_call.1} parent=11 // pred_check_branch
        %380 = sbr.rel (%p378) target = $region28
      $region27: #{tpu_custom_call.1} parent=11 // pred_region
        _
      $region28: #{tpu_custom_call.1} parent=11 // pred_fallthru
        _
      // Predicated region
      $region29: #{tpu_custom_call.1} parent=11 // pred_check
        %p381 = pneg %p263
      $region30: #{tpu_custom_call.1} parent=11 // pred_check_branch
        %383 = sbr.rel (%p381) target = $region32
      $region31: #{tpu_custom_call.1} parent=11 // pred_region
        _
      $region32: #{tpu_custom_call.1} parent=11 // pred_fallthru
        _
      // Predicated region
      $region33: #{tpu_custom_call.1} parent=11 // pred_check
        %p384 = pneg %p284
      $region34: #{tpu_custom_call.1} parent=11 // pred_check_branch
        %386 = sbr.rel (%p384) target = $region36
      $region35: #{tpu_custom_call.1} parent=11 // pred_region
        _
      $region36: #{tpu_custom_call.1} parent=11 // pred_fallthru
        _
      // Predicated region
      $region37: #{tpu_custom_call.1} parent=11 // pred_check
        %p387 = pneg %p305
      $region38: #{tpu_custom_call.1} parent=11 // pred_check_branch
        %389 = sbr.rel (%p387) target = $region40
      $region39: #{tpu_custom_call.1} parent=11 // pred_region
        _
      $region40: #{tpu_custom_call.1} parent=11 // pred_fallthru
        _
      // Predicated region
      $region41: #{tpu_custom_call.1} parent=11 // pred_check
        %p390 = pneg %p326
      $region42: #{tpu_custom_call.1} parent=11 // pred_check_branch
        %392 = sbr.rel (%p390) target = $region44
      $region43: #{tpu_custom_call.1} parent=11 // pred_region
        _
      $region44: #{tpu_custom_call.1} parent=11 // pred_fallthru
        _
    $region12: #{tpu_custom_call.1} parent=5 // pred_fallthru
      _
    %p393 = scmp.lt.s32.totalorder %s18, 2
    // Predicated region
    $region45: #{tpu_custom_call.1} parent=5 // pred_check
      %p394 = pneg %p393
    $region46: #{tpu_custom_call.1} parent=5 // pred_check_branch
      %396 = sbr.rel (%p394) target = $region48
    $region47: #{tpu_custom_call.1} parent=5 // pred_region
      // Predicated region
      $region49: #{tpu_custom_call.1} parent=47 // pred_check
        %p397 = pneg %p52
      $region50: #{tpu_custom_call.1} parent=47 // pred_check_branch
        %399 = sbr.rel (%p397) target = $region52
      $region51: #{tpu_custom_call.1} parent=47 // pred_region
        %s400 = smul.u32 16, %s26
        %s401 = ssub.s32 19, %s400
        %p402 = scmp.lt.s32.totalorder %s401, 16
        %s403 = scalar_select %p402, %s401, 16
        %s404 = smul.u32 128, %s403
        %s405 = smul.u32 %s404, 3
        %p406 = scmp.lt.s32.totalorder %s25, 1
        %s407 = scalar_select %p406, %s25, 1
        %p408 = scmp.lt.s32.totalorder %s400, 18
        %s409 = scalar_select %p408, %s400, 18
        %s410 = smul.addr %s409, 3
        %s411 = smul.addr %s407, 57
        %s412 = sadd.s32 %s410, %s411
        %s413 = smul.addr %s412, 8
        %s414 = scalar_lea.vmem %s0, %s413
        %s415 = smul.u32 16, %s26
        %s416 = ssub.s32 19, %s415
        %p417 = scmp.lt.s32.totalorder %s416, 16
        %s418 = scalar_select %p417, %s416, 16
        %s419 = smul.u32 128, %s418
        %s420 = smul.u32 %s419, 3
      $region52: #{tpu_custom_call.1} parent=47 // pred_fallthru
        _
      // Predicated region
      $region53: #{tpu_custom_call.1} parent=47 // pred_check
        %p421 = pneg %p84
      $region54: #{tpu_custom_call.1} parent=47 // pred_check_branch
        %423 = sbr.rel (%p421) target = $region56
      $region55: #{tpu_custom_call.1} parent=47 // pred_region
        %s424 = sadd.s32 %s26, 1
        %s425 = smul.u32 %s424, 16
        %p426 = scmp.lt.s32.totalorder %s25, 1
        %s427 = scalar_select %p426, %s25, 1
        %p428 = scmp.lt.s32.totalorder %s425, 18
        %s429 = scalar_select %p428, %s425, 18
        %s430 = smul.addr %s429, 3
        %s431 = smul.addr %s427, 57
        %s432 = sadd.s32 %s430, %s431
        %s433 = smul.addr %s432, 8
        %s434 = scalar_lea.vmem %s1, %s433
        %s435 = sadd.s32 %s26, 1
        %s436 = smul.u32 %s435, 16
      $region56: #{tpu_custom_call.1} parent=47 // pred_fallthru
        _
      // Predicated region
      $region57: #{tpu_custom_call.1} parent=47 // pred_check
        %p437 = pneg %p118
      $region58: #{tpu_custom_call.1} parent=47 // pred_check_branch
        %439 = sbr.rel (%p437) target = $region60
      $region59: #{tpu_custom_call.1} parent=47 // pred_region
        %s440 = sadd.s32 %s26, 1
        %s441 = smul.u32 %s440, 16
        %s442 = sadd.s32 %s441, 1
        %p443 = scmp.lt.s32.totalorder %s25, 1
        %s444 = scalar_select %p443, %s25, 1
        %p445 = scmp.lt.s32.totalorder %s442, 18
        %s446 = scalar_select %p445, %s442, 18
        %s447 = smul.addr %s446, 3
        %s448 = smul.addr %s444, 57
        %s449 = sadd.s32 %s447, %s448
        %s450 = smul.addr %s449, 8
        %s451 = scalar_lea.vmem %s2, %s450
        %s452 = sadd.s32 %s26, 1
        %s453 = smul.u32 %s452, 16
        %s454 = sadd.s32 %s453, 1
      $region60: #{tpu_custom_call.1} parent=47 // pred_fallthru
        _
      // Predicated region
      $region61: #{tpu_custom_call.1} parent=47 // pred_check
        %p455 = pneg %p152
      $region62: #{tpu_custom_call.1} parent=47 // pred_check_branch
        %457 = sbr.rel (%p455) target = $region64
      $region63: #{tpu_custom_call.1} parent=47 // pred_region
        %s458 = sadd.s32 %s26, 1
        %s459 = smul.u32 %s458, 16
        %s460 = sadd.s32 %s459, 2
        %p461 = scmp.lt.s32.totalorder %s25, 1
        %s462 = scalar_select %p461, %s25, 1
        %p463 = scmp.lt.s32.totalorder %s460, 18
        %s464 = scalar_select %p463, %s460, 18
        %s465 = smul.addr %s464, 3
        %s466 = smul.addr %s462, 57
        %s467 = sadd.s32 %s465, %s466
        %s468 = smul.addr %s467, 8
        %s469 = scalar_lea.vmem %s3, %s468
        %s470 = sadd.s32 %s26, 1
        %s471 = smul.u32 %s470, 16
        %s472 = sadd.s32 %s471, 2
      $region64: #{tpu_custom_call.1} parent=47 // pred_fallthru
        _
    $region48: #{tpu_custom_call.1} parent=5 // pred_fallthru
      _
    %p473 = scmp.le.s32.totalorder 1, %s18
    %p474 = scmp.lt.s32.totalorder %s18, 3
    %p475 = pnand %p473, %p474
    %p476 = pneg %p475
    // Predicated region
    $region65: #{tpu_custom_call.1} parent=5 // pred_check
      _
    $region66: #{tpu_custom_call.1} parent=5 // pred_check_branch
      %478 = sbr.rel (%p475) target = $region68
    $region67: #{tpu_custom_call.1} parent=5 // pred_region
      %s479 = ssub.s32 %s18, 1
      %s480 = smul.u32 16, %s28
      %s481 = ssub.s32 19, %s480
      %p482 = scmp.lt.s32.totalorder %s481, 16
      %s483 = scalar_select %p482, %s481, 16
      %s484 = smul.u32 128, %s483
      %s485 = smul.u32 %s484, 3
      %p486 = scmp.lt.s32.totalorder %s27, 1
      %s487 = scalar_select %p486, %s27, 1
      %p488 = scmp.lt.s32.totalorder %s480, 18
      %s489 = scalar_select %p488, %s480, 18
      %s490 = smul.addr %s489, 3
      %s491 = smul.addr %s487, 57
      %s492 = sadd.s32 %s490, %s491
      %s493 = smul.addr %s492, 8
      %s494 = scalar_lea.vmem %s0, %s493
      %p495 = pneg %p58
      %p496 = pneg %p55
      %s497 = sadd.s32 %s28, 1
      %s498 = smul.u32 %s497, 16
      %p499 = scmp.lt.s32.totalorder %s27, 1
      %s500 = scalar_select %p499, %s27, 1
      %p501 = scmp.lt.s32.totalorder %s498, 18
      %s502 = scalar_select %p501, %s498, 18
      %s503 = smul.addr %s502, 3
      %s504 = smul.addr %s500, 57
      %s505 = sadd.s32 %s503, %s504
      %s506 = smul.addr %s505, 8
      %s507 = scalar_lea.vmem %s1, %s506
      %p508 = pneg %p90
      %p509 = pneg %p87
      %s510 = sadd.s32 %s28, 1
      %s511 = smul.u32 %s510, 16
      %s512 = sadd.s32 %s511, 1
      %p513 = scmp.lt.s32.totalorder %s27, 1
      %s514 = scalar_select %p513, %s27, 1
      %p515 = scmp.lt.s32.totalorder %s512, 18
      %s516 = scalar_select %p515, %s512, 18
      %s517 = smul.addr %s516, 3
      %s518 = smul.addr %s514, 57
      %s519 = sadd.s32 %s517, %s518
      %s520 = smul.addr %s519, 8
      %s521 = scalar_lea.vmem %s2, %s520
      %p522 = pneg %p124
      %p523 = pneg %p121
      %s524 = sadd.s32 %s28, 1
      %s525 = smul.u32 %s524, 16
      %s526 = sadd.s32 %s525, 2
      %p527 = scmp.lt.s32.totalorder %s27, 1
      %s528 = scalar_select %p527, %s27, 1
      %p529 = scmp.lt.s32.totalorder %s526, 18
      %s530 = scalar_select %p529, %s526, 18
      %s531 = smul.addr %s530, 3
      %s532 = smul.addr %s528, 57
      %s533 = sadd.s32 %s531, %s532
      %s534 = smul.addr %s533, 8
      %s535 = scalar_lea.vmem %s3, %s534
      %p536 = pneg %p158
      %p537 = pneg %p155
      %p538 = pneg %p179
      %p539 = pneg %p176
      %p540 = pneg %p200
      %p541 = pneg %p197
      %p542 = pneg %p221
      %p543 = pneg %p218
      %p544 = pneg %p242
      %p545 = pneg %p239
      %p546 = pneg %p263
      %p547 = pneg %p260
      %p548 = pneg %p284
      %p549 = pneg %p281
      %p550 = pneg %p305
      %p551 = pneg %p302
      %p552 = pneg %p326
      %p553 = pneg %p323
      %p554 = pneg %p354
      %p555 = pneg %p351
      %s556 = smul.u32 16, %s28
      %p557 = scmp.lt.s32.totalorder %s27, 1
      %s558 = scalar_select %p557, %s27, 1
      %p559 = scmp.lt.s32.totalorder %s556, 15
      %s560 = scalar_select %p559, %s556, 15
      %s561 = smul.addr %s560, 3
      %s562 = smul.addr %s558, 48
      %s563 = sadd.s32 %s561, %s562
      %s564 = smul.addr %s563, 8
      %s565 = scalar_lea.vmem %s12, %s564
      %s566 = smul.u32 16, %s28
      %s567 = ssub.s32 19, %s566
      %p568 = scmp.lt.s32.totalorder %s567, 16
      %s569 = scalar_select %p568, %s567, 16
      %s570 = smul.u32 128, %s569
      %s571 = smul.u32 %s570, 3
      %p572 = scmp.lt.s32.totalorder %s27, 1
      %s573 = scalar_select %p572, %s27, 1
      %p574 = scmp.lt.s32.totalorder %s566, 18
      %s575 = scalar_select %p574, %s566, 18
      %s576 = smul.addr %s575, 3
      %s577 = smul.addr %s573, 57
      %s578 = sadd.s32 %s576, %s577
      %s579 = smul.addr %s578, 8
      %s580 = scalar_lea.vmem %s0, %s579
      %s581 = smul.u32 16, %s28
      %s582 = ssub.s32 19, %s581
      %p583 = scmp.lt.s32.totalorder %s582, 16
      %s584 = scalar_select %p583, %s582, 16
      %s585 = smul.u32 128, %s584
      %s586 = smul.u32 %s585, 3
      %s587 = sadd.s32 %s28, 1
      %s588 = smul.u32 %s587, 16
      %p589 = scmp.lt.s32.totalorder %s27, 1
      %s590 = scalar_select %p589, %s27, 1
      %p591 = scmp.lt.s32.totalorder %s588, 18
      %s592 = scalar_select %p591, %s588, 18
      %s593 = smul.addr %s592, 3
      %s594 = smul.addr %s590, 57
      %s595 = sadd.s32 %s593, %s594
      %s596 = smul.addr %s595, 8
      %s597 = scalar_lea.vmem %s1, %s596
      %s598 = sadd.s32 %s28, 1
      %s599 = smul.u32 %s598, 16
      %s600 = sadd.s32 %s28, 1
      %s601 = smul.u32 %s600, 16
      %s602 = sadd.s32 %s601, 1
      %p603 = scmp.lt.s32.totalorder %s27, 1
      %s604 = scalar_select %p603, %s27, 1
      %p605 = scmp.lt.s32.totalorder %s602, 18
      %s606 = scalar_select %p605, %s602, 18
      %s607 = smul.addr %s606, 3
      %s608 = smul.addr %s604, 57
      %s609 = sadd.s32 %s607, %s608
      %s610 = smul.addr %s609, 8
      %s611 = scalar_lea.vmem %s2, %s610
      %s612 = sadd.s32 %s28, 1
      %s613 = smul.u32 %s612, 16
      %s614 = sadd.s32 %s613, 1
      %s615 = sadd.s32 %s28, 1
      %s616 = smul.u32 %s615, 16
      %s617 = sadd.s32 %s616, 2
      %p618 = scmp.lt.s32.totalorder %s27, 1
      %s619 = scalar_select %p618, %s27, 1
      %p620 = scmp.lt.s32.totalorder %s617, 18
      %s621 = scalar_select %p620, %s617, 18
      %s622 = smul.addr %s621, 3
      %s623 = smul.addr %s619, 57
      %s624 = sadd.s32 %s622, %s623
      %s625 = smul.addr %s624, 8
      %s626 = scalar_lea.vmem %s3, %s625
      %s627 = sadd.s32 %s28, 1
      %s628 = smul.u32 %s627, 16
      %s629 = sadd.s32 %s628, 2
      %s630 = smul.u32 16, %s28
      %p631 = scmp.lt.s32.totalorder %s27, 1
      %s632 = scalar_select %p631, %s27, 1
      %p633 = scmp.lt.s32.totalorder %s630, 15
      %s634 = scalar_select %p633, %s630, 15
      %s635 = smul.addr %s634, 3
      %s636 = smul.addr %s632, 48
      %s637 = sadd.s32 %s635, %s636
      %s638 = smul.addr %s637, 8
      %s639 = scalar_lea.vmem %s12, %s638
      %s640 = smul.u32 16, %s28
      %v641 = vld [vmem:[%s580] sm:$0xff]
      %v642 = vld [vmem:[%s580 + $0x8] sm:$0xff]
      %v643 = vld [vmem:[%s580 + $0x10] sm:$0xff]
      %v644 = vld [vmem:[%s580 + $0x18] sm:$0xff]
      %v645 = vld [vmem:[%s580 + $0x20] sm:$0xff]
      %v646 = vld [vmem:[%s580 + $0x28] sm:$0xff]
      %v647 = vld [vmem:[%s580 + $0x30] sm:$0xff]
      %v648 = vld [vmem:[%s580 + $0x38] sm:$0xff]
      %v649 = vld [vmem:[%s580 + $0x40] sm:$0xff]
      %v650 = vld [vmem:[%s580 + $0x48] sm:$0xff]
      %v651 = vld [vmem:[%s580 + $0x50] sm:$0xff]
      %v652 = vld [vmem:[%s580 + $0x58] sm:$0xff]
      %v653 = vld [vmem:[%s580 + $0x60] sm:$0xff]
      %v654 = vld [vmem:[%s580 + $0x68] sm:$0xff]
      %v655 = vld [vmem:[%s580 + $0x70] sm:$0xff]
      %v656 = vld [vmem:[%s580 + $0x78] sm:$0xff]
      %v657 = vld [vmem:[%s580 + $0x80] sm:$0xff]
      %v658 = vld [vmem:[%s580 + $0x88] sm:$0xff]
      %v659 = vld [vmem:[%s580 + $0x90] sm:$0xff]
      %v660 = vld [vmem:[%s580 + $0x98] sm:$0xff]
      %v661 = vld [vmem:[%s580 + $0xa0] sm:$0xff]
      %v662 = vld [vmem:[%s580 + $0xa8] sm:$0xff]
      %v663 = vld [vmem:[%s580 + $0xb0] sm:$0xff]
      %v664 = vld [vmem:[%s580 + $0xb8] sm:$0xff]
      %v665 = vld [vmem:[%s580 + $0xc0] sm:$0xff]
      %v666 = vld [vmem:[%s580 + $0xc8] sm:$0xff]
      %v667 = vld [vmem:[%s580 + $0xd0] sm:$0xff]
      %v668 = vld [vmem:[%s580 + $0xd8] sm:$0xff]
      %v669 = vld [vmem:[%s580 + $0xe0] sm:$0xff]
      %v670 = vld [vmem:[%s580 + $0xe8] sm:$0xff]
      %v671 = vld [vmem:[%s580 + $0xf0] sm:$0xff]
      %v672 = vld [vmem:[%s580 + $0xf8] sm:$0xff]
      %v673 = vld [vmem:[%s580 + $0x100] sm:$0xff]
      %v674 = vld [vmem:[%s580 + $0x108] sm:$0xff]
      %v675 = vld [vmem:[%s580 + $0x110] sm:$0xff]
      %v676 = vld [vmem:[%s580 + $0x118] sm:$0xff]
      %v677 = vld [vmem:[%s580 + $0x120] sm:$0xff]
      %v678 = vld [vmem:[%s580 + $0x128] sm:$0xff]
      %v679 = vld [vmem:[%s580 + $0x130] sm:$0xff]
      %v680 = vld [vmem:[%s580 + $0x138] sm:$0xff]
      %v681 = vld [vmem:[%s580 + $0x140] sm:$0xff]
      %v682 = vld [vmem:[%s580 + $0x148] sm:$0xff]
      %v683 = vld [vmem:[%s580 + $0x150] sm:$0xff]
      %v684 = vld [vmem:[%s580 + $0x158] sm:$0xff]
      %v685 = vld [vmem:[%s580 + $0x160] sm:$0xff]
      %v686 = vld [vmem:[%s580 + $0x168] sm:$0xff]
      %v687 = vld [vmem:[%s580 + $0x170] sm:$0xff]
      %v688 = vld [vmem:[%s580 + $0x178] sm:$0xff]
      %v689 = vld [vmem:[%s4] sm:$0xff]
      %v690 = vld [vmem:[%s5] sm:$0x1]
      %v692 = vlaneseq
      %v693 = vshrl.u32 %v692, 7
      %v694 = vsub.s32 0, %v693
      %v695 = vrot.slane %v690, %v694
      %vm697 = vcmask 64512
      %v699 = vsel %vm697, %v641, 0
      %v702 = vsel %vm697, %v642, 0
      %v705 = vsel %vm697, %v643, 0
      %v708 = vsel %vm697, %v644, 0
      %v711 = vsel %vm697, %v645, 0
      %v714 = vsel %vm697, %v646, 0
      %v717 = vsel %vm697, %v647, 0
      %v720 = vsel %vm697, %v648, 0
      %v723 = vsel %vm697, %v649, 0
      %v726 = vsel %vm697, %v650, 0
      %v729 = vsel %vm697, %v651, 0
      %v732 = vsel %vm697, %v652, 0
      %v735 = vsel %vm697, %v653, 0
      %v738 = vsel %vm697, %v654, 0
      %v741 = vsel %vm697, %v655, 0
      %v744 = vsel %vm697, %v656, 0
      %v747 = vsel %vm697, %v657, 0
      %v750 = vsel %vm697, %v658, 0
      %v753 = vsel %vm697, %v659, 0
      %v756 = vsel %vm697, %v660, 0
      %v759 = vsel %vm697, %v661, 0
      %v762 = vsel %vm697, %v662, 0
      %v765 = vsel %vm697, %v663, 0
      %v768 = vsel %vm697, %v664, 0
      %v771 = vsel %vm697, %v665, 0
      %v774 = vsel %vm697, %v666, 0
      %v777 = vsel %vm697, %v667, 0
      %v780 = vsel %vm697, %v668, 0
      %v783 = vsel %vm697, %v669, 0
      %v786 = vsel %vm697, %v670, 0
      %v789 = vsel %vm697, %v671, 0
      %v792 = vsel %vm697, %v672, 0
      %v795 = vsel %vm697, %v673, 0
      %v798 = vsel %vm697, %v674, 0
      %v801 = vsel %vm697, %v675, 0
      %v804 = vsel %vm697, %v676, 0
      %v807 = vsel %vm697, %v677, 0
      %v810 = vsel %vm697, %v678, 0
      %v813 = vsel %vm697, %v679, 0
      %v816 = vsel %vm697, %v680, 0
      %v819 = vsel %vm697, %v681, 0
      %v822 = vsel %vm697, %v682, 0
      %v825 = vsel %vm697, %v683, 0
      %v828 = vsel %vm697, %v684, 0
      %v831 = vsel %vm697, %v685, 0
      %v834 = vsel %vm697, %v686, 0
      %v837 = vsel %vm697, %v687, 0
      %v840 = vsel %vm697, %v688, 0
      %842 = vmatprep.subr.mxu0 0.0
      %843 = vmatpush1.msra.mxu0 %v689
      %844 = vmatprep.subr.mxu0 0.0
      %845 = vmatpush1.msra.mxu0 0.0
      %846 = vmatprep.subr.mxu0 0.0
      %847 = vmatpush1.msra.mxu0 0.0
      %848 = vmatprep.subr.mxu0 0.0
      %849 = vmatpush1.msra.mxu0 0.0
      %850 = vmatprep.subr.mxu0 0.0
      %851 = vmatpush1.msra.mxu0 0.0
      %852 = vmatprep.subr.mxu0 0.0
      %853 = vmatpush1.msra.mxu0 0.0
      %854 = vmatprep.subr.mxu0 0.0
      %855 = vmatpush1.msra.mxu0 0.0
      %856 = vmatprep.subr.mxu0 0.0
      %857 = vmatpush1.msra.mxu0 0.0
      %858 = vmatprep.subr.mxu0 0.0
      %859 = vmatpush1.msra.mxu0 0.0
      %860 = vmatprep.subr.mxu0 0.0
      %861 = vmatpush1.msra.mxu0 0.0
      %862 = vmatprep.subr.mxu0 0.0
      %863 = vmatpush1.msra.mxu0 0.0
      %864 = vmatprep.subr.mxu0 0.0
      %865 = vmatpush1.msra.mxu0 0.0
      %866 = vmatprep.subr.mxu0 0.0
      %867 = vmatpush1.msra.mxu0 0.0
      %868 = vmatprep.subr.mxu0 0.0
      %869 = vmatpush1.msra.mxu0 0.0
      %870 = vmatprep.subr.mxu0 0.0
      %871 = vmatpush1.msra.mxu0 0.0
      %872 = vmatprep.subr.mxu0 0.0
      %873 = vmatpush1.msra.mxu0 0.0
      %874 = vmatprep.subr.mxu0 0.0
      %875 = vmatpush1.msra.mxu0 0.0
      %876 = vmatprep.subr.mxu0 0.0
      %877 = vmatpush1.msra.mxu0 0.0
      %878 = vmatprep.subr.mxu0 0.0
      %879 = vmatpush1.msra.mxu0 0.0
      %880 = vmatprep.subr.mxu0 0.0
      %881 = vmatpush1.msra.mxu0 0.0
      %882 = vmatprep.subr.mxu0 0.0
      %883 = vmatpush1.msra.mxu0 0.0
      %884 = vmatprep.subr.mxu0 0.0
      %885 = vmatpush1.msra.mxu0 0.0
      %886 = vmatprep.subr.mxu0 0.0
      %887 = vmatpush1.msra.mxu0 0.0
      %888 = vmatprep.subr.mxu0 0.0
      %889 = vmatpush1.msra.mxu0 0.0
      %890 = vmatprep.subr.mxu0 0.0
      %891 = vmatpush1.msra.mxu0 0.0
      %892 = vmatprep.subr.mxu0 0.0
      %893 = vmatpush1.msra.mxu0 0.0
      %894 = vmatprep.subr.mxu0 0.0
      %895 = vmatpush1.msra.mxu0 0.0
      %896 = vmatprep.subr.mxu0 0.0
      %897 = vmatpush1.msra.mxu0 0.0
      %898 = vmatprep.subr.mxu0 0.0
      %899 = vmatpush1.msra.mxu0 0.0
      %900 = vmatprep.subr.mxu0 0.0
      %901 = vmatpush1.msra.mxu0 0.0
      %902 = vmatprep.subr.mxu0 0.0
      %903 = vmatpush1.msra.mxu0 0.0
      %904 = vmatprep.subr.mxu0 0.0
      %905 = vmatpush1.msra.mxu0 0.0
      %906 = vmatprep.mubr.f32.mxu0 0.0
      %907 = vmatmul.mubr.f32.gmra.mrb[0].mxu0 %v699
      %v908 = vpop.f32.mrb[0].mxu0
      %v909 = vadd.f32 %v695, %v908
      %v910 = vpop.f32.mrb[0].mxu0
      %911 = vmatprep.mubr.f32.mxu0 0.0
      %912 = vmatmul.mubr.f32.gmra.mrb[0].mxu0 %v702
      %v913 = vpop.f32.mrb[0].mxu0
      %v914 = vadd.f32 %v695, %v913
      %v915 = vpop.f32.mrb[0].mxu0
      %916 = vmatprep.mubr.f32.mxu0 0.0
      %917 = vmatmul.mubr.f32.gmra.mrb[0].mxu0 %v705
      %v918 = vpop.f32.mrb[0].mxu0
      %v919 = vadd.f32 %v695, %v918
      %v920 = vpop.f32.mrb[0].mxu0
      %921 = vmatprep.mubr.f32.mxu0 0.0
      %922 = vmatmul.mubr.f32.gmra.mrb[0].mxu0 %v708
      %v923 = vpop.f32.mrb[0].mxu0
      %v924 = vadd.f32 %v695, %v923
      %v925 = vpop.f32.mrb[0].mxu0
      %926 = vmatprep.mubr.f32.mxu0 0.0
      %927 = vmatmul.mubr.f32.gmra.mrb[0].mxu0 %v711
      %v928 = vpop.f32.mrb[0].mxu0
      %v929 = vadd.f32 %v695, %v928
      %v930 = vpop.f32.mrb[0].mxu0
      %931 = vmatprep.mubr.f32.mxu0 0.0
      %932 = vmatmul.mubr.f32.gmra.mrb[0].mxu0 %v714
      %v933 = vpop.f32.mrb[0].mxu0
      %v934 = vadd.f32 %v695, %v933
      %v935 = vpop.f32.mrb[0].mxu0
      %936 = vmatprep.mubr.f32.mxu0 0.0
      %937 = vmatmul.mubr.f32.gmra.mrb[0].mxu0 %v717
      %v938 = vpop.f32.mrb[0].mxu0
      %v939 = vadd.f32 %v695, %v938
      %v940 = vpop.f32.mrb[0].mxu0
      %941 = vmatprep.mubr.f32.mxu0 0.0
      %942 = vmatmul.mubr.f32.gmra.mrb[0].mxu0 %v720
      %v943 = vpop.f32.mrb[0].mxu0
      %v944 = vadd.f32 %v695, %v943
      %v945 = vpop.f32.mrb[0].mxu0
      %946 = vmatprep.mubr.f32.mxu0 0.0
      %947 = vmatmul.mubr.f32.gmra.mrb[0].mxu0 %v723
      %v948 = vpop.f32.mrb[0].mxu0
      %v949 = vadd.f32 %v695, %v948
      %v950 = vpop.f32.mrb[0].mxu0
      %951 = vmatprep.mubr.f32.mxu0 0.0
      %952 = vmatmul.mubr.f32.gmra.mrb[0].mxu0 %v726
      %v953 = vpop.f32.mrb[0].mxu0
      %v954 = vadd.f32 %v695, %v953
      %v955 = vpop.f32.mrb[0].mxu0
      %956 = vmatprep.mubr.f32.mxu0 0.0
      %957 = vmatmul.mubr.f32.gmra.mrb[0].mxu0 %v729
      %v958 = vpop.f32.mrb[0].mxu0
      %v959 = vadd.f32 %v695, %v958
      %v960 = vpop.f32.mrb[0].mxu0
      %961 = vmatprep.mubr.f32.mxu0 0.0
      %962 = vmatmul.mubr.f32.gmra.mrb[0].mxu0 %v732
      %v963 = vpop.f32.mrb[0].mxu0
      %v964 = vadd.f32 %v695, %v963
      %v965 = vpop.f32.mrb[0].mxu0
      %966 = vmatprep.mubr.f32.mxu0 0.0
      %967 = vmatmul.mubr.f32.gmra.mrb[0].mxu0 %v735
      %v968 = vpop.f32.mrb[0].mxu0
      %v969 = vadd.f32 %v695, %v968
      %v970 = vpop.f32.mrb[0].mxu0
      %971 = vmatprep.mubr.f32.mxu0 0.0
      %972 = vmatmul.mubr.f32.gmra.mrb[0].mxu0 %v738
      %v973 = vpop.f32.mrb[0].mxu0
      %v974 = vadd.f32 %v695, %v973
      %v975 = vpop.f32.mrb[0].mxu0
      %976 = vmatprep.mubr.f32.mxu0 0.0
      %977 = vmatmul.mubr.f32.gmra.mrb[0].mxu0 %v741
      %v978 = vpop.f32.mrb[0].mxu0
      %v979 = vadd.f32 %v695, %v978
      %v980 = vpop.f32.mrb[0].mxu0
      %981 = vmatprep.mubr.f32.mxu0 0.0
      %982 = vmatmul.mubr.f32.gmra.mrb[0].mxu0 %v744
      %v983 = vpop.f32.mrb[0].mxu0
      %v984 = vadd.f32 %v695, %v983
      %v985 = vpop.f32.mrb[0].mxu0
      %986 = vmatprep.mubr.f32.mxu0 0.0
      %987 = vmatmul.mubr.f32.gmra.mrb[0].mxu0 %v747
      %v988 = vpop.f32.mrb[0].mxu0
      %v989 = vadd.f32 %v695, %v988
      %v990 = vpop.f32.mrb[0].mxu0
      %991 = vmatprep.mubr.f32.mxu0 0.0
      %992 = vmatmul.mubr.f32.gmra.mrb[0].mxu0 %v750
      %v993 = vpop.f32.mrb[0].mxu0
      %v994 = vadd.f32 %v695, %v993
      %v995 = vpop.f32.mrb[0].mxu0
      %996 = vmatprep.mubr.f32.mxu0 0.0
      %997 = vmatmul.mubr.f32.gmra.mrb[0].mxu0 %v753
      %v998 = vpop.f32.mrb[0].mxu0
      %v999 = vadd.f32 %v695, %v998
      %v1000 = vpop.f32.mrb[0].mxu0
      %1001 = vmatprep.mubr.f32.mxu0 0.0
      %1002 = vmatmul.mubr.f32.gmra.mrb[0].mxu0 %v756
      %v1003 = vpop.f32.mrb[0].mxu0
      %v1004 = vadd.f32 %v695, %v1003
      %v1005 = vpop.f32.mrb[0].mxu0
      %1006 = vmatprep.mubr.f32.mxu0 0.0
      %1007 = vmatmul.mubr.f32.gmra.mrb[0].mxu0 %v759
      %v1008 = vpop.f32.mrb[0].mxu0
      %v1009 = vadd.f32 %v695, %v1008
      %v1010 = vpop.f32.mrb[0].mxu0
      %1011 = vmatprep.mubr.f32.mxu0 0.0
      %1012 = vmatmul.mubr.f32.gmra.mrb[0].mxu0 %v762
      %v1013 = vpop.f32.mrb[0].mxu0
      %v1014 = vadd.f32 %v695, %v1013
      %v1015 = vpop.f32.mrb[0].mxu0
      %1016 = vmatprep.mubr.f32.mxu0 0.0
      %1017 = vmatmul.mubr.f32.gmra.mrb[0].mxu0 %v765
      %v1018 = vpop.f32.mrb[0].mxu0
      %v1019 = vadd.f32 %v695, %v1018
      %v1020 = vpop.f32.mrb[0].mxu0
      %1021 = vmatprep.mubr.f32.mxu0 0.0
      %1022 = vmatmul.mubr.f32.gmra.mrb[0].mxu0 %v768
      %v1023 = vpop.f32.mrb[0].mxu0
      %v1024 = vadd.f32 %v695, %v1023
      %v1025 = vpop.f32.mrb[0].mxu0
      %1026 = vmatprep.mubr.f32.mxu0 0.0
      %1027 = vmatmul.mubr.f32.gmra.mrb[0].mxu0 %v771
      %v1028 = vpop.f32.mrb[0].mxu0
      %v1029 = vadd.f32 %v695, %v1028
      %v1030 = vpop.f32.mrb[0].mxu0
      %1031 = vmatprep.mubr.f32.mxu0 0.0
      %1032 = vmatmul.mubr.f32.gmra.mrb[0].mxu0 %v774
      %v1033 = vpop.f32.mrb[0].mxu0
      %v1034 = vadd.f32 %v695, %v1033
      %v1035 = vpop.f32.mrb[0].mxu0
      %1036 = vmatprep.mubr.f32.mxu0 0.0
      %1037 = vmatmul.mubr.f32.gmra.mrb[0].mxu0 %v777
      %v1038 = vpop.f32.mrb[0].mxu0
      %v1039 = vadd.f32 %v695, %v1038
      %v1040 = vpop.f32.mrb[0].mxu0
      %1041 = vmatprep.mubr.f32.mxu0 0.0
      %1042 = vmatmul.mubr.f32.gmra.mrb[0].mxu0 %v780
      %v1043 = vpop.f32.mrb[0].mxu0
      %v1044 = vadd.f32 %v695, %v1043
      %v1045 = vpop.f32.mrb[0].mxu0
      %1046 = vmatprep.mubr.f32.mxu0 0.0
      %1047 = vmatmul.mubr.f32.gmra.mrb[0].mxu0 %v783
      %v1048 = vpop.f32.mrb[0].mxu0
      %v1049 = vadd.f32 %v695, %v1048
      %v1050 = vpop.f32.mrb[0].mxu0
      %1051 = vmatprep.mubr.f32.mxu0 0.0
      %1052 = vmatmul.mubr.f32.gmra.mrb[0].mxu0 %v786
      %v1053 = vpop.f32.mrb[0].mxu0
      %v1054 = vadd.f32 %v695, %v1053
      %v1055 = vpop.f32.mrb[0].mxu0
      %1056 = vmatprep.mubr.f32.mxu0 0.0
      %1057 = vmatmul.mubr.f32.gmra.mrb[0].mxu0 %v789
      %v1058 = vpop.f32.mrb[0].mxu0
      %v1059 = vadd.f32 %v695, %v1058
      %v1060 = vpop.f32.mrb[0].mxu0
      %1061 = vmatprep.mubr.f32.mxu0 0.0
      %1062 = vmatmul.mubr.f32.gmra.mrb[0].mxu0 %v792
      %v1063 = vpop.f32.mrb[0].mxu0
      %v1064 = vadd.f32 %v695, %v1063
      %v1065 = vpop.f32.mrb[0].mxu0
      %1066 = vmatprep.mubr.f32.mxu0 0.0
      %1067 = vmatmul.mubr.f32.gmra.mrb[0].mxu0 %v795
      %v1068 = vpop.f32.mrb[0].mxu0
      %v1069 = vadd.f32 %v695, %v1068
      %v1070 = vpop.f32.mrb[0].mxu0
      %1071 = vmatprep.mubr.f32.mxu0 0.0
      %1072 = vmatmul.mubr.f32.gmra.mrb[0].mxu0 %v798
      %v1073 = vpop.f32.mrb[0].mxu0
      %v1074 = vadd.f32 %v695, %v1073
      %v1075 = vpop.f32.mrb[0].mxu0
      %1076 = vmatprep.mubr.f32.mxu0 0.0
      %1077 = vmatmul.mubr.f32.gmra.mrb[0].mxu0 %v801
      %v1078 = vpop.f32.mrb[0].mxu0
      %v1079 = vadd.f32 %v695, %v1078
      %v1080 = vpop.f32.mrb[0].mxu0
      %1081 = vmatprep.mubr.f32.mxu0 0.0
      %1082 = vmatmul.mubr.f32.gmra.mrb[0].mxu0 %v804
      %v1083 = vpop.f32.mrb[0].mxu0
      %v1084 = vadd.f32 %v695, %v1083
      %v1085 = vpop.f32.mrb[0].mxu0
      %1086 = vmatprep.mubr.f32.mxu0 0.0
      %1087 = vmatmul.mubr.f32.gmra.mrb[0].mxu0 %v807
      %v1088 = vpop.f32.mrb[0].mxu0
      %v1089 = vadd.f32 %v695, %v1088
      %v1090 = vpop.f32.mrb[0].mxu0
      %1091 = vmatprep.mubr.f32.mxu0 0.0
      %1092 = vmatmul.mubr.f32.gmra.mrb[0].mxu0 %v810
      %v1093 = vpop.f32.mrb[0].mxu0
      %v1094 = vadd.f32 %v695, %v1093
      %v1095 = vpop.f32.mrb[0].mxu0
      %1096 = vmatprep.mubr.f32.mxu0 0.0
      %1097 = vmatmul.mubr.f32.gmra.mrb[0].mxu0 %v813
      %v1098 = vpop.f32.mrb[0].mxu0
      %v1099 = vadd.f32 %v695, %v1098
      %v1100 = vpop.f32.mrb[0].mxu0
      %1101 = vmatprep.mubr.f32.mxu0 0.0
      %1102 = vmatmul.mubr.f32.gmra.mrb[0].mxu0 %v816
      %v1103 = vpop.f32.mrb[0].mxu0
      %v1104 = vadd.f32 %v695, %v1103
      %v1105 = vpop.f32.mrb[0].mxu0
      %1106 = vmatprep.mubr.f32.mxu0 0.0
      %1107 = vmatmul.mubr.f32.gmra.mrb[0].mxu0 %v819
      %v1108 = vpop.f32.mrb[0].mxu0
      %v1109 = vadd.f32 %v695, %v1108
      %v1110 = vpop.f32.mrb[0].mxu0
      %1111 = vmatprep.mubr.f32.mxu0 0.0
      %1112 = vmatmul.mubr.f32.gmra.mrb[0].mxu0 %v822
      %v1113 = vpop.f32.mrb[0].mxu0
      %v1114 = vadd.f32 %v695, %v1113
      %v1115 = vpop.f32.mrb[0].mxu0
      %1116 = vmatprep.mubr.f32.mxu0 0.0
      %1117 = vmatmul.mubr.f32.gmra.mrb[0].mxu0 %v825
      %v1118 = vpop.f32.mrb[0].mxu0
      %v1119 = vadd.f32 %v695, %v1118
      %v1120 = vpop.f32.mrb[0].mxu0
      %1121 = vmatprep.mubr.f32.mxu0 0.0
      %1122 = vmatmul.mubr.f32.gmra.mrb[0].mxu0 %v828
      %v1123 = vpop.f32.mrb[0].mxu0
      %v1124 = vadd.f32 %v695, %v1123
      %v1125 = vpop.f32.mrb[0].mxu0
      %1126 = vmatprep.mubr.f32.mxu0 0.0
      %1127 = vmatmul.mubr.f32.gmra.mrb[0].mxu0 %v831
      %v1128 = vpop.f32.mrb[0].mxu0
      %v1129 = vadd.f32 %v695, %v1128
      %v1130 = vpop.f32.mrb[0].mxu0
      %1131 = vmatprep.mubr.f32.mxu0 0.0
      %1132 = vmatmul.mubr.f32.gmra.mrb[0].mxu0 %v834
      %v1133 = vpop.f32.mrb[0].mxu0
      %v1134 = vadd.f32 %v695, %v1133
      %v1135 = vpop.f32.mrb[0].mxu0
      %1136 = vmatprep.mubr.f32.mxu0 0.0
      %1137 = vmatmul.mubr.f32.gmra.mrb[0].mxu0 %v837
      %v1138 = vpop.f32.mrb[0].mxu0
      %v1139 = vadd.f32 %v695, %v1138
      %v1140 = vpop.f32.mrb[0].mxu0
      %1141 = vmatprep.mubr.f32.mxu0 0.0
      %1142 = vmatmul.mubr.f32.gmra.mrb[0].mxu0 %v840
      %v1143 = vpop.f32.mrb[0].mxu0
      %v1144 = vadd.f32 %v695, %v1143
      %v1145 = vpop.f32.mrb[0].mxu0
      %1146 = vdwg.mxu0
      %v1147 = vxor.u32 %v909, 2147483648
      %v1148 = vxor.u32 %v914, 2147483648
      %v1149 = vxor.u32 %v919, 2147483648
      %v1150 = vxor.u32 %v924, 2147483648
      %v1151 = vxor.u32 %v929, 2147483648
      %v1152 = vxor.u32 %v934, 2147483648
      %v1153 = vxor.u32 %v939, 2147483648
      %v1154 = vxor.u32 %v944, 2147483648
      %v1155 = vxor.u32 %v949, 2147483648
      %v1156 = vxor.u32 %v954, 2147483648
      %v1157 = vxor.u32 %v959, 2147483648
      %v1158 = vxor.u32 %v964, 2147483648
      %v1159 = vxor.u32 %v969, 2147483648
      %v1160 = vxor.u32 %v974, 2147483648
      %v1161 = vxor.u32 %v979, 2147483648
      %v1162 = vxor.u32 %v984, 2147483648
      %v1163 = vxor.u32 %v989, 2147483648
      %v1164 = vxor.u32 %v994, 2147483648
      %v1165 = vxor.u32 %v999, 2147483648
      %v1166 = vxor.u32 %v1004, 2147483648
      %v1167 = vxor.u32 %v1009, 2147483648
      %v1168 = vxor.u32 %v1014, 2147483648
      %v1169 = vxor.u32 %v1019, 2147483648
      %v1170 = vxor.u32 %v1024, 2147483648
      %v1171 = vxor.u32 %v1029, 2147483648
      %v1172 = vxor.u32 %v1034, 2147483648
      %v1173 = vxor.u32 %v1039, 2147483648
      %v1174 = vxor.u32 %v1044, 2147483648
      %v1175 = vxor.u32 %v1049, 2147483648
      %v1176 = vxor.u32 %v1054, 2147483648
      %v1177 = vxor.u32 %v1059, 2147483648
      %v1178 = vxor.u32 %v1064, 2147483648
      %v1179 = vxor.u32 %v1069, 2147483648
      %v1180 = vxor.u32 %v1074, 2147483648
      %v1181 = vxor.u32 %v1079, 2147483648
      %v1182 = vxor.u32 %v1084, 2147483648
      %v1183 = vxor.u32 %v1089, 2147483648
      %v1184 = vxor.u32 %v1094, 2147483648
      %v1185 = vxor.u32 %v1099, 2147483648
      %v1186 = vxor.u32 %v1104, 2147483648
      %v1187 = vxor.u32 %v1109, 2147483648
      %v1188 = vxor.u32 %v1114, 2147483648
      %v1189 = vxor.u32 %v1119, 2147483648
      %v1190 = vxor.u32 %v1124, 2147483648
      %v1191 = vxor.u32 %v1129, 2147483648
      %v1192 = vxor.u32 %v1134, 2147483648
      %v1193 = vxor.u32 %v1139, 2147483648
      %v1194 = vxor.u32 %v1144, 2147483648
      %v1195 = vmul.f32 %v1147, 1.442695
      %v1196 = vpow.pop %v1195
      %v1197 = vmul.f32 %v1148, 1.442695
      %v1198 = vpow.pop %v1197
      %v1199 = vmul.f32 %v1149, 1.442695
      %v1200 = vpow.pop %v1199
      %v1201 = vmul.f32 %v1150, 1.442695
      %v1202 = vpow.pop %v1201
      %v1203 = vmul.f32 %v1151, 1.442695
      %v1204 = vpow.pop %v1203
      %v1205 = vmul.f32 %v1152, 1.442695
      %v1206 = vpow.pop %v1205
      %v1207 = vmul.f32 %v1153, 1.442695
      %v1208 = vpow.pop %v1207
      %v1209 = vmul.f32 %v1154, 1.442695
      %v1210 = vpow.pop %v1209
      %v1211 = vmul.f32 %v1155, 1.442695
      %v1212 = vpow.pop %v1211
      %v1213 = vmul.f32 %v1156, 1.442695
      %v1214 = vpow.pop %v1213
      %v1215 = vmul.f32 %v1157, 1.442695
      %v1216 = vpow.pop %v1215
      %v1217 = vmul.f32 %v1158, 1.442695
      %v1218 = vpow.pop %v1217
      %v1219 = vmul.f32 %v1159, 1.442695
      %v1220 = vpow.pop %v1219
      %v1221 = vmul.f32 %v1160, 1.442695
      %v1222 = vpow.pop %v1221
      %v1223 = vmul.f32 %v1161, 1.442695
      %v1224 = vpow.pop %v1223
      %v1225 = vmul.f32 %v1162, 1.442695
      %v1226 = vpow.pop %v1225
      %v1227 = vmul.f32 %v1163, 1.442695
      %v1228 = vpow.pop %v1227
      %v1229 = vmul.f32 %v1164, 1.442695
      %v1230 = vpow.pop %v1229
      %v1231 = vmul.f32 %v1165, 1.442695
      %v1232 = vpow.pop %v1231
      %v1233 = vmul.f32 %v1166, 1.442695
      %v1234 = vpow.pop %v1233
      %v1235 = vmul.f32 %v1167, 1.442695
      %v1236 = vpow.pop %v1235
      %v1237 = vmul.f32 %v1168, 1.442695
      %v1238 = vpow.pop %v1237
      %v1239 = vmul.f32 %v1169, 1.442695
      %v1240 = vpow.pop %v1239
      %v1241 = vmul.f32 %v1170, 1.442695
      %v1242 = vpow.pop %v1241
      %v1243 = vmul.f32 %v1171, 1.442695
      %v1244 = vpow.pop %v1243
      %v1245 = vmul.f32 %v1172, 1.442695
      %v1246 = vpow.pop %v1245
      %v1247 = vmul.f32 %v1173, 1.442695
      %v1248 = vpow.pop %v1247
      %v1249 = vmul.f32 %v1174, 1.442695
      %v1250 = vpow.pop %v1249
      %v1251 = vmul.f32 %v1175, 1.442695
      %v1252 = vpow.pop %v1251
      %v1253 = vmul.f32 %v1176, 1.442695
      %v1254 = vpow.pop %v1253
      %v1255 = vmul.f32 %v1177, 1.442695
      %v1256 = vpow.pop %v1255
      %v1257 = vmul.f32 %v1178, 1.442695
      %v1258 = vpow.pop %v1257
      %v1259 = vmul.f32 %v1179, 1.442695
      %v1260 = vpow.pop %v1259
      %v1261 = vmul.f32 %v1180, 1.442695
      %v1262 = vpow.pop %v1261
      %v1263 = vmul.f32 %v1181, 1.442695
      %v1264 = vpow.pop %v1263
      %v1265 = vmul.f32 %v1182, 1.442695
      %v1266 = vpow.pop %v1265
      %v1267 = vmul.f32 %v1183, 1.442695
      %v1268 = vpow.pop %v1267
      %v1269 = vmul.f32 %v1184, 1.442695
      %v1270 = vpow.pop %v1269
      %v1271 = vmul.f32 %v1185, 1.442695
      %v1272 = vpow.pop %v1271
      %v1273 = vmul.f32 %v1186, 1.442695
      %v1274 = vpow.pop %v1273
      %v1275 = vmul.f32 %v1187, 1.442695
      %v1276 = vpow.pop %v1275
      %v1277 = vmul.f32 %v1188, 1.442695
      %v1278 = vpow.pop %v1277
      %v1279 = vmul.f32 %v1189, 1.442695
      %v1280 = vpow.pop %v1279
      %v1281 = vmul.f32 %v1190, 1.442695
      %v1282 = vpow.pop %v1281
      %v1283 = vmul.f32 %v1191, 1.442695
      %v1284 = vpow.pop %v1283
      %v1285 = vmul.f32 %v1192, 1.442695
      %v1286 = vpow.pop %v1285
      %v1287 = vmul.f32 %v1193, 1.442695
      %v1288 = vpow.pop %v1287
      %v1289 = vmul.f32 %v1194, 1.442695
      %v1290 = vpow.pop %v1289
      %v1291 = vadd.f32 %v1196, 1.0
      %v1292 = vadd.f32 %v1198, 1.0
      %v1293 = vadd.f32 %v1200, 1.0
      %v1294 = vadd.f32 %v1202, 1.0
      %v1295 = vadd.f32 %v1204, 1.0
      %v1296 = vadd.f32 %v1206, 1.0
      %v1297 = vadd.f32 %v1208, 1.0
      %v1298 = vadd.f32 %v1210, 1.0
      %v1299 = vadd.f32 %v1212, 1.0
      %v1300 = vadd.f32 %v1214, 1.0
      %v1301 = vadd.f32 %v1216, 1.0
      %v1302 = vadd.f32 %v1218, 1.0
      %v1303 = vadd.f32 %v1220, 1.0
      %v1304 = vadd.f32 %v1222, 1.0
      %v1305 = vadd.f32 %v1224, 1.0
      %v1306 = vadd.f32 %v1226, 1.0
      %v1307 = vadd.f32 %v1228, 1.0
      %v1308 = vadd.f32 %v1230, 1.0
      %v1309 = vadd.f32 %v1232, 1.0
      %v1310 = vadd.f32 %v1234, 1.0
      %v1311 = vadd.f32 %v1236, 1.0
      %v1312 = vadd.f32 %v1238, 1.0
      %v1313 = vadd.f32 %v1240, 1.0
      %v1314 = vadd.f32 %v1242, 1.0
      %v1315 = vadd.f32 %v1244, 1.0
      %v1316 = vadd.f32 %v1246, 1.0
      %v1317 = vadd.f32 %v1248, 1.0
      %v1318 = vadd.f32 %v1250, 1.0
      %v1319 = vadd.f32 %v1252, 1.0
      %v1320 = vadd.f32 %v1254, 1.0
      %v1321 = vadd.f32 %v1256, 1.0
      %v1322 = vadd.f32 %v1258, 1.0
      %v1323 = vadd.f32 %v1260, 1.0
      %v1324 = vadd.f32 %v1262, 1.0
      %v1325 = vadd.f32 %v1264, 1.0
      %v1326 = vadd.f32 %v1266, 1.0
      %v1327 = vadd.f32 %v1268, 1.0
      %v1328 = vadd.f32 %v1270, 1.0
      %v1329 = vadd.f32 %v1272, 1.0
      %v1330 = vadd.f32 %v1274, 1.0
      %v1331 = vadd.f32 %v1276, 1.0
      %v1332 = vadd.f32 %v1278, 1.0
      %v1333 = vadd.f32 %v1280, 1.0
      %v1334 = vadd.f32 %v1282, 1.0
      %v1335 = vadd.f32 %v1284, 1.0
      %v1336 = vadd.f32 %v1286, 1.0
      %v1337 = vadd.f32 %v1288, 1.0
      %v1338 = vadd.f32 %v1290, 1.0
      %v1339 = vrcp.pop %v1291
      %v1340 = vmul.f32 1.0, %v1339
      %v1341 = vrcp.pop %v1292
      %v1342 = vmul.f32 1.0, %v1341
      %v1343 = vrcp.pop %v1293
      %v1344 = vmul.f32 1.0, %v1343
      %v1345 = vrcp.pop %v1294
      %v1346 = vmul.f32 1.0, %v1345
      %v1347 = vrcp.pop %v1295
      %v1348 = vmul.f32 1.0, %v1347
      %v1349 = vrcp.pop %v1296
      %v1350 = vmul.f32 1.0, %v1349
      %v1351 = vrcp.pop %v1297
      %v1352 = vmul.f32 1.0, %v1351
      %v1353 = vrcp.pop %v1298
      %v1354 = vmul.f32 1.0, %v1353
      %v1355 = vrcp.pop %v1299
      %v1356 = vmul.f32 1.0, %v1355
      %v1357 = vrcp.pop %v1300
      %v1358 = vmul.f32 1.0, %v1357
      %v1359 = vrcp.pop %v1301
      %v1360 = vmul.f32 1.0, %v1359
      %v1361 = vrcp.pop %v1302
      %v1362 = vmul.f32 1.0, %v1361
      %v1363 = vrcp.pop %v1303
      %v1364 = vmul.f32 1.0, %v1363
      %v1365 = vrcp.pop %v1304
      %v1366 = vmul.f32 1.0, %v1365
      %v1367 = vrcp.pop %v1305
      %v1368 = vmul.f32 1.0, %v1367
      %v1369 = vrcp.pop %v1306
      %v1370 = vmul.f32 1.0, %v1369
      %v1371 = vrcp.pop %v1307
      %v1372 = vmul.f32 1.0, %v1371
      %v1373 = vrcp.pop %v1308
      %v1374 = vmul.f32 1.0, %v1373
      %v1375 = vrcp.pop %v1309
      %v1376 = vmul.f32 1.0, %v1375
      %v1377 = vrcp.pop %v1310
      %v1378 = vmul.f32 1.0, %v1377
      %v1379 = vrcp.pop %v1311
      %v1380 = vmul.f32 1.0, %v1379
      %v1381 = vrcp.pop %v1312
      %v1382 = vmul.f32 1.0, %v1381
      %v1383 = vrcp.pop %v1313
      %v1384 = vmul.f32 1.0, %v1383
      %v1385 = vrcp.pop %v1314
      %v1386 = vmul.f32 1.0, %v1385
      %v1387 = vrcp.pop %v1315
      %v1388 = vmul.f32 1.0, %v1387
      %v1389 = vrcp.pop %v1316
      %v1390 = vmul.f32 1.0, %v1389
      %v1391 = vrcp.pop %v1317
      %v1392 = vmul.f32 1.0, %v1391
      %v1393 = vrcp.pop %v1318
      %v1394 = vmul.f32 1.0, %v1393
      %v1395 = vrcp.pop %v1319
      %v1396 = vmul.f32 1.0, %v1395
      %v1397 = vrcp.pop %v1320
      %v1398 = vmul.f32 1.0, %v1397
      %v1399 = vrcp.pop %v1321
      %v1400 = vmul.f32 1.0, %v1399
      %v1401 = vrcp.pop %v1322
      %v1402 = vmul.f32 1.0, %v1401
      %v1403 = vrcp.pop %v1323
      %v1404 = vmul.f32 1.0, %v1403
      %v1405 = vrcp.pop %v1324
      %v1406 = vmul.f32 1.0, %v1405
      %v1407 = vrcp.pop %v1325
      %v1408 = vmul.f32 1.0, %v1407
      %v1409 = vrcp.pop %v1326
      %v1410 = vmul.f32 1.0, %v1409
      %v1411 = vrcp.pop %v1327
      %v1412 = vmul.f32 1.0, %v1411
      %v1413 = vrcp.pop %v1328
      %v1414 = vmul.f32 1.0, %v1413
      %v1415 = vrcp.pop %v1329
      %v1416 = vmul.f32 1.0, %v1415
      %v1417 = vrcp.pop %v1330
      %v1418 = vmul.f32 1.0, %v1417
      %v1419 = vrcp.pop %v1331
      %v1420 = vmul.f32 1.0, %v1419
      %v1421 = vrcp.pop %v1332
      %v1422 = vmul.f32 1.0, %v1421
      %v1423 = vrcp.pop %v1333
      %v1424 = vmul.f32 1.0, %v1423
      %v1425 = vrcp.pop %v1334
      %v1426 = vmul.f32 1.0, %v1425
      %v1427 = vrcp.pop %v1335
      %v1428 = vmul.f32 1.0, %v1427
      %v1429 = vrcp.pop %v1336
      %v1430 = vmul.f32 1.0, %v1429
      %v1431 = vrcp.pop %v1337
      %v1432 = vmul.f32 1.0, %v1431
      %v1433 = vrcp.pop %v1338
      %v1434 = vmul.f32 1.0, %v1433
      %v1435 = vmul.f32 %v909, %v1340
      %v1436 = vmul.f32 %v914, %v1342
      %v1437 = vmul.f32 %v919, %v1344
      %v1438 = vmul.f32 %v924, %v1346
      %v1439 = vmul.f32 %v929, %v1348
      %v1440 = vmul.f32 %v934, %v1350
      %v1441 = vmul.f32 %v939, %v1352
      %v1442 = vmul.f32 %v944, %v1354
      %v1443 = vmul.f32 %v949, %v1356
      %v1444 = vmul.f32 %v954, %v1358
      %v1445 = vmul.f32 %v959, %v1360
      %v1446 = vmul.f32 %v964, %v1362
      %v1447 = vmul.f32 %v969, %v1364
      %v1448 = vmul.f32 %v974, %v1366
      %v1449 = vmul.f32 %v979, %v1368
      %v1450 = vmul.f32 %v984, %v1370
      %v1451 = vmul.f32 %v989, %v1372
      %v1452 = vmul.f32 %v994, %v1374
      %v1453 = vmul.f32 %v999, %v1376
      %v1454 = vmul.f32 %v1004, %v1378
      %v1455 = vmul.f32 %v1009, %v1380
      %v1456 = vmul.f32 %v1014, %v1382
      %v1457 = vmul.f32 %v1019, %v1384
      %v1458 = vmul.f32 %v1024, %v1386
      %v1459 = vmul.f32 %v1029, %v1388
      %v1460 = vmul.f32 %v1034, %v1390
      %v1461 = vmul.f32 %v1039, %v1392
      %v1462 = vmul.f32 %v1044, %v1394
      %v1463 = vmul.f32 %v1049, %v1396
      %v1464 = vmul.f32 %v1054, %v1398
      %v1465 = vmul.f32 %v1059, %v1400
      %v1466 = vmul.f32 %v1064, %v1402
      %v1467 = vmul.f32 %v1069, %v1404
      %v1468 = vmul.f32 %v1074, %v1406
      %v1469 = vmul.f32 %v1079, %v1408
      %v1470 = vmul.f32 %v1084, %v1410
      %v1471 = vmul.f32 %v1089, %v1412
      %v1472 = vmul.f32 %v1094, %v1414
      %v1473 = vmul.f32 %v1099, %v1416
      %v1474 = vmul.f32 %v1104, %v1418
      %v1475 = vmul.f32 %v1109, %v1420
      %v1476 = vmul.f32 %v1114, %v1422
      %v1477 = vmul.f32 %v1119, %v1424
      %v1478 = vmul.f32 %v1124, %v1426
      %v1479 = vmul.f32 %v1129, %v1428
      %v1480 = vmul.f32 %v1134, %v1430
      %v1481 = vmul.f32 %v1139, %v1432
      %v1482 = vmul.f32 %v1144, %v1434
      %vm1483 = vcmask 31744
      %1484 = vst.msk [vmem:[#allocation2] sm:$0xff] %vm1483, %v1435
      %1485 = vst.msk [vmem:[#allocation2 + $0x8] sm:$0xff] %vm1483, %v1436
      %1486 = vst.msk [vmem:[#allocation2 + $0x10] sm:$0xff] %vm1483, %v1437
      %1487 = vst.msk [vmem:[#allocation2 + $0x18] sm:$0xff] %vm1483, %v1438
      %1488 = vst.msk [vmem:[#allocation2 + $0x20] sm:$0xff] %vm1483, %v1439
      %1489 = vst.msk [vmem:[#allocation2 + $0x28] sm:$0xff] %vm1483, %v1440
      %1490 = vst.msk [vmem:[#allocation2 + $0x30] sm:$0xff] %vm1483, %v1441
      %1491 = vst.msk [vmem:[#allocation2 + $0x38] sm:$0xff] %vm1483, %v1442
      %1492 = vst.msk [vmem:[#allocation2 + $0x40] sm:$0xff] %vm1483, %v1443
      %1493 = vst.msk [vmem:[#allocation2 + $0x48] sm:$0xff] %vm1483, %v1444
      %1494 = vst.msk [vmem:[#allocation2 + $0x50] sm:$0xff] %vm1483, %v1445
      %1495 = vst.msk [vmem:[#allocation2 + $0x58] sm:$0xff] %vm1483, %v1446
      %1496 = vst.msk [vmem:[#allocation2 + $0x60] sm:$0xff] %vm1483, %v1447
      %1497 = vst.msk [vmem:[#allocation2 + $0x68] sm:$0xff] %vm1483, %v1448
      %1498 = vst.msk [vmem:[#allocation2 + $0x70] sm:$0xff] %vm1483, %v1449
      %1499 = vst.msk [vmem:[#allocation2 + $0x78] sm:$0xff] %vm1483, %v1450
      %1500 = vst.msk [vmem:[#allocation2 + $0x80] sm:$0xff] %vm1483, %v1451
      %1501 = vst.msk [vmem:[#allocation2 + $0x88] sm:$0xff] %vm1483, %v1452
      %1502 = vst.msk [vmem:[#allocation2 + $0x90] sm:$0xff] %vm1483, %v1453
      %1503 = vst.msk [vmem:[#allocation2 + $0x98] sm:$0xff] %vm1483, %v1454
      %1504 = vst.msk [vmem:[#allocation2 + $0xa0] sm:$0xff] %vm1483, %v1455
      %1505 = vst.msk [vmem:[#allocation2 + $0xa8] sm:$0xff] %vm1483, %v1456
      %1506 = vst.msk [vmem:[#allocation2 + $0xb0] sm:$0xff] %vm1483, %v1457
      %1507 = vst.msk [vmem:[#allocation2 + $0xb8] sm:$0xff] %vm1483, %v1458
      %1508 = vst.msk [vmem:[#allocation2 + $0xc0] sm:$0xff] %vm1483, %v1459
      %1509 = vst.msk [vmem:[#allocation2 + $0xc8] sm:$0xff] %vm1483, %v1460
      %1510 = vst.msk [vmem:[#allocation2 + $0xd0] sm:$0xff] %vm1483, %v1461
      %1511 = vst.msk [vmem:[#allocation2 + $0xd8] sm:$0xff] %vm1483, %v1462
      %1512 = vst.msk [vmem:[#allocation2 + $0xe0] sm:$0xff] %vm1483, %v1463
      %1513 = vst.msk [vmem:[#allocation2 + $0xe8] sm:$0xff] %vm1483, %v1464
      %1514 = vst.msk [vmem:[#allocation2 + $0xf0] sm:$0xff] %vm1483, %v1465
      %1515 = vst.msk [vmem:[#allocation2 + $0xf8] sm:$0xff] %vm1483, %v1466
      %1516 = vst.msk [vmem:[#allocation2 + $0x100] sm:$0xff] %vm1483, %v1467
      %1517 = vst.msk [vmem:[#allocation2 + $0x108] sm:$0xff] %vm1483, %v1468
      %1518 = vst.msk [vmem:[#allocation2 + $0x110] sm:$0xff] %vm1483, %v1469
      %1519 = vst.msk [vmem:[#allocation2 + $0x118] sm:$0xff] %vm1483, %v1470
      %1520 = vst.msk [vmem:[#allocation2 + $0x120] sm:$0xff] %vm1483, %v1471
      %1521 = vst.msk [vmem:[#allocation2 + $0x128] sm:$0xff] %vm1483, %v1472
      %1522 = vst.msk [vmem:[#allocation2 + $0x130] sm:$0xff] %vm1483, %v1473
      %1523 = vst.msk [vmem:[#allocation2 + $0x138] sm:$0xff] %vm1483, %v1474
      %1524 = vst.msk [vmem:[#allocation2 + $0x140] sm:$0xff] %vm1483, %v1475
      %1525 = vst.msk [vmem:[#allocation2 + $0x148] sm:$0xff] %vm1483, %v1476
      %1526 = vst.msk [vmem:[#allocation2 + $0x150] sm:$0xff] %vm1483, %v1477
      %1527 = vst.msk [vmem:[#allocation2 + $0x158] sm:$0xff] %vm1483, %v1478
      %1528 = vst.msk [vmem:[#allocation2 + $0x160] sm:$0xff] %vm1483, %v1479
      %1529 = vst.msk [vmem:[#allocation2 + $0x168] sm:$0xff] %vm1483, %v1480
      %1530 = vst.msk [vmem:[#allocation2 + $0x170] sm:$0xff] %vm1483, %v1481
      %1531 = vst.msk [vmem:[#allocation2 + $0x178] sm:$0xff] %vm1483, %v1482
      %v1532 = vld [vmem:[%s597] sm:$0xff]
      %v1533 = vld [vmem:[%s597 + $0x8] sm:$0xff]
      %v1534 = vld [vmem:[%s597 + $0x10] sm:$0xff]
      %v1535 = vld [vmem:[%s611] sm:$0xff]
      %v1536 = vld [vmem:[%s611 + $0x8] sm:$0xff]
      %v1537 = vld [vmem:[%s611 + $0x10] sm:$0xff]
      %v1538 = vld [vmem:[%s626] sm:$0xff]
      %v1539 = vld [vmem:[%s626 + $0x8] sm:$0xff]
      %v1540 = vld [vmem:[%s626 + $0x10] sm:$0xff]
      %v1541 = vld [vmem:[%s4] sm:$0xff]
      %v1542 = vld [vmem:[%s5] sm:$0x1]
      %v1544 = vlaneseq
      %v1545 = vshrl.u32 %v1544, 7
      %v1546 = vsub.s32 0, %v1545
      %v1547 = vrot.slane %v1542, %v1546
      %v1550 = vsel %vm697, %v1532, 0
      %v1553 = vsel %vm697, %v1533, 0
      %v1556 = vsel %vm697, %v1534, 0
      %v1559 = vsel %vm697, %v1535, 0
      %v1562 = vsel %vm697, %v1536, 0
      %v1565 = vsel %vm697, %v1537, 0
      %v1568 = vsel %vm697, %v1538, 0
      %v1571 = vsel %vm697, %v1539, 0
      %v1574 = vsel %vm697, %v1540, 0
      %1576 = vmatprep.subr.mxu0 0.0
      %1577 = vmatpush1.msra.mxu0 %v1541
      %1578 = vmatprep.subr.mxu0 0.0
      %1579 = vmatpush1.msra.mxu0 0.0
      %1580 = vmatprep.subr.mxu0 0.0
      %1581 = vmatpush1.msra.mxu0 0.0
      %1582 = vmatprep.subr.mxu0 0.0
      %1583 = vmatpush1.msra.mxu0 0.0
      %1584 = vmatprep.subr.mxu0 0.0
      %1585 = vmatpush1.msra.mxu0 0.0
      %1586 = vmatprep.subr.mxu0 0.0
      %1587 = vmatpush1.msra.mxu0 0.0
      %1588 = vmatprep.subr.mxu0 0.0
      %1589 = vmatpush1.msra.mxu0 0.0
      %1590 = vmatprep.subr.mxu0 0.0
      %1591 = vmatpush1.msra.mxu0 0.0
      %1592 = vmatprep.subr.mxu0 0.0
      %1593 = vmatpush1.msra.mxu0 0.0
      %1594 = vmatprep.subr.mxu0 0.0
      %1595 = vmatpush1.msra.mxu0 0.0
      %1596 = vmatprep.subr.mxu0 0.0
      %1597 = vmatpush1.msra.mxu0 0.0
      %1598 = vmatprep.subr.mxu0 0.0
      %1599 = vmatpush1.msra.mxu0 0.0
      %1600 = vmatprep.subr.mxu0 0.0
      %1601 = vmatpush1.msra.mxu0 0.0
      %1602 = vmatprep.subr.mxu0 0.0
      %1603 = vmatpush1.msra.mxu0 0.0
      %1604 = vmatprep.subr.mxu0 0.0
      %1605 = vmatpush1.msra.mxu0 0.0
      %1606 = vmatprep.subr.mxu0 0.0
      %1607 = vmatpush1.msra.mxu0 0.0
      %1608 = vmatprep.subr.mxu0 0.0
      %1609 = vmatpush1.msra.mxu0 0.0
      %1610 = vmatprep.subr.mxu0 0.0
      %1611 = vmatpush1.msra.mxu0 0.0
      %1612 = vmatprep.subr.mxu0 0.0
      %1613 = vmatpush1.msra.mxu0 0.0
      %1614 = vmatprep.subr.mxu0 0.0
      %1615 = vmatpush1.msra.mxu0 0.0
      %1616 = vmatprep.subr.mxu0 0.0
      %1617 = vmatpush1.msra.mxu0 0.0
      %1618 = vmatprep.subr.mxu0 0.0
      %1619 = vmatpush1.msra.mxu0 0.0
      %1620 = vmatprep.subr.mxu0 0.0
      %1621 = vmatpush1.msra.mxu0 0.0
      %1622 = vmatprep.subr.mxu0 0.0
      %1623 = vmatpush1.msra.mxu0 0.0
      %1624 = vmatprep.subr.mxu0 0.0
      %1625 = vmatpush1.msra.mxu0 0.0
      %1626 = vmatprep.subr.mxu0 0.0
      %1627 = vmatpush1.msra.mxu0 0.0
      %1628 = vmatprep.subr.mxu0 0.0
      %1629 = vmatpush1.msra.mxu0 0.0
      %1630 = vmatprep.subr.mxu0 0.0
      %1631 = vmatpush1.msra.mxu0 0.0
      %1632 = vmatprep.subr.mxu0 0.0
      %1633 = vmatpush1.msra.mxu0 0.0
      %1634 = vmatprep.subr.mxu0 0.0
      %1635 = vmatpush1.msra.mxu0 0.0
      %1636 = vmatprep.subr.mxu0 0.0
      %1637 = vmatpush1.msra.mxu0 0.0
      %1638 = vmatprep.subr.mxu0 0.0
      %1639 = vmatpush1.msra.mxu0 0.0
      %1640 = vmatprep.mubr.f32.mxu0 0.0
      %1641 = vmatmul.mubr.f32.gmra.mrb[0].mxu0 %v1550
      %v1642 = vpop.f32.mrb[0].mxu0
      %v1643 = vadd.f32 %v1547, %v1642
      %v1644 = vpop.f32.mrb[0].mxu0
      %1645 = vmatprep.mubr.f32.mxu0 0.0
      %1646 = vmatmul.mubr.f32.gmra.mrb[0].mxu0 %v1553
      %v1647 = vpop.f32.mrb[0].mxu0
      %v1648 = vadd.f32 %v1547, %v1647
      %v1649 = vpop.f32.mrb[0].mxu0
      %1650 = vmatprep.mubr.f32.mxu0 0.0
      %1651 = vmatmul.mubr.f32.gmra.mrb[0].mxu0 %v1556
      %v1652 = vpop.f32.mrb[0].mxu0
      %v1653 = vadd.f32 %v1547, %v1652
      %v1654 = vpop.f32.mrb[0].mxu0
      %1655 = vmatprep.mubr.f32.mxu0 0.0
      %1656 = vmatmul.mubr.f32.gmra.mrb[0].mxu0 %v1559
      %v1657 = vpop.f32.mrb[0].mxu0
      %v1658 = vadd.f32 %v1547, %v1657
      %v1659 = vpop.f32.mrb[0].mxu0
      %1660 = vmatprep.mubr.f32.mxu0 0.0
      %1661 = vmatmul.mubr.f32.gmra.mrb[0].mxu0 %v1562
      %v1662 = vpop.f32.mrb[0].mxu0
      %v1663 = vadd.f32 %v1547, %v1662
      %v1664 = vpop.f32.mrb[0].mxu0
      %1665 = vmatprep.mubr.f32.mxu0 0.0
      %1666 = vmatmul.mubr.f32.gmra.mrb[0].mxu0 %v1565
      %v1667 = vpop.f32.mrb[0].mxu0
      %v1668 = vadd.f32 %v1547, %v1667
      %v1669 = vpop.f32.mrb[0].mxu0
      %1670 = vmatprep.mubr.f32.mxu0 0.0
      %1671 = vmatmul.mubr.f32.gmra.mrb[0].mxu0 %v1568
      %v1672 = vpop.f32.mrb[0].mxu0
      %v1673 = vadd.f32 %v1547, %v1672
      %v1674 = vpop.f32.mrb[0].mxu0
      %1675 = vmatprep.mubr.f32.mxu0 0.0
      %1676 = vmatmul.mubr.f32.gmra.mrb[0].mxu0 %v1571
      %v1677 = vpop.f32.mrb[0].mxu0
      %v1678 = vadd.f32 %v1547, %v1677
      %v1679 = vpop.f32.mrb[0].mxu0
      %1680 = vmatprep.mubr.f32.mxu0 0.0
      %1681 = vmatmul.mubr.f32.gmra.mrb[0].mxu0 %v1574
      %v1682 = vpop.f32.mrb[0].mxu0
      %v1683 = vadd.f32 %v1547, %v1682
      %v1684 = vpop.f32.mrb[0].mxu0
      %1685 = vdwg.mxu0
      %v1686 = vxor.u32 %v1643, 2147483648
      %v1687 = vxor.u32 %v1648, 2147483648
      %v1688 = vxor.u32 %v1653, 2147483648
      %v1689 = vxor.u32 %v1658, 2147483648
      %v1690 = vxor.u32 %v1663, 2147483648
      %v1691 = vxor.u32 %v1668, 2147483648
      %v1692 = vxor.u32 %v1673, 2147483648
      %v1693 = vxor.u32 %v1678, 2147483648
      %v1694 = vxor.u32 %v1683, 2147483648
      %v1695 = vmul.f32 %v1686, 1.442695
      %v1696 = vpow.pop %v1695
      %v1697 = vmul.f32 %v1687, 1.442695
      %v1698 = vpow.pop %v1697
      %v1699 = vmul.f32 %v1688, 1.442695
      %v1700 = vpow.pop %v1699
      %v1701 = vmul.f32 %v1689, 1.442695
      %v1702 = vpow.pop %v1701
      %v1703 = vmul.f32 %v1690, 1.442695
      %v1704 = vpow.pop %v1703
      %v1705 = vmul.f32 %v1691, 1.442695
      %v1706 = vpow.pop %v1705
      %v1707 = vmul.f32 %v1692, 1.442695
      %v1708 = vpow.pop %v1707
      %v1709 = vmul.f32 %v1693, 1.442695
      %v1710 = vpow.pop %v1709
      %v1711 = vmul.f32 %v1694, 1.442695
      %v1712 = vpow.pop %v1711
      %v1713 = vadd.f32 %v1696, 1.0
      %v1714 = vadd.f32 %v1698, 1.0
      %v1715 = vadd.f32 %v1700, 1.0
      %v1716 = vadd.f32 %v1702, 1.0
      %v1717 = vadd.f32 %v1704, 1.0
      %v1718 = vadd.f32 %v1706, 1.0
      %v1719 = vadd.f32 %v1708, 1.0
      %v1720 = vadd.f32 %v1710, 1.0
      %v1721 = vadd.f32 %v1712, 1.0
      %v1722 = vrcp.pop %v1713
      %v1723 = vmul.f32 1.0, %v1722
      %v1724 = vrcp.pop %v1714
      %v1725 = vmul.f32 1.0, %v1724
      %v1726 = vrcp.pop %v1715
      %v1727 = vmul.f32 1.0, %v1726
      %v1728 = vrcp.pop %v1716
      %v1729 = vmul.f32 1.0, %v1728
      %v1730 = vrcp.pop %v1717
      %v1731 = vmul.f32 1.0, %v1730
      %v1732 = vrcp.pop %v1718
      %v1733 = vmul.f32 1.0, %v1732
      %v1734 = vrcp.pop %v1719
      %v1735 = vmul.f32 1.0, %v1734
      %v1736 = vrcp.pop %v1720
      %v1737 = vmul.f32 1.0, %v1736
      %v1738 = vrcp.pop %v1721
      %v1739 = vmul.f32 1.0, %v1738
      %v1740 = vmul.f32 %v1643, %v1723
      %v1741 = vmul.f32 %v1648, %v1725
      %v1742 = vmul.f32 %v1653, %v1727
      %v1743 = vmul.f32 %v1658, %v1729
      %v1744 = vmul.f32 %v1663, %v1731
      %v1745 = vmul.f32 %v1668, %v1733
      %v1746 = vmul.f32 %v1673, %v1735
      %v1747 = vmul.f32 %v1678, %v1737
      %v1748 = vmul.f32 %v1683, %v1739
      %s1749 = scalar_lea.vmem [#allocation2], 384
      %1750 = vst.msk [vmem:[%s1749] sm:$0xff] %vm1483, %v1740
      %1751 = vst.msk [vmem:[%s1749 + $0x8] sm:$0xff] %vm1483, %v1741
      %1752 = vst.msk [vmem:[%s1749 + $0x10] sm:$0xff] %vm1483, %v1742
      %1753 = vst.msk [vmem:[%s1749 + $0x18] sm:$0xff] %vm1483, %v1743
      %1754 = vst.msk [vmem:[%s1749 + $0x20] sm:$0xff] %vm1483, %v1744
      %1755 = vst.msk [vmem:[%s1749 + $0x28] sm:$0xff] %vm1483, %v1745
      %1756 = vst.msk [vmem:[%s1749 + $0x30] sm:$0xff] %vm1483, %v1746
      %1757 = vst.msk [vmem:[%s1749 + $0x38] sm:$0xff] %vm1483, %v1747
      %1758 = vst.msk [vmem:[%s1749 + $0x40] sm:$0xff] %vm1483, %v1748
      %vm1759 = vcmask 24576
      %1760 = vst.msk [vmem:[#allocation2] sm:$0x1] %vm1759, 0.0
      %1761 = vst.msk [vmem:[#allocation2 + $0x18] sm:$0x1] %vm1759, 0.0
      %1762 = vst.msk [vmem:[#allocation2 + $0x30] sm:$0x1] %vm1759, 0.0
      %1763 = vst.msk [vmem:[#allocation2 + $0x48] sm:$0x1] %vm1759, 0.0
      %1764 = vst.msk [vmem:[#allocation2 + $0x60] sm:$0x1] %vm1759, 0.0
      %1765 = vst.msk [vmem:[#allocation2 + $0x78] sm:$0x1] %vm1759, 0.0
      %1766 = vst.msk [vmem:[#allocation2 + $0x90] sm:$0x1] %vm1759, 0.0
      %1767 = vst.msk [vmem:[#allocation2 + $0xa8] sm:$0x1] %vm1759, 0.0
      %1768 = vst.msk [vmem:[#allocation2 + $0xc0] sm:$0x1] %vm1759, 0.0
      %1769 = vst.msk [vmem:[#allocation2 + $0xd8] sm:$0x1] %vm1759, 0.0
      %1770 = vst.msk [vmem:[#allocation2 + $0xf0] sm:$0x1] %vm1759, 0.0
      %1771 = vst.msk [vmem:[#allocation2 + $0x108] sm:$0x1] %vm1759, 0.0
      %1772 = vst.msk [vmem:[#allocation2 + $0x120] sm:$0x1] %vm1759, 0.0
      %1773 = vst.msk [vmem:[#allocation2 + $0x138] sm:$0x1] %vm1759, 0.0
      %1774 = vst.msk [vmem:[#allocation2 + $0x150] sm:$0x1] %vm1759, 0.0
      %1775 = vst.msk [vmem:[#allocation2 + $0x168] sm:$0x1] %vm1759, 0.0
      %1776 = vst.msk [vmem:[#allocation2 + $0x180] sm:$0x1] %vm1759, 0.0
      %1777 = vst.msk [vmem:[#allocation2 + $0x198] sm:$0x1] %vm1759, 0.0
      %1778 = vst.msk [vmem:[#allocation2 + $0x1b0] sm:$0x1] %vm1759, 0.0
      %1779 = vst.msk [vmem:[#allocation2 + $0x11] sm:$0x1] %vm1759, 0.0
      %1780 = vst.msk [vmem:[#allocation2 + $0x29] sm:$0x1] %vm1759, 0.0
      %1781 = vst.msk [vmem:[#allocation2 + $0x41] sm:$0x1] %vm1759, 0.0
      %1782 = vst.msk [vmem:[#allocation2 + $0x59] sm:$0x1] %vm1759, 0.0
      %1783 = vst.msk [vmem:[#allocation2 + $0x71] sm:$0x1] %vm1759, 0.0
      %1784 = vst.msk [vmem:[#allocation2 + $0x89] sm:$0x1] %vm1759, 0.0
      %1785 = vst.msk [vmem:[#allocation2 + $0xa1] sm:$0x1] %vm1759, 0.0
      %1786 = vst.msk [vmem:[#allocation2 + $0xb9] sm:$0x1] %vm1759, 0.0
      %1787 = vst.msk [vmem:[#allocation2 + $0xd1] sm:$0x1] %vm1759, 0.0
      %1788 = vst.msk [vmem:[#allocation2 + $0xe9] sm:$0x1] %vm1759, 0.0
      %1789 = vst.msk [vmem:[#allocation2 + $0x101] sm:$0x1] %vm1759, 0.0
      %1790 = vst.msk [vmem:[#allocation2 + $0x119] sm:$0x1] %vm1759, 0.0
      %1791 = vst.msk [vmem:[#allocation2 + $0x131] sm:$0x1] %vm1759, 0.0
      %1792 = vst.msk [vmem:[#allocation2 + $0x149] sm:$0x1] %vm1759, 0.0
      %1793 = vst.msk [vmem:[#allocation2 + $0x161] sm:$0x1] %vm1759, 0.0
      %1794 = vst.msk [vmem:[#allocation2 + $0x179] sm:$0x1] %vm1759, 0.0
      %1795 = vst.msk [vmem:[#allocation2 + $0x191] sm:$0x1] %vm1759, 0.0
      %1796 = vst.msk [vmem:[#allocation2 + $0x1a9] sm:$0x1] %vm1759, 0.0
      %1797 = vst.msk [vmem:[#allocation2 + $0x1c1] sm:$0x1] %vm1759, 0.0
      %p1798 = scmp.eq.s32.totalorder %s28, 0
      // Predicated region
      $region69: #{tpu_custom_call.1} parent=67 // pred_check
        %p1799 = pneg %p1798
      $region70: #{tpu_custom_call.1} parent=67 // pred_check_branch
        %1801 = sbr.rel (%p1799) target = $region72
      $region71: #{tpu_custom_call.1} parent=67 // pred_region
        %1802 = vst.msk [vmem:[#allocation2] sm:$0xff] %vm1483, 0.0
        %1803 = vst.msk [vmem:[#allocation2 + $0x8] sm:$0xff] %vm1483, 0.0
        %1804 = vst.msk [vmem:[#allocation2 + $0x10] sm:$0xff] %vm1483, 0.0
      $region72: #{tpu_custom_call.1} parent=67 // pred_fallthru
        _
      %s1805 = smul.u32 %s28, 16
      %s1806 = ssub.s32 17, %s1805
      %p1807 = scmp.ge.s32.totalorder %s1806, 0
      %p1808 = scmp.lt.s32.totalorder %s1806, 19
      %p1809 = pnand %p1807, %p1808
      %p1810 = pneg %p1809
      // Predicated region
      $region73: #{tpu_custom_call.1} parent=67 // pred_check
        _
      $region74: #{tpu_custom_call.1} parent=67 // pred_check_branch
        %1812 = sbr.rel (%p1809) target = $region76
      $region75: #{tpu_custom_call.1} parent=67 // pred_region
        %s1813 = smul.u32 %s1806, 24
        %s1814 = scalar_lea.vmem [#allocation2], %s1813
        %1815 = vst.msk [vmem:[%s1814] sm:$0xff] %vm1483, 0.0
        %1816 = vst.msk [vmem:[%s1814 + $0x8] sm:$0xff] %vm1483, 0.0
        %1817 = vst.msk [vmem:[%s1814 + $0x10] sm:$0xff] %vm1483, 0.0
      $region76: #{tpu_custom_call.1} parent=67 // pred_fallthru
        _
      %v1818 = vld [vmem:[#allocation2] sm:$0xff]
      %v1819 = vld [vmem:[#allocation2 + $0x8] sm:$0xff]
      %v1820 = vld [vmem:[#allocation2 + $0x10] sm:$0xff]
      %v1821 = vld [vmem:[#allocation2 + $0x18] sm:$0xff]
      %v1822 = vld [vmem:[#allocation2 + $0x20] sm:$0xff]
      %v1823 = vld [vmem:[#allocation2 + $0x28] sm:$0xff]
      %v1824 = vld [vmem:[#allocation2 + $0x30] sm:$0xff]
      %v1825 = vld [vmem:[#allocation2 + $0x38] sm:$0xff]
      %v1826 = vld [vmem:[#allocation2 + $0x40] sm:$0xff]
      %v1827 = vld [vmem:[#allocation2 + $0x48] sm:$0xff]
      %v1828 = vld [vmem:[#allocation2 + $0x50] sm:$0xff]
      %v1829 = vld [vmem:[#allocation2 + $0x58] sm:$0xff]
      %v1830 = vld [vmem:[#allocation2 + $0x60] sm:$0xff]
      %v1831 = vld [vmem:[#allocation2 + $0x68] sm:$0xff]
      %v1832 = vld [vmem:[#allocation2 + $0x70] sm:$0xff]
      %v1833 = vld [vmem:[#allocation2 + $0x78] sm:$0xff]
      %v1834 = vld [vmem:[#allocation2 + $0x80] sm:$0xff]
      %v1835 = vld [vmem:[#allocation2 + $0x88] sm:$0xff]
      %v1836 = vld [vmem:[#allocation2 + $0x90] sm:$0xff]
      %v1837 = vld [vmem:[#allocation2 + $0x98] sm:$0xff]
      %v1838 = vld [vmem:[#allocation2 + $0xa0] sm:$0xff]
      %v1839 = vld [vmem:[#allocation2 + $0xa8] sm:$0xff]
      %v1840 = vld [vmem:[#allocation2 + $0xb0] sm:$0xff]
      %v1841 = vld [vmem:[#allocation2 + $0xb8] sm:$0xff]
      %v1842 = vld [vmem:[#allocation2 + $0xc0] sm:$0xff]
      %v1843 = vld [vmem:[#allocation2 + $0xc8] sm:$0xff]
      %v1844 = vld [vmem:[#allocation2 + $0xd0] sm:$0xff]
      %v1845 = vld [vmem:[#allocation2 + $0xd8] sm:$0xff]
      %v1846 = vld [vmem:[#allocation2 + $0xe0] sm:$0xff]
      %v1847 = vld [vmem:[#allocation2 + $0xe8] sm:$0xff]
      %v1848 = vld [vmem:[#allocation2 + $0xf0] sm:$0xff]
      %v1849 = vld [vmem:[#allocation2 + $0xf8] sm:$0xff]
      %v1850 = vld [vmem:[#allocation2 + $0x100] sm:$0xff]
      %v1851 = vld [vmem:[#allocation2 + $0x108] sm:$0xff]
      %v1852 = vld [vmem:[#allocation2 + $0x110] sm:$0xff]
      %v1853 = vld [vmem:[#allocation2 + $0x118] sm:$0xff]
      %v1854 = vld [vmem:[#allocation2 + $0x120] sm:$0xff]
      %v1855 = vld [vmem:[#allocation2 + $0x128] sm:$0xff]
      %v1856 = vld [vmem:[#allocation2 + $0x130] sm:$0xff]
      %v1857 = vld [vmem:[#allocation2 + $0x138] sm:$0xff]
      %v1858 = vld [vmem:[#allocation2 + $0x140] sm:$0xff]
      %v1859 = vld [vmem:[#allocation2 + $0x148] sm:$0xff]
      %v1860 = vld [vmem:[#allocation2 + $0x150] sm:$0xff]
      %v1861 = vld [vmem:[#allocation2 + $0x158] sm:$0xff]
      %v1862 = vld [vmem:[#allocation2 + $0x160] sm:$0xff]
      %v1863 = vld [vmem:[#allocation2 + $0x168] sm:$0xff]
      %v1864 = vld [vmem:[#allocation2 + $0x170] sm:$0xff]
      %v1865 = vld [vmem:[#allocation2 + $0x178] sm:$0xff]
      %v1866 = vld [vmem:[#allocation2 + $0x180] sm:$0xff]
      %v1867 = vld [vmem:[#allocation2 + $0x188] sm:$0xff]
      %v1868 = vld [vmem:[#allocation2 + $0x190] sm:$0xff]
      %v1869 = vld [vmem:[#allocation2 + $0x198] sm:$0xff]
      %v1870 = vld [vmem:[#allocation2 + $0x1a0] sm:$0xff]
      %v1871 = vld [vmem:[#allocation2 + $0x1a8] sm:$0xff]
      %v1872 = vld [vmem:[#allocation2 + $0x1b0] sm:$0xff]
      %v1873 = vld [vmem:[%s6] sm:$0xf]
      %s1874 = scalar_lea.vmem %s6, 4
      %v1875 = vld [vmem:[%s1874] sm:$0xf]
      %vm1925 = vcmask 1046528
      %v1926 = vrot.slane %v1818, 1
      %v1927 = vrot.slane %v1819, 1
      %v1928 = vsel %vm1925, %v1926, %v1927
      %v1929 = vrot.slane %v1820, 1
      %v1930 = vsel %vm1925, %v1927, %v1929
      %v1931 = vrot.slane %v1821, 1
      %v1932 = vsel %vm1925, %v1929, %v1931
      %v1933 = vrot.slane %v1822, 1
      %v1934 = vsel %vm1925, %v1931, %v1933
      %v1935 = vrot.slane %v1823, 1
      %v1936 = vsel %vm1925, %v1933, %v1935
      %v1937 = vrot.slane %v1824, 1
      %v1938 = vsel %vm1925, %v1935, %v1937
      %v1939 = vrot.slane %v1825, 1
      %v1940 = vsel %vm1925, %v1937, %v1939
      %v1941 = vrot.slane %v1826, 1
      %v1942 = vsel %vm1925, %v1939, %v1941
      %v1943 = vrot.slane %v1827, 1
      %v1944 = vsel %vm1925, %v1941, %v1943
      %v1945 = vrot.slane %v1828, 1
      %v1946 = vsel %vm1925, %v1943, %v1945
      %v1947 = vrot.slane %v1829, 1
      %v1948 = vsel %vm1925, %v1945, %v1947
      %v1949 = vrot.slane %v1830, 1
      %v1950 = vsel %vm1925, %v1947, %v1949
      %v1951 = vrot.slane %v1831, 1
      %v1952 = vsel %vm1925, %v1949, %v1951
      %v1953 = vrot.slane %v1832, 1
      %v1954 = vsel %vm1925, %v1951, %v1953
      %v1955 = vrot.slane %v1833, 1
      %v1956 = vsel %vm1925, %v1953, %v1955
      %v1957 = vrot.slane %v1834, 1
      %v1958 = vsel %vm1925, %v1955, %v1957
      %v1959 = vrot.slane %v1835, 1
      %v1960 = vsel %vm1925, %v1957, %v1959
      %v1961 = vrot.slane %v1836, 1
      %v1962 = vsel %vm1925, %v1959, %v1961
      %v1963 = vrot.slane %v1837, 1
      %v1964 = vsel %vm1925, %v1961, %v1963
      %v1965 = vrot.slane %v1838, 1
      %v1966 = vsel %vm1925, %v1963, %v1965
      %v1967 = vrot.slane %v1839, 1
      %v1968 = vsel %vm1925, %v1965, %v1967
      %v1969 = vrot.slane %v1840, 1
      %v1970 = vsel %vm1925, %v1967, %v1969
      %v1971 = vrot.slane %v1841, 1
      %v1972 = vsel %vm1925, %v1969, %v1971
      %v1973 = vrot.slane %v1842, 1
      %v1974 = vsel %vm1925, %v1971, %v1973
      %v1975 = vrot.slane %v1843, 1
      %v1976 = vsel %vm1925, %v1973, %v1975
      %v1977 = vrot.slane %v1844, 1
      %v1978 = vsel %vm1925, %v1975, %v1977
      %v1979 = vrot.slane %v1845, 1
      %v1980 = vsel %vm1925, %v1977, %v1979
      %v1981 = vrot.slane %v1846, 1
      %v1982 = vsel %vm1925, %v1979, %v1981
      %v1983 = vrot.slane %v1847, 1
      %v1984 = vsel %vm1925, %v1981, %v1983
      %v1985 = vrot.slane %v1848, 1
      %v1986 = vsel %vm1925, %v1983, %v1985
      %v1987 = vrot.slane %v1849, 1
      %v1988 = vsel %vm1925, %v1985, %v1987
      %v1989 = vrot.slane %v1850, 1
      %v1990 = vsel %vm1925, %v1987, %v1989
      %v1991 = vrot.slane %v1851, 1
      %v1992 = vsel %vm1925, %v1989, %v1991
      %v1993 = vrot.slane %v1852, 1
      %v1994 = vsel %vm1925, %v1991, %v1993
      %v1995 = vrot.slane %v1853, 1
      %v1996 = vsel %vm1925, %v1993, %v1995
      %v1997 = vrot.slane %v1854, 1
      %v1998 = vsel %vm1925, %v1995, %v1997
      %v1999 = vrot.slane %v1855, 1
      %v2000 = vsel %vm1925, %v1997, %v1999
      %v2001 = vrot.slane %v1856, 1
      %v2002 = vsel %vm1925, %v1999, %v2001
      %v2003 = vrot.slane %v1857, 1
      %v2004 = vsel %vm1925, %v2001, %v2003
      %v2005 = vrot.slane %v1858, 1
      %v2006 = vsel %vm1925, %v2003, %v2005
      %v2007 = vrot.slane %v1859, 1
      %v2008 = vsel %vm1925, %v2005, %v2007
      %v2009 = vrot.slane %v1860, 1
      %v2010 = vsel %vm1925, %v2007, %v2009
      %v2011 = vrot.slane %v1861, 1
      %v2012 = vsel %vm1925, %v2009, %v2011
      %v2013 = vrot.slane %v1862, 1
      %v2014 = vsel %vm1925, %v2011, %v2013
      %v2015 = vrot.slane %v1863, 1
      %v2016 = vsel %vm1925, %v2013, %v2015
      %v2017 = vrot.slane %v1864, 1
      %v2018 = vsel %vm1925, %v2015, %v2017
      %v2019 = vrot.slane %v1865, 1
      %v2020 = vsel %vm1925, %v2017, %v2019
      %v2021 = vrot.slane %v1866, 1
      %v2022 = vsel %vm1925, %v2019, %v2021
      %v2023 = vsel %vm1483, %v1928, 0
      %v2025 = vsel %vm1483, %v1930, 0
      %v2027 = vsel %vm1483, %v1932, 0
      %v2029 = vsel %vm1483, %v1934, 0
      %v2031 = vsel %vm1483, %v1936, 0
      %v2033 = vsel %vm1483, %v1938, 0
      %v2035 = vsel %vm1483, %v1940, 0
      %v2037 = vsel %vm1483, %v1942, 0
      %v2039 = vsel %vm1483, %v1944, 0
      %v2041 = vsel %vm1483, %v1946, 0
      %v2043 = vsel %vm1483, %v1948, 0
      %v2045 = vsel %vm1483, %v1950, 0
      %v2047 = vsel %vm1483, %v1952, 0
      %v2049 = vsel %vm1483, %v1954, 0
      %v2051 = vsel %vm1483, %v1956, 0
      %v2053 = vsel %vm1483, %v1958, 0
      %v2055 = vsel %vm1483, %v1960, 0
      %v2057 = vsel %vm1483, %v1962, 0
      %v2059 = vsel %vm1483, %v1964, 0
      %v2061 = vsel %vm1483, %v1966, 0
      %v2063 = vsel %vm1483, %v1968, 0
      %v2065 = vsel %vm1483, %v1970, 0
      %v2067 = vsel %vm1483, %v1972, 0
      %v2069 = vsel %vm1483, %v1974, 0
      %v2071 = vsel %vm1483, %v1976, 0
      %v2073 = vsel %vm1483, %v1978, 0
      %v2075 = vsel %vm1483, %v1980, 0
      %v2077 = vsel %vm1483, %v1982, 0
      %v2079 = vsel %vm1483, %v1984, 0
      %v2081 = vsel %vm1483, %v1986, 0
      %v2083 = vsel %vm1483, %v1988, 0
      %v2085 = vsel %vm1483, %v1990, 0
      %v2087 = vsel %vm1483, %v1992, 0
      %v2089 = vsel %vm1483, %v1994, 0
      %v2091 = vsel %vm1483, %v1996, 0
      %v2093 = vsel %vm1483, %v1998, 0
      %v2095 = vsel %vm1483, %v2000, 0
      %v2097 = vsel %vm1483, %v2002, 0
      %v2099 = vsel %vm1483, %v2004, 0
      %v2101 = vsel %vm1483, %v2006, 0
      %v2103 = vsel %vm1483, %v2008, 0
      %v2105 = vsel %vm1483, %v2010, 0
      %v2107 = vsel %vm1483, %v2012, 0
      %v2109 = vsel %vm1483, %v2014, 0
      %v2111 = vsel %vm1483, %v2016, 0
      %v2113 = vsel %vm1483, %v2018, 0
      %v2115 = vsel %vm1483, %v2020, 0
      %v2117 = vsel %vm1483, %v2022, 0
      %vm2119 = vcmask 1043456
      %v2121 = vsel %vm2119, %v1875, 0
      %2123 = vmatprep.subr.mxu0 0.0
      %2124 = vmatpush1.msra.mxu0 %v2121
      %2125 = vmatprep.subr.mxu0 0.0
      %2126 = vmatpush1.msra.mxu0 0.0
      %2127 = vmatprep.subr.mxu0 0.0
      %2128 = vmatpush1.msra.mxu0 0.0
      %2129 = vmatprep.subr.mxu0 0.0
      %2130 = vmatpush1.msra.mxu0 0.0
      %2131 = vmatprep.subr.mxu0 0.0
      %2132 = vmatpush1.msra.mxu0 0.0
      %2133 = vmatprep.subr.mxu0 0.0
      %2134 = vmatpush1.msra.mxu0 0.0
      %2135 = vmatprep.subr.mxu0 0.0
      %2136 = vmatpush1.msra.mxu0 0.0
      %2137 = vmatprep.subr.mxu0 0.0
      %2138 = vmatpush1.msra.mxu0 0.0
      %2139 = vmatprep.subr.mxu0 0.0
      %2140 = vmatpush1.msra.mxu0 0.0
      %2141 = vmatprep.subr.mxu0 0.0
      %2142 = vmatpush1.msra.mxu0 0.0
      %2143 = vmatprep.subr.mxu0 0.0
      %2144 = vmatpush1.msra.mxu0 0.0
      %2145 = vmatprep.subr.mxu0 0.0
      %2146 = vmatpush1.msra.mxu0 0.0
      %2147 = vmatprep.subr.mxu0 0.0
      %2148 = vmatpush1.msra.mxu0 0.0
      %2149 = vmatprep.subr.mxu0 0.0
      %2150 = vmatpush1.msra.mxu0 0.0
      %2151 = vmatprep.subr.mxu0 0.0
      %2152 = vmatpush1.msra.mxu0 0.0
      %2153 = vmatprep.subr.mxu0 0.0
      %2154 = vmatpush1.msra.mxu0 0.0
      %2155 = vmatprep.subr.mxu0 0.0
      %2156 = vmatpush1.msra.mxu0 0.0
      %2157 = vmatprep.subr.mxu0 0.0
      %2158 = vmatpush1.msra.mxu0 0.0
      %2159 = vmatprep.subr.mxu0 0.0
      %2160 = vmatpush1.msra.mxu0 0.0
      %2161 = vmatprep.subr.mxu0 0.0
      %2162 = vmatpush1.msra.mxu0 0.0
      %2163 = vmatprep.subr.mxu0 0.0
      %2164 = vmatpush1.msra.mxu0 0.0
      %2165 = vmatprep.subr.mxu0 0.0
      %2166 = vmatpush1.msra.mxu0 0.0
      %2167 = vmatprep.subr.mxu0 0.0
      %2168 = vmatpush1.msra.mxu0 0.0
      %2169 = vmatprep.subr.mxu0 0.0
      %2170 = vmatpush1.msra.mxu0 0.0
      %2171 = vmatprep.subr.mxu0 0.0
      %2172 = vmatpush1.msra.mxu0 0.0
      %2173 = vmatprep.subr.mxu0 0.0
      %2174 = vmatpush1.msra.mxu0 0.0
      %2175 = vmatprep.subr.mxu0 0.0
      %2176 = vmatpush1.msra.mxu0 0.0
      %2177 = vmatprep.subr.mxu0 0.0
      %2178 = vmatpush1.msra.mxu0 0.0
      %2179 = vmatprep.subr.mxu0 0.0
      %2180 = vmatpush1.msra.mxu0 0.0
      %2181 = vmatprep.subr.mxu0 0.0
      %2182 = vmatpush1.msra.mxu0 0.0
      %2183 = vmatprep.subr.mxu0 0.0
      %2184 = vmatpush1.msra.mxu0 0.0
      %2185 = vmatprep.subr.mxu0 0.0
      %2186 = vmatpush1.msra.mxu0 0.0
      %2187 = vmatprep.mubr.f32.mxu0 0.0
      %2188 = vmatmul.mubr.f32.gmra.mrb[0].mxu0 %v2023
      %v2189 = vpop.f32.mrb[0].mxu0
      %v2190 = vadd.f32 0.0, %v2189
      %v2191 = vpop.f32.mrb[0].mxu0
      %2192 = vmatprep.mubr.f32.mxu0 0.0
      %2193 = vmatmul.mubr.f32.gmra.mrb[0].mxu0 %v2025
      %v2194 = vpop.f32.mrb[0].mxu0
      %v2195 = vadd.f32 0.0, %v2194
      %v2196 = vpop.f32.mrb[0].mxu0
      %2197 = vmatprep.mubr.f32.mxu0 0.0
      %2198 = vmatmul.mubr.f32.gmra.mrb[0].mxu0 %v2027
      %v2199 = vpop.f32.mrb[0].mxu0
      %v2200 = vadd.f32 0.0, %v2199
      %v2201 = vpop.f32.mrb[0].mxu0
      %2202 = vmatprep.mubr.f32.mxu0 0.0
      %2203 = vmatmul.mubr.f32.gmra.mrb[0].mxu0 %v2029
      %v2204 = vpop.f32.mrb[0].mxu0
      %v2205 = vadd.f32 0.0, %v2204
      %v2206 = vpop.f32.mrb[0].mxu0
      %2207 = vmatprep.mubr.f32.mxu0 0.0
      %2208 = vmatmul.mubr.f32.gmra.mrb[0].mxu0 %v2031
      %v2209 = vpop.f32.mrb[0].mxu0
      %v2210 = vadd.f32 0.0, %v2209
      %v2211 = vpop.f32.mrb[0].mxu0
      %2212 = vmatprep.mubr.f32.mxu0 0.0
      %2213 = vmatmul.mubr.f32.gmra.mrb[0].mxu0 %v2033
      %v2214 = vpop.f32.mrb[0].mxu0
      %v2215 = vadd.f32 0.0, %v2214
      %v2216 = vpop.f32.mrb[0].mxu0
      %2217 = vmatprep.mubr.f32.mxu0 0.0
      %2218 = vmatmul.mubr.f32.gmra.mrb[0].mxu0 %v2035
      %v2219 = vpop.f32.mrb[0].mxu0
      %v2220 = vadd.f32 0.0, %v2219
      %v2221 = vpop.f32.mrb[0].mxu0
      %2222 = vmatprep.mubr.f32.mxu0 0.0
      %2223 = vmatmul.mubr.f32.gmra.mrb[0].mxu0 %v2037
      %v2224 = vpop.f32.mrb[0].mxu0
      %v2225 = vadd.f32 0.0, %v2224
      %v2226 = vpop.f32.mrb[0].mxu0
      %2227 = vmatprep.mubr.f32.mxu0 0.0
      %2228 = vmatmul.mubr.f32.gmra.mrb[0].mxu0 %v2039
      %v2229 = vpop.f32.mrb[0].mxu0
      %v2230 = vadd.f32 0.0, %v2229
      %v2231 = vpop.f32.mrb[0].mxu0
      %2232 = vmatprep.mubr.f32.mxu0 0.0
      %2233 = vmatmul.mubr.f32.gmra.mrb[0].mxu0 %v2041
      %v2234 = vpop.f32.mrb[0].mxu0
      %v2235 = vadd.f32 0.0, %v2234
      %v2236 = vpop.f32.mrb[0].mxu0
      %2237 = vmatprep.mubr.f32.mxu0 0.0
      %2238 = vmatmul.mubr.f32.gmra.mrb[0].mxu0 %v2043
      %v2239 = vpop.f32.mrb[0].mxu0
      %v2240 = vadd.f32 0.0, %v2239
      %v2241 = vpop.f32.mrb[0].mxu0
      %2242 = vmatprep.mubr.f32.mxu0 0.0
      %2243 = vmatmul.mubr.f32.gmra.mrb[0].mxu0 %v2045
      %v2244 = vpop.f32.mrb[0].mxu0
      %v2245 = vadd.f32 0.0, %v2244
      %v2246 = vpop.f32.mrb[0].mxu0
      %2247 = vmatprep.mubr.f32.mxu0 0.0
      %2248 = vmatmul.mubr.f32.gmra.mrb[0].mxu0 %v2047
      %v2249 = vpop.f32.mrb[0].mxu0
      %v2250 = vadd.f32 0.0, %v2249
      %v2251 = vpop.f32.mrb[0].mxu0
      %2252 = vmatprep.mubr.f32.mxu0 0.0
      %2253 = vmatmul.mubr.f32.gmra.mrb[0].mxu0 %v2049
      %v2254 = vpop.f32.mrb[0].mxu0
      %v2255 = vadd.f32 0.0, %v2254
      %v2256 = vpop.f32.mrb[0].mxu0
      %2257 = vmatprep.mubr.f32.mxu0 0.0
      %2258 = vmatmul.mubr.f32.gmra.mrb[0].mxu0 %v2051
      %v2259 = vpop.f32.mrb[0].mxu0
      %v2260 = vadd.f32 0.0, %v2259
      %v2261 = vpop.f32.mrb[0].mxu0
      %2262 = vmatprep.mubr.f32.mxu0 0.0
      %2263 = vmatmul.mubr.f32.gmra.mrb[0].mxu0 %v2053
      %v2264 = vpop.f32.mrb[0].mxu0
      %v2265 = vadd.f32 0.0, %v2264
      %v2266 = vpop.f32.mrb[0].mxu0
      %2267 = vmatprep.mubr.f32.mxu0 0.0
      %2268 = vmatmul.mubr.f32.gmra.mrb[0].mxu0 %v2055
      %v2269 = vpop.f32.mrb[0].mxu0
      %v2270 = vadd.f32 0.0, %v2269
      %v2271 = vpop.f32.mrb[0].mxu0
      %2272 = vmatprep.mubr.f32.mxu0 0.0
      %2273 = vmatmul.mubr.f32.gmra.mrb[0].mxu0 %v2057
      %v2274 = vpop.f32.mrb[0].mxu0
      %v2275 = vadd.f32 0.0, %v2274
      %v2276 = vpop.f32.mrb[0].mxu0
      %2277 = vmatprep.mubr.f32.mxu0 0.0
      %2278 = vmatmul.mubr.f32.gmra.mrb[0].mxu0 %v2059
      %v2279 = vpop.f32.mrb[0].mxu0
      %v2280 = vadd.f32 0.0, %v2279
      %v2281 = vpop.f32.mrb[0].mxu0
      %2282 = vmatprep.mubr.f32.mxu0 0.0
      %2283 = vmatmul.mubr.f32.gmra.mrb[0].mxu0 %v2061
      %v2284 = vpop.f32.mrb[0].mxu0
      %v2285 = vadd.f32 0.0, %v2284
      %v2286 = vpop.f32.mrb[0].mxu0
      %2287 = vmatprep.mubr.f32.mxu0 0.0
      %2288 = vmatmul.mubr.f32.gmra.mrb[0].mxu0 %v2063
      %v2289 = vpop.f32.mrb[0].mxu0
      %v2290 = vadd.f32 0.0, %v2289
      %v2291 = vpop.f32.mrb[0].mxu0
      %2292 = vmatprep.mubr.f32.mxu0 0.0
      %2293 = vmatmul.mubr.f32.gmra.mrb[0].mxu0 %v2065
      %v2294 = vpop.f32.mrb[0].mxu0
      %v2295 = vadd.f32 0.0, %v2294
      %v2296 = vpop.f32.mrb[0].mxu0
      %2297 = vmatprep.mubr.f32.mxu0 0.0
      %2298 = vmatmul.mubr.f32.gmra.mrb[0].mxu0 %v2067
      %v2299 = vpop.f32.mrb[0].mxu0
      %v2300 = vadd.f32 0.0, %v2299
      %v2301 = vpop.f32.mrb[0].mxu0
      %2302 = vmatprep.mubr.f32.mxu0 0.0
      %2303 = vmatmul.mubr.f32.gmra.mrb[0].mxu0 %v2069
      %v2304 = vpop.f32.mrb[0].mxu0
      %v2305 = vadd.f32 0.0, %v2304
      %v2306 = vpop.f32.mrb[0].mxu0
      %2307 = vmatprep.mubr.f32.mxu0 0.0
      %2308 = vmatmul.mubr.f32.gmra.mrb[0].mxu0 %v2071
      %v2309 = vpop.f32.mrb[0].mxu0
      %v2310 = vadd.f32 0.0, %v2309
      %v2311 = vpop.f32.mrb[0].mxu0
      %2312 = vmatprep.mubr.f32.mxu0 0.0
      %2313 = vmatmul.mubr.f32.gmra.mrb[0].mxu0 %v2073
      %v2314 = vpop.f32.mrb[0].mxu0
      %v2315 = vadd.f32 0.0, %v2314
      %v2316 = vpop.f32.mrb[0].mxu0
      %2317 = vmatprep.mubr.f32.mxu0 0.0
      %2318 = vmatmul.mubr.f32.gmra.mrb[0].mxu0 %v2075
      %v2319 = vpop.f32.mrb[0].mxu0
      %v2320 = vadd.f32 0.0, %v2319
      %v2321 = vpop.f32.mrb[0].mxu0
      %2322 = vmatprep.mubr.f32.mxu0 0.0
      %2323 = vmatmul.mubr.f32.gmra.mrb[0].mxu0 %v2077
      %v2324 = vpop.f32.mrb[0].mxu0
      %v2325 = vadd.f32 0.0, %v2324
      %v2326 = vpop.f32.mrb[0].mxu0
      %2327 = vmatprep.mubr.f32.mxu0 0.0
      %2328 = vmatmul.mubr.f32.gmra.mrb[0].mxu0 %v2079
      %v2329 = vpop.f32.mrb[0].mxu0
      %v2330 = vadd.f32 0.0, %v2329
      %v2331 = vpop.f32.mrb[0].mxu0
      %2332 = vmatprep.mubr.f32.mxu0 0.0
      %2333 = vmatmul.mubr.f32.gmra.mrb[0].mxu0 %v2081
      %v2334 = vpop.f32.mrb[0].mxu0
      %v2335 = vadd.f32 0.0, %v2334
      %v2336 = vpop.f32.mrb[0].mxu0
      %2337 = vmatprep.mubr.f32.mxu0 0.0
      %2338 = vmatmul.mubr.f32.gmra.mrb[0].mxu0 %v2083
      %v2339 = vpop.f32.mrb[0].mxu0
      %v2340 = vadd.f32 0.0, %v2339
      %v2341 = vpop.f32.mrb[0].mxu0
      %2342 = vmatprep.mubr.f32.mxu0 0.0
      %2343 = vmatmul.mubr.f32.gmra.mrb[0].mxu0 %v2085
      %v2344 = vpop.f32.mrb[0].mxu0
      %v2345 = vadd.f32 0.0, %v2344
      %v2346 = vpop.f32.mrb[0].mxu0
      %2347 = vmatprep.mubr.f32.mxu0 0.0
      %2348 = vmatmul.mubr.f32.gmra.mrb[0].mxu0 %v2087
      %v2349 = vpop.f32.mrb[0].mxu0
      %v2350 = vadd.f32 0.0, %v2349
      %v2351 = vpop.f32.mrb[0].mxu0
      %2352 = vmatprep.mubr.f32.mxu0 0.0
      %2353 = vmatmul.mubr.f32.gmra.mrb[0].mxu0 %v2089
      %v2354 = vpop.f32.mrb[0].mxu0
      %v2355 = vadd.f32 0.0, %v2354
      %v2356 = vpop.f32.mrb[0].mxu0
      %2357 = vmatprep.mubr.f32.mxu0 0.0
      %2358 = vmatmul.mubr.f32.gmra.mrb[0].mxu0 %v2091
      %v2359 = vpop.f32.mrb[0].mxu0
      %v2360 = vadd.f32 0.0, %v2359
      %v2361 = vpop.f32.mrb[0].mxu0
      %2362 = vmatprep.mubr.f32.mxu0 0.0
      %2363 = vmatmul.mubr.f32.gmra.mrb[0].mxu0 %v2093
      %v2364 = vpop.f32.mrb[0].mxu0
      %v2365 = vadd.f32 0.0, %v2364
      %v2366 = vpop.f32.mrb[0].mxu0
      %2367 = vmatprep.mubr.f32.mxu0 0.0
      %2368 = vmatmul.mubr.f32.gmra.mrb[0].mxu0 %v2095
      %v2369 = vpop.f32.mrb[0].mxu0
      %v2370 = vadd.f32 0.0, %v2369
      %v2371 = vpop.f32.mrb[0].mxu0
      %2372 = vmatprep.mubr.f32.mxu0 0.0
      %2373 = vmatmul.mubr.f32.gmra.mrb[0].mxu0 %v2097
      %v2374 = vpop.f32.mrb[0].mxu0
      %v2375 = vadd.f32 0.0, %v2374
      %v2376 = vpop.f32.mrb[0].mxu0
      %2377 = vmatprep.mubr.f32.mxu0 0.0
      %2378 = vmatmul.mubr.f32.gmra.mrb[0].mxu0 %v2099
      %v2379 = vpop.f32.mrb[0].mxu0
      %v2380 = vadd.f32 0.0, %v2379
      %v2381 = vpop.f32.mrb[0].mxu0
      %2382 = vmatprep.mubr.f32.mxu0 0.0
      %2383 = vmatmul.mubr.f32.gmra.mrb[0].mxu0 %v2101
      %v2384 = vpop.f32.mrb[0].mxu0
      %v2385 = vadd.f32 0.0, %v2384
      %v2386 = vpop.f32.mrb[0].mxu0
      %2387 = vmatprep.mubr.f32.mxu0 0.0
      %2388 = vmatmul.mubr.f32.gmra.mrb[0].mxu0 %v2103
      %v2389 = vpop.f32.mrb[0].mxu0
      %v2390 = vadd.f32 0.0, %v2389
      %v2391 = vpop.f32.mrb[0].mxu0
      %2392 = vmatprep.mubr.f32.mxu0 0.0
      %2393 = vmatmul.mubr.f32.gmra.mrb[0].mxu0 %v2105
      %v2394 = vpop.f32.mrb[0].mxu0
      %v2395 = vadd.f32 0.0, %v2394
      %v2396 = vpop.f32.mrb[0].mxu0
      %2397 = vmatprep.mubr.f32.mxu0 0.0
      %2398 = vmatmul.mubr.f32.gmra.mrb[0].mxu0 %v2107
      %v2399 = vpop.f32.mrb[0].mxu0
      %v2400 = vadd.f32 0.0, %v2399
      %v2401 = vpop.f32.mrb[0].mxu0
      %2402 = vmatprep.mubr.f32.mxu0 0.0
      %2403 = vmatmul.mubr.f32.gmra.mrb[0].mxu0 %v2109
      %v2404 = vpop.f32.mrb[0].mxu0
      %v2405 = vadd.f32 0.0, %v2404
      %v2406 = vpop.f32.mrb[0].mxu0
      %2407 = vmatprep.mubr.f32.mxu0 0.0
      %2408 = vmatmul.mubr.f32.gmra.mrb[0].mxu0 %v2111
      %v2409 = vpop.f32.mrb[0].mxu0
      %v2410 = vadd.f32 0.0, %v2409
      %v2411 = vpop.f32.mrb[0].mxu0
      %2412 = vmatprep.mubr.f32.mxu0 0.0
      %2413 = vmatmul.mubr.f32.gmra.mrb[0].mxu0 %v2113
      %v2414 = vpop.f32.mrb[0].mxu0
      %v2415 = vadd.f32 0.0, %v2414
      %v2416 = vpop.f32.mrb[0].mxu0
      %2417 = vmatprep.mubr.f32.mxu0 0.0
      %2418 = vmatmul.mubr.f32.gmra.mrb[0].mxu0 %v2115
      %v2419 = vpop.f32.mrb[0].mxu0
      %v2420 = vadd.f32 0.0, %v2419
      %v2421 = vpop.f32.mrb[0].mxu0
      %2422 = vmatprep.mubr.f32.mxu0 0.0
      %2423 = vmatmul.mubr.f32.gmra.mrb[0].mxu0 %v2117
      %v2424 = vpop.f32.mrb[0].mxu0
      %v2425 = vadd.f32 0.0, %v2424
      %v2426 = vpop.f32.mrb[0].mxu0
      %2427 = vdwg.mxu0
      %v2428 = vsel %vm1483, %v1818, 0
      %v2430 = vsel %vm1483, %v1819, 0
      %v2432 = vsel %vm1483, %v1820, 0
      %v2434 = vsel %vm1483, %v1821, 0
      %v2436 = vsel %vm1483, %v1822, 0
      %v2438 = vsel %vm1483, %v1823, 0
      %v2440 = vsel %vm1483, %v1824, 0
      %v2442 = vsel %vm1483, %v1825, 0
      %v2444 = vsel %vm1483, %v1826, 0
      %v2446 = vsel %vm1483, %v1827, 0
      %v2448 = vsel %vm1483, %v1828, 0
      %v2450 = vsel %vm1483, %v1829, 0
      %v2452 = vsel %vm1483, %v1830, 0
      %v2454 = vsel %vm1483, %v1831, 0
      %v2456 = vsel %vm1483, %v1832, 0
      %v2458 = vsel %vm1483, %v1833, 0
      %v2460 = vsel %vm1483, %v1834, 0
      %v2462 = vsel %vm1483, %v1835, 0
      %v2464 = vsel %vm1483, %v1836, 0
      %v2466 = vsel %vm1483, %v1837, 0
      %v2468 = vsel %vm1483, %v1838, 0
      %v2470 = vsel %vm1483, %v1839, 0
      %v2472 = vsel %vm1483, %v1840, 0
      %v2474 = vsel %vm1483, %v1841, 0
      %v2476 = vsel %vm1483, %v1842, 0
      %v2478 = vsel %vm1483, %v1843, 0
      %v2480 = vsel %vm1483, %v1844, 0
      %v2482 = vsel %vm1483, %v1845, 0
      %v2484 = vsel %vm1483, %v1846, 0
      %v2486 = vsel %vm1483, %v1847, 0
      %v2488 = vsel %vm1483, %v1848, 0
      %v2490 = vsel %vm1483, %v1849, 0
      %v2492 = vsel %vm1483, %v1850, 0
      %v2494 = vsel %vm1483, %v1851, 0
      %v2496 = vsel %vm1483, %v1852, 0
      %v2498 = vsel %vm1483, %v1853, 0
      %v2500 = vsel %vm1483, %v1854, 0
      %v2502 = vsel %vm1483, %v1855, 0
      %v2504 = vsel %vm1483, %v1856, 0
      %v2506 = vsel %vm1483, %v1857, 0
      %v2508 = vsel %vm1483, %v1858, 0
      %v2510 = vsel %vm1483, %v1859, 0
      %v2512 = vsel %vm1483, %v1860, 0
      %v2514 = vsel %vm1483, %v1861, 0
      %v2516 = vsel %vm1483, %v1862, 0
      %v2518 = vsel %vm1483, %v1863, 0
      %v2520 = vsel %vm1483, %v1864, 0
      %v2522 = vsel %vm1483, %v1865, 0
      %v2525 = vsel %vm2119, %v1873, 0
      %2527 = vmatprep.subr.mxu0 0.0
      %2528 = vmatpush1.msra.mxu0 %v2525
      %2529 = vmatprep.subr.mxu0 0.0
      %2530 = vmatpush1.msra.mxu0 0.0
      %2531 = vmatprep.subr.mxu0 0.0
      %2532 = vmatpush1.msra.mxu0 0.0
      %2533 = vmatprep.subr.mxu0 0.0
      %2534 = vmatpush1.msra.mxu0 0.0
      %2535 = vmatprep.subr.mxu0 0.0
      %2536 = vmatpush1.msra.mxu0 0.0
      %2537 = vmatprep.subr.mxu0 0.0
      %2538 = vmatpush1.msra.mxu0 0.0
      %2539 = vmatprep.subr.mxu0 0.0
      %2540 = vmatpush1.msra.mxu0 0.0
      %2541 = vmatprep.subr.mxu0 0.0
      %2542 = vmatpush1.msra.mxu0 0.0
      %2543 = vmatprep.subr.mxu0 0.0
      %2544 = vmatpush1.msra.mxu0 0.0
      %2545 = vmatprep.subr.mxu0 0.0
      %2546 = vmatpush1.msra.mxu0 0.0
      %2547 = vmatprep.subr.mxu0 0.0
      %2548 = vmatpush1.msra.mxu0 0.0
      %2549 = vmatprep.subr.mxu0 0.0
      %2550 = vmatpush1.msra.mxu0 0.0
      %2551 = vmatprep.subr.mxu0 0.0
      %2552 = vmatpush1.msra.mxu0 0.0
      %2553 = vmatprep.subr.mxu0 0.0
      %2554 = vmatpush1.msra.mxu0 0.0
      %2555 = vmatprep.subr.mxu0 0.0
      %2556 = vmatpush1.msra.mxu0 0.0
      %2557 = vmatprep.subr.mxu0 0.0
      %2558 = vmatpush1.msra.mxu0 0.0
      %2559 = vmatprep.subr.mxu0 0.0
      %2560 = vmatpush1.msra.mxu0 0.0
      %2561 = vmatprep.subr.mxu0 0.0
      %2562 = vmatpush1.msra.mxu0 0.0
      %2563 = vmatprep.subr.mxu0 0.0
      %2564 = vmatpush1.msra.mxu0 0.0
      %2565 = vmatprep.subr.mxu0 0.0
      %2566 = vmatpush1.msra.mxu0 0.0
      %2567 = vmatprep.subr.mxu0 0.0
      %2568 = vmatpush1.msra.mxu0 0.0
      %2569 = vmatprep.subr.mxu0 0.0
      %2570 = vmatpush1.msra.mxu0 0.0
      %2571 = vmatprep.subr.mxu0 0.0
      %2572 = vmatpush1.msra.mxu0 0.0
      %2573 = vmatprep.subr.mxu0 0.0
      %2574 = vmatpush1.msra.mxu0 0.0
      %2575 = vmatprep.subr.mxu0 0.0
      %2576 = vmatpush1.msra.mxu0 0.0
      %2577 = vmatprep.subr.mxu0 0.0
      %2578 = vmatpush1.msra.mxu0 0.0
      %2579 = vmatprep.subr.mxu0 0.0
      %2580 = vmatpush1.msra.mxu0 0.0
      %2581 = vmatprep.subr.mxu0 0.0
      %2582 = vmatpush1.msra.mxu0 0.0
      %2583 = vmatprep.subr.mxu0 0.0
      %2584 = vmatpush1.msra.mxu0 0.0
      %2585 = vmatprep.subr.mxu0 0.0
      %2586 = vmatpush1.msra.mxu0 0.0
      %2587 = vmatprep.subr.mxu0 0.0
      %2588 = vmatpush1.msra.mxu0 0.0
      %2589 = vmatprep.subr.mxu0 0.0
      %2590 = vmatpush1.msra.mxu0 0.0
      %2591 = vmatprep.mubr.f32.mxu0 0.0
      %2592 = vmatmul.mubr.f32.gmra.mrb[0].mxu0 %v2428
      %v2593 = vpop.f32.mrb[0].mxu0
      %v2594 = vadd.f32 %v2190, %v2593
      %v2595 = vpop.f32.mrb[0].mxu0
      %2596 = vmatprep.mubr.f32.mxu0 0.0
      %2597 = vmatmul.mubr.f32.gmra.mrb[0].mxu0 %v2430
      %v2598 = vpop.f32.mrb[0].mxu0
      %v2599 = vadd.f32 %v2195, %v2598
      %v2600 = vpop.f32.mrb[0].mxu0
      %2601 = vmatprep.mubr.f32.mxu0 0.0
      %2602 = vmatmul.mubr.f32.gmra.mrb[0].mxu0 %v2432
      %v2603 = vpop.f32.mrb[0].mxu0
      %v2604 = vadd.f32 %v2200, %v2603
      %v2605 = vpop.f32.mrb[0].mxu0
      %2606 = vmatprep.mubr.f32.mxu0 0.0
      %2607 = vmatmul.mubr.f32.gmra.mrb[0].mxu0 %v2434
      %v2608 = vpop.f32.mrb[0].mxu0
      %v2609 = vadd.f32 %v2205, %v2608
      %v2610 = vpop.f32.mrb[0].mxu0
      %2611 = vmatprep.mubr.f32.mxu0 0.0
      %2612 = vmatmul.mubr.f32.gmra.mrb[0].mxu0 %v2436
      %v2613 = vpop.f32.mrb[0].mxu0
      %v2614 = vadd.f32 %v2210, %v2613
      %v2615 = vpop.f32.mrb[0].mxu0
      %2616 = vmatprep.mubr.f32.mxu0 0.0
      %2617 = vmatmul.mubr.f32.gmra.mrb[0].mxu0 %v2438
      %v2618 = vpop.f32.mrb[0].mxu0
      %v2619 = vadd.f32 %v2215, %v2618
      %v2620 = vpop.f32.mrb[0].mxu0
      %2621 = vmatprep.mubr.f32.mxu0 0.0
      %2622 = vmatmul.mubr.f32.gmra.mrb[0].mxu0 %v2440
      %v2623 = vpop.f32.mrb[0].mxu0
      %v2624 = vadd.f32 %v2220, %v2623
      %v2625 = vpop.f32.mrb[0].mxu0
      %2626 = vmatprep.mubr.f32.mxu0 0.0
      %2627 = vmatmul.mubr.f32.gmra.mrb[0].mxu0 %v2442
      %v2628 = vpop.f32.mrb[0].mxu0
      %v2629 = vadd.f32 %v2225, %v2628
      %v2630 = vpop.f32.mrb[0].mxu0
      %2631 = vmatprep.mubr.f32.mxu0 0.0
      %2632 = vmatmul.mubr.f32.gmra.mrb[0].mxu0 %v2444
      %v2633 = vpop.f32.mrb[0].mxu0
      %v2634 = vadd.f32 %v2230, %v2633
      %v2635 = vpop.f32.mrb[0].mxu0
      %2636 = vmatprep.mubr.f32.mxu0 0.0
      %2637 = vmatmul.mubr.f32.gmra.mrb[0].mxu0 %v2446
      %v2638 = vpop.f32.mrb[0].mxu0
      %v2639 = vadd.f32 %v2235, %v2638
      %v2640 = vpop.f32.mrb[0].mxu0
      %2641 = vmatprep.mubr.f32.mxu0 0.0
      %2642 = vmatmul.mubr.f32.gmra.mrb[0].mxu0 %v2448
      %v2643 = vpop.f32.mrb[0].mxu0
      %v2644 = vadd.f32 %v2240, %v2643
      %v2645 = vpop.f32.mrb[0].mxu0
      %2646 = vmatprep.mubr.f32.mxu0 0.0
      %2647 = vmatmul.mubr.f32.gmra.mrb[0].mxu0 %v2450
      %v2648 = vpop.f32.mrb[0].mxu0
      %v2649 = vadd.f32 %v2245, %v2648
      %v2650 = vpop.f32.mrb[0].mxu0
      %2651 = vmatprep.mubr.f32.mxu0 0.0
      %2652 = vmatmul.mubr.f32.gmra.mrb[0].mxu0 %v2452
      %v2653 = vpop.f32.mrb[0].mxu0
      %v2654 = vadd.f32 %v2250, %v2653
      %v2655 = vpop.f32.mrb[0].mxu0
      %2656 = vmatprep.mubr.f32.mxu0 0.0
      %2657 = vmatmul.mubr.f32.gmra.mrb[0].mxu0 %v2454
      %v2658 = vpop.f32.mrb[0].mxu0
      %v2659 = vadd.f32 %v2255, %v2658
      %v2660 = vpop.f32.mrb[0].mxu0
      %2661 = vmatprep.mubr.f32.mxu0 0.0
      %2662 = vmatmul.mubr.f32.gmra.mrb[0].mxu0 %v2456
      %v2663 = vpop.f32.mrb[0].mxu0
      %v2664 = vadd.f32 %v2260, %v2663
      %v2665 = vpop.f32.mrb[0].mxu0
      %2666 = vmatprep.mubr.f32.mxu0 0.0
      %2667 = vmatmul.mubr.f32.gmra.mrb[0].mxu0 %v2458
      %v2668 = vpop.f32.mrb[0].mxu0
      %v2669 = vadd.f32 %v2265, %v2668
      %v2670 = vpop.f32.mrb[0].mxu0
      %2671 = vmatprep.mubr.f32.mxu0 0.0
      %2672 = vmatmul.mubr.f32.gmra.mrb[0].mxu0 %v2460
      %v2673 = vpop.f32.mrb[0].mxu0
      %v2674 = vadd.f32 %v2270, %v2673
      %v2675 = vpop.f32.mrb[0].mxu0
      %2676 = vmatprep.mubr.f32.mxu0 0.0
      %2677 = vmatmul.mubr.f32.gmra.mrb[0].mxu0 %v2462
      %v2678 = vpop.f32.mrb[0].mxu0
      %v2679 = vadd.f32 %v2275, %v2678
      %v2680 = vpop.f32.mrb[0].mxu0
      %2681 = vmatprep.mubr.f32.mxu0 0.0
      %2682 = vmatmul.mubr.f32.gmra.mrb[0].mxu0 %v2464
      %v2683 = vpop.f32.mrb[0].mxu0
      %v2684 = vadd.f32 %v2280, %v2683
      %v2685 = vpop.f32.mrb[0].mxu0
      %2686 = vmatprep.mubr.f32.mxu0 0.0
      %2687 = vmatmul.mubr.f32.gmra.mrb[0].mxu0 %v2466
      %v2688 = vpop.f32.mrb[0].mxu0
      %v2689 = vadd.f32 %v2285, %v2688
      %v2690 = vpop.f32.mrb[0].mxu0
      %2691 = vmatprep.mubr.f32.mxu0 0.0
      %2692 = vmatmul.mubr.f32.gmra.mrb[0].mxu0 %v2468
      %v2693 = vpop.f32.mrb[0].mxu0
      %v2694 = vadd.f32 %v2290, %v2693
      %v2695 = vpop.f32.mrb[0].mxu0
      %2696 = vmatprep.mubr.f32.mxu0 0.0
      %2697 = vmatmul.mubr.f32.gmra.mrb[0].mxu0 %v2470
      %v2698 = vpop.f32.mrb[0].mxu0
      %v2699 = vadd.f32 %v2295, %v2698
      %v2700 = vpop.f32.mrb[0].mxu0
      %2701 = vmatprep.mubr.f32.mxu0 0.0
      %2702 = vmatmul.mubr.f32.gmra.mrb[0].mxu0 %v2472
      %v2703 = vpop.f32.mrb[0].mxu0
      %v2704 = vadd.f32 %v2300, %v2703
      %v2705 = vpop.f32.mrb[0].mxu0
      %2706 = vmatprep.mubr.f32.mxu0 0.0
      %2707 = vmatmul.mubr.f32.gmra.mrb[0].mxu0 %v2474
      %v2708 = vpop.f32.mrb[0].mxu0
      %v2709 = vadd.f32 %v2305, %v2708
      %v2710 = vpop.f32.mrb[0].mxu0
      %2711 = vmatprep.mubr.f32.mxu0 0.0
      %2712 = vmatmul.mubr.f32.gmra.mrb[0].mxu0 %v2476
      %v2713 = vpop.f32.mrb[0].mxu0
      %v2714 = vadd.f32 %v2310, %v2713
      %v2715 = vpop.f32.mrb[0].mxu0
      %2716 = vmatprep.mubr.f32.mxu0 0.0
      %2717 = vmatmul.mubr.f32.gmra.mrb[0].mxu0 %v2478
      %v2718 = vpop.f32.mrb[0].mxu0
      %v2719 = vadd.f32 %v2315, %v2718
      %v2720 = vpop.f32.mrb[0].mxu0
      %2721 = vmatprep.mubr.f32.mxu0 0.0
      %2722 = vmatmul.mubr.f32.gmra.mrb[0].mxu0 %v2480
      %v2723 = vpop.f32.mrb[0].mxu0
      %v2724 = vadd.f32 %v2320, %v2723
      %v2725 = vpop.f32.mrb[0].mxu0
      %2726 = vmatprep.mubr.f32.mxu0 0.0
      %2727 = vmatmul.mubr.f32.gmra.mrb[0].mxu0 %v2482
      %v2728 = vpop.f32.mrb[0].mxu0
      %v2729 = vadd.f32 %v2325, %v2728
      %v2730 = vpop.f32.mrb[0].mxu0
      %2731 = vmatprep.mubr.f32.mxu0 0.0
      %2732 = vmatmul.mubr.f32.gmra.mrb[0].mxu0 %v2484
      %v2733 = vpop.f32.mrb[0].mxu0
      %v2734 = vadd.f32 %v2330, %v2733
      %v2735 = vpop.f32.mrb[0].mxu0
      %2736 = vmatprep.mubr.f32.mxu0 0.0
      %2737 = vmatmul.mubr.f32.gmra.mrb[0].mxu0 %v2486
      %v2738 = vpop.f32.mrb[0].mxu0
      %v2739 = vadd.f32 %v2335, %v2738
      %v2740 = vpop.f32.mrb[0].mxu0
      %2741 = vmatprep.mubr.f32.mxu0 0.0
      %2742 = vmatmul.mubr.f32.gmra.mrb[0].mxu0 %v2488
      %v2743 = vpop.f32.mrb[0].mxu0
      %v2744 = vadd.f32 %v2340, %v2743
      %v2745 = vpop.f32.mrb[0].mxu0
      %2746 = vmatprep.mubr.f32.mxu0 0.0
      %2747 = vmatmul.mubr.f32.gmra.mrb[0].mxu0 %v2490
      %v2748 = vpop.f32.mrb[0].mxu0
      %v2749 = vadd.f32 %v2345, %v2748
      %v2750 = vpop.f32.mrb[0].mxu0
      %2751 = vmatprep.mubr.f32.mxu0 0.0
      %2752 = vmatmul.mubr.f32.gmra.mrb[0].mxu0 %v2492
      %v2753 = vpop.f32.mrb[0].mxu0
      %v2754 = vadd.f32 %v2350, %v2753
      %v2755 = vpop.f32.mrb[0].mxu0
      %2756 = vmatprep.mubr.f32.mxu0 0.0
      %2757 = vmatmul.mubr.f32.gmra.mrb[0].mxu0 %v2494
      %v2758 = vpop.f32.mrb[0].mxu0
      %v2759 = vadd.f32 %v2355, %v2758
      %v2760 = vpop.f32.mrb[0].mxu0
      %2761 = vmatprep.mubr.f32.mxu0 0.0
      %2762 = vmatmul.mubr.f32.gmra.mrb[0].mxu0 %v2496
      %v2763 = vpop.f32.mrb[0].mxu0
      %v2764 = vadd.f32 %v2360, %v2763
      %v2765 = vpop.f32.mrb[0].mxu0
      %2766 = vmatprep.mubr.f32.mxu0 0.0
      %2767 = vmatmul.mubr.f32.gmra.mrb[0].mxu0 %v2498
      %v2768 = vpop.f32.mrb[0].mxu0
      %v2769 = vadd.f32 %v2365, %v2768
      %v2770 = vpop.f32.mrb[0].mxu0
      %2771 = vmatprep.mubr.f32.mxu0 0.0
      %2772 = vmatmul.mubr.f32.gmra.mrb[0].mxu0 %v2500
      %v2773 = vpop.f32.mrb[0].mxu0
      %v2774 = vadd.f32 %v2370, %v2773
      %v2775 = vpop.f32.mrb[0].mxu0
      %2776 = vmatprep.mubr.f32.mxu0 0.0
      %2777 = vmatmul.mubr.f32.gmra.mrb[0].mxu0 %v2502
      %v2778 = vpop.f32.mrb[0].mxu0
      %v2779 = vadd.f32 %v2375, %v2778
      %v2780 = vpop.f32.mrb[0].mxu0
      %2781 = vmatprep.mubr.f32.mxu0 0.0
      %2782 = vmatmul.mubr.f32.gmra.mrb[0].mxu0 %v2504
      %v2783 = vpop.f32.mrb[0].mxu0
      %v2784 = vadd.f32 %v2380, %v2783
      %v2785 = vpop.f32.mrb[0].mxu0
      %2786 = vmatprep.mubr.f32.mxu0 0.0
      %2787 = vmatmul.mubr.f32.gmra.mrb[0].mxu0 %v2506
      %v2788 = vpop.f32.mrb[0].mxu0
      %v2789 = vadd.f32 %v2385, %v2788
      %v2790 = vpop.f32.mrb[0].mxu0
      %2791 = vmatprep.mubr.f32.mxu0 0.0
      %2792 = vmatmul.mubr.f32.gmra.mrb[0].mxu0 %v2508
      %v2793 = vpop.f32.mrb[0].mxu0
      %v2794 = vadd.f32 %v2390, %v2793
      %v2795 = vpop.f32.mrb[0].mxu0
      %2796 = vmatprep.mubr.f32.mxu0 0.0
      %2797 = vmatmul.mubr.f32.gmra.mrb[0].mxu0 %v2510
      %v2798 = vpop.f32.mrb[0].mxu0
      %v2799 = vadd.f32 %v2395, %v2798
      %v2800 = vpop.f32.mrb[0].mxu0
      %2801 = vmatprep.mubr.f32.mxu0 0.0
      %2802 = vmatmul.mubr.f32.gmra.mrb[0].mxu0 %v2512
      %v2803 = vpop.f32.mrb[0].mxu0
      %v2804 = vadd.f32 %v2400, %v2803
      %v2805 = vpop.f32.mrb[0].mxu0
      %2806 = vmatprep.mubr.f32.mxu0 0.0
      %2807 = vmatmul.mubr.f32.gmra.mrb[0].mxu0 %v2514
      %v2808 = vpop.f32.mrb[0].mxu0
      %v2809 = vadd.f32 %v2405, %v2808
      %v2810 = vpop.f32.mrb[0].mxu0
      %2811 = vmatprep.mubr.f32.mxu0 0.0
      %2812 = vmatmul.mubr.f32.gmra.mrb[0].mxu0 %v2516
      %v2813 = vpop.f32.mrb[0].mxu0
      %v2814 = vadd.f32 %v2410, %v2813
      %v2815 = vpop.f32.mrb[0].mxu0
      %2816 = vmatprep.mubr.f32.mxu0 0.0
      %2817 = vmatmul.mubr.f32.gmra.mrb[0].mxu0 %v2518
      %v2818 = vpop.f32.mrb[0].mxu0
      %v2819 = vadd.f32 %v2415, %v2818
      %v2820 = vpop.f32.mrb[0].mxu0
      %2821 = vmatprep.mubr.f32.mxu0 0.0
      %2822 = vmatmul.mubr.f32.gmra.mrb[0].mxu0 %v2520
      %v2823 = vpop.f32.mrb[0].mxu0
      %v2824 = vadd.f32 %v2420, %v2823
      %v2825 = vpop.f32.mrb[0].mxu0
      %2826 = vmatprep.mubr.f32.mxu0 0.0
      %2827 = vmatmul.mubr.f32.gmra.mrb[0].mxu0 %v2522
      %v2828 = vpop.f32.mrb[0].mxu0
      %v2829 = vadd.f32 %v2425, %v2828
      %v2830 = vpop.f32.mrb[0].mxu0
      %2831 = vdwg.mxu0
      %s2832 = scalar_lea.vmem %s6, 8
      %v2833 = vld [vmem:[%s2832] sm:$0xf]
      %vm2834 = vcmask 1045504
      %v2835 = vrot.slane %v1818, 2
      %v2836 = vrot.slane %v1819, 2
      %v2837 = vsel %vm2834, %v2835, %v2836
      %v2838 = vrot.slane %v1820, 2
      %v2839 = vsel %vm2834, %v2836, %v2838
      %v2840 = vrot.slane %v1821, 2
      %v2841 = vsel %vm2834, %v2838, %v2840
      %v2842 = vrot.slane %v1822, 2
      %v2843 = vsel %vm2834, %v2840, %v2842
      %v2844 = vrot.slane %v1823, 2
      %v2845 = vsel %vm2834, %v2842, %v2844
      %v2846 = vrot.slane %v1824, 2
      %v2847 = vsel %vm2834, %v2844, %v2846
      %v2848 = vrot.slane %v1825, 2
      %v2849 = vsel %vm2834, %v2846, %v2848
      %v2850 = vrot.slane %v1826, 2
      %v2851 = vsel %vm2834, %v2848, %v2850
      %v2852 = vrot.slane %v1827, 2
      %v2853 = vsel %vm2834, %v2850, %v2852
      %v2854 = vrot.slane %v1828, 2
      %v2855 = vsel %vm2834, %v2852, %v2854
      %v2856 = vrot.slane %v1829, 2
      %v2857 = vsel %vm2834, %v2854, %v2856
      %v2858 = vrot.slane %v1830, 2
      %v2859 = vsel %vm2834, %v2856, %v2858
      %v2860 = vrot.slane %v1831, 2
      %v2861 = vsel %vm2834, %v2858, %v2860
      %v2862 = vrot.slane %v1832, 2
      %v2863 = vsel %vm2834, %v2860, %v2862
      %v2864 = vrot.slane %v1833, 2
      %v2865 = vsel %vm2834, %v2862, %v2864
      %v2866 = vrot.slane %v1834, 2
      %v2867 = vsel %vm2834, %v2864, %v2866
      %v2868 = vrot.slane %v1835, 2
      %v2869 = vsel %vm2834, %v2866, %v2868
      %v2870 = vrot.slane %v1836, 2
      %v2871 = vsel %vm2834, %v2868, %v2870
      %v2872 = vrot.slane %v1837, 2
      %v2873 = vsel %vm2834, %v2870, %v2872
      %v2874 = vrot.slane %v1838, 2
      %v2875 = vsel %vm2834, %v2872, %v2874
      %v2876 = vrot.slane %v1839, 2
      %v2877 = vsel %vm2834, %v2874, %v2876
      %v2878 = vrot.slane %v1840, 2
      %v2879 = vsel %vm2834, %v2876, %v2878
      %v2880 = vrot.slane %v1841, 2
      %v2881 = vsel %vm2834, %v2878, %v2880
      %v2882 = vrot.slane %v1842, 2
      %v2883 = vsel %vm2834, %v2880, %v2882
      %v2884 = vrot.slane %v1843, 2
      %v2885 = vsel %vm2834, %v2882, %v2884
      %v2886 = vrot.slane %v1844, 2
      %v2887 = vsel %vm2834, %v2884, %v2886
      %v2888 = vrot.slane %v1845, 2
      %v2889 = vsel %vm2834, %v2886, %v2888
      %v2890 = vrot.slane %v1846, 2
      %v2891 = vsel %vm2834, %v2888, %v2890
      %v2892 = vrot.slane %v1847, 2
      %v2893 = vsel %vm2834, %v2890, %v2892
      %v2894 = vrot.slane %v1848, 2
      %v2895 = vsel %vm2834, %v2892, %v2894
      %v2896 = vrot.slane %v1849, 2
      %v2897 = vsel %vm2834, %v2894, %v2896
      %v2898 = vrot.slane %v1850, 2
      %v2899 = vsel %vm2834, %v2896, %v2898
      %v2900 = vrot.slane %v1851, 2
      %v2901 = vsel %vm2834, %v2898, %v2900
      %v2902 = vrot.slane %v1852, 2
      %v2903 = vsel %vm2834, %v2900, %v2902
      %v2904 = vrot.slane %v1853, 2
      %v2905 = vsel %vm2834, %v2902, %v2904
      %v2906 = vrot.slane %v1854, 2
      %v2907 = vsel %vm2834, %v2904, %v2906
      %v2908 = vrot.slane %v1855, 2
      %v2909 = vsel %vm2834, %v2906, %v2908
      %v2910 = vrot.slane %v1856, 2
      %v2911 = vsel %vm2834, %v2908, %v2910
      %v2912 = vrot.slane %v1857, 2
      %v2913 = vsel %vm2834, %v2910, %v2912
      %v2914 = vrot.slane %v1858, 2
      %v2915 = vsel %vm2834, %v2912, %v2914
      %v2916 = vrot.slane %v1859, 2
      %v2917 = vsel %vm2834, %v2914, %v2916
      %v2918 = vrot.slane %v1860, 2
      %v2919 = vsel %vm2834, %v2916, %v2918
      %v2920 = vrot.slane %v1861, 2
      %v2921 = vsel %vm2834, %v2918, %v2920
      %v2922 = vrot.slane %v1862, 2
      %v2923 = vsel %vm2834, %v2920, %v2922
      %v2924 = vrot.slane %v1863, 2
      %v2925 = vsel %vm2834, %v2922, %v2924
      %v2926 = vrot.slane %v1864, 2
      %v2927 = vsel %vm2834, %v2924, %v2926
      %v2928 = vrot.slane %v1865, 2
      %v2929 = vsel %vm2834, %v2926, %v2928
      %v2930 = vrot.slane %v1866, 2
      %v2931 = vsel %vm2834, %v2928, %v2930
      %v2932 = vsel %vm1483, %v2837, 0
      %v2934 = vsel %vm1483, %v2839, 0
      %v2936 = vsel %vm1483, %v2841, 0
      %v2938 = vsel %vm1483, %v2843, 0
      %v2940 = vsel %vm1483, %v2845, 0
      %v2942 = vsel %vm1483, %v2847, 0
      %v2944 = vsel %vm1483, %v2849, 0
      %v2946 = vsel %vm1483, %v2851, 0
      %v2948 = vsel %vm1483, %v2853, 0
      %v2950 = vsel %vm1483, %v2855, 0
      %v2952 = vsel %vm1483, %v2857, 0
      %v2954 = vsel %vm1483, %v2859, 0
      %v2956 = vsel %vm1483, %v2861, 0
      %v2958 = vsel %vm1483, %v2863, 0
      %v2960 = vsel %vm1483, %v2865, 0
      %v2962 = vsel %vm1483, %v2867, 0
      %v2964 = vsel %vm1483, %v2869, 0
      %v2966 = vsel %vm1483, %v2871, 0
      %v2968 = vsel %vm1483, %v2873, 0
      %v2970 = vsel %vm1483, %v2875, 0
      %v2972 = vsel %vm1483, %v2877, 0
      %v2974 = vsel %vm1483, %v2879, 0
      %v2976 = vsel %vm1483, %v2881, 0
      %v2978 = vsel %vm1483, %v2883, 0
      %v2980 = vsel %vm1483, %v2885, 0
      %v2982 = vsel %vm1483, %v2887, 0
      %v2984 = vsel %vm1483, %v2889, 0
      %v2986 = vsel %vm1483, %v2891, 0
      %v2988 = vsel %vm1483, %v2893, 0
      %v2990 = vsel %vm1483, %v2895, 0
      %v2992 = vsel %vm1483, %v2897, 0
      %v2994 = vsel %vm1483, %v2899, 0
      %v2996 = vsel %vm1483, %v2901, 0
      %v2998 = vsel %vm1483, %v2903, 0
      %v3000 = vsel %vm1483, %v2905, 0
      %v3002 = vsel %vm1483, %v2907, 0
      %v3004 = vsel %vm1483, %v2909, 0
      %v3006 = vsel %vm1483, %v2911, 0
      %v3008 = vsel %vm1483, %v2913, 0
      %v3010 = vsel %vm1483, %v2915, 0
      %v3012 = vsel %vm1483, %v2917, 0
      %v3014 = vsel %vm1483, %v2919, 0
      %v3016 = vsel %vm1483, %v2921, 0
      %v3018 = vsel %vm1483, %v2923, 0
      %v3020 = vsel %vm1483, %v2925, 0
      %v3022 = vsel %vm1483, %v2927, 0
      %v3024 = vsel %vm1483, %v2929, 0
      %v3026 = vsel %vm1483, %v2931, 0
      %v3029 = vsel %vm2119, %v2833, 0
      %3031 = vmatprep.subr.mxu0 0.0
      %3032 = vmatpush1.msra.mxu0 %v3029
      %3033 = vmatprep.subr.mxu0 0.0
      %3034 = vmatpush1.msra.mxu0 0.0
      %3035 = vmatprep.subr.mxu0 0.0
      %3036 = vmatpush1.msra.mxu0 0.0
      %3037 = vmatprep.subr.mxu0 0.0
      %3038 = vmatpush1.msra.mxu0 0.0
      %3039 = vmatprep.subr.mxu0 0.0
      %3040 = vmatpush1.msra.mxu0 0.0
      %3041 = vmatprep.subr.mxu0 0.0
      %3042 = vmatpush1.msra.mxu0 0.0
      %3043 = vmatprep.subr.mxu0 0.0
      %3044 = vmatpush1.msra.mxu0 0.0
      %3045 = vmatprep.subr.mxu0 0.0
      %3046 = vmatpush1.msra.mxu0 0.0
      %3047 = vmatprep.subr.mxu0 0.0
      %3048 = vmatpush1.msra.mxu0 0.0
      %3049 = vmatprep.subr.mxu0 0.0
      %3050 = vmatpush1.msra.mxu0 0.0
      %3051 = vmatprep.subr.mxu0 0.0
      %3052 = vmatpush1.msra.mxu0 0.0
      %3053 = vmatprep.subr.mxu0 0.0
      %3054 = vmatpush1.msra.mxu0 0.0
      %3055 = vmatprep.subr.mxu0 0.0
      %3056 = vmatpush1.msra.mxu0 0.0
      %3057 = vmatprep.subr.mxu0 0.0
      %3058 = vmatpush1.msra.mxu0 0.0
      %3059 = vmatprep.subr.mxu0 0.0
      %3060 = vmatpush1.msra.mxu0 0.0
      %3061 = vmatprep.subr.mxu0 0.0
      %3062 = vmatpush1.msra.mxu0 0.0
      %3063 = vmatprep.subr.mxu0 0.0
      %3064 = vmatpush1.msra.mxu0 0.0
      %3065 = vmatprep.subr.mxu0 0.0
      %3066 = vmatpush1.msra.mxu0 0.0
      %3067 = vmatprep.subr.mxu0 0.0
      %3068 = vmatpush1.msra.mxu0 0.0
      %3069 = vmatprep.subr.mxu0 0.0
      %3070 = vmatpush1.msra.mxu0 0.0
      %3071 = vmatprep.subr.mxu0 0.0
      %3072 = vmatpush1.msra.mxu0 0.0
      %3073 = vmatprep.subr.mxu0 0.0
      %3074 = vmatpush1.msra.mxu0 0.0
      %3075 = vmatprep.subr.mxu0 0.0
      %3076 = vmatpush1.msra.mxu0 0.0
      %3077 = vmatprep.subr.mxu0 0.0
      %3078 = vmatpush1.msra.mxu0 0.0
      %3079 = vmatprep.subr.mxu0 0.0
      %3080 = vmatpush1.msra.mxu0 0.0
      %3081 = vmatprep.subr.mxu0 0.0
      %3082 = vmatpush1.msra.mxu0 0.0
      %3083 = vmatprep.subr.mxu0 0.0
      %3084 = vmatpush1.msra.mxu0 0.0
      %3085 = vmatprep.subr.mxu0 0.0
      %3086 = vmatpush1.msra.mxu0 0.0
      %3087 = vmatprep.subr.mxu0 0.0
      %3088 = vmatpush1.msra.mxu0 0.0
      %3089 = vmatprep.subr.mxu0 0.0
      %3090 = vmatpush1.msra.mxu0 0.0
      %3091 = vmatprep.subr.mxu0 0.0
      %3092 = vmatpush1.msra.mxu0 0.0
      %3093 = vmatprep.subr.mxu0 0.0
      %3094 = vmatpush1.msra.mxu0 0.0
      %3095 = vmatprep.mubr.f32.mxu0 0.0
      %3096 = vmatmul.mubr.f32.gmra.mrb[0].mxu0 %v2932
      %v3097 = vpop.f32.mrb[0].mxu0
      %v3098 = vadd.f32 0.0, %v3097
      %v3099 = vpop.f32.mrb[0].mxu0
      %3100 = vmatprep.mubr.f32.mxu0 0.0
      %3101 = vmatmul.mubr.f32.gmra.mrb[0].mxu0 %v2934
      %v3102 = vpop.f32.mrb[0].mxu0
      %v3103 = vadd.f32 0.0, %v3102
      %v3104 = vpop.f32.mrb[0].mxu0
      %3105 = vmatprep.mubr.f32.mxu0 0.0
      %3106 = vmatmul.mubr.f32.gmra.mrb[0].mxu0 %v2936
      %v3107 = vpop.f32.mrb[0].mxu0
      %v3108 = vadd.f32 0.0, %v3107
      %v3109 = vpop.f32.mrb[0].mxu0
      %3110 = vmatprep.mubr.f32.mxu0 0.0
      %3111 = vmatmul.mubr.f32.gmra.mrb[0].mxu0 %v2938
      %v3112 = vpop.f32.mrb[0].mxu0
      %v3113 = vadd.f32 0.0, %v3112
      %v3114 = vpop.f32.mrb[0].mxu0
      %3115 = vmatprep.mubr.f32.mxu0 0.0
      %3116 = vmatmul.mubr.f32.gmra.mrb[0].mxu0 %v2940
      %v3117 = vpop.f32.mrb[0].mxu0
      %v3118 = vadd.f32 0.0, %v3117
      %v3119 = vpop.f32.mrb[0].mxu0
      %3120 = vmatprep.mubr.f32.mxu0 0.0
      %3121 = vmatmul.mubr.f32.gmra.mrb[0].mxu0 %v2942
      %v3122 = vpop.f32.mrb[0].mxu0
      %v3123 = vadd.f32 0.0, %v3122
      %v3124 = vpop.f32.mrb[0].mxu0
      %3125 = vmatprep.mubr.f32.mxu0 0.0
      %3126 = vmatmul.mubr.f32.gmra.mrb[0].mxu0 %v2944
      %v3127 = vpop.f32.mrb[0].mxu0
      %v3128 = vadd.f32 0.0, %v3127
      %v3129 = vpop.f32.mrb[0].mxu0
      %3130 = vmatprep.mubr.f32.mxu0 0.0
      %3131 = vmatmul.mubr.f32.gmra.mrb[0].mxu0 %v2946
      %v3132 = vpop.f32.mrb[0].mxu0
      %v3133 = vadd.f32 0.0, %v3132
      %v3134 = vpop.f32.mrb[0].mxu0
      %3135 = vmatprep.mubr.f32.mxu0 0.0
      %3136 = vmatmul.mubr.f32.gmra.mrb[0].mxu0 %v2948
      %v3137 = vpop.f32.mrb[0].mxu0
      %v3138 = vadd.f32 0.0, %v3137
      %v3139 = vpop.f32.mrb[0].mxu0
      %3140 = vmatprep.mubr.f32.mxu0 0.0
      %3141 = vmatmul.mubr.f32.gmra.mrb[0].mxu0 %v2950
      %v3142 = vpop.f32.mrb[0].mxu0
      %v3143 = vadd.f32 0.0, %v3142
      %v3144 = vpop.f32.mrb[0].mxu0
      %3145 = vmatprep.mubr.f32.mxu0 0.0
      %3146 = vmatmul.mubr.f32.gmra.mrb[0].mxu0 %v2952
      %v3147 = vpop.f32.mrb[0].mxu0
      %v3148 = vadd.f32 0.0, %v3147
      %v3149 = vpop.f32.mrb[0].mxu0
      %3150 = vmatprep.mubr.f32.mxu0 0.0
      %3151 = vmatmul.mubr.f32.gmra.mrb[0].mxu0 %v2954
      %v3152 = vpop.f32.mrb[0].mxu0
      %v3153 = vadd.f32 0.0, %v3152
      %v3154 = vpop.f32.mrb[0].mxu0
      %3155 = vmatprep.mubr.f32.mxu0 0.0
      %3156 = vmatmul.mubr.f32.gmra.mrb[0].mxu0 %v2956
      %v3157 = vpop.f32.mrb[0].mxu0
      %v3158 = vadd.f32 0.0, %v3157
      %v3159 = vpop.f32.mrb[0].mxu0
      %3160 = vmatprep.mubr.f32.mxu0 0.0
      %3161 = vmatmul.mubr.f32.gmra.mrb[0].mxu0 %v2958
      %v3162 = vpop.f32.mrb[0].mxu0
      %v3163 = vadd.f32 0.0, %v3162
      %v3164 = vpop.f32.mrb[0].mxu0
      %3165 = vmatprep.mubr.f32.mxu0 0.0
      %3166 = vmatmul.mubr.f32.gmra.mrb[0].mxu0 %v2960
      %v3167 = vpop.f32.mrb[0].mxu0
      %v3168 = vadd.f32 0.0, %v3167
      %v3169 = vpop.f32.mrb[0].mxu0
      %3170 = vmatprep.mubr.f32.mxu0 0.0
      %3171 = vmatmul.mubr.f32.gmra.mrb[0].mxu0 %v2962
      %v3172 = vpop.f32.mrb[0].mxu0
      %v3173 = vadd.f32 0.0, %v3172
      %v3174 = vpop.f32.mrb[0].mxu0
      %3175 = vmatprep.mubr.f32.mxu0 0.0
      %3176 = vmatmul.mubr.f32.gmra.mrb[0].mxu0 %v2964
      %v3177 = vpop.f32.mrb[0].mxu0
      %v3178 = vadd.f32 0.0, %v3177
      %v3179 = vpop.f32.mrb[0].mxu0
      %3180 = vmatprep.mubr.f32.mxu0 0.0
      %3181 = vmatmul.mubr.f32.gmra.mrb[0].mxu0 %v2966
      %v3182 = vpop.f32.mrb[0].mxu0
      %v3183 = vadd.f32 0.0, %v3182
      %v3184 = vpop.f32.mrb[0].mxu0
      %3185 = vmatprep.mubr.f32.mxu0 0.0
      %3186 = vmatmul.mubr.f32.gmra.mrb[0].mxu0 %v2968
      %v3187 = vpop.f32.mrb[0].mxu0
      %v3188 = vadd.f32 0.0, %v3187
      %v3189 = vpop.f32.mrb[0].mxu0
      %3190 = vmatprep.mubr.f32.mxu0 0.0
      %3191 = vmatmul.mubr.f32.gmra.mrb[0].mxu0 %v2970
      %v3192 = vpop.f32.mrb[0].mxu0
      %v3193 = vadd.f32 0.0, %v3192
      %v3194 = vpop.f32.mrb[0].mxu0
      %3195 = vmatprep.mubr.f32.mxu0 0.0
      %3196 = vmatmul.mubr.f32.gmra.mrb[0].mxu0 %v2972
      %v3197 = vpop.f32.mrb[0].mxu0
      %v3198 = vadd.f32 0.0, %v3197
      %v3199 = vpop.f32.mrb[0].mxu0
      %3200 = vmatprep.mubr.f32.mxu0 0.0
      %3201 = vmatmul.mubr.f32.gmra.mrb[0].mxu0 %v2974
      %v3202 = vpop.f32.mrb[0].mxu0
      %v3203 = vadd.f32 0.0, %v3202
      %v3204 = vpop.f32.mrb[0].mxu0
      %3205 = vmatprep.mubr.f32.mxu0 0.0
      %3206 = vmatmul.mubr.f32.gmra.mrb[0].mxu0 %v2976
      %v3207 = vpop.f32.mrb[0].mxu0
      %v3208 = vadd.f32 0.0, %v3207
      %v3209 = vpop.f32.mrb[0].mxu0
      %3210 = vmatprep.mubr.f32.mxu0 0.0
      %3211 = vmatmul.mubr.f32.gmra.mrb[0].mxu0 %v2978
      %v3212 = vpop.f32.mrb[0].mxu0
      %v3213 = vadd.f32 0.0, %v3212
      %v3214 = vpop.f32.mrb[0].mxu0
      %3215 = vmatprep.mubr.f32.mxu0 0.0
      %3216 = vmatmul.mubr.f32.gmra.mrb[0].mxu0 %v2980
      %v3217 = vpop.f32.mrb[0].mxu0
      %v3218 = vadd.f32 0.0, %v3217
      %v3219 = vpop.f32.mrb[0].mxu0
      %3220 = vmatprep.mubr.f32.mxu0 0.0
      %3221 = vmatmul.mubr.f32.gmra.mrb[0].mxu0 %v2982
      %v3222 = vpop.f32.mrb[0].mxu0
      %v3223 = vadd.f32 0.0, %v3222
      %v3224 = vpop.f32.mrb[0].mxu0
      %3225 = vmatprep.mubr.f32.mxu0 0.0
      %3226 = vmatmul.mubr.f32.gmra.mrb[0].mxu0 %v2984
      %v3227 = vpop.f32.mrb[0].mxu0
      %v3228 = vadd.f32 0.0, %v3227
      %v3229 = vpop.f32.mrb[0].mxu0
      %3230 = vmatprep.mubr.f32.mxu0 0.0
      %3231 = vmatmul.mubr.f32.gmra.mrb[0].mxu0 %v2986
      %v3232 = vpop.f32.mrb[0].mxu0
      %v3233 = vadd.f32 0.0, %v3232
      %v3234 = vpop.f32.mrb[0].mxu0
      %3235 = vmatprep.mubr.f32.mxu0 0.0
      %3236 = vmatmul.mubr.f32.gmra.mrb[0].mxu0 %v2988
      %v3237 = vpop.f32.mrb[0].mxu0
      %v3238 = vadd.f32 0.0, %v3237
      %v3239 = vpop.f32.mrb[0].mxu0
      %3240 = vmatprep.mubr.f32.mxu0 0.0
      %3241 = vmatmul.mubr.f32.gmra.mrb[0].mxu0 %v2990
      %v3242 = vpop.f32.mrb[0].mxu0
      %v3243 = vadd.f32 0.0, %v3242
      %v3244 = vpop.f32.mrb[0].mxu0
      %3245 = vmatprep.mubr.f32.mxu0 0.0
      %3246 = vmatmul.mubr.f32.gmra.mrb[0].mxu0 %v2992
      %v3247 = vpop.f32.mrb[0].mxu0
      %v3248 = vadd.f32 0.0, %v3247
      %v3249 = vpop.f32.mrb[0].mxu0
      %3250 = vmatprep.mubr.f32.mxu0 0.0
      %3251 = vmatmul.mubr.f32.gmra.mrb[0].mxu0 %v2994
      %v3252 = vpop.f32.mrb[0].mxu0
      %v3253 = vadd.f32 0.0, %v3252
      %v3254 = vpop.f32.mrb[0].mxu0
      %3255 = vmatprep.mubr.f32.mxu0 0.0
      %3256 = vmatmul.mubr.f32.gmra.mrb[0].mxu0 %v2996
      %v3257 = vpop.f32.mrb[0].mxu0
      %v3258 = vadd.f32 0.0, %v3257
      %v3259 = vpop.f32.mrb[0].mxu0
      %3260 = vmatprep.mubr.f32.mxu0 0.0
      %3261 = vmatmul.mubr.f32.gmra.mrb[0].mxu0 %v2998
      %v3262 = vpop.f32.mrb[0].mxu0
      %v3263 = vadd.f32 0.0, %v3262
      %v3264 = vpop.f32.mrb[0].mxu0
      %3265 = vmatprep.mubr.f32.mxu0 0.0
      %3266 = vmatmul.mubr.f32.gmra.mrb[0].mxu0 %v3000
      %v3267 = vpop.f32.mrb[0].mxu0
      %v3268 = vadd.f32 0.0, %v3267
      %v3269 = vpop.f32.mrb[0].mxu0
      %3270 = vmatprep.mubr.f32.mxu0 0.0
      %3271 = vmatmul.mubr.f32.gmra.mrb[0].mxu0 %v3002
      %v3272 = vpop.f32.mrb[0].mxu0
      %v3273 = vadd.f32 0.0, %v3272
      %v3274 = vpop.f32.mrb[0].mxu0
      %3275 = vmatprep.mubr.f32.mxu0 0.0
      %3276 = vmatmul.mubr.f32.gmra.mrb[0].mxu0 %v3004
      %v3277 = vpop.f32.mrb[0].mxu0
      %v3278 = vadd.f32 0.0, %v3277
      %v3279 = vpop.f32.mrb[0].mxu0
      %3280 = vmatprep.mubr.f32.mxu0 0.0
      %3281 = vmatmul.mubr.f32.gmra.mrb[0].mxu0 %v3006
      %v3282 = vpop.f32.mrb[0].mxu0
      %v3283 = vadd.f32 0.0, %v3282
      %v3284 = vpop.f32.mrb[0].mxu0
      %3285 = vmatprep.mubr.f32.mxu0 0.0
      %3286 = vmatmul.mubr.f32.gmra.mrb[0].mxu0 %v3008
      %v3287 = vpop.f32.mrb[0].mxu0
      %v3288 = vadd.f32 0.0, %v3287
      %v3289 = vpop.f32.mrb[0].mxu0
      %3290 = vmatprep.mubr.f32.mxu0 0.0
      %3291 = vmatmul.mubr.f32.gmra.mrb[0].mxu0 %v3010
      %v3292 = vpop.f32.mrb[0].mxu0
      %v3293 = vadd.f32 0.0, %v3292
      %v3294 = vpop.f32.mrb[0].mxu0
      %3295 = vmatprep.mubr.f32.mxu0 0.0
      %3296 = vmatmul.mubr.f32.gmra.mrb[0].mxu0 %v3012
      %v3297 = vpop.f32.mrb[0].mxu0
      %v3298 = vadd.f32 0.0, %v3297
      %v3299 = vpop.f32.mrb[0].mxu0
      %3300 = vmatprep.mubr.f32.mxu0 0.0
      %3301 = vmatmul.mubr.f32.gmra.mrb[0].mxu0 %v3014
      %v3302 = vpop.f32.mrb[0].mxu0
      %v3303 = vadd.f32 0.0, %v3302
      %v3304 = vpop.f32.mrb[0].mxu0
      %3305 = vmatprep.mubr.f32.mxu0 0.0
      %3306 = vmatmul.mubr.f32.gmra.mrb[0].mxu0 %v3016
      %v3307 = vpop.f32.mrb[0].mxu0
      %v3308 = vadd.f32 0.0, %v3307
      %v3309 = vpop.f32.mrb[0].mxu0
      %3310 = vmatprep.mubr.f32.mxu0 0.0
      %3311 = vmatmul.mubr.f32.gmra.mrb[0].mxu0 %v3018
      %v3312 = vpop.f32.mrb[0].mxu0
      %v3313 = vadd.f32 0.0, %v3312
      %v3314 = vpop.f32.mrb[0].mxu0
      %3315 = vmatprep.mubr.f32.mxu0 0.0
      %3316 = vmatmul.mubr.f32.gmra.mrb[0].mxu0 %v3020
      %v3317 = vpop.f32.mrb[0].mxu0
      %v3318 = vadd.f32 0.0, %v3317
      %v3319 = vpop.f32.mrb[0].mxu0
      %3320 = vmatprep.mubr.f32.mxu0 0.0
      %3321 = vmatmul.mubr.f32.gmra.mrb[0].mxu0 %v3022
      %v3322 = vpop.f32.mrb[0].mxu0
      %v3323 = vadd.f32 0.0, %v3322
      %v3324 = vpop.f32.mrb[0].mxu0
      %3325 = vmatprep.mubr.f32.mxu0 0.0
      %3326 = vmatmul.mubr.f32.gmra.mrb[0].mxu0 %v3024
      %v3327 = vpop.f32.mrb[0].mxu0
      %v3328 = vadd.f32 0.0, %v3327
      %v3329 = vpop.f32.mrb[0].mxu0
      %3330 = vmatprep.mubr.f32.mxu0 0.0
      %3331 = vmatmul.mubr.f32.gmra.mrb[0].mxu0 %v3026
      %v3332 = vpop.f32.mrb[0].mxu0
      %v3333 = vadd.f32 0.0, %v3332
      %v3334 = vpop.f32.mrb[0].mxu0
      %3335 = vdwg.mxu0
      %v3336 = vadd.f32 %v2594, %v3098
      %v3337 = vadd.f32 %v2599, %v3103
      %v3338 = vadd.f32 %v2604, %v3108
      %v3339 = vadd.f32 %v2609, %v3113
      %v3340 = vadd.f32 %v2614, %v3118
      %v3341 = vadd.f32 %v2619, %v3123
      %v3342 = vadd.f32 %v2624, %v3128
      %v3343 = vadd.f32 %v2629, %v3133
      %v3344 = vadd.f32 %v2634, %v3138
      %v3345 = vadd.f32 %v2639, %v3143
      %v3346 = vadd.f32 %v2644, %v3148
      %v3347 = vadd.f32 %v2649, %v3153
      %v3348 = vadd.f32 %v2654, %v3158
      %v3349 = vadd.f32 %v2659, %v3163
      %v3350 = vadd.f32 %v2664, %v3168
      %v3351 = vadd.f32 %v2669, %v3173
      %v3352 = vadd.f32 %v2674, %v3178
      %v3353 = vadd.f32 %v2679, %v3183
      %v3354 = vadd.f32 %v2684, %v3188
      %v3355 = vadd.f32 %v2689, %v3193
      %v3356 = vadd.f32 %v2694, %v3198
      %v3357 = vadd.f32 %v2699, %v3203
      %v3358 = vadd.f32 %v2704, %v3208
      %v3359 = vadd.f32 %v2709, %v3213
      %v3360 = vadd.f32 %v2714, %v3218
      %v3361 = vadd.f32 %v2719, %v3223
      %v3362 = vadd.f32 %v2724, %v3228
      %v3363 = vadd.f32 %v2729, %v3233
      %v3364 = vadd.f32 %v2734, %v3238
      %v3365 = vadd.f32 %v2739, %v3243
      %v3366 = vadd.f32 %v2744, %v3248
      %v3367 = vadd.f32 %v2749, %v3253
      %v3368 = vadd.f32 %v2754, %v3258
      %v3369 = vadd.f32 %v2759, %v3263
      %v3370 = vadd.f32 %v2764, %v3268
      %v3371 = vadd.f32 %v2769, %v3273
      %v3372 = vadd.f32 %v2774, %v3278
      %v3373 = vadd.f32 %v2779, %v3283
      %v3374 = vadd.f32 %v2784, %v3288
      %v3375 = vadd.f32 %v2789, %v3293
      %v3376 = vadd.f32 %v2794, %v3298
      %v3377 = vadd.f32 %v2799, %v3303
      %v3378 = vadd.f32 %v2804, %v3308
      %v3379 = vadd.f32 %v2809, %v3313
      %v3380 = vadd.f32 %v2814, %v3318
      %v3381 = vadd.f32 %v2819, %v3323
      %v3382 = vadd.f32 %v2824, %v3328
      %v3383 = vadd.f32 %v2829, %v3333
      %s3384 = scalar_lea.vmem %s6, 12
      %v3385 = vld [vmem:[%s3384] sm:$0xf]
      %v3386 = vsel %vm1483, %v1866, 0
      %v3389 = vsel %vm1483, %v1867, 0
      %v3392 = vsel %vm1483, %v1868, 0
      %v3395 = vsel %vm2119, %v3385, 0
      %3397 = vmatprep.subr.mxu0 0.0
      %3398 = vmatpush1.msra.mxu0 %v3395
      %3399 = vmatprep.subr.mxu0 0.0
      %3400 = vmatpush1.msra.mxu0 0.0
      %3401 = vmatprep.subr.mxu0 0.0
      %3402 = vmatpush1.msra.mxu0 0.0
      %3403 = vmatprep.subr.mxu0 0.0
      %3404 = vmatpush1.msra.mxu0 0.0
      %3405 = vmatprep.subr.mxu0 0.0
      %3406 = vmatpush1.msra.mxu0 0.0
      %3407 = vmatprep.subr.mxu0 0.0
      %3408 = vmatpush1.msra.mxu0 0.0
      %3409 = vmatprep.subr.mxu0 0.0
      %3410 = vmatpush1.msra.mxu0 0.0
      %3411 = vmatprep.subr.mxu0 0.0
      %3412 = vmatpush1.msra.mxu0 0.0
      %3413 = vmatprep.subr.mxu0 0.0
      %3414 = vmatpush1.msra.mxu0 0.0
      %3415 = vmatprep.subr.mxu0 0.0
      %3416 = vmatpush1.msra.mxu0 0.0
      %3417 = vmatprep.subr.mxu0 0.0
      %3418 = vmatpush1.msra.mxu0 0.0
      %3419 = vmatprep.subr.mxu0 0.0
      %3420 = vmatpush1.msra.mxu0 0.0
      %3421 = vmatprep.subr.mxu0 0.0
      %3422 = vmatpush1.msra.mxu0 0.0
      %3423 = vmatprep.subr.mxu0 0.0
      %3424 = vmatpush1.msra.mxu0 0.0
      %3425 = vmatprep.subr.mxu0 0.0
      %3426 = vmatpush1.msra.mxu0 0.0
      %3427 = vmatprep.subr.mxu0 0.0
      %3428 = vmatpush1.msra.mxu0 0.0
      %3429 = vmatprep.subr.mxu0 0.0
      %3430 = vmatpush1.msra.mxu0 0.0
      %3431 = vmatprep.subr.mxu0 0.0
      %3432 = vmatpush1.msra.mxu0 0.0
      %3433 = vmatprep.subr.mxu0 0.0
      %3434 = vmatpush1.msra.mxu0 0.0
      %3435 = vmatprep.subr.mxu0 0.0
      %3436 = vmatpush1.msra.mxu0 0.0
      %3437 = vmatprep.subr.mxu0 0.0
      %3438 = vmatpush1.msra.mxu0 0.0
      %3439 = vmatprep.subr.mxu0 0.0
      %3440 = vmatpush1.msra.mxu0 0.0
      %3441 = vmatprep.subr.mxu0 0.0
      %3442 = vmatpush1.msra.mxu0 0.0
      %3443 = vmatprep.subr.mxu0 0.0
      %3444 = vmatpush1.msra.mxu0 0.0
      %3445 = vmatprep.subr.mxu0 0.0
      %3446 = vmatpush1.msra.mxu0 0.0
      %3447 = vmatprep.subr.mxu0 0.0
      %3448 = vmatpush1.msra.mxu0 0.0
      %3449 = vmatprep.subr.mxu0 0.0
      %3450 = vmatpush1.msra.mxu0 0.0
      %3451 = vmatprep.subr.mxu0 0.0
      %3452 = vmatpush1.msra.mxu0 0.0
      %3453 = vmatprep.subr.mxu0 0.0
      %3454 = vmatpush1.msra.mxu0 0.0
      %3455 = vmatprep.subr.mxu0 0.0
      %3456 = vmatpush1.msra.mxu0 0.0
      %3457 = vmatprep.subr.mxu0 0.0
      %3458 = vmatpush1.msra.mxu0 0.0
      %3459 = vmatprep.subr.mxu0 0.0
      %3460 = vmatpush1.msra.mxu0 0.0
      %3461 = vmatprep.mubr.f32.mxu0 0.0
      %3462 = vmatmul.mubr.f32.gmra.mrb[0].mxu0 %v2434
      %v3463 = vpop.f32.mrb[0].mxu0
      %v3464 = vadd.f32 0.0, %v3463
      %v3465 = vpop.f32.mrb[0].mxu0
      %3466 = vmatprep.mubr.f32.mxu0 0.0
      %3467 = vmatmul.mubr.f32.gmra.mrb[0].mxu0 %v2436
      %v3468 = vpop.f32.mrb[0].mxu0
      %v3469 = vadd.f32 0.0, %v3468
      %v3470 = vpop.f32.mrb[0].mxu0
      %3471 = vmatprep.mubr.f32.mxu0 0.0
      %3472 = vmatmul.mubr.f32.gmra.mrb[0].mxu0 %v2438
      %v3473 = vpop.f32.mrb[0].mxu0
      %v3474 = vadd.f32 0.0, %v3473
      %v3475 = vpop.f32.mrb[0].mxu0
      %3476 = vmatprep.mubr.f32.mxu0 0.0
      %3477 = vmatmul.mubr.f32.gmra.mrb[0].mxu0 %v2440
      %v3478 = vpop.f32.mrb[0].mxu0
      %v3479 = vadd.f32 0.0, %v3478
      %v3480 = vpop.f32.mrb[0].mxu0
      %3481 = vmatprep.mubr.f32.mxu0 0.0
      %3482 = vmatmul.mubr.f32.gmra.mrb[0].mxu0 %v2442
      %v3483 = vpop.f32.mrb[0].mxu0
      %v3484 = vadd.f32 0.0, %v3483
      %v3485 = vpop.f32.mrb[0].mxu0
      %3486 = vmatprep.mubr.f32.mxu0 0.0
      %3487 = vmatmul.mubr.f32.gmra.mrb[0].mxu0 %v2444
      %v3488 = vpop.f32.mrb[0].mxu0
      %v3489 = vadd.f32 0.0, %v3488
      %v3490 = vpop.f32.mrb[0].mxu0
      %3491 = vmatprep.mubr.f32.mxu0 0.0
      %3492 = vmatmul.mubr.f32.gmra.mrb[0].mxu0 %v2446
      %v3493 = vpop.f32.mrb[0].mxu0
      %v3494 = vadd.f32 0.0, %v3493
      %v3495 = vpop.f32.mrb[0].mxu0
      %3496 = vmatprep.mubr.f32.mxu0 0.0
      %3497 = vmatmul.mubr.f32.gmra.mrb[0].mxu0 %v2448
      %v3498 = vpop.f32.mrb[0].mxu0
      %v3499 = vadd.f32 0.0, %v3498
      %v3500 = vpop.f32.mrb[0].mxu0
      %3501 = vmatprep.mubr.f32.mxu0 0.0
      %3502 = vmatmul.mubr.f32.gmra.mrb[0].mxu0 %v2450
      %v3503 = vpop.f32.mrb[0].mxu0
      %v3504 = vadd.f32 0.0, %v3503
      %v3505 = vpop.f32.mrb[0].mxu0
      %3506 = vmatprep.mubr.f32.mxu0 0.0
      %3507 = vmatmul.mubr.f32.gmra.mrb[0].mxu0 %v2452
      %v3508 = vpop.f32.mrb[0].mxu0
      %v3509 = vadd.f32 0.0, %v3508
      %v3510 = vpop.f32.mrb[0].mxu0
      %3511 = vmatprep.mubr.f32.mxu0 0.0
      %3512 = vmatmul.mubr.f32.gmra.mrb[0].mxu0 %v2454
      %v3513 = vpop.f32.mrb[0].mxu0
      %v3514 = vadd.f32 0.0, %v3513
      %v3515 = vpop.f32.mrb[0].mxu0
      %3516 = vmatprep.mubr.f32.mxu0 0.0
      %3517 = vmatmul.mubr.f32.gmra.mrb[0].mxu0 %v2456
      %v3518 = vpop.f32.mrb[0].mxu0
      %v3519 = vadd.f32 0.0, %v3518
      %v3520 = vpop.f32.mrb[0].mxu0
      %3521 = vmatprep.mubr.f32.mxu0 0.0
      %3522 = vmatmul.mubr.f32.gmra.mrb[0].mxu0 %v2458
      %v3523 = vpop.f32.mrb[0].mxu0
      %v3524 = vadd.f32 0.0, %v3523
      %v3525 = vpop.f32.mrb[0].mxu0
      %3526 = vmatprep.mubr.f32.mxu0 0.0
      %3527 = vmatmul.mubr.f32.gmra.mrb[0].mxu0 %v2460
      %v3528 = vpop.f32.mrb[0].mxu0
      %v3529 = vadd.f32 0.0, %v3528
      %v3530 = vpop.f32.mrb[0].mxu0
      %3531 = vmatprep.mubr.f32.mxu0 0.0
      %3532 = vmatmul.mubr.f32.gmra.mrb[0].mxu0 %v2462
      %v3533 = vpop.f32.mrb[0].mxu0
      %v3534 = vadd.f32 0.0, %v3533
      %v3535 = vpop.f32.mrb[0].mxu0
      %3536 = vmatprep.mubr.f32.mxu0 0.0
      %3537 = vmatmul.mubr.f32.gmra.mrb[0].mxu0 %v2464
      %v3538 = vpop.f32.mrb[0].mxu0
      %v3539 = vadd.f32 0.0, %v3538
      %v3540 = vpop.f32.mrb[0].mxu0
      %3541 = vmatprep.mubr.f32.mxu0 0.0
      %3542 = vmatmul.mubr.f32.gmra.mrb[0].mxu0 %v2466
      %v3543 = vpop.f32.mrb[0].mxu0
      %v3544 = vadd.f32 0.0, %v3543
      %v3545 = vpop.f32.mrb[0].mxu0
      %3546 = vmatprep.mubr.f32.mxu0 0.0
      %3547 = vmatmul.mubr.f32.gmra.mrb[0].mxu0 %v2468
      %v3548 = vpop.f32.mrb[0].mxu0
      %v3549 = vadd.f32 0.0, %v3548
      %v3550 = vpop.f32.mrb[0].mxu0
      %3551 = vmatprep.mubr.f32.mxu0 0.0
      %3552 = vmatmul.mubr.f32.gmra.mrb[0].mxu0 %v2470
      %v3553 = vpop.f32.mrb[0].mxu0
      %v3554 = vadd.f32 0.0, %v3553
      %v3555 = vpop.f32.mrb[0].mxu0
      %3556 = vmatprep.mubr.f32.mxu0 0.0
      %3557 = vmatmul.mubr.f32.gmra.mrb[0].mxu0 %v2472
      %v3558 = vpop.f32.mrb[0].mxu0
      %v3559 = vadd.f32 0.0, %v3558
      %v3560 = vpop.f32.mrb[0].mxu0
      %3561 = vmatprep.mubr.f32.mxu0 0.0
      %3562 = vmatmul.mubr.f32.gmra.mrb[0].mxu0 %v2474
      %v3563 = vpop.f32.mrb[0].mxu0
      %v3564 = vadd.f32 0.0, %v3563
      %v3565 = vpop.f32.mrb[0].mxu0
      %3566 = vmatprep.mubr.f32.mxu0 0.0
      %3567 = vmatmul.mubr.f32.gmra.mrb[0].mxu0 %v2476
      %v3568 = vpop.f32.mrb[0].mxu0
      %v3569 = vadd.f32 0.0, %v3568
      %v3570 = vpop.f32.mrb[0].mxu0
      %3571 = vmatprep.mubr.f32.mxu0 0.0
      %3572 = vmatmul.mubr.f32.gmra.mrb[0].mxu0 %v2478
      %v3573 = vpop.f32.mrb[0].mxu0
      %v3574 = vadd.f32 0.0, %v3573
      %v3575 = vpop.f32.mrb[0].mxu0
      %3576 = vmatprep.mubr.f32.mxu0 0.0
      %3577 = vmatmul.mubr.f32.gmra.mrb[0].mxu0 %v2480
      %v3578 = vpop.f32.mrb[0].mxu0
      %v3579 = vadd.f32 0.0, %v3578
      %v3580 = vpop.f32.mrb[0].mxu0
      %3581 = vmatprep.mubr.f32.mxu0 0.0
      %3582 = vmatmul.mubr.f32.gmra.mrb[0].mxu0 %v2482
      %v3583 = vpop.f32.mrb[0].mxu0
      %v3584 = vadd.f32 0.0, %v3583
      %v3585 = vpop.f32.mrb[0].mxu0
      %3586 = vmatprep.mubr.f32.mxu0 0.0
      %3587 = vmatmul.mubr.f32.gmra.mrb[0].mxu0 %v2484
      %v3588 = vpop.f32.mrb[0].mxu0
      %v3589 = vadd.f32 0.0, %v3588
      %v3590 = vpop.f32.mrb[0].mxu0
      %3591 = vmatprep.mubr.f32.mxu0 0.0
      %3592 = vmatmul.mubr.f32.gmra.mrb[0].mxu0 %v2486
      %v3593 = vpop.f32.mrb[0].mxu0
      %v3594 = vadd.f32 0.0, %v3593
      %v3595 = vpop.f32.mrb[0].mxu0
      %3596 = vmatprep.mubr.f32.mxu0 0.0
      %3597 = vmatmul.mubr.f32.gmra.mrb[0].mxu0 %v2488
      %v3598 = vpop.f32.mrb[0].mxu0
      %v3599 = vadd.f32 0.0, %v3598
      %v3600 = vpop.f32.mrb[0].mxu0
      %3601 = vmatprep.mubr.f32.mxu0 0.0
      %3602 = vmatmul.mubr.f32.gmra.mrb[0].mxu0 %v2490
      %v3603 = vpop.f32.mrb[0].mxu0
      %v3604 = vadd.f32 0.0, %v3603
      %v3605 = vpop.f32.mrb[0].mxu0
      %3606 = vmatprep.mubr.f32.mxu0 0.0
      %3607 = vmatmul.mubr.f32.gmra.mrb[0].mxu0 %v2492
      %v3608 = vpop.f32.mrb[0].mxu0
      %v3609 = vadd.f32 0.0, %v3608
      %v3610 = vpop.f32.mrb[0].mxu0
      %3611 = vmatprep.mubr.f32.mxu0 0.0
      %3612 = vmatmul.mubr.f32.gmra.mrb[0].mxu0 %v2494
      %v3613 = vpop.f32.mrb[0].mxu0
      %v3614 = vadd.f32 0.0, %v3613
      %v3615 = vpop.f32.mrb[0].mxu0
      %3616 = vmatprep.mubr.f32.mxu0 0.0
      %3617 = vmatmul.mubr.f32.gmra.mrb[0].mxu0 %v2496
      %v3618 = vpop.f32.mrb[0].mxu0
      %v3619 = vadd.f32 0.0, %v3618
      %v3620 = vpop.f32.mrb[0].mxu0
      %3621 = vmatprep.mubr.f32.mxu0 0.0
      %3622 = vmatmul.mubr.f32.gmra.mrb[0].mxu0 %v2498
      %v3623 = vpop.f32.mrb[0].mxu0
      %v3624 = vadd.f32 0.0, %v3623
      %v3625 = vpop.f32.mrb[0].mxu0
      %3626 = vmatprep.mubr.f32.mxu0 0.0
      %3627 = vmatmul.mubr.f32.gmra.mrb[0].mxu0 %v2500
      %v3628 = vpop.f32.mrb[0].mxu0
      %v3629 = vadd.f32 0.0, %v3628
      %v3630 = vpop.f32.mrb[0].mxu0
      %3631 = vmatprep.mubr.f32.mxu0 0.0
      %3632 = vmatmul.mubr.f32.gmra.mrb[0].mxu0 %v2502
      %v3633 = vpop.f32.mrb[0].mxu0
      %v3634 = vadd.f32 0.0, %v3633
      %v3635 = vpop.f32.mrb[0].mxu0
      %3636 = vmatprep.mubr.f32.mxu0 0.0
      %3637 = vmatmul.mubr.f32.gmra.mrb[0].mxu0 %v2504
      %v3638 = vpop.f32.mrb[0].mxu0
      %v3639 = vadd.f32 0.0, %v3638
      %v3640 = vpop.f32.mrb[0].mxu0
      %3641 = vmatprep.mubr.f32.mxu0 0.0
      %3642 = vmatmul.mubr.f32.gmra.mrb[0].mxu0 %v2506
      %v3643 = vpop.f32.mrb[0].mxu0
      %v3644 = vadd.f32 0.0, %v3643
      %v3645 = vpop.f32.mrb[0].mxu0
      %3646 = vmatprep.mubr.f32.mxu0 0.0
      %3647 = vmatmul.mubr.f32.gmra.mrb[0].mxu0 %v2508
      %v3648 = vpop.f32.mrb[0].mxu0
      %v3649 = vadd.f32 0.0, %v3648
      %v3650 = vpop.f32.mrb[0].mxu0
      %3651 = vmatprep.mubr.f32.mxu0 0.0
      %3652 = vmatmul.mubr.f32.gmra.mrb[0].mxu0 %v2510
      %v3653 = vpop.f32.mrb[0].mxu0
      %v3654 = vadd.f32 0.0, %v3653
      %v3655 = vpop.f32.mrb[0].mxu0
      %3656 = vmatprep.mubr.f32.mxu0 0.0
      %3657 = vmatmul.mubr.f32.gmra.mrb[0].mxu0 %v2512
      %v3658 = vpop.f32.mrb[0].mxu0
      %v3659 = vadd.f32 0.0, %v3658
      %v3660 = vpop.f32.mrb[0].mxu0
      %3661 = vmatprep.mubr.f32.mxu0 0.0
      %3662 = vmatmul.mubr.f32.gmra.mrb[0].mxu0 %v2514
      %v3663 = vpop.f32.mrb[0].mxu0
      %v3664 = vadd.f32 0.0, %v3663
      %v3665 = vpop.f32.mrb[0].mxu0
      %3666 = vmatprep.mubr.f32.mxu0 0.0
      %3667 = vmatmul.mubr.f32.gmra.mrb[0].mxu0 %v2516
      %v3668 = vpop.f32.mrb[0].mxu0
      %v3669 = vadd.f32 0.0, %v3668
      %v3670 = vpop.f32.mrb[0].mxu0
      %3671 = vmatprep.mubr.f32.mxu0 0.0
      %3672 = vmatmul.mubr.f32.gmra.mrb[0].mxu0 %v2518
      %v3673 = vpop.f32.mrb[0].mxu0
      %v3674 = vadd.f32 0.0, %v3673
      %v3675 = vpop.f32.mrb[0].mxu0
      %3676 = vmatprep.mubr.f32.mxu0 0.0
      %3677 = vmatmul.mubr.f32.gmra.mrb[0].mxu0 %v2520
      %v3678 = vpop.f32.mrb[0].mxu0
      %v3679 = vadd.f32 0.0, %v3678
      %v3680 = vpop.f32.mrb[0].mxu0
      %3681 = vmatprep.mubr.f32.mxu0 0.0
      %3682 = vmatmul.mubr.f32.gmra.mrb[0].mxu0 %v2522
      %v3683 = vpop.f32.mrb[0].mxu0
      %v3684 = vadd.f32 0.0, %v3683
      %v3685 = vpop.f32.mrb[0].mxu0
      %3686 = vmatprep.mubr.f32.mxu0 0.0
      %3687 = vmatmul.mubr.f32.gmra.mrb[0].mxu0 %v3386
      %v3688 = vpop.f32.mrb[0].mxu0
      %v3689 = vadd.f32 0.0, %v3688
      %v3690 = vpop.f32.mrb[0].mxu0
      %3691 = vmatprep.mubr.f32.mxu0 0.0
      %3692 = vmatmul.mubr.f32.gmra.mrb[0].mxu0 %v3389
      %v3693 = vpop.f32.mrb[0].mxu0
      %v3694 = vadd.f32 0.0, %v3693
      %v3695 = vpop.f32.mrb[0].mxu0
      %3696 = vmatprep.mubr.f32.mxu0 0.0
      %3697 = vmatmul.mubr.f32.gmra.mrb[0].mxu0 %v3392
      %v3698 = vpop.f32.mrb[0].mxu0
      %v3699 = vadd.f32 0.0, %v3698
      %v3700 = vpop.f32.mrb[0].mxu0
      %3701 = vdwg.mxu0
      %v3702 = vadd.f32 %v3336, %v3464
      %v3703 = vadd.f32 %v3337, %v3469
      %v3704 = vadd.f32 %v3338, %v3474
      %v3705 = vadd.f32 %v3339, %v3479
      %v3706 = vadd.f32 %v3340, %v3484
      %v3707 = vadd.f32 %v3341, %v3489
      %v3708 = vadd.f32 %v3342, %v3494
      %v3709 = vadd.f32 %v3343, %v3499
      %v3710 = vadd.f32 %v3344, %v3504
      %v3711 = vadd.f32 %v3345, %v3509
      %v3712 = vadd.f32 %v3346, %v3514
      %v3713 = vadd.f32 %v3347, %v3519
      %v3714 = vadd.f32 %v3348, %v3524
      %v3715 = vadd.f32 %v3349, %v3529
      %v3716 = vadd.f32 %v3350, %v3534
      %v3717 = vadd.f32 %v3351, %v3539
      %v3718 = vadd.f32 %v3352, %v3544
      %v3719 = vadd.f32 %v3353, %v3549
      %v3720 = vadd.f32 %v3354, %v3554
      %v3721 = vadd.f32 %v3355, %v3559
      %v3722 = vadd.f32 %v3356, %v3564
      %v3723 = vadd.f32 %v3357, %v3569
      %v3724 = vadd.f32 %v3358, %v3574
      %v3725 = vadd.f32 %v3359, %v3579
      %v3726 = vadd.f32 %v3360, %v3584
      %v3727 = vadd.f32 %v3361, %v3589
      %v3728 = vadd.f32 %v3362, %v3594
      %v3729 = vadd.f32 %v3363, %v3599
      %v3730 = vadd.f32 %v3364, %v3604
      %v3731 = vadd.f32 %v3365, %v3609
      %v3732 = vadd.f32 %v3366, %v3614
      %v3733 = vadd.f32 %v3367, %v3619
      %v3734 = vadd.f32 %v3368, %v3624
      %v3735 = vadd.f32 %v3369, %v3629
      %v3736 = vadd.f32 %v3370, %v3634
      %v3737 = vadd.f32 %v3371, %v3639
      %v3738 = vadd.f32 %v3372, %v3644
      %v3739 = vadd.f32 %v3373, %v3649
      %v3740 = vadd.f32 %v3374, %v3654
      %v3741 = vadd.f32 %v3375, %v3659
      %v3742 = vadd.f32 %v3376, %v3664
      %v3743 = vadd.f32 %v3377, %v3669
      %v3744 = vadd.f32 %v3378, %v3674
      %v3745 = vadd.f32 %v3379, %v3679
      %v3746 = vadd.f32 %v3380, %v3684
      %v3747 = vadd.f32 %v3381, %v3689
      %v3748 = vadd.f32 %v3382, %v3694
      %v3749 = vadd.f32 %v3383, %v3699
      %s3750 = scalar_lea.vmem %s6, 16
      %v3751 = vld [vmem:[%s3750] sm:$0xf]
      %v3753 = vrot.slane %v1867, 1
      %v3754 = vsel %vm1925, %v2021, %v3753
      %v3755 = vrot.slane %v1868, 1
      %v3756 = vsel %vm1925, %v3753, %v3755
      %v3757 = vrot.slane %v1869, 1
      %v3758 = vsel %vm1925, %v3755, %v3757
      %v3759 = vsel %vm1483, %v3754, 0
      %v3761 = vsel %vm1483, %v3756, 0
      %v3763 = vsel %vm1483, %v3758, 0
      %v3766 = vsel %vm2119, %v3751, 0
      %3768 = vmatprep.subr.mxu0 0.0
      %3769 = vmatpush1.msra.mxu0 %v3766
      %3770 = vmatprep.subr.mxu0 0.0
      %3771 = vmatpush1.msra.mxu0 0.0
      %3772 = vmatprep.subr.mxu0 0.0
      %3773 = vmatpush1.msra.mxu0 0.0
      %3774 = vmatprep.subr.mxu0 0.0
      %3775 = vmatpush1.msra.mxu0 0.0
      %3776 = vmatprep.subr.mxu0 0.0
      %3777 = vmatpush1.msra.mxu0 0.0
      %3778 = vmatprep.subr.mxu0 0.0
      %3779 = vmatpush1.msra.mxu0 0.0
      %3780 = vmatprep.subr.mxu0 0.0
      %3781 = vmatpush1.msra.mxu0 0.0
      %3782 = vmatprep.subr.mxu0 0.0
      %3783 = vmatpush1.msra.mxu0 0.0
      %3784 = vmatprep.subr.mxu0 0.0
      %3785 = vmatpush1.msra.mxu0 0.0
      %3786 = vmatprep.subr.mxu0 0.0
      %3787 = vmatpush1.msra.mxu0 0.0
      %3788 = vmatprep.subr.mxu0 0.0
      %3789 = vmatpush1.msra.mxu0 0.0
      %3790 = vmatprep.subr.mxu0 0.0
      %3791 = vmatpush1.msra.mxu0 0.0
      %3792 = vmatprep.subr.mxu0 0.0
      %3793 = vmatpush1.msra.mxu0 0.0
      %3794 = vmatprep.subr.mxu0 0.0
      %3795 = vmatpush1.msra.mxu0 0.0
      %3796 = vmatprep.subr.mxu0 0.0
      %3797 = vmatpush1.msra.mxu0 0.0
      %3798 = vmatprep.subr.mxu0 0.0
      %3799 = vmatpush1.msra.mxu0 0.0
      %3800 = vmatprep.subr.mxu0 0.0
      %3801 = vmatpush1.msra.mxu0 0.0
      %3802 = vmatprep.subr.mxu0 0.0
      %3803 = vmatpush1.msra.mxu0 0.0
      %3804 = vmatprep.subr.mxu0 0.0
      %3805 = vmatpush1.msra.mxu0 0.0
      %3806 = vmatprep.subr.mxu0 0.0
      %3807 = vmatpush1.msra.mxu0 0.0
      %3808 = vmatprep.subr.mxu0 0.0
      %3809 = vmatpush1.msra.mxu0 0.0
      %3810 = vmatprep.subr.mxu0 0.0
      %3811 = vmatpush1.msra.mxu0 0.0
      %3812 = vmatprep.subr.mxu0 0.0
      %3813 = vmatpush1.msra.mxu0 0.0
      %3814 = vmatprep.subr.mxu0 0.0
      %3815 = vmatpush1.msra.mxu0 0.0
      %3816 = vmatprep.subr.mxu0 0.0
      %3817 = vmatpush1.msra.mxu0 0.0
      %3818 = vmatprep.subr.mxu0 0.0
      %3819 = vmatpush1.msra.mxu0 0.0
      %3820 = vmatprep.subr.mxu0 0.0
      %3821 = vmatpush1.msra.mxu0 0.0
      %3822 = vmatprep.subr.mxu0 0.0
      %3823 = vmatpush1.msra.mxu0 0.0
      %3824 = vmatprep.subr.mxu0 0.0
      %3825 = vmatpush1.msra.mxu0 0.0
      %3826 = vmatprep.subr.mxu0 0.0
      %3827 = vmatpush1.msra.mxu0 0.0
      %3828 = vmatprep.subr.mxu0 0.0
      %3829 = vmatpush1.msra.mxu0 0.0
      %3830 = vmatprep.subr.mxu0 0.0
      %3831 = vmatpush1.msra.mxu0 0.0
      %3832 = vmatprep.mubr.f32.mxu0 0.0
      %3833 = vmatmul.mubr.f32.gmra.mrb[0].mxu0 %v2029
      %v3834 = vpop.f32.mrb[0].mxu0
      %v3835 = vadd.f32 0.0, %v3834
      %v3836 = vpop.f32.mrb[0].mxu0
      %3837 = vmatprep.mubr.f32.mxu0 0.0
      %3838 = vmatmul.mubr.f32.gmra.mrb[0].mxu0 %v2031
      %v3839 = vpop.f32.mrb[0].mxu0
      %v3840 = vadd.f32 0.0, %v3839
      %v3841 = vpop.f32.mrb[0].mxu0
      %3842 = vmatprep.mubr.f32.mxu0 0.0
      %3843 = vmatmul.mubr.f32.gmra.mrb[0].mxu0 %v2033
      %v3844 = vpop.f32.mrb[0].mxu0
      %v3845 = vadd.f32 0.0, %v3844
      %v3846 = vpop.f32.mrb[0].mxu0
      %3847 = vmatprep.mubr.f32.mxu0 0.0
      %3848 = vmatmul.mubr.f32.gmra.mrb[0].mxu0 %v2035
      %v3849 = vpop.f32.mrb[0].mxu0
      %v3850 = vadd.f32 0.0, %v3849
      %v3851 = vpop.f32.mrb[0].mxu0
      %3852 = vmatprep.mubr.f32.mxu0 0.0
      %3853 = vmatmul.mubr.f32.gmra.mrb[0].mxu0 %v2037
      %v3854 = vpop.f32.mrb[0].mxu0
      %v3855 = vadd.f32 0.0, %v3854
      %v3856 = vpop.f32.mrb[0].mxu0
      %3857 = vmatprep.mubr.f32.mxu0 0.0
      %3858 = vmatmul.mubr.f32.gmra.mrb[0].mxu0 %v2039
      %v3859 = vpop.f32.mrb[0].mxu0
      %v3860 = vadd.f32 0.0, %v3859
      %v3861 = vpop.f32.mrb[0].mxu0
      %3862 = vmatprep.mubr.f32.mxu0 0.0
      %3863 = vmatmul.mubr.f32.gmra.mrb[0].mxu0 %v2041
      %v3864 = vpop.f32.mrb[0].mxu0
      %v3865 = vadd.f32 0.0, %v3864
      %v3866 = vpop.f32.mrb[0].mxu0
      %3867 = vmatprep.mubr.f32.mxu0 0.0
      %3868 = vmatmul.mubr.f32.gmra.mrb[0].mxu0 %v2043
      %v3869 = vpop.f32.mrb[0].mxu0
      %v3870 = vadd.f32 0.0, %v3869
      %v3871 = vpop.f32.mrb[0].mxu0
      %3872 = vmatprep.mubr.f32.mxu0 0.0
      %3873 = vmatmul.mubr.f32.gmra.mrb[0].mxu0 %v2045
      %v3874 = vpop.f32.mrb[0].mxu0
      %v3875 = vadd.f32 0.0, %v3874
      %v3876 = vpop.f32.mrb[0].mxu0
      %3877 = vmatprep.mubr.f32.mxu0 0.0
      %3878 = vmatmul.mubr.f32.gmra.mrb[0].mxu0 %v2047
      %v3879 = vpop.f32.mrb[0].mxu0
      %v3880 = vadd.f32 0.0, %v3879
      %v3881 = vpop.f32.mrb[0].mxu0
      %3882 = vmatprep.mubr.f32.mxu0 0.0
      %3883 = vmatmul.mubr.f32.gmra.mrb[0].mxu0 %v2049
      %v3884 = vpop.f32.mrb[0].mxu0
      %v3885 = vadd.f32 0.0, %v3884
      %v3886 = vpop.f32.mrb[0].mxu0
      %3887 = vmatprep.mubr.f32.mxu0 0.0
      %3888 = vmatmul.mubr.f32.gmra.mrb[0].mxu0 %v2051
      %v3889 = vpop.f32.mrb[0].mxu0
      %v3890 = vadd.f32 0.0, %v3889
      %v3891 = vpop.f32.mrb[0].mxu0
      %3892 = vmatprep.mubr.f32.mxu0 0.0
      %3893 = vmatmul.mubr.f32.gmra.mrb[0].mxu0 %v2053
      %v3894 = vpop.f32.mrb[0].mxu0
      %v3895 = vadd.f32 0.0, %v3894
      %v3896 = vpop.f32.mrb[0].mxu0
      %3897 = vmatprep.mubr.f32.mxu0 0.0
      %3898 = vmatmul.mubr.f32.gmra.mrb[0].mxu0 %v2055
      %v3899 = vpop.f32.mrb[0].mxu0
      %v3900 = vadd.f32 0.0, %v3899
      %v3901 = vpop.f32.mrb[0].mxu0
      %3902 = vmatprep.mubr.f32.mxu0 0.0
      %3903 = vmatmul.mubr.f32.gmra.mrb[0].mxu0 %v2057
      %v3904 = vpop.f32.mrb[0].mxu0
      %v3905 = vadd.f32 0.0, %v3904
      %v3906 = vpop.f32.mrb[0].mxu0
      %3907 = vmatprep.mubr.f32.mxu0 0.0
      %3908 = vmatmul.mubr.f32.gmra.mrb[0].mxu0 %v2059
      %v3909 = vpop.f32.mrb[0].mxu0
      %v3910 = vadd.f32 0.0, %v3909
      %v3911 = vpop.f32.mrb[0].mxu0
      %3912 = vmatprep.mubr.f32.mxu0 0.0
      %3913 = vmatmul.mubr.f32.gmra.mrb[0].mxu0 %v2061
      %v3914 = vpop.f32.mrb[0].mxu0
      %v3915 = vadd.f32 0.0, %v3914
      %v3916 = vpop.f32.mrb[0].mxu0
      %3917 = vmatprep.mubr.f32.mxu0 0.0
      %3918 = vmatmul.mubr.f32.gmra.mrb[0].mxu0 %v2063
      %v3919 = vpop.f32.mrb[0].mxu0
      %v3920 = vadd.f32 0.0, %v3919
      %v3921 = vpop.f32.mrb[0].mxu0
      %3922 = vmatprep.mubr.f32.mxu0 0.0
      %3923 = vmatmul.mubr.f32.gmra.mrb[0].mxu0 %v2065
      %v3924 = vpop.f32.mrb[0].mxu0
      %v3925 = vadd.f32 0.0, %v3924
      %v3926 = vpop.f32.mrb[0].mxu0
      %3927 = vmatprep.mubr.f32.mxu0 0.0
      %3928 = vmatmul.mubr.f32.gmra.mrb[0].mxu0 %v2067
      %v3929 = vpop.f32.mrb[0].mxu0
      %v3930 = vadd.f32 0.0, %v3929
      %v3931 = vpop.f32.mrb[0].mxu0
      %3932 = vmatprep.mubr.f32.mxu0 0.0
      %3933 = vmatmul.mubr.f32.gmra.mrb[0].mxu0 %v2069
      %v3934 = vpop.f32.mrb[0].mxu0
      %v3935 = vadd.f32 0.0, %v3934
      %v3936 = vpop.f32.mrb[0].mxu0
      %3937 = vmatprep.mubr.f32.mxu0 0.0
      %3938 = vmatmul.mubr.f32.gmra.mrb[0].mxu0 %v2071
      %v3939 = vpop.f32.mrb[0].mxu0
      %v3940 = vadd.f32 0.0, %v3939
      %v3941 = vpop.f32.mrb[0].mxu0
      %3942 = vmatprep.mubr.f32.mxu0 0.0
      %3943 = vmatmul.mubr.f32.gmra.mrb[0].mxu0 %v2073
      %v3944 = vpop.f32.mrb[0].mxu0
      %v3945 = vadd.f32 0.0, %v3944
      %v3946 = vpop.f32.mrb[0].mxu0
      %3947 = vmatprep.mubr.f32.mxu0 0.0
      %3948 = vmatmul.mubr.f32.gmra.mrb[0].mxu0 %v2075
      %v3949 = vpop.f32.mrb[0].mxu0
      %v3950 = vadd.f32 0.0, %v3949
      %v3951 = vpop.f32.mrb[0].mxu0
      %3952 = vmatprep.mubr.f32.mxu0 0.0
      %3953 = vmatmul.mubr.f32.gmra.mrb[0].mxu0 %v2077
      %v3954 = vpop.f32.mrb[0].mxu0
      %v3955 = vadd.f32 0.0, %v3954
      %v3956 = vpop.f32.mrb[0].mxu0
      %3957 = vmatprep.mubr.f32.mxu0 0.0
      %3958 = vmatmul.mubr.f32.gmra.mrb[0].mxu0 %v2079
      %v3959 = vpop.f32.mrb[0].mxu0
      %v3960 = vadd.f32 0.0, %v3959
      %v3961 = vpop.f32.mrb[0].mxu0
      %3962 = vmatprep.mubr.f32.mxu0 0.0
      %3963 = vmatmul.mubr.f32.gmra.mrb[0].mxu0 %v2081
      %v3964 = vpop.f32.mrb[0].mxu0
      %v3965 = vadd.f32 0.0, %v3964
      %v3966 = vpop.f32.mrb[0].mxu0
      %3967 = vmatprep.mubr.f32.mxu0 0.0
      %3968 = vmatmul.mubr.f32.gmra.mrb[0].mxu0 %v2083
      %v3969 = vpop.f32.mrb[0].mxu0
      %v3970 = vadd.f32 0.0, %v3969
      %v3971 = vpop.f32.mrb[0].mxu0
      %3972 = vmatprep.mubr.f32.mxu0 0.0
      %3973 = vmatmul.mubr.f32.gmra.mrb[0].mxu0 %v2085
      %v3974 = vpop.f32.mrb[0].mxu0
      %v3975 = vadd.f32 0.0, %v3974
      %v3976 = vpop.f32.mrb[0].mxu0
      %3977 = vmatprep.mubr.f32.mxu0 0.0
      %3978 = vmatmul.mubr.f32.gmra.mrb[0].mxu0 %v2087
      %v3979 = vpop.f32.mrb[0].mxu0
      %v3980 = vadd.f32 0.0, %v3979
      %v3981 = vpop.f32.mrb[0].mxu0
      %3982 = vmatprep.mubr.f32.mxu0 0.0
      %3983 = vmatmul.mubr.f32.gmra.mrb[0].mxu0 %v2089
      %v3984 = vpop.f32.mrb[0].mxu0
      %v3985 = vadd.f32 0.0, %v3984
      %v3986 = vpop.f32.mrb[0].mxu0
      %3987 = vmatprep.mubr.f32.mxu0 0.0
      %3988 = vmatmul.mubr.f32.gmra.mrb[0].mxu0 %v2091
      %v3989 = vpop.f32.mrb[0].mxu0
      %v3990 = vadd.f32 0.0, %v3989
      %v3991 = vpop.f32.mrb[0].mxu0
      %3992 = vmatprep.mubr.f32.mxu0 0.0
      %3993 = vmatmul.mubr.f32.gmra.mrb[0].mxu0 %v2093
      %v3994 = vpop.f32.mrb[0].mxu0
      %v3995 = vadd.f32 0.0, %v3994
      %v3996 = vpop.f32.mrb[0].mxu0
      %3997 = vmatprep.mubr.f32.mxu0 0.0
      %3998 = vmatmul.mubr.f32.gmra.mrb[0].mxu0 %v2095
      %v3999 = vpop.f32.mrb[0].mxu0
      %v4000 = vadd.f32 0.0, %v3999
      %v4001 = vpop.f32.mrb[0].mxu0
      %4002 = vmatprep.mubr.f32.mxu0 0.0
      %4003 = vmatmul.mubr.f32.gmra.mrb[0].mxu0 %v2097
      %v4004 = vpop.f32.mrb[0].mxu0
      %v4005 = vadd.f32 0.0, %v4004
      %v4006 = vpop.f32.mrb[0].mxu0
      %4007 = vmatprep.mubr.f32.mxu0 0.0
      %4008 = vmatmul.mubr.f32.gmra.mrb[0].mxu0 %v2099
      %v4009 = vpop.f32.mrb[0].mxu0
      %v4010 = vadd.f32 0.0, %v4009
      %v4011 = vpop.f32.mrb[0].mxu0
      %4012 = vmatprep.mubr.f32.mxu0 0.0
      %4013 = vmatmul.mubr.f32.gmra.mrb[0].mxu0 %v2101
      %v4014 = vpop.f32.mrb[0].mxu0
      %v4015 = vadd.f32 0.0, %v4014
      %v4016 = vpop.f32.mrb[0].mxu0
      %4017 = vmatprep.mubr.f32.mxu0 0.0
      %4018 = vmatmul.mubr.f32.gmra.mrb[0].mxu0 %v2103
      %v4019 = vpop.f32.mrb[0].mxu0
      %v4020 = vadd.f32 0.0, %v4019
      %v4021 = vpop.f32.mrb[0].mxu0
      %4022 = vmatprep.mubr.f32.mxu0 0.0
      %4023 = vmatmul.mubr.f32.gmra.mrb[0].mxu0 %v2105
      %v4024 = vpop.f32.mrb[0].mxu0
      %v4025 = vadd.f32 0.0, %v4024
      %v4026 = vpop.f32.mrb[0].mxu0
      %4027 = vmatprep.mubr.f32.mxu0 0.0
      %4028 = vmatmul.mubr.f32.gmra.mrb[0].mxu0 %v2107
      %v4029 = vpop.f32.mrb[0].mxu0
      %v4030 = vadd.f32 0.0, %v4029
      %v4031 = vpop.f32.mrb[0].mxu0
      %4032 = vmatprep.mubr.f32.mxu0 0.0
      %4033 = vmatmul.mubr.f32.gmra.mrb[0].mxu0 %v2109
      %v4034 = vpop.f32.mrb[0].mxu0
      %v4035 = vadd.f32 0.0, %v4034
      %v4036 = vpop.f32.mrb[0].mxu0
      %4037 = vmatprep.mubr.f32.mxu0 0.0
      %4038 = vmatmul.mubr.f32.gmra.mrb[0].mxu0 %v2111
      %v4039 = vpop.f32.mrb[0].mxu0
      %v4040 = vadd.f32 0.0, %v4039
      %v4041 = vpop.f32.mrb[0].mxu0
      %4042 = vmatprep.mubr.f32.mxu0 0.0
      %4043 = vmatmul.mubr.f32.gmra.mrb[0].mxu0 %v2113
      %v4044 = vpop.f32.mrb[0].mxu0
      %v4045 = vadd.f32 0.0, %v4044
      %v4046 = vpop.f32.mrb[0].mxu0
      %4047 = vmatprep.mubr.f32.mxu0 0.0
      %4048 = vmatmul.mubr.f32.gmra.mrb[0].mxu0 %v2115
      %v4049 = vpop.f32.mrb[0].mxu0
      %v4050 = vadd.f32 0.0, %v4049
      %v4051 = vpop.f32.mrb[0].mxu0
      %4052 = vmatprep.mubr.f32.mxu0 0.0
      %4053 = vmatmul.mubr.f32.gmra.mrb[0].mxu0 %v2117
      %v4054 = vpop.f32.mrb[0].mxu0
      %v4055 = vadd.f32 0.0, %v4054
      %v4056 = vpop.f32.mrb[0].mxu0
      %4057 = vmatprep.mubr.f32.mxu0 0.0
      %4058 = vmatmul.mubr.f32.gmra.mrb[0].mxu0 %v3759
      %v4059 = vpop.f32.mrb[0].mxu0
      %v4060 = vadd.f32 0.0, %v4059
      %v4061 = vpop.f32.mrb[0].mxu0
      %4062 = vmatprep.mubr.f32.mxu0 0.0
      %4063 = vmatmul.mubr.f32.gmra.mrb[0].mxu0 %v3761
      %v4064 = vpop.f32.mrb[0].mxu0
      %v4065 = vadd.f32 0.0, %v4064
      %v4066 = vpop.f32.mrb[0].mxu0
      %4067 = vmatprep.mubr.f32.mxu0 0.0
      %4068 = vmatmul.mubr.f32.gmra.mrb[0].mxu0 %v3763
      %v4069 = vpop.f32.mrb[0].mxu0
      %v4070 = vadd.f32 0.0, %v4069
      %v4071 = vpop.f32.mrb[0].mxu0
      %4072 = vdwg.mxu0
      %v4073 = vadd.f32 %v3702, %v3835
      %v4074 = vadd.f32 %v3703, %v3840
      %v4075 = vadd.f32 %v3704, %v3845
      %v4076 = vadd.f32 %v3705, %v3850
      %v4077 = vadd.f32 %v3706, %v3855
      %v4078 = vadd.f32 %v3707, %v3860
      %v4079 = vadd.f32 %v3708, %v3865
      %v4080 = vadd.f32 %v3709, %v3870
      %v4081 = vadd.f32 %v3710, %v3875
      %v4082 = vadd.f32 %v3711, %v3880
      %v4083 = vadd.f32 %v3712, %v3885
      %v4084 = vadd.f32 %v3713, %v3890
      %v4085 = vadd.f32 %v3714, %v3895
      %v4086 = vadd.f32 %v3715, %v3900
      %v4087 = vadd.f32 %v3716, %v3905
      %v4088 = vadd.f32 %v3717, %v3910
      %v4089 = vadd.f32 %v3718, %v3915
      %v4090 = vadd.f32 %v3719, %v3920
      %v4091 = vadd.f32 %v3720, %v3925
      %v4092 = vadd.f32 %v3721, %v3930
      %v4093 = vadd.f32 %v3722, %v3935
      %v4094 = vadd.f32 %v3723, %v3940
      %v4095 = vadd.f32 %v3724, %v3945
      %v4096 = vadd.f32 %v3725, %v3950
      %v4097 = vadd.f32 %v3726, %v3955
      %v4098 = vadd.f32 %v3727, %v3960
      %v4099 = vadd.f32 %v3728, %v3965
      %v4100 = vadd.f32 %v3729, %v3970
      %v4101 = vadd.f32 %v3730, %v3975
      %v4102 = vadd.f32 %v3731, %v3980
      %v4103 = vadd.f32 %v3732, %v3985
      %v4104 = vadd.f32 %v3733, %v3990
      %v4105 = vadd.f32 %v3734, %v3995
      %v4106 = vadd.f32 %v3735, %v4000
      %v4107 = vadd.f32 %v3736, %v4005
      %v4108 = vadd.f32 %v3737, %v4010
      %v4109 = vadd.f32 %v3738, %v4015
      %v4110 = vadd.f32 %v3739, %v4020
      %v4111 = vadd.f32 %v3740, %v4025
      %v4112 = vadd.f32 %v3741, %v4030
      %v4113 = vadd.f32 %v3742, %v4035
      %v4114 = vadd.f32 %v3743, %v4040
      %v4115 = vadd.f32 %v3744, %v4045
      %v4116 = vadd.f32 %v3745, %v4050
      %v4117 = vadd.f32 %v3746, %v4055
      %v4118 = vadd.f32 %v3747, %v4060
      %v4119 = vadd.f32 %v3748, %v4065
      %v4120 = vadd.f32 %v3749, %v4070
      %s4121 = scalar_lea.vmem %s6, 20
      %v4122 = vld [vmem:[%s4121] sm:$0xf]
      %v4123 = vrot.slane %v1867, 2
      %v4124 = vsel %vm2834, %v2930, %v4123
      %v4125 = vrot.slane %v1868, 2
      %v4126 = vsel %vm2834, %v4123, %v4125
      %v4127 = vrot.slane %v1869, 2
      %v4128 = vsel %vm2834, %v4125, %v4127
      %v4129 = vsel %vm1483, %v4124, 0
      %v4131 = vsel %vm1483, %v4126, 0
      %v4133 = vsel %vm1483, %v4128, 0
      %v4136 = vsel %vm2119, %v4122, 0
      %4138 = vmatprep.subr.mxu0 0.0
      %4139 = vmatpush1.msra.mxu0 %v4136
      %4140 = vmatprep.subr.mxu0 0.0
      %4141 = vmatpush1.msra.mxu0 0.0
      %4142 = vmatprep.subr.mxu0 0.0
      %4143 = vmatpush1.msra.mxu0 0.0
      %4144 = vmatprep.subr.mxu0 0.0
      %4145 = vmatpush1.msra.mxu0 0.0
      %4146 = vmatprep.subr.mxu0 0.0
      %4147 = vmatpush1.msra.mxu0 0.0
      %4148 = vmatprep.subr.mxu0 0.0
      %4149 = vmatpush1.msra.mxu0 0.0
      %4150 = vmatprep.subr.mxu0 0.0
      %4151 = vmatpush1.msra.mxu0 0.0
      %4152 = vmatprep.subr.mxu0 0.0
      %4153 = vmatpush1.msra.mxu0 0.0
      %4154 = vmatprep.subr.mxu0 0.0
      %4155 = vmatpush1.msra.mxu0 0.0
      %4156 = vmatprep.subr.mxu0 0.0
      %4157 = vmatpush1.msra.mxu0 0.0
      %4158 = vmatprep.subr.mxu0 0.0
      %4159 = vmatpush1.msra.mxu0 0.0
      %4160 = vmatprep.subr.mxu0 0.0
      %4161 = vmatpush1.msra.mxu0 0.0
      %4162 = vmatprep.subr.mxu0 0.0
      %4163 = vmatpush1.msra.mxu0 0.0
      %4164 = vmatprep.subr.mxu0 0.0
      %4165 = vmatpush1.msra.mxu0 0.0
      %4166 = vmatprep.subr.mxu0 0.0
      %4167 = vmatpush1.msra.mxu0 0.0
      %4168 = vmatprep.subr.mxu0 0.0
      %4169 = vmatpush1.msra.mxu0 0.0
      %4170 = vmatprep.subr.mxu0 0.0
      %4171 = vmatpush1.msra.mxu0 0.0
      %4172 = vmatprep.subr.mxu0 0.0
      %4173 = vmatpush1.msra.mxu0 0.0
      %4174 = vmatprep.subr.mxu0 0.0
      %4175 = vmatpush1.msra.mxu0 0.0
      %4176 = vmatprep.subr.mxu0 0.0
      %4177 = vmatpush1.msra.mxu0 0.0
      %4178 = vmatprep.subr.mxu0 0.0
      %4179 = vmatpush1.msra.mxu0 0.0
      %4180 = vmatprep.subr.mxu0 0.0
      %4181 = vmatpush1.msra.mxu0 0.0
      %4182 = vmatprep.subr.mxu0 0.0
      %4183 = vmatpush1.msra.mxu0 0.0
      %4184 = vmatprep.subr.mxu0 0.0
      %4185 = vmatpush1.msra.mxu0 0.0
      %4186 = vmatprep.subr.mxu0 0.0
      %4187 = vmatpush1.msra.mxu0 0.0
      %4188 = vmatprep.subr.mxu0 0.0
      %4189 = vmatpush1.msra.mxu0 0.0
      %4190 = vmatprep.subr.mxu0 0.0
      %4191 = vmatpush1.msra.mxu0 0.0
      %4192 = vmatprep.subr.mxu0 0.0
      %4193 = vmatpush1.msra.mxu0 0.0
      %4194 = vmatprep.subr.mxu0 0.0
      %4195 = vmatpush1.msra.mxu0 0.0
      %4196 = vmatprep.subr.mxu0 0.0
      %4197 = vmatpush1.msra.mxu0 0.0
      %4198 = vmatprep.subr.mxu0 0.0
      %4199 = vmatpush1.msra.mxu0 0.0
      %4200 = vmatprep.subr.mxu0 0.0
      %4201 = vmatpush1.msra.mxu0 0.0
      %4202 = vmatprep.mubr.f32.mxu0 0.0
      %4203 = vmatmul.mubr.f32.gmra.mrb[0].mxu0 %v2938
      %v4204 = vpop.f32.mrb[0].mxu0
      %v4205 = vadd.f32 0.0, %v4204
      %v4206 = vpop.f32.mrb[0].mxu0
      %4207 = vmatprep.mubr.f32.mxu0 0.0
      %4208 = vmatmul.mubr.f32.gmra.mrb[0].mxu0 %v2940
      %v4209 = vpop.f32.mrb[0].mxu0
      %v4210 = vadd.f32 0.0, %v4209
      %v4211 = vpop.f32.mrb[0].mxu0
      %4212 = vmatprep.mubr.f32.mxu0 0.0
      %4213 = vmatmul.mubr.f32.gmra.mrb[0].mxu0 %v2942
      %v4214 = vpop.f32.mrb[0].mxu0
      %v4215 = vadd.f32 0.0, %v4214
      %v4216 = vpop.f32.mrb[0].mxu0
      %4217 = vmatprep.mubr.f32.mxu0 0.0
      %4218 = vmatmul.mubr.f32.gmra.mrb[0].mxu0 %v2944
      %v4219 = vpop.f32.mrb[0].mxu0
      %v4220 = vadd.f32 0.0, %v4219
      %v4221 = vpop.f32.mrb[0].mxu0
      %4222 = vmatprep.mubr.f32.mxu0 0.0
      %4223 = vmatmul.mubr.f32.gmra.mrb[0].mxu0 %v2946
      %v4224 = vpop.f32.mrb[0].mxu0
      %v4225 = vadd.f32 0.0, %v4224
      %v4226 = vpop.f32.mrb[0].mxu0
      %4227 = vmatprep.mubr.f32.mxu0 0.0
      %4228 = vmatmul.mubr.f32.gmra.mrb[0].mxu0 %v2948
      %v4229 = vpop.f32.mrb[0].mxu0
      %v4230 = vadd.f32 0.0, %v4229
      %v4231 = vpop.f32.mrb[0].mxu0
      %4232 = vmatprep.mubr.f32.mxu0 0.0
      %4233 = vmatmul.mubr.f32.gmra.mrb[0].mxu0 %v2950
      %v4234 = vpop.f32.mrb[0].mxu0
      %v4235 = vadd.f32 0.0, %v4234
      %v4236 = vpop.f32.mrb[0].mxu0
      %4237 = vmatprep.mubr.f32.mxu0 0.0
      %4238 = vmatmul.mubr.f32.gmra.mrb[0].mxu0 %v2952
      %v4239 = vpop.f32.mrb[0].mxu0
      %v4240 = vadd.f32 0.0, %v4239
      %v4241 = vpop.f32.mrb[0].mxu0
      %4242 = vmatprep.mubr.f32.mxu0 0.0
      %4243 = vmatmul.mubr.f32.gmra.mrb[0].mxu0 %v2954
      %v4244 = vpop.f32.mrb[0].mxu0
      %v4245 = vadd.f32 0.0, %v4244
      %v4246 = vpop.f32.mrb[0].mxu0
      %4247 = vmatprep.mubr.f32.mxu0 0.0
      %4248 = vmatmul.mubr.f32.gmra.mrb[0].mxu0 %v2956
      %v4249 = vpop.f32.mrb[0].mxu0
      %v4250 = vadd.f32 0.0, %v4249
      %v4251 = vpop.f32.mrb[0].mxu0
      %4252 = vmatprep.mubr.f32.mxu0 0.0
      %4253 = vmatmul.mubr.f32.gmra.mrb[0].mxu0 %v2958
      %v4254 = vpop.f32.mrb[0].mxu0
      %v4255 = vadd.f32 0.0, %v4254
      %v4256 = vpop.f32.mrb[0].mxu0
      %4257 = vmatprep.mubr.f32.mxu0 0.0
      %4258 = vmatmul.mubr.f32.gmra.mrb[0].mxu0 %v2960
      %v4259 = vpop.f32.mrb[0].mxu0
      %v4260 = vadd.f32 0.0, %v4259
      %v4261 = vpop.f32.mrb[0].mxu0
      %4262 = vmatprep.mubr.f32.mxu0 0.0
      %4263 = vmatmul.mubr.f32.gmra.mrb[0].mxu0 %v2962
      %v4264 = vpop.f32.mrb[0].mxu0
      %v4265 = vadd.f32 0.0, %v4264
      %v4266 = vpop.f32.mrb[0].mxu0
      %4267 = vmatprep.mubr.f32.mxu0 0.0
      %4268 = vmatmul.mubr.f32.gmra.mrb[0].mxu0 %v2964
      %v4269 = vpop.f32.mrb[0].mxu0
      %v4270 = vadd.f32 0.0, %v4269
      %v4271 = vpop.f32.mrb[0].mxu0
      %4272 = vmatprep.mubr.f32.mxu0 0.0
      %4273 = vmatmul.mubr.f32.gmra.mrb[0].mxu0 %v2966
      %v4274 = vpop.f32.mrb[0].mxu0
      %v4275 = vadd.f32 0.0, %v4274
      %v4276 = vpop.f32.mrb[0].mxu0
      %4277 = vmatprep.mubr.f32.mxu0 0.0
      %4278 = vmatmul.mubr.f32.gmra.mrb[0].mxu0 %v2968
      %v4279 = vpop.f32.mrb[0].mxu0
      %v4280 = vadd.f32 0.0, %v4279
      %v4281 = vpop.f32.mrb[0].mxu0
      %4282 = vmatprep.mubr.f32.mxu0 0.0
      %4283 = vmatmul.mubr.f32.gmra.mrb[0].mxu0 %v2970
      %v4284 = vpop.f32.mrb[0].mxu0
      %v4285 = vadd.f32 0.0, %v4284
      %v4286 = vpop.f32.mrb[0].mxu0
      %4287 = vmatprep.mubr.f32.mxu0 0.0
      %4288 = vmatmul.mubr.f32.gmra.mrb[0].mxu0 %v2972
      %v4289 = vpop.f32.mrb[0].mxu0
      %v4290 = vadd.f32 0.0, %v4289
      %v4291 = vpop.f32.mrb[0].mxu0
      %4292 = vmatprep.mubr.f32.mxu0 0.0
      %4293 = vmatmul.mubr.f32.gmra.mrb[0].mxu0 %v2974
      %v4294 = vpop.f32.mrb[0].mxu0
      %v4295 = vadd.f32 0.0, %v4294
      %v4296 = vpop.f32.mrb[0].mxu0
      %4297 = vmatprep.mubr.f32.mxu0 0.0
      %4298 = vmatmul.mubr.f32.gmra.mrb[0].mxu0 %v2976
      %v4299 = vpop.f32.mrb[0].mxu0
      %v4300 = vadd.f32 0.0, %v4299
      %v4301 = vpop.f32.mrb[0].mxu0
      %4302 = vmatprep.mubr.f32.mxu0 0.0
      %4303 = vmatmul.mubr.f32.gmra.mrb[0].mxu0 %v2978
      %v4304 = vpop.f32.mrb[0].mxu0
      %v4305 = vadd.f32 0.0, %v4304
      %v4306 = vpop.f32.mrb[0].mxu0
      %4307 = vmatprep.mubr.f32.mxu0 0.0
      %4308 = vmatmul.mubr.f32.gmra.mrb[0].mxu0 %v2980
      %v4309 = vpop.f32.mrb[0].mxu0
      %v4310 = vadd.f32 0.0, %v4309
      %v4311 = vpop.f32.mrb[0].mxu0
      %4312 = vmatprep.mubr.f32.mxu0 0.0
      %4313 = vmatmul.mubr.f32.gmra.mrb[0].mxu0 %v2982
      %v4314 = vpop.f32.mrb[0].mxu0
      %v4315 = vadd.f32 0.0, %v4314
      %v4316 = vpop.f32.mrb[0].mxu0
      %4317 = vmatprep.mubr.f32.mxu0 0.0
      %4318 = vmatmul.mubr.f32.gmra.mrb[0].mxu0 %v2984
      %v4319 = vpop.f32.mrb[0].mxu0
      %v4320 = vadd.f32 0.0, %v4319
      %v4321 = vpop.f32.mrb[0].mxu0
      %4322 = vmatprep.mubr.f32.mxu0 0.0
      %4323 = vmatmul.mubr.f32.gmra.mrb[0].mxu0 %v2986
      %v4324 = vpop.f32.mrb[0].mxu0
      %v4325 = vadd.f32 0.0, %v4324
      %v4326 = vpop.f32.mrb[0].mxu0
      %4327 = vmatprep.mubr.f32.mxu0 0.0
      %4328 = vmatmul.mubr.f32.gmra.mrb[0].mxu0 %v2988
      %v4329 = vpop.f32.mrb[0].mxu0
      %v4330 = vadd.f32 0.0, %v4329
      %v4331 = vpop.f32.mrb[0].mxu0
      %4332 = vmatprep.mubr.f32.mxu0 0.0
      %4333 = vmatmul.mubr.f32.gmra.mrb[0].mxu0 %v2990
      %v4334 = vpop.f32.mrb[0].mxu0
      %v4335 = vadd.f32 0.0, %v4334
      %v4336 = vpop.f32.mrb[0].mxu0
      %4337 = vmatprep.mubr.f32.mxu0 0.0
      %4338 = vmatmul.mubr.f32.gmra.mrb[0].mxu0 %v2992
      %v4339 = vpop.f32.mrb[0].mxu0
      %v4340 = vadd.f32 0.0, %v4339
      %v4341 = vpop.f32.mrb[0].mxu0
      %4342 = vmatprep.mubr.f32.mxu0 0.0
      %4343 = vmatmul.mubr.f32.gmra.mrb[0].mxu0 %v2994
      %v4344 = vpop.f32.mrb[0].mxu0
      %v4345 = vadd.f32 0.0, %v4344
      %v4346 = vpop.f32.mrb[0].mxu0
      %4347 = vmatprep.mubr.f32.mxu0 0.0
      %4348 = vmatmul.mubr.f32.gmra.mrb[0].mxu0 %v2996
      %v4349 = vpop.f32.mrb[0].mxu0
      %v4350 = vadd.f32 0.0, %v4349
      %v4351 = vpop.f32.mrb[0].mxu0
      %4352 = vmatprep.mubr.f32.mxu0 0.0
      %4353 = vmatmul.mubr.f32.gmra.mrb[0].mxu0 %v2998
      %v4354 = vpop.f32.mrb[0].mxu0
      %v4355 = vadd.f32 0.0, %v4354
      %v4356 = vpop.f32.mrb[0].mxu0
      %4357 = vmatprep.mubr.f32.mxu0 0.0
      %4358 = vmatmul.mubr.f32.gmra.mrb[0].mxu0 %v3000
      %v4359 = vpop.f32.mrb[0].mxu0
      %v4360 = vadd.f32 0.0, %v4359
      %v4361 = vpop.f32.mrb[0].mxu0
      %4362 = vmatprep.mubr.f32.mxu0 0.0
      %4363 = vmatmul.mubr.f32.gmra.mrb[0].mxu0 %v3002
      %v4364 = vpop.f32.mrb[0].mxu0
      %v4365 = vadd.f32 0.0, %v4364
      %v4366 = vpop.f32.mrb[0].mxu0
      %4367 = vmatprep.mubr.f32.mxu0 0.0
      %4368 = vmatmul.mubr.f32.gmra.mrb[0].mxu0 %v3004
      %v4369 = vpop.f32.mrb[0].mxu0
      %v4370 = vadd.f32 0.0, %v4369
      %v4371 = vpop.f32.mrb[0].mxu0
      %4372 = vmatprep.mubr.f32.mxu0 0.0
      %4373 = vmatmul.mubr.f32.gmra.mrb[0].mxu0 %v3006
      %v4374 = vpop.f32.mrb[0].mxu0
      %v4375 = vadd.f32 0.0, %v4374
      %v4376 = vpop.f32.mrb[0].mxu0
      %4377 = vmatprep.mubr.f32.mxu0 0.0
      %4378 = vmatmul.mubr.f32.gmra.mrb[0].mxu0 %v3008
      %v4379 = vpop.f32.mrb[0].mxu0
      %v4380 = vadd.f32 0.0, %v4379
      %v4381 = vpop.f32.mrb[0].mxu0
      %4382 = vmatprep.mubr.f32.mxu0 0.0
      %4383 = vmatmul.mubr.f32.gmra.mrb[0].mxu0 %v3010
      %v4384 = vpop.f32.mrb[0].mxu0
      %v4385 = vadd.f32 0.0, %v4384
      %v4386 = vpop.f32.mrb[0].mxu0
      %4387 = vmatprep.mubr.f32.mxu0 0.0
      %4388 = vmatmul.mubr.f32.gmra.mrb[0].mxu0 %v3012
      %v4389 = vpop.f32.mrb[0].mxu0
      %v4390 = vadd.f32 0.0, %v4389
      %v4391 = vpop.f32.mrb[0].mxu0
      %4392 = vmatprep.mubr.f32.mxu0 0.0
      %4393 = vmatmul.mubr.f32.gmra.mrb[0].mxu0 %v3014
      %v4394 = vpop.f32.mrb[0].mxu0
      %v4395 = vadd.f32 0.0, %v4394
      %v4396 = vpop.f32.mrb[0].mxu0
      %4397 = vmatprep.mubr.f32.mxu0 0.0
      %4398 = vmatmul.mubr.f32.gmra.mrb[0].mxu0 %v3016
      %v4399 = vpop.f32.mrb[0].mxu0
      %v4400 = vadd.f32 0.0, %v4399
      %v4401 = vpop.f32.mrb[0].mxu0
      %4402 = vmatprep.mubr.f32.mxu0 0.0
      %4403 = vmatmul.mubr.f32.gmra.mrb[0].mxu0 %v3018
      %v4404 = vpop.f32.mrb[0].mxu0
      %v4405 = vadd.f32 0.0, %v4404
      %v4406 = vpop.f32.mrb[0].mxu0
      %4407 = vmatprep.mubr.f32.mxu0 0.0
      %4408 = vmatmul.mubr.f32.gmra.mrb[0].mxu0 %v3020
      %v4409 = vpop.f32.mrb[0].mxu0
      %v4410 = vadd.f32 0.0, %v4409
      %v4411 = vpop.f32.mrb[0].mxu0
      %4412 = vmatprep.mubr.f32.mxu0 0.0
      %4413 = vmatmul.mubr.f32.gmra.mrb[0].mxu0 %v3022
      %v4414 = vpop.f32.mrb[0].mxu0
      %v4415 = vadd.f32 0.0, %v4414
      %v4416 = vpop.f32.mrb[0].mxu0
      %4417 = vmatprep.mubr.f32.mxu0 0.0
      %4418 = vmatmul.mubr.f32.gmra.mrb[0].mxu0 %v3024
      %v4419 = vpop.f32.mrb[0].mxu0
      %v4420 = vadd.f32 0.0, %v4419
      %v4421 = vpop.f32.mrb[0].mxu0
      %4422 = vmatprep.mubr.f32.mxu0 0.0
      %4423 = vmatmul.mubr.f32.gmra.mrb[0].mxu0 %v3026
      %v4424 = vpop.f32.mrb[0].mxu0
      %v4425 = vadd.f32 0.0, %v4424
      %v4426 = vpop.f32.mrb[0].mxu0
      %4427 = vmatprep.mubr.f32.mxu0 0.0
      %4428 = vmatmul.mubr.f32.gmra.mrb[0].mxu0 %v4129
      %v4429 = vpop.f32.mrb[0].mxu0
      %v4430 = vadd.f32 0.0, %v4429
      %v4431 = vpop.f32.mrb[0].mxu0
      %4432 = vmatprep.mubr.f32.mxu0 0.0
      %4433 = vmatmul.mubr.f32.gmra.mrb[0].mxu0 %v4131
      %v4434 = vpop.f32.mrb[0].mxu0
      %v4435 = vadd.f32 0.0, %v4434
      %v4436 = vpop.f32.mrb[0].mxu0
      %4437 = vmatprep.mubr.f32.mxu0 0.0
      %4438 = vmatmul.mubr.f32.gmra.mrb[0].mxu0 %v4133
      %v4439 = vpop.f32.mrb[0].mxu0
      %v4440 = vadd.f32 0.0, %v4439
      %v4441 = vpop.f32.mrb[0].mxu0
      %4442 = vdwg.mxu0
      %v4443 = vadd.f32 %v4073, %v4205
      %v4444 = vadd.f32 %v4074, %v4210
      %v4445 = vadd.f32 %v4075, %v4215
      %v4446 = vadd.f32 %v4076, %v4220
      %v4447 = vadd.f32 %v4077, %v4225
      %v4448 = vadd.f32 %v4078, %v4230
      %v4449 = vadd.f32 %v4079, %v4235
      %v4450 = vadd.f32 %v4080, %v4240
      %v4451 = vadd.f32 %v4081, %v4245
      %v4452 = vadd.f32 %v4082, %v4250
      %v4453 = vadd.f32 %v4083, %v4255
      %v4454 = vadd.f32 %v4084, %v4260
      %v4455 = vadd.f32 %v4085, %v4265
      %v4456 = vadd.f32 %v4086, %v4270
      %v4457 = vadd.f32 %v4087, %v4275
      %v4458 = vadd.f32 %v4088, %v4280
      %v4459 = vadd.f32 %v4089, %v4285
      %v4460 = vadd.f32 %v4090, %v4290
      %v4461 = vadd.f32 %v4091, %v4295
      %v4462 = vadd.f32 %v4092, %v4300
      %v4463 = vadd.f32 %v4093, %v4305
      %v4464 = vadd.f32 %v4094, %v4310
      %v4465 = vadd.f32 %v4095, %v4315
      %v4466 = vadd.f32 %v4096, %v4320
      %v4467 = vadd.f32 %v4097, %v4325
      %v4468 = vadd.f32 %v4098, %v4330
      %v4469 = vadd.f32 %v4099, %v4335
      %v4470 = vadd.f32 %v4100, %v4340
      %v4471 = vadd.f32 %v4101, %v4345
      %v4472 = vadd.f32 %v4102, %v4350
      %v4473 = vadd.f32 %v4103, %v4355
      %v4474 = vadd.f32 %v4104, %v4360
      %v4475 = vadd.f32 %v4105, %v4365
      %v4476 = vadd.f32 %v4106, %v4370
      %v4477 = vadd.f32 %v4107, %v4375
      %v4478 = vadd.f32 %v4108, %v4380
      %v4479 = vadd.f32 %v4109, %v4385
      %v4480 = vadd.f32 %v4110, %v4390
      %v4481 = vadd.f32 %v4111, %v4395
      %v4482 = vadd.f32 %v4112, %v4400
      %v4483 = vadd.f32 %v4113, %v4405
      %v4484 = vadd.f32 %v4114, %v4410
      %v4485 = vadd.f32 %v4115, %v4415
      %v4486 = vadd.f32 %v4116, %v4420
      %v4487 = vadd.f32 %v4117, %v4425
      %v4488 = vadd.f32 %v4118, %v4430
      %v4489 = vadd.f32 %v4119, %v4435
      %v4490 = vadd.f32 %v4120, %v4440
      %s4491 = scalar_lea.vmem %s6, 24
      %v4492 = vld [vmem:[%s4491] sm:$0xf]
      %v4493 = vsel %vm1483, %v1869, 0
      %v4496 = vsel %vm1483, %v1870, 0
      %v4499 = vsel %vm1483, %v1871, 0
      %v4502 = vsel %vm2119, %v4492, 0
      %4504 = vmatprep.subr.mxu0 0.0
      %4505 = vmatpush1.msra.mxu0 %v4502
      %4506 = vmatprep.subr.mxu0 0.0
      %4507 = vmatpush1.msra.mxu0 0.0
      %4508 = vmatprep.subr.mxu0 0.0
      %4509 = vmatpush1.msra.mxu0 0.0
      %4510 = vmatprep.subr.mxu0 0.0
      %4511 = vmatpush1.msra.mxu0 0.0
      %4512 = vmatprep.subr.mxu0 0.0
      %4513 = vmatpush1.msra.mxu0 0.0
      %4514 = vmatprep.subr.mxu0 0.0
      %4515 = vmatpush1.msra.mxu0 0.0
      %4516 = vmatprep.subr.mxu0 0.0
      %4517 = vmatpush1.msra.mxu0 0.0
      %4518 = vmatprep.subr.mxu0 0.0
      %4519 = vmatpush1.msra.mxu0 0.0
      %4520 = vmatprep.subr.mxu0 0.0
      %4521 = vmatpush1.msra.mxu0 0.0
      %4522 = vmatprep.subr.mxu0 0.0
      %4523 = vmatpush1.msra.mxu0 0.0
      %4524 = vmatprep.subr.mxu0 0.0
      %4525 = vmatpush1.msra.mxu0 0.0
      %4526 = vmatprep.subr.mxu0 0.0
      %4527 = vmatpush1.msra.mxu0 0.0
      %4528 = vmatprep.subr.mxu0 0.0
      %4529 = vmatpush1.msra.mxu0 0.0
      %4530 = vmatprep.subr.mxu0 0.0
      %4531 = vmatpush1.msra.mxu0 0.0
      %4532 = vmatprep.subr.mxu0 0.0
      %4533 = vmatpush1.msra.mxu0 0.0
      %4534 = vmatprep.subr.mxu0 0.0
      %4535 = vmatpush1.msra.mxu0 0.0
      %4536 = vmatprep.subr.mxu0 0.0
      %4537 = vmatpush1.msra.mxu0 0.0
      %4538 = vmatprep.subr.mxu0 0.0
      %4539 = vmatpush1.msra.mxu0 0.0
      %4540 = vmatprep.subr.mxu0 0.0
      %4541 = vmatpush1.msra.mxu0 0.0
      %4542 = vmatprep.subr.mxu0 0.0
      %4543 = vmatpush1.msra.mxu0 0.0
      %4544 = vmatprep.subr.mxu0 0.0
      %4545 = vmatpush1.msra.mxu0 0.0
      %4546 = vmatprep.subr.mxu0 0.0
      %4547 = vmatpush1.msra.mxu0 0.0
      %4548 = vmatprep.subr.mxu0 0.0
      %4549 = vmatpush1.msra.mxu0 0.0
      %4550 = vmatprep.subr.mxu0 0.0
      %4551 = vmatpush1.msra.mxu0 0.0
      %4552 = vmatprep.subr.mxu0 0.0
      %4553 = vmatpush1.msra.mxu0 0.0
      %4554 = vmatprep.subr.mxu0 0.0
      %4555 = vmatpush1.msra.mxu0 0.0
      %4556 = vmatprep.subr.mxu0 0.0
      %4557 = vmatpush1.msra.mxu0 0.0
      %4558 = vmatprep.subr.mxu0 0.0
      %4559 = vmatpush1.msra.mxu0 0.0
      %4560 = vmatprep.subr.mxu0 0.0
      %4561 = vmatpush1.msra.mxu0 0.0
      %4562 = vmatprep.subr.mxu0 0.0
      %4563 = vmatpush1.msra.mxu0 0.0
      %4564 = vmatprep.subr.mxu0 0.0
      %4565 = vmatpush1.msra.mxu0 0.0
      %4566 = vmatprep.subr.mxu0 0.0
      %4567 = vmatpush1.msra.mxu0 0.0
      %4568 = vmatprep.mubr.f32.mxu0 0.0
      %4569 = vmatmul.mubr.f32.gmra.mrb[0].mxu0 %v2440
      %v4570 = vpop.f32.mrb[0].mxu0
      %v4571 = vadd.f32 0.0, %v4570
      %v4572 = vpop.f32.mrb[0].mxu0
      %4573 = vmatprep.mubr.f32.mxu0 0.0
      %4574 = vmatmul.mubr.f32.gmra.mrb[0].mxu0 %v2442
      %v4575 = vpop.f32.mrb[0].mxu0
      %v4576 = vadd.f32 0.0, %v4575
      %v4577 = vpop.f32.mrb[0].mxu0
      %4578 = vmatprep.mubr.f32.mxu0 0.0
      %4579 = vmatmul.mubr.f32.gmra.mrb[0].mxu0 %v2444
      %v4580 = vpop.f32.mrb[0].mxu0
      %v4581 = vadd.f32 0.0, %v4580
      %v4582 = vpop.f32.mrb[0].mxu0
      %4583 = vmatprep.mubr.f32.mxu0 0.0
      %4584 = vmatmul.mubr.f32.gmra.mrb[0].mxu0 %v2446
      %v4585 = vpop.f32.mrb[0].mxu0
      %v4586 = vadd.f32 0.0, %v4585
      %v4587 = vpop.f32.mrb[0].mxu0
      %4588 = vmatprep.mubr.f32.mxu0 0.0
      %4589 = vmatmul.mubr.f32.gmra.mrb[0].mxu0 %v2448
      %v4590 = vpop.f32.mrb[0].mxu0
      %v4591 = vadd.f32 0.0, %v4590
      %v4592 = vpop.f32.mrb[0].mxu0
      %4593 = vmatprep.mubr.f32.mxu0 0.0
      %4594 = vmatmul.mubr.f32.gmra.mrb[0].mxu0 %v2450
      %v4595 = vpop.f32.mrb[0].mxu0
      %v4596 = vadd.f32 0.0, %v4595
      %v4597 = vpop.f32.mrb[0].mxu0
      %4598 = vmatprep.mubr.f32.mxu0 0.0
      %4599 = vmatmul.mubr.f32.gmra.mrb[0].mxu0 %v2452
      %v4600 = vpop.f32.mrb[0].mxu0
      %v4601 = vadd.f32 0.0, %v4600
      %v4602 = vpop.f32.mrb[0].mxu0
      %4603 = vmatprep.mubr.f32.mxu0 0.0
      %4604 = vmatmul.mubr.f32.gmra.mrb[0].mxu0 %v2454
      %v4605 = vpop.f32.mrb[0].mxu0
      %v4606 = vadd.f32 0.0, %v4605
      %v4607 = vpop.f32.mrb[0].mxu0
      %4608 = vmatprep.mubr.f32.mxu0 0.0
      %4609 = vmatmul.mubr.f32.gmra.mrb[0].mxu0 %v2456
      %v4610 = vpop.f32.mrb[0].mxu0
      %v4611 = vadd.f32 0.0, %v4610
      %v4612 = vpop.f32.mrb[0].mxu0
      %4613 = vmatprep.mubr.f32.mxu0 0.0
      %4614 = vmatmul.mubr.f32.gmra.mrb[0].mxu0 %v2458
      %v4615 = vpop.f32.mrb[0].mxu0
      %v4616 = vadd.f32 0.0, %v4615
      %v4617 = vpop.f32.mrb[0].mxu0
      %4618 = vmatprep.mubr.f32.mxu0 0.0
      %4619 = vmatmul.mubr.f32.gmra.mrb[0].mxu0 %v2460
      %v4620 = vpop.f32.mrb[0].mxu0
      %v4621 = vadd.f32 0.0, %v4620
      %v4622 = vpop.f32.mrb[0].mxu0
      %4623 = vmatprep.mubr.f32.mxu0 0.0
      %4624 = vmatmul.mubr.f32.gmra.mrb[0].mxu0 %v2462
      %v4625 = vpop.f32.mrb[0].mxu0
      %v4626 = vadd.f32 0.0, %v4625
      %v4627 = vpop.f32.mrb[0].mxu0
      %4628 = vmatprep.mubr.f32.mxu0 0.0
      %4629 = vmatmul.mubr.f32.gmra.mrb[0].mxu0 %v2464
      %v4630 = vpop.f32.mrb[0].mxu0
      %v4631 = vadd.f32 0.0, %v4630
      %v4632 = vpop.f32.mrb[0].mxu0
      %4633 = vmatprep.mubr.f32.mxu0 0.0
      %4634 = vmatmul.mubr.f32.gmra.mrb[0].mxu0 %v2466
      %v4635 = vpop.f32.mrb[0].mxu0
      %v4636 = vadd.f32 0.0, %v4635
      %v4637 = vpop.f32.mrb[0].mxu0
      %4638 = vmatprep.mubr.f32.mxu0 0.0
      %4639 = vmatmul.mubr.f32.gmra.mrb[0].mxu0 %v2468
      %v4640 = vpop.f32.mrb[0].mxu0
      %v4641 = vadd.f32 0.0, %v4640
      %v4642 = vpop.f32.mrb[0].mxu0
      %4643 = vmatprep.mubr.f32.mxu0 0.0
      %4644 = vmatmul.mubr.f32.gmra.mrb[0].mxu0 %v2470
      %v4645 = vpop.f32.mrb[0].mxu0
      %v4646 = vadd.f32 0.0, %v4645
      %v4647 = vpop.f32.mrb[0].mxu0
      %4648 = vmatprep.mubr.f32.mxu0 0.0
      %4649 = vmatmul.mubr.f32.gmra.mrb[0].mxu0 %v2472
      %v4650 = vpop.f32.mrb[0].mxu0
      %v4651 = vadd.f32 0.0, %v4650
      %v4652 = vpop.f32.mrb[0].mxu0
      %4653 = vmatprep.mubr.f32.mxu0 0.0
      %4654 = vmatmul.mubr.f32.gmra.mrb[0].mxu0 %v2474
      %v4655 = vpop.f32.mrb[0].mxu0
      %v4656 = vadd.f32 0.0, %v4655
      %v4657 = vpop.f32.mrb[0].mxu0
      %4658 = vmatprep.mubr.f32.mxu0 0.0
      %4659 = vmatmul.mubr.f32.gmra.mrb[0].mxu0 %v2476
      %v4660 = vpop.f32.mrb[0].mxu0
      %v4661 = vadd.f32 0.0, %v4660
      %v4662 = vpop.f32.mrb[0].mxu0
      %4663 = vmatprep.mubr.f32.mxu0 0.0
      %4664 = vmatmul.mubr.f32.gmra.mrb[0].mxu0 %v2478
      %v4665 = vpop.f32.mrb[0].mxu0
      %v4666 = vadd.f32 0.0, %v4665
      %v4667 = vpop.f32.mrb[0].mxu0
      %4668 = vmatprep.mubr.f32.mxu0 0.0
      %4669 = vmatmul.mubr.f32.gmra.mrb[0].mxu0 %v2480
      %v4670 = vpop.f32.mrb[0].mxu0
      %v4671 = vadd.f32 0.0, %v4670
      %v4672 = vpop.f32.mrb[0].mxu0
      %4673 = vmatprep.mubr.f32.mxu0 0.0
      %4674 = vmatmul.mubr.f32.gmra.mrb[0].mxu0 %v2482
      %v4675 = vpop.f32.mrb[0].mxu0
      %v4676 = vadd.f32 0.0, %v4675
      %v4677 = vpop.f32.mrb[0].mxu0
      %4678 = vmatprep.mubr.f32.mxu0 0.0
      %4679 = vmatmul.mubr.f32.gmra.mrb[0].mxu0 %v2484
      %v4680 = vpop.f32.mrb[0].mxu0
      %v4681 = vadd.f32 0.0, %v4680
      %v4682 = vpop.f32.mrb[0].mxu0
      %4683 = vmatprep.mubr.f32.mxu0 0.0
      %4684 = vmatmul.mubr.f32.gmra.mrb[0].mxu0 %v2486
      %v4685 = vpop.f32.mrb[0].mxu0
      %v4686 = vadd.f32 0.0, %v4685
      %v4687 = vpop.f32.mrb[0].mxu0
      %4688 = vmatprep.mubr.f32.mxu0 0.0
      %4689 = vmatmul.mubr.f32.gmra.mrb[0].mxu0 %v2488
      %v4690 = vpop.f32.mrb[0].mxu0
      %v4691 = vadd.f32 0.0, %v4690
      %v4692 = vpop.f32.mrb[0].mxu0
      %4693 = vmatprep.mubr.f32.mxu0 0.0
      %4694 = vmatmul.mubr.f32.gmra.mrb[0].mxu0 %v2490
      %v4695 = vpop.f32.mrb[0].mxu0
      %v4696 = vadd.f32 0.0, %v4695
      %v4697 = vpop.f32.mrb[0].mxu0
      %4698 = vmatprep.mubr.f32.mxu0 0.0
      %4699 = vmatmul.mubr.f32.gmra.mrb[0].mxu0 %v2492
      %v4700 = vpop.f32.mrb[0].mxu0
      %v4701 = vadd.f32 0.0, %v4700
      %v4702 = vpop.f32.mrb[0].mxu0
      %4703 = vmatprep.mubr.f32.mxu0 0.0
      %4704 = vmatmul.mubr.f32.gmra.mrb[0].mxu0 %v2494
      %v4705 = vpop.f32.mrb[0].mxu0
      %v4706 = vadd.f32 0.0, %v4705
      %v4707 = vpop.f32.mrb[0].mxu0
      %4708 = vmatprep.mubr.f32.mxu0 0.0
      %4709 = vmatmul.mubr.f32.gmra.mrb[0].mxu0 %v2496
      %v4710 = vpop.f32.mrb[0].mxu0
      %v4711 = vadd.f32 0.0, %v4710
      %v4712 = vpop.f32.mrb[0].mxu0
      %4713 = vmatprep.mubr.f32.mxu0 0.0
      %4714 = vmatmul.mubr.f32.gmra.mrb[0].mxu0 %v2498
      %v4715 = vpop.f32.mrb[0].mxu0
      %v4716 = vadd.f32 0.0, %v4715
      %v4717 = vpop.f32.mrb[0].mxu0
      %4718 = vmatprep.mubr.f32.mxu0 0.0
      %4719 = vmatmul.mubr.f32.gmra.mrb[0].mxu0 %v2500
      %v4720 = vpop.f32.mrb[0].mxu0
      %v4721 = vadd.f32 0.0, %v4720
      %v4722 = vpop.f32.mrb[0].mxu0
      %4723 = vmatprep.mubr.f32.mxu0 0.0
      %4724 = vmatmul.mubr.f32.gmra.mrb[0].mxu0 %v2502
      %v4725 = vpop.f32.mrb[0].mxu0
      %v4726 = vadd.f32 0.0, %v4725
      %v4727 = vpop.f32.mrb[0].mxu0
      %4728 = vmatprep.mubr.f32.mxu0 0.0
      %4729 = vmatmul.mubr.f32.gmra.mrb[0].mxu0 %v2504
      %v4730 = vpop.f32.mrb[0].mxu0
      %v4731 = vadd.f32 0.0, %v4730
      %v4732 = vpop.f32.mrb[0].mxu0
      %4733 = vmatprep.mubr.f32.mxu0 0.0
      %4734 = vmatmul.mubr.f32.gmra.mrb[0].mxu0 %v2506
      %v4735 = vpop.f32.mrb[0].mxu0
      %v4736 = vadd.f32 0.0, %v4735
      %v4737 = vpop.f32.mrb[0].mxu0
      %4738 = vmatprep.mubr.f32.mxu0 0.0
      %4739 = vmatmul.mubr.f32.gmra.mrb[0].mxu0 %v2508
      %v4740 = vpop.f32.mrb[0].mxu0
      %v4741 = vadd.f32 0.0, %v4740
      %v4742 = vpop.f32.mrb[0].mxu0
      %4743 = vmatprep.mubr.f32.mxu0 0.0
      %4744 = vmatmul.mubr.f32.gmra.mrb[0].mxu0 %v2510
      %v4745 = vpop.f32.mrb[0].mxu0
      %v4746 = vadd.f32 0.0, %v4745
      %v4747 = vpop.f32.mrb[0].mxu0
      %4748 = vmatprep.mubr.f32.mxu0 0.0
      %4749 = vmatmul.mubr.f32.gmra.mrb[0].mxu0 %v2512
      %v4750 = vpop.f32.mrb[0].mxu0
      %v4751 = vadd.f32 0.0, %v4750
      %v4752 = vpop.f32.mrb[0].mxu0
      %4753 = vmatprep.mubr.f32.mxu0 0.0
      %4754 = vmatmul.mubr.f32.gmra.mrb[0].mxu0 %v2514
      %v4755 = vpop.f32.mrb[0].mxu0
      %v4756 = vadd.f32 0.0, %v4755
      %v4757 = vpop.f32.mrb[0].mxu0
      %4758 = vmatprep.mubr.f32.mxu0 0.0
      %4759 = vmatmul.mubr.f32.gmra.mrb[0].mxu0 %v2516
      %v4760 = vpop.f32.mrb[0].mxu0
      %v4761 = vadd.f32 0.0, %v4760
      %v4762 = vpop.f32.mrb[0].mxu0
      %4763 = vmatprep.mubr.f32.mxu0 0.0
      %4764 = vmatmul.mubr.f32.gmra.mrb[0].mxu0 %v2518
      %v4765 = vpop.f32.mrb[0].mxu0
      %v4766 = vadd.f32 0.0, %v4765
      %v4767 = vpop.f32.mrb[0].mxu0
      %4768 = vmatprep.mubr.f32.mxu0 0.0
      %4769 = vmatmul.mubr.f32.gmra.mrb[0].mxu0 %v2520
      %v4770 = vpop.f32.mrb[0].mxu0
      %v4771 = vadd.f32 0.0, %v4770
      %v4772 = vpop.f32.mrb[0].mxu0
      %4773 = vmatprep.mubr.f32.mxu0 0.0
      %4774 = vmatmul.mubr.f32.gmra.mrb[0].mxu0 %v2522
      %v4775 = vpop.f32.mrb[0].mxu0
      %v4776 = vadd.f32 0.0, %v4775
      %v4777 = vpop.f32.mrb[0].mxu0
      %4778 = vmatprep.mubr.f32.mxu0 0.0
      %4779 = vmatmul.mubr.f32.gmra.mrb[0].mxu0 %v3386
      %v4780 = vpop.f32.mrb[0].mxu0
      %v4781 = vadd.f32 0.0, %v4780
      %v4782 = vpop.f32.mrb[0].mxu0
      %4783 = vmatprep.mubr.f32.mxu0 0.0
      %4784 = vmatmul.mubr.f32.gmra.mrb[0].mxu0 %v3389
      %v4785 = vpop.f32.mrb[0].mxu0
      %v4786 = vadd.f32 0.0, %v4785
      %v4787 = vpop.f32.mrb[0].mxu0
      %4788 = vmatprep.mubr.f32.mxu0 0.0
      %4789 = vmatmul.mubr.f32.gmra.mrb[0].mxu0 %v3392
      %v4790 = vpop.f32.mrb[0].mxu0
      %v4791 = vadd.f32 0.0, %v4790
      %v4792 = vpop.f32.mrb[0].mxu0
      %4793 = vmatprep.mubr.f32.mxu0 0.0
      %4794 = vmatmul.mubr.f32.gmra.mrb[0].mxu0 %v4493
      %v4795 = vpop.f32.mrb[0].mxu0
      %v4796 = vadd.f32 0.0, %v4795
      %v4797 = vpop.f32.mrb[0].mxu0
      %4798 = vmatprep.mubr.f32.mxu0 0.0
      %4799 = vmatmul.mubr.f32.gmra.mrb[0].mxu0 %v4496
      %v4800 = vpop.f32.mrb[0].mxu0
      %v4801 = vadd.f32 0.0, %v4800
      %v4802 = vpop.f32.mrb[0].mxu0
      %4803 = vmatprep.mubr.f32.mxu0 0.0
      %4804 = vmatmul.mubr.f32.gmra.mrb[0].mxu0 %v4499
      %v4805 = vpop.f32.mrb[0].mxu0
      %v4806 = vadd.f32 0.0, %v4805
      %v4807 = vpop.f32.mrb[0].mxu0
      %4808 = vdwg.mxu0
      %v4809 = vadd.f32 %v4443, %v4571
      %v4810 = vadd.f32 %v4444, %v4576
      %v4811 = vadd.f32 %v4445, %v4581
      %v4812 = vadd.f32 %v4446, %v4586
      %v4813 = vadd.f32 %v4447, %v4591
      %v4814 = vadd.f32 %v4448, %v4596
      %v4815 = vadd.f32 %v4449, %v4601
      %v4816 = vadd.f32 %v4450, %v4606
      %v4817 = vadd.f32 %v4451, %v4611
      %v4818 = vadd.f32 %v4452, %v4616
      %v4819 = vadd.f32 %v4453, %v4621
      %v4820 = vadd.f32 %v4454, %v4626
      %v4821 = vadd.f32 %v4455, %v4631
      %v4822 = vadd.f32 %v4456, %v4636
      %v4823 = vadd.f32 %v4457, %v4641
      %v4824 = vadd.f32 %v4458, %v4646
      %v4825 = vadd.f32 %v4459, %v4651
      %v4826 = vadd.f32 %v4460, %v4656
      %v4827 = vadd.f32 %v4461, %v4661
      %v4828 = vadd.f32 %v4462, %v4666
      %v4829 = vadd.f32 %v4463, %v4671
      %v4830 = vadd.f32 %v4464, %v4676
      %v4831 = vadd.f32 %v4465, %v4681
      %v4832 = vadd.f32 %v4466, %v4686
      %v4833 = vadd.f32 %v4467, %v4691
      %v4834 = vadd.f32 %v4468, %v4696
      %v4835 = vadd.f32 %v4469, %v4701
      %v4836 = vadd.f32 %v4470, %v4706
      %v4837 = vadd.f32 %v4471, %v4711
      %v4838 = vadd.f32 %v4472, %v4716
      %v4839 = vadd.f32 %v4473, %v4721
      %v4840 = vadd.f32 %v4474, %v4726
      %v4841 = vadd.f32 %v4475, %v4731
      %v4842 = vadd.f32 %v4476, %v4736
      %v4843 = vadd.f32 %v4477, %v4741
      %v4844 = vadd.f32 %v4478, %v4746
      %v4845 = vadd.f32 %v4479, %v4751
      %v4846 = vadd.f32 %v4480, %v4756
      %v4847 = vadd.f32 %v4481, %v4761
      %v4848 = vadd.f32 %v4482, %v4766
      %v4849 = vadd.f32 %v4483, %v4771
      %v4850 = vadd.f32 %v4484, %v4776
      %v4851 = vadd.f32 %v4485, %v4781
      %v4852 = vadd.f32 %v4486, %v4786
      %v4853 = vadd.f32 %v4487, %v4791
      %v4854 = vadd.f32 %v4488, %v4796
      %v4855 = vadd.f32 %v4489, %v4801
      %v4856 = vadd.f32 %v4490, %v4806
      %s4857 = scalar_lea.vmem %s6, 28
      %v4858 = vld [vmem:[%s4857] sm:$0xf]
      %v4860 = vrot.slane %v1870, 1
      %v4861 = vsel %vm1925, %v3757, %v4860
      %v4862 = vrot.slane %v1871, 1
      %v4863 = vsel %vm1925, %v4860, %v4862
      %v4864 = vrot.slane %v1872, 1
      %v4865 = vsel %vm1925, %v4862, %v4864
      %v4866 = vsel %vm1483, %v4861, 0
      %v4868 = vsel %vm1483, %v4863, 0
      %v4870 = vsel %vm1483, %v4865, 0
      %v4873 = vsel %vm2119, %v4858, 0
      %4875 = vmatprep.subr.mxu0 0.0
      %4876 = vmatpush1.msra.mxu0 %v4873
      %4877 = vmatprep.subr.mxu0 0.0
      %4878 = vmatpush1.msra.mxu0 0.0
      %4879 = vmatprep.subr.mxu0 0.0
      %4880 = vmatpush1.msra.mxu0 0.0
      %4881 = vmatprep.subr.mxu0 0.0
      %4882 = vmatpush1.msra.mxu0 0.0
      %4883 = vmatprep.subr.mxu0 0.0
      %4884 = vmatpush1.msra.mxu0 0.0
      %4885 = vmatprep.subr.mxu0 0.0
      %4886 = vmatpush1.msra.mxu0 0.0
      %4887 = vmatprep.subr.mxu0 0.0
      %4888 = vmatpush1.msra.mxu0 0.0
      %4889 = vmatprep.subr.mxu0 0.0
      %4890 = vmatpush1.msra.mxu0 0.0
      %4891 = vmatprep.subr.mxu0 0.0
      %4892 = vmatpush1.msra.mxu0 0.0
      %4893 = vmatprep.subr.mxu0 0.0
      %4894 = vmatpush1.msra.mxu0 0.0
      %4895 = vmatprep.subr.mxu0 0.0
      %4896 = vmatpush1.msra.mxu0 0.0
      %4897 = vmatprep.subr.mxu0 0.0
      %4898 = vmatpush1.msra.mxu0 0.0
      %4899 = vmatprep.subr.mxu0 0.0
      %4900 = vmatpush1.msra.mxu0 0.0
      %4901 = vmatprep.subr.mxu0 0.0
      %4902 = vmatpush1.msra.mxu0 0.0
      %4903 = vmatprep.subr.mxu0 0.0
      %4904 = vmatpush1.msra.mxu0 0.0
      %4905 = vmatprep.subr.mxu0 0.0
      %4906 = vmatpush1.msra.mxu0 0.0
      %4907 = vmatprep.subr.mxu0 0.0
      %4908 = vmatpush1.msra.mxu0 0.0
      %4909 = vmatprep.subr.mxu0 0.0
      %4910 = vmatpush1.msra.mxu0 0.0
      %4911 = vmatprep.subr.mxu0 0.0
      %4912 = vmatpush1.msra.mxu0 0.0
      %4913 = vmatprep.subr.mxu0 0.0
      %4914 = vmatpush1.msra.mxu0 0.0
      %4915 = vmatprep.subr.mxu0 0.0
      %4916 = vmatpush1.msra.mxu0 0.0
      %4917 = vmatprep.subr.mxu0 0.0
      %4918 = vmatpush1.msra.mxu0 0.0
      %4919 = vmatprep.subr.mxu0 0.0
      %4920 = vmatpush1.msra.mxu0 0.0
      %4921 = vmatprep.subr.mxu0 0.0
      %4922 = vmatpush1.msra.mxu0 0.0
      %4923 = vmatprep.subr.mxu0 0.0
      %4924 = vmatpush1.msra.mxu0 0.0
      %4925 = vmatprep.subr.mxu0 0.0
      %4926 = vmatpush1.msra.mxu0 0.0
      %4927 = vmatprep.subr.mxu0 0.0
      %4928 = vmatpush1.msra.mxu0 0.0
      %4929 = vmatprep.subr.mxu0 0.0
      %4930 = vmatpush1.msra.mxu0 0.0
      %4931 = vmatprep.subr.mxu0 0.0
      %4932 = vmatpush1.msra.mxu0 0.0
      %4933 = vmatprep.subr.mxu0 0.0
      %4934 = vmatpush1.msra.mxu0 0.0
      %4935 = vmatprep.subr.mxu0 0.0
      %4936 = vmatpush1.msra.mxu0 0.0
      %4937 = vmatprep.subr.mxu0 0.0
      %4938 = vmatpush1.msra.mxu0 0.0
      %4939 = vmatprep.mubr.f32.mxu0 0.0
      %4940 = vmatmul.mubr.f32.gmra.mrb[0].mxu0 %v2035
      %v4941 = vpop.f32.mrb[0].mxu0
      %v4942 = vadd.f32 0.0, %v4941
      %v4943 = vpop.f32.mrb[0].mxu0
      %4944 = vmatprep.mubr.f32.mxu0 0.0
      %4945 = vmatmul.mubr.f32.gmra.mrb[0].mxu0 %v2037
      %v4946 = vpop.f32.mrb[0].mxu0
      %v4947 = vadd.f32 0.0, %v4946
      %v4948 = vpop.f32.mrb[0].mxu0
      %4949 = vmatprep.mubr.f32.mxu0 0.0
      %4950 = vmatmul.mubr.f32.gmra.mrb[0].mxu0 %v2039
      %v4951 = vpop.f32.mrb[0].mxu0
      %v4952 = vadd.f32 0.0, %v4951
      %v4953 = vpop.f32.mrb[0].mxu0
      %4954 = vmatprep.mubr.f32.mxu0 0.0
      %4955 = vmatmul.mubr.f32.gmra.mrb[0].mxu0 %v2041
      %v4956 = vpop.f32.mrb[0].mxu0
      %v4957 = vadd.f32 0.0, %v4956
      %v4958 = vpop.f32.mrb[0].mxu0
      %4959 = vmatprep.mubr.f32.mxu0 0.0
      %4960 = vmatmul.mubr.f32.gmra.mrb[0].mxu0 %v2043
      %v4961 = vpop.f32.mrb[0].mxu0
      %v4962 = vadd.f32 0.0, %v4961
      %v4963 = vpop.f32.mrb[0].mxu0
      %4964 = vmatprep.mubr.f32.mxu0 0.0
      %4965 = vmatmul.mubr.f32.gmra.mrb[0].mxu0 %v2045
      %v4966 = vpop.f32.mrb[0].mxu0
      %v4967 = vadd.f32 0.0, %v4966
      %v4968 = vpop.f32.mrb[0].mxu0
      %4969 = vmatprep.mubr.f32.mxu0 0.0
      %4970 = vmatmul.mubr.f32.gmra.mrb[0].mxu0 %v2047
      %v4971 = vpop.f32.mrb[0].mxu0
      %v4972 = vadd.f32 0.0, %v4971
      %v4973 = vpop.f32.mrb[0].mxu0
      %4974 = vmatprep.mubr.f32.mxu0 0.0
      %4975 = vmatmul.mubr.f32.gmra.mrb[0].mxu0 %v2049
      %v4976 = vpop.f32.mrb[0].mxu0
      %v4977 = vadd.f32 0.0, %v4976
      %v4978 = vpop.f32.mrb[0].mxu0
      %4979 = vmatprep.mubr.f32.mxu0 0.0
      %4980 = vmatmul.mubr.f32.gmra.mrb[0].mxu0 %v2051
      %v4981 = vpop.f32.mrb[0].mxu0
      %v4982 = vadd.f32 0.0, %v4981
      %v4983 = vpop.f32.mrb[0].mxu0
      %4984 = vmatprep.mubr.f32.mxu0 0.0
      %4985 = vmatmul.mubr.f32.gmra.mrb[0].mxu0 %v2053
      %v4986 = vpop.f32.mrb[0].mxu0
      %v4987 = vadd.f32 0.0, %v4986
      %v4988 = vpop.f32.mrb[0].mxu0
      %4989 = vmatprep.mubr.f32.mxu0 0.0
      %4990 = vmatmul.mubr.f32.gmra.mrb[0].mxu0 %v2055
      %v4991 = vpop.f32.mrb[0].mxu0
      %v4992 = vadd.f32 0.0, %v4991
      %v4993 = vpop.f32.mrb[0].mxu0
      %4994 = vmatprep.mubr.f32.mxu0 0.0
      %4995 = vmatmul.mubr.f32.gmra.mrb[0].mxu0 %v2057
      %v4996 = vpop.f32.mrb[0].mxu0
      %v4997 = vadd.f32 0.0, %v4996
      %v4998 = vpop.f32.mrb[0].mxu0
      %4999 = vmatprep.mubr.f32.mxu0 0.0
      %5000 = vmatmul.mubr.f32.gmra.mrb[0].mxu0 %v2059
      %v5001 = vpop.f32.mrb[0].mxu0
      %v5002 = vadd.f32 0.0, %v5001
      %v5003 = vpop.f32.mrb[0].mxu0
      %5004 = vmatprep.mubr.f32.mxu0 0.0
      %5005 = vmatmul.mubr.f32.gmra.mrb[0].mxu0 %v2061
      %v5006 = vpop.f32.mrb[0].mxu0
      %v5007 = vadd.f32 0.0, %v5006
      %v5008 = vpop.f32.mrb[0].mxu0
      %5009 = vmatprep.mubr.f32.mxu0 0.0
      %5010 = vmatmul.mubr.f32.gmra.mrb[0].mxu0 %v2063
      %v5011 = vpop.f32.mrb[0].mxu0
      %v5012 = vadd.f32 0.0, %v5011
      %v5013 = vpop.f32.mrb[0].mxu0
      %5014 = vmatprep.mubr.f32.mxu0 0.0
      %5015 = vmatmul.mubr.f32.gmra.mrb[0].mxu0 %v2065
      %v5016 = vpop.f32.mrb[0].mxu0
      %v5017 = vadd.f32 0.0, %v5016
      %v5018 = vpop.f32.mrb[0].mxu0
      %5019 = vmatprep.mubr.f32.mxu0 0.0
      %5020 = vmatmul.mubr.f32.gmra.mrb[0].mxu0 %v2067
      %v5021 = vpop.f32.mrb[0].mxu0
      %v5022 = vadd.f32 0.0, %v5021
      %v5023 = vpop.f32.mrb[0].mxu0
      %5024 = vmatprep.mubr.f32.mxu0 0.0
      %5025 = vmatmul.mubr.f32.gmra.mrb[0].mxu0 %v2069
      %v5026 = vpop.f32.mrb[0].mxu0
      %v5027 = vadd.f32 0.0, %v5026
      %v5028 = vpop.f32.mrb[0].mxu0
      %5029 = vmatprep.mubr.f32.mxu0 0.0
      %5030 = vmatmul.mubr.f32.gmra.mrb[0].mxu0 %v2071
      %v5031 = vpop.f32.mrb[0].mxu0
      %v5032 = vadd.f32 0.0, %v5031
      %v5033 = vpop.f32.mrb[0].mxu0
      %5034 = vmatprep.mubr.f32.mxu0 0.0
      %5035 = vmatmul.mubr.f32.gmra.mrb[0].mxu0 %v2073
      %v5036 = vpop.f32.mrb[0].mxu0
      %v5037 = vadd.f32 0.0, %v5036
      %v5038 = vpop.f32.mrb[0].mxu0
      %5039 = vmatprep.mubr.f32.mxu0 0.0
      %5040 = vmatmul.mubr.f32.gmra.mrb[0].mxu0 %v2075
      %v5041 = vpop.f32.mrb[0].mxu0
      %v5042 = vadd.f32 0.0, %v5041
      %v5043 = vpop.f32.mrb[0].mxu0
      %5044 = vmatprep.mubr.f32.mxu0 0.0
      %5045 = vmatmul.mubr.f32.gmra.mrb[0].mxu0 %v2077
      %v5046 = vpop.f32.mrb[0].mxu0
      %v5047 = vadd.f32 0.0, %v5046
      %v5048 = vpop.f32.mrb[0].mxu0
      %5049 = vmatprep.mubr.f32.mxu0 0.0
      %5050 = vmatmul.mubr.f32.gmra.mrb[0].mxu0 %v2079
      %v5051 = vpop.f32.mrb[0].mxu0
      %v5052 = vadd.f32 0.0, %v5051
      %v5053 = vpop.f32.mrb[0].mxu0
      %5054 = vmatprep.mubr.f32.mxu0 0.0
      %5055 = vmatmul.mubr.f32.gmra.mrb[0].mxu0 %v2081
      %v5056 = vpop.f32.mrb[0].mxu0
      %v5057 = vadd.f32 0.0, %v5056
      %v5058 = vpop.f32.mrb[0].mxu0
      %5059 = vmatprep.mubr.f32.mxu0 0.0
      %5060 = vmatmul.mubr.f32.gmra.mrb[0].mxu0 %v2083
      %v5061 = vpop.f32.mrb[0].mxu0
      %v5062 = vadd.f32 0.0, %v5061
      %v5063 = vpop.f32.mrb[0].mxu0
      %5064 = vmatprep.mubr.f32.mxu0 0.0
      %5065 = vmatmul.mubr.f32.gmra.mrb[0].mxu0 %v2085
      %v5066 = vpop.f32.mrb[0].mxu0
      %v5067 = vadd.f32 0.0, %v5066
      %v5068 = vpop.f32.mrb[0].mxu0
      %5069 = vmatprep.mubr.f32.mxu0 0.0
      %5070 = vmatmul.mubr.f32.gmra.mrb[0].mxu0 %v2087
      %v5071 = vpop.f32.mrb[0].mxu0
      %v5072 = vadd.f32 0.0, %v5071
      %v5073 = vpop.f32.mrb[0].mxu0
      %5074 = vmatprep.mubr.f32.mxu0 0.0
      %5075 = vmatmul.mubr.f32.gmra.mrb[0].mxu0 %v2089
      %v5076 = vpop.f32.mrb[0].mxu0
      %v5077 = vadd.f32 0.0, %v5076
      %v5078 = vpop.f32.mrb[0].mxu0
      %5079 = vmatprep.mubr.f32.mxu0 0.0
      %5080 = vmatmul.mubr.f32.gmra.mrb[0].mxu0 %v2091
      %v5081 = vpop.f32.mrb[0].mxu0
      %v5082 = vadd.f32 0.0, %v5081
      %v5083 = vpop.f32.mrb[0].mxu0
      %5084 = vmatprep.mubr.f32.mxu0 0.0
      %5085 = vmatmul.mubr.f32.gmra.mrb[0].mxu0 %v2093
      %v5086 = vpop.f32.mrb[0].mxu0
      %v5087 = vadd.f32 0.0, %v5086
      %v5088 = vpop.f32.mrb[0].mxu0
      %5089 = vmatprep.mubr.f32.mxu0 0.0
      %5090 = vmatmul.mubr.f32.gmra.mrb[0].mxu0 %v2095
      %v5091 = vpop.f32.mrb[0].mxu0
      %v5092 = vadd.f32 0.0, %v5091
      %v5093 = vpop.f32.mrb[0].mxu0
      %5094 = vmatprep.mubr.f32.mxu0 0.0
      %5095 = vmatmul.mubr.f32.gmra.mrb[0].mxu0 %v2097
      %v5096 = vpop.f32.mrb[0].mxu0
      %v5097 = vadd.f32 0.0, %v5096
      %v5098 = vpop.f32.mrb[0].mxu0
      %5099 = vmatprep.mubr.f32.mxu0 0.0
      %5100 = vmatmul.mubr.f32.gmra.mrb[0].mxu0 %v2099
      %v5101 = vpop.f32.mrb[0].mxu0
      %v5102 = vadd.f32 0.0, %v5101
      %v5103 = vpop.f32.mrb[0].mxu0
      %5104 = vmatprep.mubr.f32.mxu0 0.0
      %5105 = vmatmul.mubr.f32.gmra.mrb[0].mxu0 %v2101
      %v5106 = vpop.f32.mrb[0].mxu0
      %v5107 = vadd.f32 0.0, %v5106
      %v5108 = vpop.f32.mrb[0].mxu0
      %5109 = vmatprep.mubr.f32.mxu0 0.0
      %5110 = vmatmul.mubr.f32.gmra.mrb[0].mxu0 %v2103
      %v5111 = vpop.f32.mrb[0].mxu0
      %v5112 = vadd.f32 0.0, %v5111
      %v5113 = vpop.f32.mrb[0].mxu0
      %5114 = vmatprep.mubr.f32.mxu0 0.0
      %5115 = vmatmul.mubr.f32.gmra.mrb[0].mxu0 %v2105
      %v5116 = vpop.f32.mrb[0].mxu0
      %v5117 = vadd.f32 0.0, %v5116
      %v5118 = vpop.f32.mrb[0].mxu0
      %5119 = vmatprep.mubr.f32.mxu0 0.0
      %5120 = vmatmul.mubr.f32.gmra.mrb[0].mxu0 %v2107
      %v5121 = vpop.f32.mrb[0].mxu0
      %v5122 = vadd.f32 0.0, %v5121
      %v5123 = vpop.f32.mrb[0].mxu0
      %5124 = vmatprep.mubr.f32.mxu0 0.0
      %5125 = vmatmul.mubr.f32.gmra.mrb[0].mxu0 %v2109
      %v5126 = vpop.f32.mrb[0].mxu0
      %v5127 = vadd.f32 0.0, %v5126
      %v5128 = vpop.f32.mrb[0].mxu0
      %5129 = vmatprep.mubr.f32.mxu0 0.0
      %5130 = vmatmul.mubr.f32.gmra.mrb[0].mxu0 %v2111
      %v5131 = vpop.f32.mrb[0].mxu0
      %v5132 = vadd.f32 0.0, %v5131
      %v5133 = vpop.f32.mrb[0].mxu0
      %5134 = vmatprep.mubr.f32.mxu0 0.0
      %5135 = vmatmul.mubr.f32.gmra.mrb[0].mxu0 %v2113
      %v5136 = vpop.f32.mrb[0].mxu0
      %v5137 = vadd.f32 0.0, %v5136
      %v5138 = vpop.f32.mrb[0].mxu0
      %5139 = vmatprep.mubr.f32.mxu0 0.0
      %5140 = vmatmul.mubr.f32.gmra.mrb[0].mxu0 %v2115
      %v5141 = vpop.f32.mrb[0].mxu0
      %v5142 = vadd.f32 0.0, %v5141
      %v5143 = vpop.f32.mrb[0].mxu0
      %5144 = vmatprep.mubr.f32.mxu0 0.0
      %5145 = vmatmul.mubr.f32.gmra.mrb[0].mxu0 %v2117
      %v5146 = vpop.f32.mrb[0].mxu0
      %v5147 = vadd.f32 0.0, %v5146
      %v5148 = vpop.f32.mrb[0].mxu0
      %5149 = vmatprep.mubr.f32.mxu0 0.0
      %5150 = vmatmul.mubr.f32.gmra.mrb[0].mxu0 %v3759
      %v5151 = vpop.f32.mrb[0].mxu0
      %v5152 = vadd.f32 0.0, %v5151
      %v5153 = vpop.f32.mrb[0].mxu0
      %5154 = vmatprep.mubr.f32.mxu0 0.0
      %5155 = vmatmul.mubr.f32.gmra.mrb[0].mxu0 %v3761
      %v5156 = vpop.f32.mrb[0].mxu0
      %v5157 = vadd.f32 0.0, %v5156
      %v5158 = vpop.f32.mrb[0].mxu0
      %5159 = vmatprep.mubr.f32.mxu0 0.0
      %5160 = vmatmul.mubr.f32.gmra.mrb[0].mxu0 %v3763
      %v5161 = vpop.f32.mrb[0].mxu0
      %v5162 = vadd.f32 0.0, %v5161
      %v5163 = vpop.f32.mrb[0].mxu0
      %5164 = vmatprep.mubr.f32.mxu0 0.0
      %5165 = vmatmul.mubr.f32.gmra.mrb[0].mxu0 %v4866
      %v5166 = vpop.f32.mrb[0].mxu0
      %v5167 = vadd.f32 0.0, %v5166
      %v5168 = vpop.f32.mrb[0].mxu0
      %5169 = vmatprep.mubr.f32.mxu0 0.0
      %5170 = vmatmul.mubr.f32.gmra.mrb[0].mxu0 %v4868
      %v5171 = vpop.f32.mrb[0].mxu0
      %v5172 = vadd.f32 0.0, %v5171
      %v5173 = vpop.f32.mrb[0].mxu0
      %5174 = vmatprep.mubr.f32.mxu0 0.0
      %5175 = vmatmul.mubr.f32.gmra.mrb[0].mxu0 %v4870
      %v5176 = vpop.f32.mrb[0].mxu0
      %v5177 = vadd.f32 0.0, %v5176
      %v5178 = vpop.f32.mrb[0].mxu0
      %5179 = vdwg.mxu0
      %v5180 = vadd.f32 %v4809, %v4942
      %v5181 = vadd.f32 %v4810, %v4947
      %v5182 = vadd.f32 %v4811, %v4952
      %v5183 = vadd.f32 %v4812, %v4957
      %v5184 = vadd.f32 %v4813, %v4962
      %v5185 = vadd.f32 %v4814, %v4967
      %v5186 = vadd.f32 %v4815, %v4972
      %v5187 = vadd.f32 %v4816, %v4977
      %v5188 = vadd.f32 %v4817, %v4982
      %v5189 = vadd.f32 %v4818, %v4987
      %v5190 = vadd.f32 %v4819, %v4992
      %v5191 = vadd.f32 %v4820, %v4997
      %v5192 = vadd.f32 %v4821, %v5002
      %v5193 = vadd.f32 %v4822, %v5007
      %v5194 = vadd.f32 %v4823, %v5012
      %v5195 = vadd.f32 %v4824, %v5017
      %v5196 = vadd.f32 %v4825, %v5022
      %v5197 = vadd.f32 %v4826, %v5027
      %v5198 = vadd.f32 %v4827, %v5032
      %v5199 = vadd.f32 %v4828, %v5037
      %v5200 = vadd.f32 %v4829, %v5042
      %v5201 = vadd.f32 %v4830, %v5047
      %v5202 = vadd.f32 %v4831, %v5052
      %v5203 = vadd.f32 %v4832, %v5057
      %v5204 = vadd.f32 %v4833, %v5062
      %v5205 = vadd.f32 %v4834, %v5067
      %v5206 = vadd.f32 %v4835, %v5072
      %v5207 = vadd.f32 %v4836, %v5077
      %v5208 = vadd.f32 %v4837, %v5082
      %v5209 = vadd.f32 %v4838, %v5087
      %v5210 = vadd.f32 %v4839, %v5092
      %v5211 = vadd.f32 %v4840, %v5097
      %v5212 = vadd.f32 %v4841, %v5102
      %v5213 = vadd.f32 %v4842, %v5107
      %v5214 = vadd.f32 %v4843, %v5112
      %v5215 = vadd.f32 %v4844, %v5117
      %v5216 = vadd.f32 %v4845, %v5122
      %v5217 = vadd.f32 %v4846, %v5127
      %v5218 = vadd.f32 %v4847, %v5132
      %v5219 = vadd.f32 %v4848, %v5137
      %v5220 = vadd.f32 %v4849, %v5142
      %v5221 = vadd.f32 %v4850, %v5147
      %v5222 = vadd.f32 %v4851, %v5152
      %v5223 = vadd.f32 %v4852, %v5157
      %v5224 = vadd.f32 %v4853, %v5162
      %v5225 = vadd.f32 %v4854, %v5167
      %v5226 = vadd.f32 %v4855, %v5172
      %v5227 = vadd.f32 %v4856, %v5177
      %s5228 = scalar_lea.vmem %s6, 32
      %v5229 = vld [vmem:[%s5228] sm:$0xf]
      %v5230 = vrot.slane %v1870, 2
      %v5231 = vsel %vm2834, %v4127, %v5230
      %v5232 = vrot.slane %v1871, 2
      %v5233 = vsel %vm2834, %v5230, %v5232
      %v5234 = vrot.slane %v1872, 2
      %v5235 = vsel %vm2834, %v5232, %v5234
      %v5236 = vsel %vm1483, %v5231, 0
      %v5238 = vsel %vm1483, %v5233, 0
      %v5240 = vsel %vm1483, %v5235, 0
      %v5243 = vsel %vm2119, %v5229, 0
      %5245 = vmatprep.subr.mxu0 0.0
      %5246 = vmatpush1.msra.mxu0 %v5243
      %5247 = vmatprep.subr.mxu0 0.0
      %5248 = vmatpush1.msra.mxu0 0.0
      %5249 = vmatprep.subr.mxu0 0.0
      %5250 = vmatpush1.msra.mxu0 0.0
      %5251 = vmatprep.subr.mxu0 0.0
      %5252 = vmatpush1.msra.mxu0 0.0
      %5253 = vmatprep.subr.mxu0 0.0
      %5254 = vmatpush1.msra.mxu0 0.0
      %5255 = vmatprep.subr.mxu0 0.0
      %5256 = vmatpush1.msra.mxu0 0.0
      %5257 = vmatprep.subr.mxu0 0.0
      %5258 = vmatpush1.msra.mxu0 0.0
      %5259 = vmatprep.subr.mxu0 0.0
      %5260 = vmatpush1.msra.mxu0 0.0
      %5261 = vmatprep.subr.mxu0 0.0
      %5262 = vmatpush1.msra.mxu0 0.0
      %5263 = vmatprep.subr.mxu0 0.0
      %5264 = vmatpush1.msra.mxu0 0.0
      %5265 = vmatprep.subr.mxu0 0.0
      %5266 = vmatpush1.msra.mxu0 0.0
      %5267 = vmatprep.subr.mxu0 0.0
      %5268 = vmatpush1.msra.mxu0 0.0
      %5269 = vmatprep.subr.mxu0 0.0
      %5270 = vmatpush1.msra.mxu0 0.0
      %5271 = vmatprep.subr.mxu0 0.0
      %5272 = vmatpush1.msra.mxu0 0.0
      %5273 = vmatprep.subr.mxu0 0.0
      %5274 = vmatpush1.msra.mxu0 0.0
      %5275 = vmatprep.subr.mxu0 0.0
      %5276 = vmatpush1.msra.mxu0 0.0
      %5277 = vmatprep.subr.mxu0 0.0
      %5278 = vmatpush1.msra.mxu0 0.0
      %5279 = vmatprep.subr.mxu0 0.0
      %5280 = vmatpush1.msra.mxu0 0.0
      %5281 = vmatprep.subr.mxu0 0.0
      %5282 = vmatpush1.msra.mxu0 0.0
      %5283 = vmatprep.subr.mxu0 0.0
      %5284 = vmatpush1.msra.mxu0 0.0
      %5285 = vmatprep.subr.mxu0 0.0
      %5286 = vmatpush1.msra.mxu0 0.0
      %5287 = vmatprep.subr.mxu0 0.0
      %5288 = vmatpush1.msra.mxu0 0.0
      %5289 = vmatprep.subr.mxu0 0.0
      %5290 = vmatpush1.msra.mxu0 0.0
      %5291 = vmatprep.subr.mxu0 0.0
      %5292 = vmatpush1.msra.mxu0 0.0
      %5293 = vmatprep.subr.mxu0 0.0
      %5294 = vmatpush1.msra.mxu0 0.0
      %5295 = vmatprep.subr.mxu0 0.0
      %5296 = vmatpush1.msra.mxu0 0.0
      %5297 = vmatprep.subr.mxu0 0.0
      %5298 = vmatpush1.msra.mxu0 0.0
      %5299 = vmatprep.subr.mxu0 0.0
      %5300 = vmatpush1.msra.mxu0 0.0
      %5301 = vmatprep.subr.mxu0 0.0
      %5302 = vmatpush1.msra.mxu0 0.0
      %5303 = vmatprep.subr.mxu0 0.0
      %5304 = vmatpush1.msra.mxu0 0.0
      %5305 = vmatprep.subr.mxu0 0.0
      %5306 = vmatpush1.msra.mxu0 0.0
      %5307 = vmatprep.subr.mxu0 0.0
      %5308 = vmatpush1.msra.mxu0 0.0
      %5309 = vmatprep.mubr.f32.mxu0 0.0
      %5310 = vmatmul.mubr.f32.gmra.mrb[0].mxu0 %v2944
      %v5311 = vpop.f32.mrb[0].mxu0
      %v5312 = vadd.f32 0.0, %v5311
      %v5313 = vpop.f32.mrb[0].mxu0
      %5314 = vmatprep.mubr.f32.mxu0 0.0
      %5315 = vmatmul.mubr.f32.gmra.mrb[0].mxu0 %v2946
      %v5316 = vpop.f32.mrb[0].mxu0
      %v5317 = vadd.f32 0.0, %v5316
      %v5318 = vpop.f32.mrb[0].mxu0
      %5319 = vmatprep.mubr.f32.mxu0 0.0
      %5320 = vmatmul.mubr.f32.gmra.mrb[0].mxu0 %v2948
      %v5321 = vpop.f32.mrb[0].mxu0
      %v5322 = vadd.f32 0.0, %v5321
      %v5323 = vpop.f32.mrb[0].mxu0
      %5324 = vmatprep.mubr.f32.mxu0 0.0
      %5325 = vmatmul.mubr.f32.gmra.mrb[0].mxu0 %v2950
      %v5326 = vpop.f32.mrb[0].mxu0
      %v5327 = vadd.f32 0.0, %v5326
      %v5328 = vpop.f32.mrb[0].mxu0
      %5329 = vmatprep.mubr.f32.mxu0 0.0
      %5330 = vmatmul.mubr.f32.gmra.mrb[0].mxu0 %v2952
      %v5331 = vpop.f32.mrb[0].mxu0
      %v5332 = vadd.f32 0.0, %v5331
      %v5333 = vpop.f32.mrb[0].mxu0
      %5334 = vmatprep.mubr.f32.mxu0 0.0
      %5335 = vmatmul.mubr.f32.gmra.mrb[0].mxu0 %v2954
      %v5336 = vpop.f32.mrb[0].mxu0
      %v5337 = vadd.f32 0.0, %v5336
      %v5338 = vpop.f32.mrb[0].mxu0
      %5339 = vmatprep.mubr.f32.mxu0 0.0
      %5340 = vmatmul.mubr.f32.gmra.mrb[0].mxu0 %v2956
      %v5341 = vpop.f32.mrb[0].mxu0
      %v5342 = vadd.f32 0.0, %v5341
      %v5343 = vpop.f32.mrb[0].mxu0
      %5344 = vmatprep.mubr.f32.mxu0 0.0
      %5345 = vmatmul.mubr.f32.gmra.mrb[0].mxu0 %v2958
      %v5346 = vpop.f32.mrb[0].mxu0
      %v5347 = vadd.f32 0.0, %v5346
      %v5348 = vpop.f32.mrb[0].mxu0
      %5349 = vmatprep.mubr.f32.mxu0 0.0
      %5350 = vmatmul.mubr.f32.gmra.mrb[0].mxu0 %v2960
      %v5351 = vpop.f32.mrb[0].mxu0
      %v5352 = vadd.f32 0.0, %v5351
      %v5353 = vpop.f32.mrb[0].mxu0
      %5354 = vmatprep.mubr.f32.mxu0 0.0
      %5355 = vmatmul.mubr.f32.gmra.mrb[0].mxu0 %v2962
      %v5356 = vpop.f32.mrb[0].mxu0
      %v5357 = vadd.f32 0.0, %v5356
      %v5358 = vpop.f32.mrb[0].mxu0
      %5359 = vmatprep.mubr.f32.mxu0 0.0
      %5360 = vmatmul.mubr.f32.gmra.mrb[0].mxu0 %v2964
      %v5361 = vpop.f32.mrb[0].mxu0
      %v5362 = vadd.f32 0.0, %v5361
      %v5363 = vpop.f32.mrb[0].mxu0
      %5364 = vmatprep.mubr.f32.mxu0 0.0
      %5365 = vmatmul.mubr.f32.gmra.mrb[0].mxu0 %v2966
      %v5366 = vpop.f32.mrb[0].mxu0
      %v5367 = vadd.f32 0.0, %v5366
      %v5368 = vpop.f32.mrb[0].mxu0
      %5369 = vmatprep.mubr.f32.mxu0 0.0
      %5370 = vmatmul.mubr.f32.gmra.mrb[0].mxu0 %v2968
      %v5371 = vpop.f32.mrb[0].mxu0
      %v5372 = vadd.f32 0.0, %v5371
      %v5373 = vpop.f32.mrb[0].mxu0
      %5374 = vmatprep.mubr.f32.mxu0 0.0
      %5375 = vmatmul.mubr.f32.gmra.mrb[0].mxu0 %v2970
      %v5376 = vpop.f32.mrb[0].mxu0
      %v5377 = vadd.f32 0.0, %v5376
      %v5378 = vpop.f32.mrb[0].mxu0
      %5379 = vmatprep.mubr.f32.mxu0 0.0
      %5380 = vmatmul.mubr.f32.gmra.mrb[0].mxu0 %v2972
      %v5381 = vpop.f32.mrb[0].mxu0
      %v5382 = vadd.f32 0.0, %v5381
      %v5383 = vpop.f32.mrb[0].mxu0
      %5384 = vmatprep.mubr.f32.mxu0 0.0
      %5385 = vmatmul.mubr.f32.gmra.mrb[0].mxu0 %v2974
      %v5386 = vpop.f32.mrb[0].mxu0
      %v5387 = vadd.f32 0.0, %v5386
      %v5388 = vpop.f32.mrb[0].mxu0
      %5389 = vmatprep.mubr.f32.mxu0 0.0
      %5390 = vmatmul.mubr.f32.gmra.mrb[0].mxu0 %v2976
      %v5391 = vpop.f32.mrb[0].mxu0
      %v5392 = vadd.f32 0.0, %v5391
      %v5393 = vpop.f32.mrb[0].mxu0
      %5394 = vmatprep.mubr.f32.mxu0 0.0
      %5395 = vmatmul.mubr.f32.gmra.mrb[0].mxu0 %v2978
      %v5396 = vpop.f32.mrb[0].mxu0
      %v5397 = vadd.f32 0.0, %v5396
      %v5398 = vpop.f32.mrb[0].mxu0
      %5399 = vmatprep.mubr.f32.mxu0 0.0
      %5400 = vmatmul.mubr.f32.gmra.mrb[0].mxu0 %v2980
      %v5401 = vpop.f32.mrb[0].mxu0
      %v5402 = vadd.f32 0.0, %v5401
      %v5403 = vpop.f32.mrb[0].mxu0
      %5404 = vmatprep.mubr.f32.mxu0 0.0
      %5405 = vmatmul.mubr.f32.gmra.mrb[0].mxu0 %v2982
      %v5406 = vpop.f32.mrb[0].mxu0
      %v5407 = vadd.f32 0.0, %v5406
      %v5408 = vpop.f32.mrb[0].mxu0
      %5409 = vmatprep.mubr.f32.mxu0 0.0
      %5410 = vmatmul.mubr.f32.gmra.mrb[0].mxu0 %v2984
      %v5411 = vpop.f32.mrb[0].mxu0
      %v5412 = vadd.f32 0.0, %v5411
      %v5413 = vpop.f32.mrb[0].mxu0
      %5414 = vmatprep.mubr.f32.mxu0 0.0
      %5415 = vmatmul.mubr.f32.gmra.mrb[0].mxu0 %v2986
      %v5416 = vpop.f32.mrb[0].mxu0
      %v5417 = vadd.f32 0.0, %v5416
      %v5418 = vpop.f32.mrb[0].mxu0
      %5419 = vmatprep.mubr.f32.mxu0 0.0
      %5420 = vmatmul.mubr.f32.gmra.mrb[0].mxu0 %v2988
      %v5421 = vpop.f32.mrb[0].mxu0
      %v5422 = vadd.f32 0.0, %v5421
      %v5423 = vpop.f32.mrb[0].mxu0
      %5424 = vmatprep.mubr.f32.mxu0 0.0
      %5425 = vmatmul.mubr.f32.gmra.mrb[0].mxu0 %v2990
      %v5426 = vpop.f32.mrb[0].mxu0
      %v5427 = vadd.f32 0.0, %v5426
      %v5428 = vpop.f32.mrb[0].mxu0
      %5429 = vmatprep.mubr.f32.mxu0 0.0
      %5430 = vmatmul.mubr.f32.gmra.mrb[0].mxu0 %v2992
      %v5431 = vpop.f32.mrb[0].mxu0
      %v5432 = vadd.f32 0.0, %v5431
      %v5433 = vpop.f32.mrb[0].mxu0
      %5434 = vmatprep.mubr.f32.mxu0 0.0
      %5435 = vmatmul.mubr.f32.gmra.mrb[0].mxu0 %v2994
      %v5436 = vpop.f32.mrb[0].mxu0
      %v5437 = vadd.f32 0.0, %v5436
      %v5438 = vpop.f32.mrb[0].mxu0
      %5439 = vmatprep.mubr.f32.mxu0 0.0
      %5440 = vmatmul.mubr.f32.gmra.mrb[0].mxu0 %v2996
      %v5441 = vpop.f32.mrb[0].mxu0
      %v5442 = vadd.f32 0.0, %v5441
      %v5443 = vpop.f32.mrb[0].mxu0
      %5444 = vmatprep.mubr.f32.mxu0 0.0
      %5445 = vmatmul.mubr.f32.gmra.mrb[0].mxu0 %v2998
      %v5446 = vpop.f32.mrb[0].mxu0
      %v5447 = vadd.f32 0.0, %v5446
      %v5448 = vpop.f32.mrb[0].mxu0
      %5449 = vmatprep.mubr.f32.mxu0 0.0
      %5450 = vmatmul.mubr.f32.gmra.mrb[0].mxu0 %v3000
      %v5451 = vpop.f32.mrb[0].mxu0
      %v5452 = vadd.f32 0.0, %v5451
      %v5453 = vpop.f32.mrb[0].mxu0
      %5454 = vmatprep.mubr.f32.mxu0 0.0
      %5455 = vmatmul.mubr.f32.gmra.mrb[0].mxu0 %v3002
      %v5456 = vpop.f32.mrb[0].mxu0
      %v5457 = vadd.f32 0.0, %v5456
      %v5458 = vpop.f32.mrb[0].mxu0
      %5459 = vmatprep.mubr.f32.mxu0 0.0
      %5460 = vmatmul.mubr.f32.gmra.mrb[0].mxu0 %v3004
      %v5461 = vpop.f32.mrb[0].mxu0
      %v5462 = vadd.f32 0.0, %v5461
      %v5463 = vpop.f32.mrb[0].mxu0
      %5464 = vmatprep.mubr.f32.mxu0 0.0
      %5465 = vmatmul.mubr.f32.gmra.mrb[0].mxu0 %v3006
      %v5466 = vpop.f32.mrb[0].mxu0
      %v5467 = vadd.f32 0.0, %v5466
      %v5468 = vpop.f32.mrb[0].mxu0
      %5469 = vmatprep.mubr.f32.mxu0 0.0
      %5470 = vmatmul.mubr.f32.gmra.mrb[0].mxu0 %v3008
      %v5471 = vpop.f32.mrb[0].mxu0
      %v5472 = vadd.f32 0.0, %v5471
      %v5473 = vpop.f32.mrb[0].mxu0
      %5474 = vmatprep.mubr.f32.mxu0 0.0
      %5475 = vmatmul.mubr.f32.gmra.mrb[0].mxu0 %v3010
      %v5476 = vpop.f32.mrb[0].mxu0
      %v5477 = vadd.f32 0.0, %v5476
      %v5478 = vpop.f32.mrb[0].mxu0
      %5479 = vmatprep.mubr.f32.mxu0 0.0
      %5480 = vmatmul.mubr.f32.gmra.mrb[0].mxu0 %v3012
      %v5481 = vpop.f32.mrb[0].mxu0
      %v5482 = vadd.f32 0.0, %v5481
      %v5483 = vpop.f32.mrb[0].mxu0
      %5484 = vmatprep.mubr.f32.mxu0 0.0
      %5485 = vmatmul.mubr.f32.gmra.mrb[0].mxu0 %v3014
      %v5486 = vpop.f32.mrb[0].mxu0
      %v5487 = vadd.f32 0.0, %v5486
      %v5488 = vpop.f32.mrb[0].mxu0
      %5489 = vmatprep.mubr.f32.mxu0 0.0
      %5490 = vmatmul.mubr.f32.gmra.mrb[0].mxu0 %v3016
      %v5491 = vpop.f32.mrb[0].mxu0
      %v5492 = vadd.f32 0.0, %v5491
      %v5493 = vpop.f32.mrb[0].mxu0
      %5494 = vmatprep.mubr.f32.mxu0 0.0
      %5495 = vmatmul.mubr.f32.gmra.mrb[0].mxu0 %v3018
      %v5496 = vpop.f32.mrb[0].mxu0
      %v5497 = vadd.f32 0.0, %v5496
      %v5498 = vpop.f32.mrb[0].mxu0
      %5499 = vmatprep.mubr.f32.mxu0 0.0
      %5500 = vmatmul.mubr.f32.gmra.mrb[0].mxu0 %v3020
      %v5501 = vpop.f32.mrb[0].mxu0
      %v5502 = vadd.f32 0.0, %v5501
      %v5503 = vpop.f32.mrb[0].mxu0
      %5504 = vmatprep.mubr.f32.mxu0 0.0
      %5505 = vmatmul.mubr.f32.gmra.mrb[0].mxu0 %v3022
      %v5506 = vpop.f32.mrb[0].mxu0
      %v5507 = vadd.f32 0.0, %v5506
      %v5508 = vpop.f32.mrb[0].mxu0
      %5509 = vmatprep.mubr.f32.mxu0 0.0
      %5510 = vmatmul.mubr.f32.gmra.mrb[0].mxu0 %v3024
      %v5511 = vpop.f32.mrb[0].mxu0
      %v5512 = vadd.f32 0.0, %v5511
      %v5513 = vpop.f32.mrb[0].mxu0
      %5514 = vmatprep.mubr.f32.mxu0 0.0
      %5515 = vmatmul.mubr.f32.gmra.mrb[0].mxu0 %v3026
      %v5516 = vpop.f32.mrb[0].mxu0
      %v5517 = vadd.f32 0.0, %v5516
      %v5518 = vpop.f32.mrb[0].mxu0
      %5519 = vmatprep.mubr.f32.mxu0 0.0
      %5520 = vmatmul.mubr.f32.gmra.mrb[0].mxu0 %v4129
      %v5521 = vpop.f32.mrb[0].mxu0
      %v5522 = vadd.f32 0.0, %v5521
      %v5523 = vpop.f32.mrb[0].mxu0
      %5524 = vmatprep.mubr.f32.mxu0 0.0
      %5525 = vmatmul.mubr.f32.gmra.mrb[0].mxu0 %v4131
      %v5526 = vpop.f32.mrb[0].mxu0
      %v5527 = vadd.f32 0.0, %v5526
      %v5528 = vpop.f32.mrb[0].mxu0
      %5529 = vmatprep.mubr.f32.mxu0 0.0
      %5530 = vmatmul.mubr.f32.gmra.mrb[0].mxu0 %v4133
      %v5531 = vpop.f32.mrb[0].mxu0
      %v5532 = vadd.f32 0.0, %v5531
      %v5533 = vpop.f32.mrb[0].mxu0
      %5534 = vmatprep.mubr.f32.mxu0 0.0
      %5535 = vmatmul.mubr.f32.gmra.mrb[0].mxu0 %v5236
      %v5536 = vpop.f32.mrb[0].mxu0
      %v5537 = vadd.f32 0.0, %v5536
      %v5538 = vpop.f32.mrb[0].mxu0
      %5539 = vmatprep.mubr.f32.mxu0 0.0
      %5540 = vmatmul.mubr.f32.gmra.mrb[0].mxu0 %v5238
      %v5541 = vpop.f32.mrb[0].mxu0
      %v5542 = vadd.f32 0.0, %v5541
      %v5543 = vpop.f32.mrb[0].mxu0
      %5544 = vmatprep.mubr.f32.mxu0 0.0
      %5545 = vmatmul.mubr.f32.gmra.mrb[0].mxu0 %v5240
      %v5546 = vpop.f32.mrb[0].mxu0
      %v5547 = vadd.f32 0.0, %v5546
      %v5548 = vpop.f32.mrb[0].mxu0
      %5549 = vdwg.mxu0
      %v5550 = vadd.f32 %v5180, %v5312
      %v5551 = vadd.f32 %v5181, %v5317
      %v5552 = vadd.f32 %v5182, %v5322
      %v5553 = vadd.f32 %v5183, %v5327
      %v5554 = vadd.f32 %v5184, %v5332
      %v5555 = vadd.f32 %v5185, %v5337
      %v5556 = vadd.f32 %v5186, %v5342
      %v5557 = vadd.f32 %v5187, %v5347
      %v5558 = vadd.f32 %v5188, %v5352
      %v5559 = vadd.f32 %v5189, %v5357
      %v5560 = vadd.f32 %v5190, %v5362
      %v5561 = vadd.f32 %v5191, %v5367
      %v5562 = vadd.f32 %v5192, %v5372
      %v5563 = vadd.f32 %v5193, %v5377
      %v5564 = vadd.f32 %v5194, %v5382
      %v5565 = vadd.f32 %v5195, %v5387
      %v5566 = vadd.f32 %v5196, %v5392
      %v5567 = vadd.f32 %v5197, %v5397
      %v5568 = vadd.f32 %v5198, %v5402
      %v5569 = vadd.f32 %v5199, %v5407
      %v5570 = vadd.f32 %v5200, %v5412
      %v5571 = vadd.f32 %v5201, %v5417
      %v5572 = vadd.f32 %v5202, %v5422
      %v5573 = vadd.f32 %v5203, %v5427
      %v5574 = vadd.f32 %v5204, %v5432
      %v5575 = vadd.f32 %v5205, %v5437
      %v5576 = vadd.f32 %v5206, %v5442
      %v5577 = vadd.f32 %v5207, %v5447
      %v5578 = vadd.f32 %v5208, %v5452
      %v5579 = vadd.f32 %v5209, %v5457
      %v5580 = vadd.f32 %v5210, %v5462
      %v5581 = vadd.f32 %v5211, %v5467
      %v5582 = vadd.f32 %v5212, %v5472
      %v5583 = vadd.f32 %v5213, %v5477
      %v5584 = vadd.f32 %v5214, %v5482
      %v5585 = vadd.f32 %v5215, %v5487
      %v5586 = vadd.f32 %v5216, %v5492
      %v5587 = vadd.f32 %v5217, %v5497
      %v5588 = vadd.f32 %v5218, %v5502
      %v5589 = vadd.f32 %v5219, %v5507
      %v5590 = vadd.f32 %v5220, %v5512
      %v5591 = vadd.f32 %v5221, %v5517
      %v5592 = vadd.f32 %v5222, %v5522
      %v5593 = vadd.f32 %v5223, %v5527
      %v5594 = vadd.f32 %v5224, %v5532
      %v5595 = vadd.f32 %v5225, %v5537
      %v5596 = vadd.f32 %v5226, %v5542
      %v5597 = vadd.f32 %v5227, %v5547
      %v5598 = vld [vmem:[%s7] sm:$0x1]
      %v5600 = vlaneseq
      %v5601 = vshrl.u32 %v5600, 7
      %v5602 = vsub.s32 0, %v5601
      %v5603 = vrot.slane %v5598, %v5602
      %v5605 = vadd.f32 %v5550, %v5603
      %v5606 = vadd.f32 %v5551, %v5603
      %v5607 = vadd.f32 %v5552, %v5603
      %v5608 = vadd.f32 %v5553, %v5603
      %v5609 = vadd.f32 %v5554, %v5603
      %v5610 = vadd.f32 %v5555, %v5603
      %v5611 = vadd.f32 %v5556, %v5603
      %v5612 = vadd.f32 %v5557, %v5603
      %v5613 = vadd.f32 %v5558, %v5603
      %v5614 = vadd.f32 %v5559, %v5603
      %v5615 = vadd.f32 %v5560, %v5603
      %v5616 = vadd.f32 %v5561, %v5603
      %v5617 = vadd.f32 %v5562, %v5603
      %v5618 = vadd.f32 %v5563, %v5603
      %v5619 = vadd.f32 %v5564, %v5603
      %v5620 = vadd.f32 %v5565, %v5603
      %v5621 = vadd.f32 %v5566, %v5603
      %v5622 = vadd.f32 %v5567, %v5603
      %v5623 = vadd.f32 %v5568, %v5603
      %v5624 = vadd.f32 %v5569, %v5603
      %v5625 = vadd.f32 %v5570, %v5603
      %v5626 = vadd.f32 %v5571, %v5603
      %v5627 = vadd.f32 %v5572, %v5603
      %v5628 = vadd.f32 %v5573, %v5603
      %v5629 = vadd.f32 %v5574, %v5603
      %v5630 = vadd.f32 %v5575, %v5603
      %v5631 = vadd.f32 %v5576, %v5603
      %v5632 = vadd.f32 %v5577, %v5603
      %v5633 = vadd.f32 %v5578, %v5603
      %v5634 = vadd.f32 %v5579, %v5603
      %v5635 = vadd.f32 %v5580, %v5603
      %v5636 = vadd.f32 %v5581, %v5603
      %v5637 = vadd.f32 %v5582, %v5603
      %v5638 = vadd.f32 %v5583, %v5603
      %v5639 = vadd.f32 %v5584, %v5603
      %v5640 = vadd.f32 %v5585, %v5603
      %v5641 = vadd.f32 %v5586, %v5603
      %v5642 = vadd.f32 %v5587, %v5603
      %v5643 = vadd.f32 %v5588, %v5603
      %v5644 = vadd.f32 %v5589, %v5603
      %v5645 = vadd.f32 %v5590, %v5603
      %v5646 = vadd.f32 %v5591, %v5603
      %v5647 = vadd.f32 %v5592, %v5603
      %v5648 = vadd.f32 %v5593, %v5603
      %v5649 = vadd.f32 %v5594, %v5603
      %v5650 = vadd.f32 %v5595, %v5603
      %v5651 = vadd.f32 %v5596, %v5603
      %v5652 = vadd.f32 %v5597, %v5603
      %v5653 = vxor.u32 %v5605, 2147483648
      %v5654 = vxor.u32 %v5606, 2147483648
      %v5655 = vxor.u32 %v5607, 2147483648
      %v5656 = vxor.u32 %v5608, 2147483648
      %v5657 = vxor.u32 %v5609, 2147483648
      %v5658 = vxor.u32 %v5610, 2147483648
      %v5659 = vxor.u32 %v5611, 2147483648
      %v5660 = vxor.u32 %v5612, 2147483648
      %v5661 = vxor.u32 %v5613, 2147483648
      %v5662 = vxor.u32 %v5614, 2147483648
      %v5663 = vxor.u32 %v5615, 2147483648
      %v5664 = vxor.u32 %v5616, 2147483648
      %v5665 = vxor.u32 %v5617, 2147483648
      %v5666 = vxor.u32 %v5618, 2147483648
      %v5667 = vxor.u32 %v5619, 2147483648
      %v5668 = vxor.u32 %v5620, 2147483648
      %v5669 = vxor.u32 %v5621, 2147483648
      %v5670 = vxor.u32 %v5622, 2147483648
      %v5671 = vxor.u32 %v5623, 2147483648
      %v5672 = vxor.u32 %v5624, 2147483648
      %v5673 = vxor.u32 %v5625, 2147483648
      %v5674 = vxor.u32 %v5626, 2147483648
      %v5675 = vxor.u32 %v5627, 2147483648
      %v5676 = vxor.u32 %v5628, 2147483648
      %v5677 = vxor.u32 %v5629, 2147483648
      %v5678 = vxor.u32 %v5630, 2147483648
      %v5679 = vxor.u32 %v5631, 2147483648
      %v5680 = vxor.u32 %v5632, 2147483648
      %v5681 = vxor.u32 %v5633, 2147483648
      %v5682 = vxor.u32 %v5634, 2147483648
      %v5683 = vxor.u32 %v5635, 2147483648
      %v5684 = vxor.u32 %v5636, 2147483648
      %v5685 = vxor.u32 %v5637, 2147483648
      %v5686 = vxor.u32 %v5638, 2147483648
      %v5687 = vxor.u32 %v5639, 2147483648
      %v5688 = vxor.u32 %v5640, 2147483648
      %v5689 = vxor.u32 %v5641, 2147483648
      %v5690 = vxor.u32 %v5642, 2147483648
      %v5691 = vxor.u32 %v5643, 2147483648
      %v5692 = vxor.u32 %v5644, 2147483648
      %v5693 = vxor.u32 %v5645, 2147483648
      %v5694 = vxor.u32 %v5646, 2147483648
      %v5695 = vxor.u32 %v5647, 2147483648
      %v5696 = vxor.u32 %v5648, 2147483648
      %v5697 = vxor.u32 %v5649, 2147483648
      %v5698 = vxor.u32 %v5650, 2147483648
      %v5699 = vxor.u32 %v5651, 2147483648
      %v5700 = vxor.u32 %v5652, 2147483648
      %v5701 = vmul.f32 %v5653, 1.442695
      %v5702 = vpow.pop %v5701
      %v5703 = vmul.f32 %v5654, 1.442695
      %v5704 = vpow.pop %v5703
      %v5705 = vmul.f32 %v5655, 1.442695
      %v5706 = vpow.pop %v5705
      %v5707 = vmul.f32 %v5656, 1.442695
      %v5708 = vpow.pop %v5707
      %v5709 = vmul.f32 %v5657, 1.442695
      %v5710 = vpow.pop %v5709
      %v5711 = vmul.f32 %v5658, 1.442695
      %v5712 = vpow.pop %v5711
      %v5713 = vmul.f32 %v5659, 1.442695
      %v5714 = vpow.pop %v5713
      %v5715 = vmul.f32 %v5660, 1.442695
      %v5716 = vpow.pop %v5715
      %v5717 = vmul.f32 %v5661, 1.442695
      %v5718 = vpow.pop %v5717
      %v5719 = vmul.f32 %v5662, 1.442695
      %v5720 = vpow.pop %v5719
      %v5721 = vmul.f32 %v5663, 1.442695
      %v5722 = vpow.pop %v5721
      %v5723 = vmul.f32 %v5664, 1.442695
      %v5724 = vpow.pop %v5723
      %v5725 = vmul.f32 %v5665, 1.442695
      %v5726 = vpow.pop %v5725
      %v5727 = vmul.f32 %v5666, 1.442695
      %v5728 = vpow.pop %v5727
      %v5729 = vmul.f32 %v5667, 1.442695
      %v5730 = vpow.pop %v5729
      %v5731 = vmul.f32 %v5668, 1.442695
      %v5732 = vpow.pop %v5731
      %v5733 = vmul.f32 %v5669, 1.442695
      %v5734 = vpow.pop %v5733
      %v5735 = vmul.f32 %v5670, 1.442695
      %v5736 = vpow.pop %v5735
      %v5737 = vmul.f32 %v5671, 1.442695
      %v5738 = vpow.pop %v5737
      %v5739 = vmul.f32 %v5672, 1.442695
      %v5740 = vpow.pop %v5739
      %v5741 = vmul.f32 %v5673, 1.442695
      %v5742 = vpow.pop %v5741
      %v5743 = vmul.f32 %v5674, 1.442695
      %v5744 = vpow.pop %v5743
      %v5745 = vmul.f32 %v5675, 1.442695
      %v5746 = vpow.pop %v5745
      %v5747 = vmul.f32 %v5676, 1.442695
      %v5748 = vpow.pop %v5747
      %v5749 = vmul.f32 %v5677, 1.442695
      %v5750 = vpow.pop %v5749
      %v5751 = vmul.f32 %v5678, 1.442695
      %v5752 = vpow.pop %v5751
      %v5753 = vmul.f32 %v5679, 1.442695
      %v5754 = vpow.pop %v5753
      %v5755 = vmul.f32 %v5680, 1.442695
      %v5756 = vpow.pop %v5755
      %v5757 = vmul.f32 %v5681, 1.442695
      %v5758 = vpow.pop %v5757
      %v5759 = vmul.f32 %v5682, 1.442695
      %v5760 = vpow.pop %v5759
      %v5761 = vmul.f32 %v5683, 1.442695
      %v5762 = vpow.pop %v5761
      %v5763 = vmul.f32 %v5684, 1.442695
      %v5764 = vpow.pop %v5763
      %v5765 = vmul.f32 %v5685, 1.442695
      %v5766 = vpow.pop %v5765
      %v5767 = vmul.f32 %v5686, 1.442695
      %v5768 = vpow.pop %v5767
      %v5769 = vmul.f32 %v5687, 1.442695
      %v5770 = vpow.pop %v5769
      %v5771 = vmul.f32 %v5688, 1.442695
      %v5772 = vpow.pop %v5771
      %v5773 = vmul.f32 %v5689, 1.442695
      %v5774 = vpow.pop %v5773
      %v5775 = vmul.f32 %v5690, 1.442695
      %v5776 = vpow.pop %v5775
      %v5777 = vmul.f32 %v5691, 1.442695
      %v5778 = vpow.pop %v5777
      %v5779 = vmul.f32 %v5692, 1.442695
      %v5780 = vpow.pop %v5779
      %v5781 = vmul.f32 %v5693, 1.442695
      %v5782 = vpow.pop %v5781
      %v5783 = vmul.f32 %v5694, 1.442695
      %v5784 = vpow.pop %v5783
      %v5785 = vmul.f32 %v5695, 1.442695
      %v5786 = vpow.pop %v5785
      %v5787 = vmul.f32 %v5696, 1.442695
      %v5788 = vpow.pop %v5787
      %v5789 = vmul.f32 %v5697, 1.442695
      %v5790 = vpow.pop %v5789
      %v5791 = vmul.f32 %v5698, 1.442695
      %v5792 = vpow.pop %v5791
      %v5793 = vmul.f32 %v5699, 1.442695
      %v5794 = vpow.pop %v5793
      %v5795 = vmul.f32 %v5700, 1.442695
      %v5796 = vpow.pop %v5795
      %v5797 = vadd.f32 %v5702, 1.0
      %v5798 = vadd.f32 %v5704, 1.0
      %v5799 = vadd.f32 %v5706, 1.0
      %v5800 = vadd.f32 %v5708, 1.0
      %v5801 = vadd.f32 %v5710, 1.0
      %v5802 = vadd.f32 %v5712, 1.0
      %v5803 = vadd.f32 %v5714, 1.0
      %v5804 = vadd.f32 %v5716, 1.0
      %v5805 = vadd.f32 %v5718, 1.0
      %v5806 = vadd.f32 %v5720, 1.0
      %v5807 = vadd.f32 %v5722, 1.0
      %v5808 = vadd.f32 %v5724, 1.0
      %v5809 = vadd.f32 %v5726, 1.0
      %v5810 = vadd.f32 %v5728, 1.0
      %v5811 = vadd.f32 %v5730, 1.0
      %v5812 = vadd.f32 %v5732, 1.0
      %v5813 = vadd.f32 %v5734, 1.0
      %v5814 = vadd.f32 %v5736, 1.0
      %v5815 = vadd.f32 %v5738, 1.0
      %v5816 = vadd.f32 %v5740, 1.0
      %v5817 = vadd.f32 %v5742, 1.0
      %v5818 = vadd.f32 %v5744, 1.0
      %v5819 = vadd.f32 %v5746, 1.0
      %v5820 = vadd.f32 %v5748, 1.0
      %v5821 = vadd.f32 %v5750, 1.0
      %v5822 = vadd.f32 %v5752, 1.0
      %v5823 = vadd.f32 %v5754, 1.0
      %v5824 = vadd.f32 %v5756, 1.0
      %v5825 = vadd.f32 %v5758, 1.0
      %v5826 = vadd.f32 %v5760, 1.0
      %v5827 = vadd.f32 %v5762, 1.0
      %v5828 = vadd.f32 %v5764, 1.0
      %v5829 = vadd.f32 %v5766, 1.0
      %v5830 = vadd.f32 %v5768, 1.0
      %v5831 = vadd.f32 %v5770, 1.0
      %v5832 = vadd.f32 %v5772, 1.0
      %v5833 = vadd.f32 %v5774, 1.0
      %v5834 = vadd.f32 %v5776, 1.0
      %v5835 = vadd.f32 %v5778, 1.0
      %v5836 = vadd.f32 %v5780, 1.0
      %v5837 = vadd.f32 %v5782, 1.0
      %v5838 = vadd.f32 %v5784, 1.0
      %v5839 = vadd.f32 %v5786, 1.0
      %v5840 = vadd.f32 %v5788, 1.0
      %v5841 = vadd.f32 %v5790, 1.0
      %v5842 = vadd.f32 %v5792, 1.0
      %v5843 = vadd.f32 %v5794, 1.0
      %v5844 = vadd.f32 %v5796, 1.0
      %v5845 = vrcp.pop %v5797
      %v5846 = vmul.f32 1.0, %v5845
      %v5847 = vrcp.pop %v5798
      %v5848 = vmul.f32 1.0, %v5847
      %v5849 = vrcp.pop %v5799
      %v5850 = vmul.f32 1.0, %v5849
      %v5851 = vrcp.pop %v5800
      %v5852 = vmul.f32 1.0, %v5851
      %v5853 = vrcp.pop %v5801
      %v5854 = vmul.f32 1.0, %v5853
      %v5855 = vrcp.pop %v5802
      %v5856 = vmul.f32 1.0, %v5855
      %v5857 = vrcp.pop %v5803
      %v5858 = vmul.f32 1.0, %v5857
      %v5859 = vrcp.pop %v5804
      %v5860 = vmul.f32 1.0, %v5859
      %v5861 = vrcp.pop %v5805
      %v5862 = vmul.f32 1.0, %v5861
      %v5863 = vrcp.pop %v5806
      %v5864 = vmul.f32 1.0, %v5863
      %v5865 = vrcp.pop %v5807
      %v5866 = vmul.f32 1.0, %v5865
      %v5867 = vrcp.pop %v5808
      %v5868 = vmul.f32 1.0, %v5867
      %v5869 = vrcp.pop %v5809
      %v5870 = vmul.f32 1.0, %v5869
      %v5871 = vrcp.pop %v5810
      %v5872 = vmul.f32 1.0, %v5871
      %v5873 = vrcp.pop %v5811
      %v5874 = vmul.f32 1.0, %v5873
      %v5875 = vrcp.pop %v5812
      %v5876 = vmul.f32 1.0, %v5875
      %v5877 = vrcp.pop %v5813
      %v5878 = vmul.f32 1.0, %v5877
      %v5879 = vrcp.pop %v5814
      %v5880 = vmul.f32 1.0, %v5879
      %v5881 = vrcp.pop %v5815
      %v5882 = vmul.f32 1.0, %v5881
      %v5883 = vrcp.pop %v5816
      %v5884 = vmul.f32 1.0, %v5883
      %v5885 = vrcp.pop %v5817
      %v5886 = vmul.f32 1.0, %v5885
      %v5887 = vrcp.pop %v5818
      %v5888 = vmul.f32 1.0, %v5887
      %v5889 = vrcp.pop %v5819
      %v5890 = vmul.f32 1.0, %v5889
      %v5891 = vrcp.pop %v5820
      %v5892 = vmul.f32 1.0, %v5891
      %v5893 = vrcp.pop %v5821
      %v5894 = vmul.f32 1.0, %v5893
      %v5895 = vrcp.pop %v5822
      %v5896 = vmul.f32 1.0, %v5895
      %v5897 = vrcp.pop %v5823
      %v5898 = vmul.f32 1.0, %v5897
      %v5899 = vrcp.pop %v5824
      %v5900 = vmul.f32 1.0, %v5899
      %v5901 = vrcp.pop %v5825
      %v5902 = vmul.f32 1.0, %v5901
      %v5903 = vrcp.pop %v5826
      %v5904 = vmul.f32 1.0, %v5903
      %v5905 = vrcp.pop %v5827
      %v5906 = vmul.f32 1.0, %v5905
      %v5907 = vrcp.pop %v5828
      %v5908 = vmul.f32 1.0, %v5907
      %v5909 = vrcp.pop %v5829
      %v5910 = vmul.f32 1.0, %v5909
      %v5911 = vrcp.pop %v5830
      %v5912 = vmul.f32 1.0, %v5911
      %v5913 = vrcp.pop %v5831
      %v5914 = vmul.f32 1.0, %v5913
      %v5915 = vrcp.pop %v5832
      %v5916 = vmul.f32 1.0, %v5915
      %v5917 = vrcp.pop %v5833
      %v5918 = vmul.f32 1.0, %v5917
      %v5919 = vrcp.pop %v5834
      %v5920 = vmul.f32 1.0, %v5919
      %v5921 = vrcp.pop %v5835
      %v5922 = vmul.f32 1.0, %v5921
      %v5923 = vrcp.pop %v5836
      %v5924 = vmul.f32 1.0, %v5923
      %v5925 = vrcp.pop %v5837
      %v5926 = vmul.f32 1.0, %v5925
      %v5927 = vrcp.pop %v5838
      %v5928 = vmul.f32 1.0, %v5927
      %v5929 = vrcp.pop %v5839
      %v5930 = vmul.f32 1.0, %v5929
      %v5931 = vrcp.pop %v5840
      %v5932 = vmul.f32 1.0, %v5931
      %v5933 = vrcp.pop %v5841
      %v5934 = vmul.f32 1.0, %v5933
      %v5935 = vrcp.pop %v5842
      %v5936 = vmul.f32 1.0, %v5935
      %v5937 = vrcp.pop %v5843
      %v5938 = vmul.f32 1.0, %v5937
      %v5939 = vrcp.pop %v5844
      %v5940 = vmul.f32 1.0, %v5939
      %v5941 = vmul.f32 %v5605, %v5846
      %v5942 = vmul.f32 %v5606, %v5848
      %v5943 = vmul.f32 %v5607, %v5850
      %v5944 = vmul.f32 %v5608, %v5852
      %v5945 = vmul.f32 %v5609, %v5854
      %v5946 = vmul.f32 %v5610, %v5856
      %v5947 = vmul.f32 %v5611, %v5858
      %v5948 = vmul.f32 %v5612, %v5860
      %v5949 = vmul.f32 %v5613, %v5862
      %v5950 = vmul.f32 %v5614, %v5864
      %v5951 = vmul.f32 %v5615, %v5866
      %v5952 = vmul.f32 %v5616, %v5868
      %v5953 = vmul.f32 %v5617, %v5870
      %v5954 = vmul.f32 %v5618, %v5872
      %v5955 = vmul.f32 %v5619, %v5874
      %v5956 = vmul.f32 %v5620, %v5876
      %v5957 = vmul.f32 %v5621, %v5878
      %v5958 = vmul.f32 %v5622, %v5880
      %v5959 = vmul.f32 %v5623, %v5882
      %v5960 = vmul.f32 %v5624, %v5884
      %v5961 = vmul.f32 %v5625, %v5886
      %v5962 = vmul.f32 %v5626, %v5888
      %v5963 = vmul.f32 %v5627, %v5890
      %v5964 = vmul.f32 %v5628, %v5892
      %v5965 = vmul.f32 %v5629, %v5894
      %v5966 = vmul.f32 %v5630, %v5896
      %v5967 = vmul.f32 %v5631, %v5898
      %v5968 = vmul.f32 %v5632, %v5900
      %v5969 = vmul.f32 %v5633, %v5902
      %v5970 = vmul.f32 %v5634, %v5904
      %v5971 = vmul.f32 %v5635, %v5906
      %v5972 = vmul.f32 %v5636, %v5908
      %v5973 = vmul.f32 %v5637, %v5910
      %v5974 = vmul.f32 %v5638, %v5912
      %v5975 = vmul.f32 %v5639, %v5914
      %v5976 = vmul.f32 %v5640, %v5916
      %v5977 = vmul.f32 %v5641, %v5918
      %v5978 = vmul.f32 %v5642, %v5920
      %v5979 = vmul.f32 %v5643, %v5922
      %v5980 = vmul.f32 %v5644, %v5924
      %v5981 = vmul.f32 %v5645, %v5926
      %v5982 = vmul.f32 %v5646, %v5928
      %v5983 = vmul.f32 %v5647, %v5930
      %v5984 = vmul.f32 %v5648, %v5932
      %v5985 = vmul.f32 %v5649, %v5934
      %v5986 = vmul.f32 %v5650, %v5936
      %v5987 = vmul.f32 %v5651, %v5938
      %v5988 = vmul.f32 %v5652, %v5940
      %v5989 = vld [vmem:[%s8] sm:$0xf]
      %v5990 = vld [vmem:[%s9] sm:$0x1]
      %v5992 = vlaneseq
      %v5993 = vshrl.u32 %v5992, 7
      %v5994 = vsub.s32 0, %v5993
      %v5995 = vrot.slane %v5990, %v5994
      %v5998 = vsel %vm1483, %v5941, 0
      %v6001 = vsel %vm1483, %v5942, 0
      %v6004 = vsel %vm1483, %v5943, 0
      %v6007 = vsel %vm1483, %v5944, 0
      %v6010 = vsel %vm1483, %v5945, 0
      %v6013 = vsel %vm1483, %v5946, 0
      %v6016 = vsel %vm1483, %v5947, 0
      %v6019 = vsel %vm1483, %v5948, 0
      %v6022 = vsel %vm1483, %v5949, 0
      %v6025 = vsel %vm1483, %v5950, 0
      %v6028 = vsel %vm1483, %v5951, 0
      %v6031 = vsel %vm1483, %v5952, 0
      %v6034 = vsel %vm1483, %v5953, 0
      %v6037 = vsel %vm1483, %v5954, 0
      %v6040 = vsel %vm1483, %v5955, 0
      %v6043 = vsel %vm1483, %v5956, 0
      %v6046 = vsel %vm1483, %v5957, 0
      %v6049 = vsel %vm1483, %v5958, 0
      %v6052 = vsel %vm1483, %v5959, 0
      %v6055 = vsel %vm1483, %v5960, 0
      %v6058 = vsel %vm1483, %v5961, 0
      %v6061 = vsel %vm1483, %v5962, 0
      %v6064 = vsel %vm1483, %v5963, 0
      %v6067 = vsel %vm1483, %v5964, 0
      %v6070 = vsel %vm1483, %v5965, 0
      %v6073 = vsel %vm1483, %v5966, 0
      %v6076 = vsel %vm1483, %v5967, 0
      %v6079 = vsel %vm1483, %v5968, 0
      %v6082 = vsel %vm1483, %v5969, 0
      %v6085 = vsel %vm1483, %v5970, 0
      %v6088 = vsel %vm1483, %v5971, 0
      %v6091 = vsel %vm1483, %v5972, 0
      %v6094 = vsel %vm1483, %v5973, 0
      %v6097 = vsel %vm1483, %v5974, 0
      %v6100 = vsel %vm1483, %v5975, 0
      %v6103 = vsel %vm1483, %v5976, 0
      %v6106 = vsel %vm1483, %v5977, 0
      %v6109 = vsel %vm1483, %v5978, 0
      %v6112 = vsel %vm1483, %v5979, 0
      %v6115 = vsel %vm1483, %v5980, 0
      %v6118 = vsel %vm1483, %v5981, 0
      %v6121 = vsel %vm1483, %v5982, 0
      %v6124 = vsel %vm1483, %v5983, 0
      %v6127 = vsel %vm1483, %v5984, 0
      %v6130 = vsel %vm1483, %v5985, 0
      %v6133 = vsel %vm1483, %v5986, 0
      %v6136 = vsel %vm1483, %v5987, 0
      %v6139 = vsel %vm1483, %v5988, 0
      %v6142 = vsel %vm2119, %v5989, 0
      %6144 = vmatprep.subr.mxu0 0.0
      %6145 = vmatpush1.msra.mxu0 %v6142
      %6146 = vmatprep.subr.mxu0 0.0
      %6147 = vmatpush1.msra.mxu0 0.0
      %6148 = vmatprep.subr.mxu0 0.0
      %6149 = vmatpush1.msra.mxu0 0.0
      %6150 = vmatprep.subr.mxu0 0.0
      %6151 = vmatpush1.msra.mxu0 0.0
      %6152 = vmatprep.subr.mxu0 0.0
      %6153 = vmatpush1.msra.mxu0 0.0
      %6154 = vmatprep.subr.mxu0 0.0
      %6155 = vmatpush1.msra.mxu0 0.0
      %6156 = vmatprep.subr.mxu0 0.0
      %6157 = vmatpush1.msra.mxu0 0.0
      %6158 = vmatprep.subr.mxu0 0.0
      %6159 = vmatpush1.msra.mxu0 0.0
      %6160 = vmatprep.subr.mxu0 0.0
      %6161 = vmatpush1.msra.mxu0 0.0
      %6162 = vmatprep.subr.mxu0 0.0
      %6163 = vmatpush1.msra.mxu0 0.0
      %6164 = vmatprep.subr.mxu0 0.0
      %6165 = vmatpush1.msra.mxu0 0.0
      %6166 = vmatprep.subr.mxu0 0.0
      %6167 = vmatpush1.msra.mxu0 0.0
      %6168 = vmatprep.subr.mxu0 0.0
      %6169 = vmatpush1.msra.mxu0 0.0
      %6170 = vmatprep.subr.mxu0 0.0
      %6171 = vmatpush1.msra.mxu0 0.0
      %6172 = vmatprep.subr.mxu0 0.0
      %6173 = vmatpush1.msra.mxu0 0.0
      %6174 = vmatprep.subr.mxu0 0.0
      %6175 = vmatpush1.msra.mxu0 0.0
      %6176 = vmatprep.subr.mxu0 0.0
      %6177 = vmatpush1.msra.mxu0 0.0
      %6178 = vmatprep.subr.mxu0 0.0
      %6179 = vmatpush1.msra.mxu0 0.0
      %6180 = vmatprep.subr.mxu0 0.0
      %6181 = vmatpush1.msra.mxu0 0.0
      %6182 = vmatprep.subr.mxu0 0.0
      %6183 = vmatpush1.msra.mxu0 0.0
      %6184 = vmatprep.subr.mxu0 0.0
      %6185 = vmatpush1.msra.mxu0 0.0
      %6186 = vmatprep.subr.mxu0 0.0
      %6187 = vmatpush1.msra.mxu0 0.0
      %6188 = vmatprep.subr.mxu0 0.0
      %6189 = vmatpush1.msra.mxu0 0.0
      %6190 = vmatprep.subr.mxu0 0.0
      %6191 = vmatpush1.msra.mxu0 0.0
      %6192 = vmatprep.subr.mxu0 0.0
      %6193 = vmatpush1.msra.mxu0 0.0
      %6194 = vmatprep.subr.mxu0 0.0
      %6195 = vmatpush1.msra.mxu0 0.0
      %6196 = vmatprep.subr.mxu0 0.0
      %6197 = vmatpush1.msra.mxu0 0.0
      %6198 = vmatprep.subr.mxu0 0.0
      %6199 = vmatpush1.msra.mxu0 0.0
      %6200 = vmatprep.subr.mxu0 0.0
      %6201 = vmatpush1.msra.mxu0 0.0
      %6202 = vmatprep.subr.mxu0 0.0
      %6203 = vmatpush1.msra.mxu0 0.0
      %6204 = vmatprep.subr.mxu0 0.0
      %6205 = vmatpush1.msra.mxu0 0.0
      %6206 = vmatprep.subr.mxu0 0.0
      %6207 = vmatpush1.msra.mxu0 0.0
      %6208 = vmatprep.mubr.f32.mxu0 0.0
      %6209 = vmatmul.mubr.f32.gmra.mrb[0].mxu0 %v5998
      %v6210 = vpop.f32.mrb[0].mxu0
      %v6211 = vadd.f32 %v5995, %v6210
      %v6212 = vpop.f32.mrb[0].mxu0
      %6213 = vmatprep.mubr.f32.mxu0 0.0
      %6214 = vmatmul.mubr.f32.gmra.mrb[0].mxu0 %v6001
      %v6215 = vpop.f32.mrb[0].mxu0
      %v6216 = vadd.f32 %v5995, %v6215
      %v6217 = vpop.f32.mrb[0].mxu0
      %6218 = vmatprep.mubr.f32.mxu0 0.0
      %6219 = vmatmul.mubr.f32.gmra.mrb[0].mxu0 %v6004
      %v6220 = vpop.f32.mrb[0].mxu0
      %v6221 = vadd.f32 %v5995, %v6220
      %v6222 = vpop.f32.mrb[0].mxu0
      %6223 = vmatprep.mubr.f32.mxu0 0.0
      %6224 = vmatmul.mubr.f32.gmra.mrb[0].mxu0 %v6007
      %v6225 = vpop.f32.mrb[0].mxu0
      %v6226 = vadd.f32 %v5995, %v6225
      %v6227 = vpop.f32.mrb[0].mxu0
      %6228 = vmatprep.mubr.f32.mxu0 0.0
      %6229 = vmatmul.mubr.f32.gmra.mrb[0].mxu0 %v6010
      %v6230 = vpop.f32.mrb[0].mxu0
      %v6231 = vadd.f32 %v5995, %v6230
      %v6232 = vpop.f32.mrb[0].mxu0
      %6233 = vmatprep.mubr.f32.mxu0 0.0
      %6234 = vmatmul.mubr.f32.gmra.mrb[0].mxu0 %v6013
      %v6235 = vpop.f32.mrb[0].mxu0
      %v6236 = vadd.f32 %v5995, %v6235
      %v6237 = vpop.f32.mrb[0].mxu0
      %6238 = vmatprep.mubr.f32.mxu0 0.0
      %6239 = vmatmul.mubr.f32.gmra.mrb[0].mxu0 %v6016
      %v6240 = vpop.f32.mrb[0].mxu0
      %v6241 = vadd.f32 %v5995, %v6240
      %v6242 = vpop.f32.mrb[0].mxu0
      %6243 = vmatprep.mubr.f32.mxu0 0.0
      %6244 = vmatmul.mubr.f32.gmra.mrb[0].mxu0 %v6019
      %v6245 = vpop.f32.mrb[0].mxu0
      %v6246 = vadd.f32 %v5995, %v6245
      %v6247 = vpop.f32.mrb[0].mxu0
      %6248 = vmatprep.mubr.f32.mxu0 0.0
      %6249 = vmatmul.mubr.f32.gmra.mrb[0].mxu0 %v6022
      %v6250 = vpop.f32.mrb[0].mxu0
      %v6251 = vadd.f32 %v5995, %v6250
      %v6252 = vpop.f32.mrb[0].mxu0
      %6253 = vmatprep.mubr.f32.mxu0 0.0
      %6254 = vmatmul.mubr.f32.gmra.mrb[0].mxu0 %v6025
      %v6255 = vpop.f32.mrb[0].mxu0
      %v6256 = vadd.f32 %v5995, %v6255
      %v6257 = vpop.f32.mrb[0].mxu0
      %6258 = vmatprep.mubr.f32.mxu0 0.0
      %6259 = vmatmul.mubr.f32.gmra.mrb[0].mxu0 %v6028
      %v6260 = vpop.f32.mrb[0].mxu0
      %v6261 = vadd.f32 %v5995, %v6260
      %v6262 = vpop.f32.mrb[0].mxu0
      %6263 = vmatprep.mubr.f32.mxu0 0.0
      %6264 = vmatmul.mubr.f32.gmra.mrb[0].mxu0 %v6031
      %v6265 = vpop.f32.mrb[0].mxu0
      %v6266 = vadd.f32 %v5995, %v6265
      %v6267 = vpop.f32.mrb[0].mxu0
      %6268 = vmatprep.mubr.f32.mxu0 0.0
      %6269 = vmatmul.mubr.f32.gmra.mrb[0].mxu0 %v6034
      %v6270 = vpop.f32.mrb[0].mxu0
      %v6271 = vadd.f32 %v5995, %v6270
      %v6272 = vpop.f32.mrb[0].mxu0
      %6273 = vmatprep.mubr.f32.mxu0 0.0
      %6274 = vmatmul.mubr.f32.gmra.mrb[0].mxu0 %v6037
      %v6275 = vpop.f32.mrb[0].mxu0
      %v6276 = vadd.f32 %v5995, %v6275
      %v6277 = vpop.f32.mrb[0].mxu0
      %6278 = vmatprep.mubr.f32.mxu0 0.0
      %6279 = vmatmul.mubr.f32.gmra.mrb[0].mxu0 %v6040
      %v6280 = vpop.f32.mrb[0].mxu0
      %v6281 = vadd.f32 %v5995, %v6280
      %v6282 = vpop.f32.mrb[0].mxu0
      %6283 = vmatprep.mubr.f32.mxu0 0.0
      %6284 = vmatmul.mubr.f32.gmra.mrb[0].mxu0 %v6043
      %v6285 = vpop.f32.mrb[0].mxu0
      %v6286 = vadd.f32 %v5995, %v6285
      %v6287 = vpop.f32.mrb[0].mxu0
      %6288 = vmatprep.mubr.f32.mxu0 0.0
      %6289 = vmatmul.mubr.f32.gmra.mrb[0].mxu0 %v6046
      %v6290 = vpop.f32.mrb[0].mxu0
      %v6291 = vadd.f32 %v5995, %v6290
      %v6292 = vpop.f32.mrb[0].mxu0
      %6293 = vmatprep.mubr.f32.mxu0 0.0
      %6294 = vmatmul.mubr.f32.gmra.mrb[0].mxu0 %v6049
      %v6295 = vpop.f32.mrb[0].mxu0
      %v6296 = vadd.f32 %v5995, %v6295
      %v6297 = vpop.f32.mrb[0].mxu0
      %6298 = vmatprep.mubr.f32.mxu0 0.0
      %6299 = vmatmul.mubr.f32.gmra.mrb[0].mxu0 %v6052
      %v6300 = vpop.f32.mrb[0].mxu0
      %v6301 = vadd.f32 %v5995, %v6300
      %v6302 = vpop.f32.mrb[0].mxu0
      %6303 = vmatprep.mubr.f32.mxu0 0.0
      %6304 = vmatmul.mubr.f32.gmra.mrb[0].mxu0 %v6055
      %v6305 = vpop.f32.mrb[0].mxu0
      %v6306 = vadd.f32 %v5995, %v6305
      %v6307 = vpop.f32.mrb[0].mxu0
      %6308 = vmatprep.mubr.f32.mxu0 0.0
      %6309 = vmatmul.mubr.f32.gmra.mrb[0].mxu0 %v6058
      %v6310 = vpop.f32.mrb[0].mxu0
      %v6311 = vadd.f32 %v5995, %v6310
      %v6312 = vpop.f32.mrb[0].mxu0
      %6313 = vmatprep.mubr.f32.mxu0 0.0
      %6314 = vmatmul.mubr.f32.gmra.mrb[0].mxu0 %v6061
      %v6315 = vpop.f32.mrb[0].mxu0
      %v6316 = vadd.f32 %v5995, %v6315
      %v6317 = vpop.f32.mrb[0].mxu0
      %6318 = vmatprep.mubr.f32.mxu0 0.0
      %6319 = vmatmul.mubr.f32.gmra.mrb[0].mxu0 %v6064
      %v6320 = vpop.f32.mrb[0].mxu0
      %v6321 = vadd.f32 %v5995, %v6320
      %v6322 = vpop.f32.mrb[0].mxu0
      %6323 = vmatprep.mubr.f32.mxu0 0.0
      %6324 = vmatmul.mubr.f32.gmra.mrb[0].mxu0 %v6067
      %v6325 = vpop.f32.mrb[0].mxu0
      %v6326 = vadd.f32 %v5995, %v6325
      %v6327 = vpop.f32.mrb[0].mxu0
      %6328 = vmatprep.mubr.f32.mxu0 0.0
      %6329 = vmatmul.mubr.f32.gmra.mrb[0].mxu0 %v6070
      %v6330 = vpop.f32.mrb[0].mxu0
      %v6331 = vadd.f32 %v5995, %v6330
      %v6332 = vpop.f32.mrb[0].mxu0
      %6333 = vmatprep.mubr.f32.mxu0 0.0
      %6334 = vmatmul.mubr.f32.gmra.mrb[0].mxu0 %v6073
      %v6335 = vpop.f32.mrb[0].mxu0
      %v6336 = vadd.f32 %v5995, %v6335
      %v6337 = vpop.f32.mrb[0].mxu0
      %6338 = vmatprep.mubr.f32.mxu0 0.0
      %6339 = vmatmul.mubr.f32.gmra.mrb[0].mxu0 %v6076
      %v6340 = vpop.f32.mrb[0].mxu0
      %v6341 = vadd.f32 %v5995, %v6340
      %v6342 = vpop.f32.mrb[0].mxu0
      %6343 = vmatprep.mubr.f32.mxu0 0.0
      %6344 = vmatmul.mubr.f32.gmra.mrb[0].mxu0 %v6079
      %v6345 = vpop.f32.mrb[0].mxu0
      %v6346 = vadd.f32 %v5995, %v6345
      %v6347 = vpop.f32.mrb[0].mxu0
      %6348 = vmatprep.mubr.f32.mxu0 0.0
      %6349 = vmatmul.mubr.f32.gmra.mrb[0].mxu0 %v6082
      %v6350 = vpop.f32.mrb[0].mxu0
      %v6351 = vadd.f32 %v5995, %v6350
      %v6352 = vpop.f32.mrb[0].mxu0
      %6353 = vmatprep.mubr.f32.mxu0 0.0
      %6354 = vmatmul.mubr.f32.gmra.mrb[0].mxu0 %v6085
      %v6355 = vpop.f32.mrb[0].mxu0
      %v6356 = vadd.f32 %v5995, %v6355
      %v6357 = vpop.f32.mrb[0].mxu0
      %6358 = vmatprep.mubr.f32.mxu0 0.0
      %6359 = vmatmul.mubr.f32.gmra.mrb[0].mxu0 %v6088
      %v6360 = vpop.f32.mrb[0].mxu0
      %v6361 = vadd.f32 %v5995, %v6360
      %v6362 = vpop.f32.mrb[0].mxu0
      %6363 = vmatprep.mubr.f32.mxu0 0.0
      %6364 = vmatmul.mubr.f32.gmra.mrb[0].mxu0 %v6091
      %v6365 = vpop.f32.mrb[0].mxu0
      %v6366 = vadd.f32 %v5995, %v6365
      %v6367 = vpop.f32.mrb[0].mxu0
      %6368 = vmatprep.mubr.f32.mxu0 0.0
      %6369 = vmatmul.mubr.f32.gmra.mrb[0].mxu0 %v6094
      %v6370 = vpop.f32.mrb[0].mxu0
      %v6371 = vadd.f32 %v5995, %v6370
      %v6372 = vpop.f32.mrb[0].mxu0
      %6373 = vmatprep.mubr.f32.mxu0 0.0
      %6374 = vmatmul.mubr.f32.gmra.mrb[0].mxu0 %v6097
      %v6375 = vpop.f32.mrb[0].mxu0
      %v6376 = vadd.f32 %v5995, %v6375
      %v6377 = vpop.f32.mrb[0].mxu0
      %6378 = vmatprep.mubr.f32.mxu0 0.0
      %6379 = vmatmul.mubr.f32.gmra.mrb[0].mxu0 %v6100
      %v6380 = vpop.f32.mrb[0].mxu0
      %v6381 = vadd.f32 %v5995, %v6380
      %v6382 = vpop.f32.mrb[0].mxu0
      %6383 = vmatprep.mubr.f32.mxu0 0.0
      %6384 = vmatmul.mubr.f32.gmra.mrb[0].mxu0 %v6103
      %v6385 = vpop.f32.mrb[0].mxu0
      %v6386 = vadd.f32 %v5995, %v6385
      %v6387 = vpop.f32.mrb[0].mxu0
      %6388 = vmatprep.mubr.f32.mxu0 0.0
      %6389 = vmatmul.mubr.f32.gmra.mrb[0].mxu0 %v6106
      %v6390 = vpop.f32.mrb[0].mxu0
      %v6391 = vadd.f32 %v5995, %v6390
      %v6392 = vpop.f32.mrb[0].mxu0
      %6393 = vmatprep.mubr.f32.mxu0 0.0
      %6394 = vmatmul.mubr.f32.gmra.mrb[0].mxu0 %v6109
      %v6395 = vpop.f32.mrb[0].mxu0
      %v6396 = vadd.f32 %v5995, %v6395
      %v6397 = vpop.f32.mrb[0].mxu0
      %6398 = vmatprep.mubr.f32.mxu0 0.0
      %6399 = vmatmul.mubr.f32.gmra.mrb[0].mxu0 %v6112
      %v6400 = vpop.f32.mrb[0].mxu0
      %v6401 = vadd.f32 %v5995, %v6400
      %v6402 = vpop.f32.mrb[0].mxu0
      %6403 = vmatprep.mubr.f32.mxu0 0.0
      %6404 = vmatmul.mubr.f32.gmra.mrb[0].mxu0 %v6115
      %v6405 = vpop.f32.mrb[0].mxu0
      %v6406 = vadd.f32 %v5995, %v6405
      %v6407 = vpop.f32.mrb[0].mxu0
      %6408 = vmatprep.mubr.f32.mxu0 0.0
      %6409 = vmatmul.mubr.f32.gmra.mrb[0].mxu0 %v6118
      %v6410 = vpop.f32.mrb[0].mxu0
      %v6411 = vadd.f32 %v5995, %v6410
      %v6412 = vpop.f32.mrb[0].mxu0
      %6413 = vmatprep.mubr.f32.mxu0 0.0
      %6414 = vmatmul.mubr.f32.gmra.mrb[0].mxu0 %v6121
      %v6415 = vpop.f32.mrb[0].mxu0
      %v6416 = vadd.f32 %v5995, %v6415
      %v6417 = vpop.f32.mrb[0].mxu0
      %6418 = vmatprep.mubr.f32.mxu0 0.0
      %6419 = vmatmul.mubr.f32.gmra.mrb[0].mxu0 %v6124
      %v6420 = vpop.f32.mrb[0].mxu0
      %v6421 = vadd.f32 %v5995, %v6420
      %v6422 = vpop.f32.mrb[0].mxu0
      %6423 = vmatprep.mubr.f32.mxu0 0.0
      %6424 = vmatmul.mubr.f32.gmra.mrb[0].mxu0 %v6127
      %v6425 = vpop.f32.mrb[0].mxu0
      %v6426 = vadd.f32 %v5995, %v6425
      %v6427 = vpop.f32.mrb[0].mxu0
      %6428 = vmatprep.mubr.f32.mxu0 0.0
      %6429 = vmatmul.mubr.f32.gmra.mrb[0].mxu0 %v6130
      %v6430 = vpop.f32.mrb[0].mxu0
      %v6431 = vadd.f32 %v5995, %v6430
      %v6432 = vpop.f32.mrb[0].mxu0
      %6433 = vmatprep.mubr.f32.mxu0 0.0
      %6434 = vmatmul.mubr.f32.gmra.mrb[0].mxu0 %v6133
      %v6435 = vpop.f32.mrb[0].mxu0
      %v6436 = vadd.f32 %v5995, %v6435
      %v6437 = vpop.f32.mrb[0].mxu0
      %6438 = vmatprep.mubr.f32.mxu0 0.0
      %6439 = vmatmul.mubr.f32.gmra.mrb[0].mxu0 %v6136
      %v6440 = vpop.f32.mrb[0].mxu0
      %v6441 = vadd.f32 %v5995, %v6440
      %v6442 = vpop.f32.mrb[0].mxu0
      %6443 = vmatprep.mubr.f32.mxu0 0.0
      %6444 = vmatmul.mubr.f32.gmra.mrb[0].mxu0 %v6139
      %v6445 = vpop.f32.mrb[0].mxu0
      %v6446 = vadd.f32 %v5995, %v6445
      %v6447 = vpop.f32.mrb[0].mxu0
      %6448 = vdwg.mxu0
      %v6449 = vxor.u32 %v6211, 2147483648
      %v6450 = vxor.u32 %v6216, 2147483648
      %v6451 = vxor.u32 %v6221, 2147483648
      %v6452 = vxor.u32 %v6226, 2147483648
      %v6453 = vxor.u32 %v6231, 2147483648
      %v6454 = vxor.u32 %v6236, 2147483648
      %v6455 = vxor.u32 %v6241, 2147483648
      %v6456 = vxor.u32 %v6246, 2147483648
      %v6457 = vxor.u32 %v6251, 2147483648
      %v6458 = vxor.u32 %v6256, 2147483648
      %v6459 = vxor.u32 %v6261, 2147483648
      %v6460 = vxor.u32 %v6266, 2147483648
      %v6461 = vxor.u32 %v6271, 2147483648
      %v6462 = vxor.u32 %v6276, 2147483648
      %v6463 = vxor.u32 %v6281, 2147483648
      %v6464 = vxor.u32 %v6286, 2147483648
      %v6465 = vxor.u32 %v6291, 2147483648
      %v6466 = vxor.u32 %v6296, 2147483648
      %v6467 = vxor.u32 %v6301, 2147483648
      %v6468 = vxor.u32 %v6306, 2147483648
      %v6469 = vxor.u32 %v6311, 2147483648
      %v6470 = vxor.u32 %v6316, 2147483648
      %v6471 = vxor.u32 %v6321, 2147483648
      %v6472 = vxor.u32 %v6326, 2147483648
      %v6473 = vxor.u32 %v6331, 2147483648
      %v6474 = vxor.u32 %v6336, 2147483648
      %v6475 = vxor.u32 %v6341, 2147483648
      %v6476 = vxor.u32 %v6346, 2147483648
      %v6477 = vxor.u32 %v6351, 2147483648
      %v6478 = vxor.u32 %v6356, 2147483648
      %v6479 = vxor.u32 %v6361, 2147483648
      %v6480 = vxor.u32 %v6366, 2147483648
      %v6481 = vxor.u32 %v6371, 2147483648
      %v6482 = vxor.u32 %v6376, 2147483648
      %v6483 = vxor.u32 %v6381, 2147483648
      %v6484 = vxor.u32 %v6386, 2147483648
      %v6485 = vxor.u32 %v6391, 2147483648
      %v6486 = vxor.u32 %v6396, 2147483648
      %v6487 = vxor.u32 %v6401, 2147483648
      %v6488 = vxor.u32 %v6406, 2147483648
      %v6489 = vxor.u32 %v6411, 2147483648
      %v6490 = vxor.u32 %v6416, 2147483648
      %v6491 = vxor.u32 %v6421, 2147483648
      %v6492 = vxor.u32 %v6426, 2147483648
      %v6493 = vxor.u32 %v6431, 2147483648
      %v6494 = vxor.u32 %v6436, 2147483648
      %v6495 = vxor.u32 %v6441, 2147483648
      %v6496 = vxor.u32 %v6446, 2147483648
      %v6497 = vmul.f32 %v6449, 1.442695
      %v6498 = vpow.pop %v6497
      %v6499 = vmul.f32 %v6450, 1.442695
      %v6500 = vpow.pop %v6499
      %v6501 = vmul.f32 %v6451, 1.442695
      %v6502 = vpow.pop %v6501
      %v6503 = vmul.f32 %v6452, 1.442695
      %v6504 = vpow.pop %v6503
      %v6505 = vmul.f32 %v6453, 1.442695
      %v6506 = vpow.pop %v6505
      %v6507 = vmul.f32 %v6454, 1.442695
      %v6508 = vpow.pop %v6507
      %v6509 = vmul.f32 %v6455, 1.442695
      %v6510 = vpow.pop %v6509
      %v6511 = vmul.f32 %v6456, 1.442695
      %v6512 = vpow.pop %v6511
      %v6513 = vmul.f32 %v6457, 1.442695
      %v6514 = vpow.pop %v6513
      %v6515 = vmul.f32 %v6458, 1.442695
      %v6516 = vpow.pop %v6515
      %v6517 = vmul.f32 %v6459, 1.442695
      %v6518 = vpow.pop %v6517
      %v6519 = vmul.f32 %v6460, 1.442695
      %v6520 = vpow.pop %v6519
      %v6521 = vmul.f32 %v6461, 1.442695
      %v6522 = vpow.pop %v6521
      %v6523 = vmul.f32 %v6462, 1.442695
      %v6524 = vpow.pop %v6523
      %v6525 = vmul.f32 %v6463, 1.442695
      %v6526 = vpow.pop %v6525
      %v6527 = vmul.f32 %v6464, 1.442695
      %v6528 = vpow.pop %v6527
      %v6529 = vmul.f32 %v6465, 1.442695
      %v6530 = vpow.pop %v6529
      %v6531 = vmul.f32 %v6466, 1.442695
      %v6532 = vpow.pop %v6531
      %v6533 = vmul.f32 %v6467, 1.442695
      %v6534 = vpow.pop %v6533
      %v6535 = vmul.f32 %v6468, 1.442695
      %v6536 = vpow.pop %v6535
      %v6537 = vmul.f32 %v6469, 1.442695
      %v6538 = vpow.pop %v6537
      %v6539 = vmul.f32 %v6470, 1.442695
      %v6540 = vpow.pop %v6539
      %v6541 = vmul.f32 %v6471, 1.442695
      %v6542 = vpow.pop %v6541
      %v6543 = vmul.f32 %v6472, 1.442695
      %v6544 = vpow.pop %v6543
      %v6545 = vmul.f32 %v6473, 1.442695
      %v6546 = vpow.pop %v6545
      %v6547 = vmul.f32 %v6474, 1.442695
      %v6548 = vpow.pop %v6547
      %v6549 = vmul.f32 %v6475, 1.442695
      %v6550 = vpow.pop %v6549
      %v6551 = vmul.f32 %v6476, 1.442695
      %v6552 = vpow.pop %v6551
      %v6553 = vmul.f32 %v6477, 1.442695
      %v6554 = vpow.pop %v6553
      %v6555 = vmul.f32 %v6478, 1.442695
      %v6556 = vpow.pop %v6555
      %v6557 = vmul.f32 %v6479, 1.442695
      %v6558 = vpow.pop %v6557
      %v6559 = vmul.f32 %v6480, 1.442695
      %v6560 = vpow.pop %v6559
      %v6561 = vmul.f32 %v6481, 1.442695
      %v6562 = vpow.pop %v6561
      %v6563 = vmul.f32 %v6482, 1.442695
      %v6564 = vpow.pop %v6563
      %v6565 = vmul.f32 %v6483, 1.442695
      %v6566 = vpow.pop %v6565
      %v6567 = vmul.f32 %v6484, 1.442695
      %v6568 = vpow.pop %v6567
      %v6569 = vmul.f32 %v6485, 1.442695
      %v6570 = vpow.pop %v6569
      %v6571 = vmul.f32 %v6486, 1.442695
      %v6572 = vpow.pop %v6571
      %v6573 = vmul.f32 %v6487, 1.442695
      %v6574 = vpow.pop %v6573
      %v6575 = vmul.f32 %v6488, 1.442695
      %v6576 = vpow.pop %v6575
      %v6577 = vmul.f32 %v6489, 1.442695
      %v6578 = vpow.pop %v6577
      %v6579 = vmul.f32 %v6490, 1.442695
      %v6580 = vpow.pop %v6579
      %v6581 = vmul.f32 %v6491, 1.442695
      %v6582 = vpow.pop %v6581
      %v6583 = vmul.f32 %v6492, 1.442695
      %v6584 = vpow.pop %v6583
      %v6585 = vmul.f32 %v6493, 1.442695
      %v6586 = vpow.pop %v6585
      %v6587 = vmul.f32 %v6494, 1.442695
      %v6588 = vpow.pop %v6587
      %v6589 = vmul.f32 %v6495, 1.442695
      %v6590 = vpow.pop %v6589
      %v6591 = vmul.f32 %v6496, 1.442695
      %v6592 = vpow.pop %v6591
      %v6593 = vadd.f32 %v6498, 1.0
      %v6594 = vadd.f32 %v6500, 1.0
      %v6595 = vadd.f32 %v6502, 1.0
      %v6596 = vadd.f32 %v6504, 1.0
      %v6597 = vadd.f32 %v6506, 1.0
      %v6598 = vadd.f32 %v6508, 1.0
      %v6599 = vadd.f32 %v6510, 1.0
      %v6600 = vadd.f32 %v6512, 1.0
      %v6601 = vadd.f32 %v6514, 1.0
      %v6602 = vadd.f32 %v6516, 1.0
      %v6603 = vadd.f32 %v6518, 1.0
      %v6604 = vadd.f32 %v6520, 1.0
      %v6605 = vadd.f32 %v6522, 1.0
      %v6606 = vadd.f32 %v6524, 1.0
      %v6607 = vadd.f32 %v6526, 1.0
      %v6608 = vadd.f32 %v6528, 1.0
      %v6609 = vadd.f32 %v6530, 1.0
      %v6610 = vadd.f32 %v6532, 1.0
      %v6611 = vadd.f32 %v6534, 1.0
      %v6612 = vadd.f32 %v6536, 1.0
      %v6613 = vadd.f32 %v6538, 1.0
      %v6614 = vadd.f32 %v6540, 1.0
      %v6615 = vadd.f32 %v6542, 1.0
      %v6616 = vadd.f32 %v6544, 1.0
      %v6617 = vadd.f32 %v6546, 1.0
      %v6618 = vadd.f32 %v6548, 1.0
      %v6619 = vadd.f32 %v6550, 1.0
      %v6620 = vadd.f32 %v6552, 1.0
      %v6621 = vadd.f32 %v6554, 1.0
      %v6622 = vadd.f32 %v6556, 1.0
      %v6623 = vadd.f32 %v6558, 1.0
      %v6624 = vadd.f32 %v6560, 1.0
      %v6625 = vadd.f32 %v6562, 1.0
      %v6626 = vadd.f32 %v6564, 1.0
      %v6627 = vadd.f32 %v6566, 1.0
      %v6628 = vadd.f32 %v6568, 1.0
      %v6629 = vadd.f32 %v6570, 1.0
      %v6630 = vadd.f32 %v6572, 1.0
      %v6631 = vadd.f32 %v6574, 1.0
      %v6632 = vadd.f32 %v6576, 1.0
      %v6633 = vadd.f32 %v6578, 1.0
      %v6634 = vadd.f32 %v6580, 1.0
      %v6635 = vadd.f32 %v6582, 1.0
      %v6636 = vadd.f32 %v6584, 1.0
      %v6637 = vadd.f32 %v6586, 1.0
      %v6638 = vadd.f32 %v6588, 1.0
      %v6639 = vadd.f32 %v6590, 1.0
      %v6640 = vadd.f32 %v6592, 1.0
      %v6641 = vrcp.pop %v6593
      %v6642 = vmul.f32 1.0, %v6641
      %v6643 = vrcp.pop %v6594
      %v6644 = vmul.f32 1.0, %v6643
      %v6645 = vrcp.pop %v6595
      %v6646 = vmul.f32 1.0, %v6645
      %v6647 = vrcp.pop %v6596
      %v6648 = vmul.f32 1.0, %v6647
      %v6649 = vrcp.pop %v6597
      %v6650 = vmul.f32 1.0, %v6649
      %v6651 = vrcp.pop %v6598
      %v6652 = vmul.f32 1.0, %v6651
      %v6653 = vrcp.pop %v6599
      %v6654 = vmul.f32 1.0, %v6653
      %v6655 = vrcp.pop %v6600
      %v6656 = vmul.f32 1.0, %v6655
      %v6657 = vrcp.pop %v6601
      %v6658 = vmul.f32 1.0, %v6657
      %v6659 = vrcp.pop %v6602
      %v6660 = vmul.f32 1.0, %v6659
      %v6661 = vrcp.pop %v6603
      %v6662 = vmul.f32 1.0, %v6661
      %v6663 = vrcp.pop %v6604
      %v6664 = vmul.f32 1.0, %v6663
      %v6665 = vrcp.pop %v6605
      %v6666 = vmul.f32 1.0, %v6665
      %v6667 = vrcp.pop %v6606
      %v6668 = vmul.f32 1.0, %v6667
      %v6669 = vrcp.pop %v6607
      %v6670 = vmul.f32 1.0, %v6669
      %v6671 = vrcp.pop %v6608
      %v6672 = vmul.f32 1.0, %v6671
      %v6673 = vrcp.pop %v6609
      %v6674 = vmul.f32 1.0, %v6673
      %v6675 = vrcp.pop %v6610
      %v6676 = vmul.f32 1.0, %v6675
      %v6677 = vrcp.pop %v6611
      %v6678 = vmul.f32 1.0, %v6677
      %v6679 = vrcp.pop %v6612
      %v6680 = vmul.f32 1.0, %v6679
      %v6681 = vrcp.pop %v6613
      %v6682 = vmul.f32 1.0, %v6681
      %v6683 = vrcp.pop %v6614
      %v6684 = vmul.f32 1.0, %v6683
      %v6685 = vrcp.pop %v6615
      %v6686 = vmul.f32 1.0, %v6685
      %v6687 = vrcp.pop %v6616
      %v6688 = vmul.f32 1.0, %v6687
      %v6689 = vrcp.pop %v6617
      %v6690 = vmul.f32 1.0, %v6689
      %v6691 = vrcp.pop %v6618
      %v6692 = vmul.f32 1.0, %v6691
      %v6693 = vrcp.pop %v6619
      %v6694 = vmul.f32 1.0, %v6693
      %v6695 = vrcp.pop %v6620
      %v6696 = vmul.f32 1.0, %v6695
      %v6697 = vrcp.pop %v6621
      %v6698 = vmul.f32 1.0, %v6697
      %v6699 = vrcp.pop %v6622
      %v6700 = vmul.f32 1.0, %v6699
      %v6701 = vrcp.pop %v6623
      %v6702 = vmul.f32 1.0, %v6701
      %v6703 = vrcp.pop %v6624
      %v6704 = vmul.f32 1.0, %v6703
      %v6705 = vrcp.pop %v6625
      %v6706 = vmul.f32 1.0, %v6705
      %v6707 = vrcp.pop %v6626
      %v6708 = vmul.f32 1.0, %v6707
      %v6709 = vrcp.pop %v6627
      %v6710 = vmul.f32 1.0, %v6709
      %v6711 = vrcp.pop %v6628
      %v6712 = vmul.f32 1.0, %v6711
      %v6713 = vrcp.pop %v6629
      %v6714 = vmul.f32 1.0, %v6713
      %v6715 = vrcp.pop %v6630
      %v6716 = vmul.f32 1.0, %v6715
      %v6717 = vrcp.pop %v6631
      %v6718 = vmul.f32 1.0, %v6717
      %v6719 = vrcp.pop %v6632
      %v6720 = vmul.f32 1.0, %v6719
      %v6721 = vrcp.pop %v6633
      %v6722 = vmul.f32 1.0, %v6721
      %v6723 = vrcp.pop %v6634
      %v6724 = vmul.f32 1.0, %v6723
      %v6725 = vrcp.pop %v6635
      %v6726 = vmul.f32 1.0, %v6725
      %v6727 = vrcp.pop %v6636
      %v6728 = vmul.f32 1.0, %v6727
      %v6729 = vrcp.pop %v6637
      %v6730 = vmul.f32 1.0, %v6729
      %v6731 = vrcp.pop %v6638
      %v6732 = vmul.f32 1.0, %v6731
      %v6733 = vrcp.pop %v6639
      %v6734 = vmul.f32 1.0, %v6733
      %v6735 = vrcp.pop %v6640
      %v6736 = vmul.f32 1.0, %v6735
      %v6737 = vmul.f32 %v6211, %v6642
      %v6738 = vmul.f32 %v6216, %v6644
      %v6739 = vmul.f32 %v6221, %v6646
      %v6740 = vmul.f32 %v6226, %v6648
      %v6741 = vmul.f32 %v6231, %v6650
      %v6742 = vmul.f32 %v6236, %v6652
      %v6743 = vmul.f32 %v6241, %v6654
      %v6744 = vmul.f32 %v6246, %v6656
      %v6745 = vmul.f32 %v6251, %v6658
      %v6746 = vmul.f32 %v6256, %v6660
      %v6747 = vmul.f32 %v6261, %v6662
      %v6748 = vmul.f32 %v6266, %v6664
      %v6749 = vmul.f32 %v6271, %v6666
      %v6750 = vmul.f32 %v6276, %v6668
      %v6751 = vmul.f32 %v6281, %v6670
      %v6752 = vmul.f32 %v6286, %v6672
      %v6753 = vmul.f32 %v6291, %v6674
      %v6754 = vmul.f32 %v6296, %v6676
      %v6755 = vmul.f32 %v6301, %v6678
      %v6756 = vmul.f32 %v6306, %v6680
      %v6757 = vmul.f32 %v6311, %v6682
      %v6758 = vmul.f32 %v6316, %v6684
      %v6759 = vmul.f32 %v6321, %v6686
      %v6760 = vmul.f32 %v6326, %v6688
      %v6761 = vmul.f32 %v6331, %v6690
      %v6762 = vmul.f32 %v6336, %v6692
      %v6763 = vmul.f32 %v6341, %v6694
      %v6764 = vmul.f32 %v6346, %v6696
      %v6765 = vmul.f32 %v6351, %v6698
      %v6766 = vmul.f32 %v6356, %v6700
      %v6767 = vmul.f32 %v6361, %v6702
      %v6768 = vmul.f32 %v6366, %v6704
      %v6769 = vmul.f32 %v6371, %v6706
      %v6770 = vmul.f32 %v6376, %v6708
      %v6771 = vmul.f32 %v6381, %v6710
      %v6772 = vmul.f32 %v6386, %v6712
      %v6773 = vmul.f32 %v6391, %v6714
      %v6774 = vmul.f32 %v6396, %v6716
      %v6775 = vmul.f32 %v6401, %v6718
      %v6776 = vmul.f32 %v6406, %v6720
      %v6777 = vmul.f32 %v6411, %v6722
      %v6778 = vmul.f32 %v6416, %v6724
      %v6779 = vmul.f32 %v6421, %v6726
      %v6780 = vmul.f32 %v6426, %v6728
      %v6781 = vmul.f32 %v6431, %v6730
      %v6782 = vmul.f32 %v6436, %v6732
      %v6783 = vmul.f32 %v6441, %v6734
      %v6784 = vmul.f32 %v6446, %v6736
      %v6785 = vld [vmem:[%s10] sm:$0xff]
      %v6786 = vld [vmem:[%s11] sm:$0x1]
      %v6788 = vlaneseq
      %v6789 = vshrl.u32 %v6788, 7
      %v6790 = vsub.s32 0, %v6789
      %v6791 = vrot.slane %v6786, %v6790
      %v6794 = vsel %vm697, %v6737, 0
      %v6797 = vsel %vm697, %v6738, 0
      %v6800 = vsel %vm697, %v6739, 0
      %v6803 = vsel %vm697, %v6740, 0
      %v6806 = vsel %vm697, %v6741, 0
      %v6809 = vsel %vm697, %v6742, 0
      %v6812 = vsel %vm697, %v6743, 0
      %v6815 = vsel %vm697, %v6744, 0
      %v6818 = vsel %vm697, %v6745, 0
      %v6821 = vsel %vm697, %v6746, 0
      %v6824 = vsel %vm697, %v6747, 0
      %v6827 = vsel %vm697, %v6748, 0
      %v6830 = vsel %vm697, %v6749, 0
      %v6833 = vsel %vm697, %v6750, 0
      %v6836 = vsel %vm697, %v6751, 0
      %v6839 = vsel %vm697, %v6752, 0
      %v6842 = vsel %vm697, %v6753, 0
      %v6845 = vsel %vm697, %v6754, 0
      %v6848 = vsel %vm697, %v6755, 0
      %v6851 = vsel %vm697, %v6756, 0
      %v6854 = vsel %vm697, %v6757, 0
      %v6857 = vsel %vm697, %v6758, 0
      %v6860 = vsel %vm697, %v6759, 0
      %v6863 = vsel %vm697, %v6760, 0
      %v6866 = vsel %vm697, %v6761, 0
      %v6869 = vsel %vm697, %v6762, 0
      %v6872 = vsel %vm697, %v6763, 0
      %v6875 = vsel %vm697, %v6764, 0
      %v6878 = vsel %vm697, %v6765, 0
      %v6881 = vsel %vm697, %v6766, 0
      %v6884 = vsel %vm697, %v6767, 0
      %v6887 = vsel %vm697, %v6768, 0
      %v6890 = vsel %vm697, %v6769, 0
      %v6893 = vsel %vm697, %v6770, 0
      %v6896 = vsel %vm697, %v6771, 0
      %v6899 = vsel %vm697, %v6772, 0
      %v6902 = vsel %vm697, %v6773, 0
      %v6905 = vsel %vm697, %v6774, 0
      %v6908 = vsel %vm697, %v6775, 0
      %v6911 = vsel %vm697, %v6776, 0
      %v6914 = vsel %vm697, %v6777, 0
      %v6917 = vsel %vm697, %v6778, 0
      %v6920 = vsel %vm697, %v6779, 0
      %v6923 = vsel %vm697, %v6780, 0
      %v6926 = vsel %vm697, %v6781, 0
      %v6929 = vsel %vm697, %v6782, 0
      %v6932 = vsel %vm697, %v6783, 0
      %v6935 = vsel %vm697, %v6784, 0
      %6937 = vmatprep.subr.mxu0 0.0
      %6938 = vmatpush1.msra.mxu0 %v6785
      %6939 = vmatprep.subr.mxu0 0.0
      %6940 = vmatpush1.msra.mxu0 0.0
      %6941 = vmatprep.subr.mxu0 0.0
      %6942 = vmatpush1.msra.mxu0 0.0
      %6943 = vmatprep.subr.mxu0 0.0
      %6944 = vmatpush1.msra.mxu0 0.0
      %6945 = vmatprep.subr.mxu0 0.0
      %6946 = vmatpush1.msra.mxu0 0.0
      %6947 = vmatprep.subr.mxu0 0.0
      %6948 = vmatpush1.msra.mxu0 0.0
      %6949 = vmatprep.subr.mxu0 0.0
      %6950 = vmatpush1.msra.mxu0 0.0
      %6951 = vmatprep.subr.mxu0 0.0
      %6952 = vmatpush1.msra.mxu0 0.0
      %6953 = vmatprep.subr.mxu0 0.0
      %6954 = vmatpush1.msra.mxu0 0.0
      %6955 = vmatprep.subr.mxu0 0.0
      %6956 = vmatpush1.msra.mxu0 0.0
      %6957 = vmatprep.subr.mxu0 0.0
      %6958 = vmatpush1.msra.mxu0 0.0
      %6959 = vmatprep.subr.mxu0 0.0
      %6960 = vmatpush1.msra.mxu0 0.0
      %6961 = vmatprep.subr.mxu0 0.0
      %6962 = vmatpush1.msra.mxu0 0.0
      %6963 = vmatprep.subr.mxu0 0.0
      %6964 = vmatpush1.msra.mxu0 0.0
      %6965 = vmatprep.subr.mxu0 0.0
      %6966 = vmatpush1.msra.mxu0 0.0
      %6967 = vmatprep.subr.mxu0 0.0
      %6968 = vmatpush1.msra.mxu0 0.0
      %6969 = vmatprep.subr.mxu0 0.0
      %6970 = vmatpush1.msra.mxu0 0.0
      %6971 = vmatprep.subr.mxu0 0.0
      %6972 = vmatpush1.msra.mxu0 0.0
      %6973 = vmatprep.subr.mxu0 0.0
      %6974 = vmatpush1.msra.mxu0 0.0
      %6975 = vmatprep.subr.mxu0 0.0
      %6976 = vmatpush1.msra.mxu0 0.0
      %6977 = vmatprep.subr.mxu0 0.0
      %6978 = vmatpush1.msra.mxu0 0.0
      %6979 = vmatprep.subr.mxu0 0.0
      %6980 = vmatpush1.msra.mxu0 0.0
      %6981 = vmatprep.subr.mxu0 0.0
      %6982 = vmatpush1.msra.mxu0 0.0
      %6983 = vmatprep.subr.mxu0 0.0
      %6984 = vmatpush1.msra.mxu0 0.0
      %6985 = vmatprep.subr.mxu0 0.0
      %6986 = vmatpush1.msra.mxu0 0.0
      %6987 = vmatprep.subr.mxu0 0.0
      %6988 = vmatpush1.msra.mxu0 0.0
      %6989 = vmatprep.subr.mxu0 0.0
      %6990 = vmatpush1.msra.mxu0 0.0
      %6991 = vmatprep.subr.mxu0 0.0
      %6992 = vmatpush1.msra.mxu0 0.0
      %6993 = vmatprep.subr.mxu0 0.0
      %6994 = vmatpush1.msra.mxu0 0.0
      %6995 = vmatprep.subr.mxu0 0.0
      %6996 = vmatpush1.msra.mxu0 0.0
      %6997 = vmatprep.subr.mxu0 0.0
      %6998 = vmatpush1.msra.mxu0 0.0
      %6999 = vmatprep.subr.mxu0 0.0
      %7000 = vmatpush1.msra.mxu0 0.0
      %7001 = vmatprep.mubr.f32.mxu0 0.0
      %7002 = vmatmul.mubr.f32.gmra.mrb[0].mxu0 %v6794
      %v7003 = vpop.f32.mrb[0].mxu0
      %v7004 = vadd.f32 %v6791, %v7003
      %v7005 = vpop.f32.mrb[0].mxu0
      %7006 = vmatprep.mubr.f32.mxu0 0.0
      %7007 = vmatmul.mubr.f32.gmra.mrb[0].mxu0 %v6797
      %v7008 = vpop.f32.mrb[0].mxu0
      %v7009 = vadd.f32 %v6791, %v7008
      %v7010 = vpop.f32.mrb[0].mxu0
      %7011 = vmatprep.mubr.f32.mxu0 0.0
      %7012 = vmatmul.mubr.f32.gmra.mrb[0].mxu0 %v6800
      %v7013 = vpop.f32.mrb[0].mxu0
      %v7014 = vadd.f32 %v6791, %v7013
      %v7015 = vpop.f32.mrb[0].mxu0
      %7016 = vmatprep.mubr.f32.mxu0 0.0
      %7017 = vmatmul.mubr.f32.gmra.mrb[0].mxu0 %v6803
      %v7018 = vpop.f32.mrb[0].mxu0
      %v7019 = vadd.f32 %v6791, %v7018
      %v7020 = vpop.f32.mrb[0].mxu0
      %7021 = vmatprep.mubr.f32.mxu0 0.0
      %7022 = vmatmul.mubr.f32.gmra.mrb[0].mxu0 %v6806
      %v7023 = vpop.f32.mrb[0].mxu0
      %v7024 = vadd.f32 %v6791, %v7023
      %v7025 = vpop.f32.mrb[0].mxu0
      %7026 = vmatprep.mubr.f32.mxu0 0.0
      %7027 = vmatmul.mubr.f32.gmra.mrb[0].mxu0 %v6809
      %v7028 = vpop.f32.mrb[0].mxu0
      %v7029 = vadd.f32 %v6791, %v7028
      %v7030 = vpop.f32.mrb[0].mxu0
      %7031 = vmatprep.mubr.f32.mxu0 0.0
      %7032 = vmatmul.mubr.f32.gmra.mrb[0].mxu0 %v6812
      %v7033 = vpop.f32.mrb[0].mxu0
      %v7034 = vadd.f32 %v6791, %v7033
      %v7035 = vpop.f32.mrb[0].mxu0
      %7036 = vmatprep.mubr.f32.mxu0 0.0
      %7037 = vmatmul.mubr.f32.gmra.mrb[0].mxu0 %v6815
      %v7038 = vpop.f32.mrb[0].mxu0
      %v7039 = vadd.f32 %v6791, %v7038
      %v7040 = vpop.f32.mrb[0].mxu0
      %7041 = vmatprep.mubr.f32.mxu0 0.0
      %7042 = vmatmul.mubr.f32.gmra.mrb[0].mxu0 %v6818
      %v7043 = vpop.f32.mrb[0].mxu0
      %v7044 = vadd.f32 %v6791, %v7043
      %v7045 = vpop.f32.mrb[0].mxu0
      %7046 = vmatprep.mubr.f32.mxu0 0.0
      %7047 = vmatmul.mubr.f32.gmra.mrb[0].mxu0 %v6821
      %v7048 = vpop.f32.mrb[0].mxu0
      %v7049 = vadd.f32 %v6791, %v7048
      %v7050 = vpop.f32.mrb[0].mxu0
      %7051 = vmatprep.mubr.f32.mxu0 0.0
      %7052 = vmatmul.mubr.f32.gmra.mrb[0].mxu0 %v6824
      %v7053 = vpop.f32.mrb[0].mxu0
      %v7054 = vadd.f32 %v6791, %v7053
      %v7055 = vpop.f32.mrb[0].mxu0
      %7056 = vmatprep.mubr.f32.mxu0 0.0
      %7057 = vmatmul.mubr.f32.gmra.mrb[0].mxu0 %v6827
      %v7058 = vpop.f32.mrb[0].mxu0
      %v7059 = vadd.f32 %v6791, %v7058
      %v7060 = vpop.f32.mrb[0].mxu0
      %7061 = vmatprep.mubr.f32.mxu0 0.0
      %7062 = vmatmul.mubr.f32.gmra.mrb[0].mxu0 %v6830
      %v7063 = vpop.f32.mrb[0].mxu0
      %v7064 = vadd.f32 %v6791, %v7063
      %v7065 = vpop.f32.mrb[0].mxu0
      %7066 = vmatprep.mubr.f32.mxu0 0.0
      %7067 = vmatmul.mubr.f32.gmra.mrb[0].mxu0 %v6833
      %v7068 = vpop.f32.mrb[0].mxu0
      %v7069 = vadd.f32 %v6791, %v7068
      %v7070 = vpop.f32.mrb[0].mxu0
      %7071 = vmatprep.mubr.f32.mxu0 0.0
      %7072 = vmatmul.mubr.f32.gmra.mrb[0].mxu0 %v6836
      %v7073 = vpop.f32.mrb[0].mxu0
      %v7074 = vadd.f32 %v6791, %v7073
      %v7075 = vpop.f32.mrb[0].mxu0
      %7076 = vmatprep.mubr.f32.mxu0 0.0
      %7077 = vmatmul.mubr.f32.gmra.mrb[0].mxu0 %v6839
      %v7078 = vpop.f32.mrb[0].mxu0
      %v7079 = vadd.f32 %v6791, %v7078
      %v7080 = vpop.f32.mrb[0].mxu0
      %7081 = vmatprep.mubr.f32.mxu0 0.0
      %7082 = vmatmul.mubr.f32.gmra.mrb[0].mxu0 %v6842
      %v7083 = vpop.f32.mrb[0].mxu0
      %v7084 = vadd.f32 %v6791, %v7083
      %v7085 = vpop.f32.mrb[0].mxu0
      %7086 = vmatprep.mubr.f32.mxu0 0.0
      %7087 = vmatmul.mubr.f32.gmra.mrb[0].mxu0 %v6845
      %v7088 = vpop.f32.mrb[0].mxu0
      %v7089 = vadd.f32 %v6791, %v7088
      %v7090 = vpop.f32.mrb[0].mxu0
      %7091 = vmatprep.mubr.f32.mxu0 0.0
      %7092 = vmatmul.mubr.f32.gmra.mrb[0].mxu0 %v6848
      %v7093 = vpop.f32.mrb[0].mxu0
      %v7094 = vadd.f32 %v6791, %v7093
      %v7095 = vpop.f32.mrb[0].mxu0
      %7096 = vmatprep.mubr.f32.mxu0 0.0
      %7097 = vmatmul.mubr.f32.gmra.mrb[0].mxu0 %v6851
      %v7098 = vpop.f32.mrb[0].mxu0
      %v7099 = vadd.f32 %v6791, %v7098
      %v7100 = vpop.f32.mrb[0].mxu0
      %7101 = vmatprep.mubr.f32.mxu0 0.0
      %7102 = vmatmul.mubr.f32.gmra.mrb[0].mxu0 %v6854
      %v7103 = vpop.f32.mrb[0].mxu0
      %v7104 = vadd.f32 %v6791, %v7103
      %v7105 = vpop.f32.mrb[0].mxu0
      %7106 = vmatprep.mubr.f32.mxu0 0.0
      %7107 = vmatmul.mubr.f32.gmra.mrb[0].mxu0 %v6857
      %v7108 = vpop.f32.mrb[0].mxu0
      %v7109 = vadd.f32 %v6791, %v7108
      %v7110 = vpop.f32.mrb[0].mxu0
      %7111 = vmatprep.mubr.f32.mxu0 0.0
      %7112 = vmatmul.mubr.f32.gmra.mrb[0].mxu0 %v6860
      %v7113 = vpop.f32.mrb[0].mxu0
      %v7114 = vadd.f32 %v6791, %v7113
      %v7115 = vpop.f32.mrb[0].mxu0
      %7116 = vmatprep.mubr.f32.mxu0 0.0
      %7117 = vmatmul.mubr.f32.gmra.mrb[0].mxu0 %v6863
      %v7118 = vpop.f32.mrb[0].mxu0
      %v7119 = vadd.f32 %v6791, %v7118
      %v7120 = vpop.f32.mrb[0].mxu0
      %7121 = vmatprep.mubr.f32.mxu0 0.0
      %7122 = vmatmul.mubr.f32.gmra.mrb[0].mxu0 %v6866
      %v7123 = vpop.f32.mrb[0].mxu0
      %v7124 = vadd.f32 %v6791, %v7123
      %v7125 = vpop.f32.mrb[0].mxu0
      %7126 = vmatprep.mubr.f32.mxu0 0.0
      %7127 = vmatmul.mubr.f32.gmra.mrb[0].mxu0 %v6869
      %v7128 = vpop.f32.mrb[0].mxu0
      %v7129 = vadd.f32 %v6791, %v7128
      %v7130 = vpop.f32.mrb[0].mxu0
      %7131 = vmatprep.mubr.f32.mxu0 0.0
      %7132 = vmatmul.mubr.f32.gmra.mrb[0].mxu0 %v6872
      %v7133 = vpop.f32.mrb[0].mxu0
      %v7134 = vadd.f32 %v6791, %v7133
      %v7135 = vpop.f32.mrb[0].mxu0
      %7136 = vmatprep.mubr.f32.mxu0 0.0
      %7137 = vmatmul.mubr.f32.gmra.mrb[0].mxu0 %v6875
      %v7138 = vpop.f32.mrb[0].mxu0
      %v7139 = vadd.f32 %v6791, %v7138
      %v7140 = vpop.f32.mrb[0].mxu0
      %7141 = vmatprep.mubr.f32.mxu0 0.0
      %7142 = vmatmul.mubr.f32.gmra.mrb[0].mxu0 %v6878
      %v7143 = vpop.f32.mrb[0].mxu0
      %v7144 = vadd.f32 %v6791, %v7143
      %v7145 = vpop.f32.mrb[0].mxu0
      %7146 = vmatprep.mubr.f32.mxu0 0.0
      %7147 = vmatmul.mubr.f32.gmra.mrb[0].mxu0 %v6881
      %v7148 = vpop.f32.mrb[0].mxu0
      %v7149 = vadd.f32 %v6791, %v7148
      %v7150 = vpop.f32.mrb[0].mxu0
      %7151 = vmatprep.mubr.f32.mxu0 0.0
      %7152 = vmatmul.mubr.f32.gmra.mrb[0].mxu0 %v6884
      %v7153 = vpop.f32.mrb[0].mxu0
      %v7154 = vadd.f32 %v6791, %v7153
      %v7155 = vpop.f32.mrb[0].mxu0
      %7156 = vmatprep.mubr.f32.mxu0 0.0
      %7157 = vmatmul.mubr.f32.gmra.mrb[0].mxu0 %v6887
      %v7158 = vpop.f32.mrb[0].mxu0
      %v7159 = vadd.f32 %v6791, %v7158
      %v7160 = vpop.f32.mrb[0].mxu0
      %7161 = vmatprep.mubr.f32.mxu0 0.0
      %7162 = vmatmul.mubr.f32.gmra.mrb[0].mxu0 %v6890
      %v7163 = vpop.f32.mrb[0].mxu0
      %v7164 = vadd.f32 %v6791, %v7163
      %v7165 = vpop.f32.mrb[0].mxu0
      %7166 = vmatprep.mubr.f32.mxu0 0.0
      %7167 = vmatmul.mubr.f32.gmra.mrb[0].mxu0 %v6893
      %v7168 = vpop.f32.mrb[0].mxu0
      %v7169 = vadd.f32 %v6791, %v7168
      %v7170 = vpop.f32.mrb[0].mxu0
      %7171 = vmatprep.mubr.f32.mxu0 0.0
      %7172 = vmatmul.mubr.f32.gmra.mrb[0].mxu0 %v6896
      %v7173 = vpop.f32.mrb[0].mxu0
      %v7174 = vadd.f32 %v6791, %v7173
      %v7175 = vpop.f32.mrb[0].mxu0
      %7176 = vmatprep.mubr.f32.mxu0 0.0
      %7177 = vmatmul.mubr.f32.gmra.mrb[0].mxu0 %v6899
      %v7178 = vpop.f32.mrb[0].mxu0
      %v7179 = vadd.f32 %v6791, %v7178
      %v7180 = vpop.f32.mrb[0].mxu0
      %7181 = vmatprep.mubr.f32.mxu0 0.0
      %7182 = vmatmul.mubr.f32.gmra.mrb[0].mxu0 %v6902
      %v7183 = vpop.f32.mrb[0].mxu0
      %v7184 = vadd.f32 %v6791, %v7183
      %v7185 = vpop.f32.mrb[0].mxu0
      %7186 = vmatprep.mubr.f32.mxu0 0.0
      %7187 = vmatmul.mubr.f32.gmra.mrb[0].mxu0 %v6905
      %v7188 = vpop.f32.mrb[0].mxu0
      %v7189 = vadd.f32 %v6791, %v7188
      %v7190 = vpop.f32.mrb[0].mxu0
      %7191 = vmatprep.mubr.f32.mxu0 0.0
      %7192 = vmatmul.mubr.f32.gmra.mrb[0].mxu0 %v6908
      %v7193 = vpop.f32.mrb[0].mxu0
      %v7194 = vadd.f32 %v6791, %v7193
      %v7195 = vpop.f32.mrb[0].mxu0
      %7196 = vmatprep.mubr.f32.mxu0 0.0
      %7197 = vmatmul.mubr.f32.gmra.mrb[0].mxu0 %v6911
      %v7198 = vpop.f32.mrb[0].mxu0
      %v7199 = vadd.f32 %v6791, %v7198
      %v7200 = vpop.f32.mrb[0].mxu0
      %7201 = vmatprep.mubr.f32.mxu0 0.0
      %7202 = vmatmul.mubr.f32.gmra.mrb[0].mxu0 %v6914
      %v7203 = vpop.f32.mrb[0].mxu0
      %v7204 = vadd.f32 %v6791, %v7203
      %v7205 = vpop.f32.mrb[0].mxu0
      %7206 = vmatprep.mubr.f32.mxu0 0.0
      %7207 = vmatmul.mubr.f32.gmra.mrb[0].mxu0 %v6917
      %v7208 = vpop.f32.mrb[0].mxu0
      %v7209 = vadd.f32 %v6791, %v7208
      %v7210 = vpop.f32.mrb[0].mxu0
      %7211 = vmatprep.mubr.f32.mxu0 0.0
      %7212 = vmatmul.mubr.f32.gmra.mrb[0].mxu0 %v6920
      %v7213 = vpop.f32.mrb[0].mxu0
      %v7214 = vadd.f32 %v6791, %v7213
      %v7215 = vpop.f32.mrb[0].mxu0
      %7216 = vmatprep.mubr.f32.mxu0 0.0
      %7217 = vmatmul.mubr.f32.gmra.mrb[0].mxu0 %v6923
      %v7218 = vpop.f32.mrb[0].mxu0
      %v7219 = vadd.f32 %v6791, %v7218
      %v7220 = vpop.f32.mrb[0].mxu0
      %7221 = vmatprep.mubr.f32.mxu0 0.0
      %7222 = vmatmul.mubr.f32.gmra.mrb[0].mxu0 %v6926
      %v7223 = vpop.f32.mrb[0].mxu0
      %v7224 = vadd.f32 %v6791, %v7223
      %v7225 = vpop.f32.mrb[0].mxu0
      %7226 = vmatprep.mubr.f32.mxu0 0.0
      %7227 = vmatmul.mubr.f32.gmra.mrb[0].mxu0 %v6929
      %v7228 = vpop.f32.mrb[0].mxu0
      %v7229 = vadd.f32 %v6791, %v7228
      %v7230 = vpop.f32.mrb[0].mxu0
      %7231 = vmatprep.mubr.f32.mxu0 0.0
      %7232 = vmatmul.mubr.f32.gmra.mrb[0].mxu0 %v6932
      %v7233 = vpop.f32.mrb[0].mxu0
      %v7234 = vadd.f32 %v6791, %v7233
      %v7235 = vpop.f32.mrb[0].mxu0
      %7236 = vmatprep.mubr.f32.mxu0 0.0
      %7237 = vmatmul.mubr.f32.gmra.mrb[0].mxu0 %v6935
      %v7238 = vpop.f32.mrb[0].mxu0
      %v7239 = vadd.f32 %v6791, %v7238
      %v7240 = vpop.f32.mrb[0].mxu0
      %7241 = vdwg.mxu0
      %v7242 = vxor.u32 %v7004, 2147483648
      %v7243 = vxor.u32 %v7009, 2147483648
      %v7244 = vxor.u32 %v7014, 2147483648
      %v7245 = vxor.u32 %v7019, 2147483648
      %v7246 = vxor.u32 %v7024, 2147483648
      %v7247 = vxor.u32 %v7029, 2147483648
      %v7248 = vxor.u32 %v7034, 2147483648
      %v7249 = vxor.u32 %v7039, 2147483648
      %v7250 = vxor.u32 %v7044, 2147483648
      %v7251 = vxor.u32 %v7049, 2147483648
      %v7252 = vxor.u32 %v7054, 2147483648
      %v7253 = vxor.u32 %v7059, 2147483648
      %v7254 = vxor.u32 %v7064, 2147483648
      %v7255 = vxor.u32 %v7069, 2147483648
      %v7256 = vxor.u32 %v7074, 2147483648
      %v7257 = vxor.u32 %v7079, 2147483648
      %v7258 = vxor.u32 %v7084, 2147483648
      %v7259 = vxor.u32 %v7089, 2147483648
      %v7260 = vxor.u32 %v7094, 2147483648
      %v7261 = vxor.u32 %v7099, 2147483648
      %v7262 = vxor.u32 %v7104, 2147483648
      %v7263 = vxor.u32 %v7109, 2147483648
      %v7264 = vxor.u32 %v7114, 2147483648
      %v7265 = vxor.u32 %v7119, 2147483648
      %v7266 = vxor.u32 %v7124, 2147483648
      %v7267 = vxor.u32 %v7129, 2147483648
      %v7268 = vxor.u32 %v7134, 2147483648
      %v7269 = vxor.u32 %v7139, 2147483648
      %v7270 = vxor.u32 %v7144, 2147483648
      %v7271 = vxor.u32 %v7149, 2147483648
      %v7272 = vxor.u32 %v7154, 2147483648
      %v7273 = vxor.u32 %v7159, 2147483648
      %v7274 = vxor.u32 %v7164, 2147483648
      %v7275 = vxor.u32 %v7169, 2147483648
      %v7276 = vxor.u32 %v7174, 2147483648
      %v7277 = vxor.u32 %v7179, 2147483648
      %v7278 = vxor.u32 %v7184, 2147483648
      %v7279 = vxor.u32 %v7189, 2147483648
      %v7280 = vxor.u32 %v7194, 2147483648
      %v7281 = vxor.u32 %v7199, 2147483648
      %v7282 = vxor.u32 %v7204, 2147483648
      %v7283 = vxor.u32 %v7209, 2147483648
      %v7284 = vxor.u32 %v7214, 2147483648
      %v7285 = vxor.u32 %v7219, 2147483648
      %v7286 = vxor.u32 %v7224, 2147483648
      %v7287 = vxor.u32 %v7229, 2147483648
      %v7288 = vxor.u32 %v7234, 2147483648
      %v7289 = vxor.u32 %v7239, 2147483648
      %v7290 = vmul.f32 %v7242, 1.442695
      %v7291 = vpow.pop %v7290
      %v7292 = vmul.f32 %v7243, 1.442695
      %v7293 = vpow.pop %v7292
      %v7294 = vmul.f32 %v7244, 1.442695
      %v7295 = vpow.pop %v7294
      %v7296 = vmul.f32 %v7245, 1.442695
      %v7297 = vpow.pop %v7296
      %v7298 = vmul.f32 %v7246, 1.442695
      %v7299 = vpow.pop %v7298
      %v7300 = vmul.f32 %v7247, 1.442695
      %v7301 = vpow.pop %v7300
      %v7302 = vmul.f32 %v7248, 1.442695
      %v7303 = vpow.pop %v7302
      %v7304 = vmul.f32 %v7249, 1.442695
      %v7305 = vpow.pop %v7304
      %v7306 = vmul.f32 %v7250, 1.442695
      %v7307 = vpow.pop %v7306
      %v7308 = vmul.f32 %v7251, 1.442695
      %v7309 = vpow.pop %v7308
      %v7310 = vmul.f32 %v7252, 1.442695
      %v7311 = vpow.pop %v7310
      %v7312 = vmul.f32 %v7253, 1.442695
      %v7313 = vpow.pop %v7312
      %v7314 = vmul.f32 %v7254, 1.442695
      %v7315 = vpow.pop %v7314
      %v7316 = vmul.f32 %v7255, 1.442695
      %v7317 = vpow.pop %v7316
      %v7318 = vmul.f32 %v7256, 1.442695
      %v7319 = vpow.pop %v7318
      %v7320 = vmul.f32 %v7257, 1.442695
      %v7321 = vpow.pop %v7320
      %v7322 = vmul.f32 %v7258, 1.442695
      %v7323 = vpow.pop %v7322
      %v7324 = vmul.f32 %v7259, 1.442695
      %v7325 = vpow.pop %v7324
      %v7326 = vmul.f32 %v7260, 1.442695
      %v7327 = vpow.pop %v7326
      %v7328 = vmul.f32 %v7261, 1.442695
      %v7329 = vpow.pop %v7328
      %v7330 = vmul.f32 %v7262, 1.442695
      %v7331 = vpow.pop %v7330
      %v7332 = vmul.f32 %v7263, 1.442695
      %v7333 = vpow.pop %v7332
      %v7334 = vmul.f32 %v7264, 1.442695
      %v7335 = vpow.pop %v7334
      %v7336 = vmul.f32 %v7265, 1.442695
      %v7337 = vpow.pop %v7336
      %v7338 = vmul.f32 %v7266, 1.442695
      %v7339 = vpow.pop %v7338
      %v7340 = vmul.f32 %v7267, 1.442695
      %v7341 = vpow.pop %v7340
      %v7342 = vmul.f32 %v7268, 1.442695
      %v7343 = vpow.pop %v7342
      %v7344 = vmul.f32 %v7269, 1.442695
      %v7345 = vpow.pop %v7344
      %v7346 = vmul.f32 %v7270, 1.442695
      %v7347 = vpow.pop %v7346
      %v7348 = vmul.f32 %v7271, 1.442695
      %v7349 = vpow.pop %v7348
      %v7350 = vmul.f32 %v7272, 1.442695
      %v7351 = vpow.pop %v7350
      %v7352 = vmul.f32 %v7273, 1.442695
      %v7353 = vpow.pop %v7352
      %v7354 = vmul.f32 %v7274, 1.442695
      %v7355 = vpow.pop %v7354
      %v7356 = vmul.f32 %v7275, 1.442695
      %v7357 = vpow.pop %v7356
      %v7358 = vmul.f32 %v7276, 1.442695
      %v7359 = vpow.pop %v7358
      %v7360 = vmul.f32 %v7277, 1.442695
      %v7361 = vpow.pop %v7360
      %v7362 = vmul.f32 %v7278, 1.442695
      %v7363 = vpow.pop %v7362
      %v7364 = vmul.f32 %v7279, 1.442695
      %v7365 = vpow.pop %v7364
      %v7366 = vmul.f32 %v7280, 1.442695
      %v7367 = vpow.pop %v7366
      %v7368 = vmul.f32 %v7281, 1.442695
      %v7369 = vpow.pop %v7368
      %v7370 = vmul.f32 %v7282, 1.442695
      %v7371 = vpow.pop %v7370
      %v7372 = vmul.f32 %v7283, 1.442695
      %v7373 = vpow.pop %v7372
      %v7374 = vmul.f32 %v7284, 1.442695
      %v7375 = vpow.pop %v7374
      %v7376 = vmul.f32 %v7285, 1.442695
      %v7377 = vpow.pop %v7376
      %v7378 = vmul.f32 %v7286, 1.442695
      %v7379 = vpow.pop %v7378
      %v7380 = vmul.f32 %v7287, 1.442695
      %v7381 = vpow.pop %v7380
      %v7382 = vmul.f32 %v7288, 1.442695
      %v7383 = vpow.pop %v7382
      %v7384 = vmul.f32 %v7289, 1.442695
      %v7385 = vpow.pop %v7384
      %v7386 = vadd.f32 %v7291, 1.0
      %v7387 = vadd.f32 %v7293, 1.0
      %v7388 = vadd.f32 %v7295, 1.0
      %v7389 = vadd.f32 %v7297, 1.0
      %v7390 = vadd.f32 %v7299, 1.0
      %v7391 = vadd.f32 %v7301, 1.0
      %v7392 = vadd.f32 %v7303, 1.0
      %v7393 = vadd.f32 %v7305, 1.0
      %v7394 = vadd.f32 %v7307, 1.0
      %v7395 = vadd.f32 %v7309, 1.0
      %v7396 = vadd.f32 %v7311, 1.0
      %v7397 = vadd.f32 %v7313, 1.0
      %v7398 = vadd.f32 %v7315, 1.0
      %v7399 = vadd.f32 %v7317, 1.0
      %v7400 = vadd.f32 %v7319, 1.0
      %v7401 = vadd.f32 %v7321, 1.0
      %v7402 = vadd.f32 %v7323, 1.0
      %v7403 = vadd.f32 %v7325, 1.0
      %v7404 = vadd.f32 %v7327, 1.0
      %v7405 = vadd.f32 %v7329, 1.0
      %v7406 = vadd.f32 %v7331, 1.0
      %v7407 = vadd.f32 %v7333, 1.0
      %v7408 = vadd.f32 %v7335, 1.0
      %v7409 = vadd.f32 %v7337, 1.0
      %v7410 = vadd.f32 %v7339, 1.0
      %v7411 = vadd.f32 %v7341, 1.0
      %v7412 = vadd.f32 %v7343, 1.0
      %v7413 = vadd.f32 %v7345, 1.0
      %v7414 = vadd.f32 %v7347, 1.0
      %v7415 = vadd.f32 %v7349, 1.0
      %v7416 = vadd.f32 %v7351, 1.0
      %v7417 = vadd.f32 %v7353, 1.0
      %v7418 = vadd.f32 %v7355, 1.0
      %v7419 = vadd.f32 %v7357, 1.0
      %v7420 = vadd.f32 %v7359, 1.0
      %v7421 = vadd.f32 %v7361, 1.0
      %v7422 = vadd.f32 %v7363, 1.0
      %v7423 = vadd.f32 %v7365, 1.0
      %v7424 = vadd.f32 %v7367, 1.0
      %v7425 = vadd.f32 %v7369, 1.0
      %v7426 = vadd.f32 %v7371, 1.0
      %v7427 = vadd.f32 %v7373, 1.0
      %v7428 = vadd.f32 %v7375, 1.0
      %v7429 = vadd.f32 %v7377, 1.0
      %v7430 = vadd.f32 %v7379, 1.0
      %v7431 = vadd.f32 %v7381, 1.0
      %v7432 = vadd.f32 %v7383, 1.0
      %v7433 = vadd.f32 %v7385, 1.0
      %v7434 = vrcp.pop %v7386
      %v7435 = vmul.f32 1.0, %v7434
      %v7436 = vrcp.pop %v7387
      %v7437 = vmul.f32 1.0, %v7436
      %v7438 = vrcp.pop %v7388
      %v7439 = vmul.f32 1.0, %v7438
      %v7440 = vrcp.pop %v7389
      %v7441 = vmul.f32 1.0, %v7440
      %v7442 = vrcp.pop %v7390
      %v7443 = vmul.f32 1.0, %v7442
      %v7444 = vrcp.pop %v7391
      %v7445 = vmul.f32 1.0, %v7444
      %v7446 = vrcp.pop %v7392
      %v7447 = vmul.f32 1.0, %v7446
      %v7448 = vrcp.pop %v7393
      %v7449 = vmul.f32 1.0, %v7448
      %v7450 = vrcp.pop %v7394
      %v7451 = vmul.f32 1.0, %v7450
      %v7452 = vrcp.pop %v7395
      %v7453 = vmul.f32 1.0, %v7452
      %v7454 = vrcp.pop %v7396
      %v7455 = vmul.f32 1.0, %v7454
      %v7456 = vrcp.pop %v7397
      %v7457 = vmul.f32 1.0, %v7456
      %v7458 = vrcp.pop %v7398
      %v7459 = vmul.f32 1.0, %v7458
      %v7460 = vrcp.pop %v7399
      %v7461 = vmul.f32 1.0, %v7460
      %v7462 = vrcp.pop %v7400
      %v7463 = vmul.f32 1.0, %v7462
      %v7464 = vrcp.pop %v7401
      %v7465 = vmul.f32 1.0, %v7464
      %v7466 = vrcp.pop %v7402
      %v7467 = vmul.f32 1.0, %v7466
      %v7468 = vrcp.pop %v7403
      %v7469 = vmul.f32 1.0, %v7468
      %v7470 = vrcp.pop %v7404
      %v7471 = vmul.f32 1.0, %v7470
      %v7472 = vrcp.pop %v7405
      %v7473 = vmul.f32 1.0, %v7472
      %v7474 = vrcp.pop %v7406
      %v7475 = vmul.f32 1.0, %v7474
      %v7476 = vrcp.pop %v7407
      %v7477 = vmul.f32 1.0, %v7476
      %v7478 = vrcp.pop %v7408
      %v7479 = vmul.f32 1.0, %v7478
      %v7480 = vrcp.pop %v7409
      %v7481 = vmul.f32 1.0, %v7480
      %v7482 = vrcp.pop %v7410
      %v7483 = vmul.f32 1.0, %v7482
      %v7484 = vrcp.pop %v7411
      %v7485 = vmul.f32 1.0, %v7484
      %v7486 = vrcp.pop %v7412
      %v7487 = vmul.f32 1.0, %v7486
      %v7488 = vrcp.pop %v7413
      %v7489 = vmul.f32 1.0, %v7488
      %v7490 = vrcp.pop %v7414
      %v7491 = vmul.f32 1.0, %v7490
      %v7492 = vrcp.pop %v7415
      %v7493 = vmul.f32 1.0, %v7492
      %v7494 = vrcp.pop %v7416
      %v7495 = vmul.f32 1.0, %v7494
      %v7496 = vrcp.pop %v7417
      %v7497 = vmul.f32 1.0, %v7496
      %v7498 = vrcp.pop %v7418
      %v7499 = vmul.f32 1.0, %v7498
      %v7500 = vrcp.pop %v7419
      %v7501 = vmul.f32 1.0, %v7500
      %v7502 = vrcp.pop %v7420
      %v7503 = vmul.f32 1.0, %v7502
      %v7504 = vrcp.pop %v7421
      %v7505 = vmul.f32 1.0, %v7504
      %v7506 = vrcp.pop %v7422
      %v7507 = vmul.f32 1.0, %v7506
      %v7508 = vrcp.pop %v7423
      %v7509 = vmul.f32 1.0, %v7508
      %v7510 = vrcp.pop %v7424
      %v7511 = vmul.f32 1.0, %v7510
      %v7512 = vrcp.pop %v7425
      %v7513 = vmul.f32 1.0, %v7512
      %v7514 = vrcp.pop %v7426
      %v7515 = vmul.f32 1.0, %v7514
      %v7516 = vrcp.pop %v7427
      %v7517 = vmul.f32 1.0, %v7516
      %v7518 = vrcp.pop %v7428
      %v7519 = vmul.f32 1.0, %v7518
      %v7520 = vrcp.pop %v7429
      %v7521 = vmul.f32 1.0, %v7520
      %v7522 = vrcp.pop %v7430
      %v7523 = vmul.f32 1.0, %v7522
      %v7524 = vrcp.pop %v7431
      %v7525 = vmul.f32 1.0, %v7524
      %v7526 = vrcp.pop %v7432
      %v7527 = vmul.f32 1.0, %v7526
      %v7528 = vrcp.pop %v7433
      %v7529 = vmul.f32 1.0, %v7528
      %v7530 = vmul.f32 %v7004, %v7435
      %v7531 = vmul.f32 %v7009, %v7437
      %v7532 = vmul.f32 %v7014, %v7439
      %v7533 = vmul.f32 %v7019, %v7441
      %v7534 = vmul.f32 %v7024, %v7443
      %v7535 = vmul.f32 %v7029, %v7445
      %v7536 = vmul.f32 %v7034, %v7447
      %v7537 = vmul.f32 %v7039, %v7449
      %v7538 = vmul.f32 %v7044, %v7451
      %v7539 = vmul.f32 %v7049, %v7453
      %v7540 = vmul.f32 %v7054, %v7455
      %v7541 = vmul.f32 %v7059, %v7457
      %v7542 = vmul.f32 %v7064, %v7459
      %v7543 = vmul.f32 %v7069, %v7461
      %v7544 = vmul.f32 %v7074, %v7463
      %v7545 = vmul.f32 %v7079, %v7465
      %v7546 = vmul.f32 %v7084, %v7467
      %v7547 = vmul.f32 %v7089, %v7469
      %v7548 = vmul.f32 %v7094, %v7471
      %v7549 = vmul.f32 %v7099, %v7473
      %v7550 = vmul.f32 %v7104, %v7475
      %v7551 = vmul.f32 %v7109, %v7477
      %v7552 = vmul.f32 %v7114, %v7479
      %v7553 = vmul.f32 %v7119, %v7481
      %v7554 = vmul.f32 %v7124, %v7483
      %v7555 = vmul.f32 %v7129, %v7485
      %v7556 = vmul.f32 %v7134, %v7487
      %v7557 = vmul.f32 %v7139, %v7489
      %v7558 = vmul.f32 %v7144, %v7491
      %v7559 = vmul.f32 %v7149, %v7493
      %v7560 = vmul.f32 %v7154, %v7495
      %v7561 = vmul.f32 %v7159, %v7497
      %v7562 = vmul.f32 %v7164, %v7499
      %v7563 = vmul.f32 %v7169, %v7501
      %v7564 = vmul.f32 %v7174, %v7503
      %v7565 = vmul.f32 %v7179, %v7505
      %v7566 = vmul.f32 %v7184, %v7507
      %v7567 = vmul.f32 %v7189, %v7509
      %v7568 = vmul.f32 %v7194, %v7511
      %v7569 = vmul.f32 %v7199, %v7513
      %v7570 = vmul.f32 %v7204, %v7515
      %v7571 = vmul.f32 %v7209, %v7517
      %v7572 = vmul.f32 %v7214, %v7519
      %v7573 = vmul.f32 %v7219, %v7521
      %v7574 = vmul.f32 %v7224, %v7523
      %v7575 = vmul.f32 %v7229, %v7525
      %v7576 = vmul.f32 %v7234, %v7527
      %v7577 = vmul.f32 %v7239, %v7529
      %7578 = vst.msk [vmem:[%s639] sm:$0xff] %vm697, %v7530
      %7579 = vst.msk [vmem:[%s639 + $0x8] sm:$0xff] %vm697, %v7531
      %7580 = vst.msk [vmem:[%s639 + $0x10] sm:$0xff] %vm697, %v7532
      %7581 = vst.msk [vmem:[%s639 + $0x18] sm:$0xff] %vm697, %v7533
      %7582 = vst.msk [vmem:[%s639 + $0x20] sm:$0xff] %vm697, %v7534
      %7583 = vst.msk [vmem:[%s639 + $0x28] sm:$0xff] %vm697, %v7535
      %7584 = vst.msk [vmem:[%s639 + $0x30] sm:$0xff] %vm697, %v7536
      %7585 = vst.msk [vmem:[%s639 + $0x38] sm:$0xff] %vm697, %v7537
      %7586 = vst.msk [vmem:[%s639 + $0x40] sm:$0xff] %vm697, %v7538
      %7587 = vst.msk [vmem:[%s639 + $0x48] sm:$0xff] %vm697, %v7539
      %7588 = vst.msk [vmem:[%s639 + $0x50] sm:$0xff] %vm697, %v7540
      %7589 = vst.msk [vmem:[%s639 + $0x58] sm:$0xff] %vm697, %v7541
      %7590 = vst.msk [vmem:[%s639 + $0x60] sm:$0xff] %vm697, %v7542
      %7591 = vst.msk [vmem:[%s639 + $0x68] sm:$0xff] %vm697, %v7543
      %7592 = vst.msk [vmem:[%s639 + $0x70] sm:$0xff] %vm697, %v7544
      %7593 = vst.msk [vmem:[%s639 + $0x78] sm:$0xff] %vm697, %v7545
      %7594 = vst.msk [vmem:[%s639 + $0x80] sm:$0xff] %vm697, %v7546
      %7595 = vst.msk [vmem:[%s639 + $0x88] sm:$0xff] %vm697, %v7547
      %7596 = vst.msk [vmem:[%s639 + $0x90] sm:$0xff] %vm697, %v7548
      %7597 = vst.msk [vmem:[%s639 + $0x98] sm:$0xff] %vm697, %v7549
      %7598 = vst.msk [vmem:[%s639 + $0xa0] sm:$0xff] %vm697, %v7550
      %7599 = vst.msk [vmem:[%s639 + $0xa8] sm:$0xff] %vm697, %v7551
      %7600 = vst.msk [vmem:[%s639 + $0xb0] sm:$0xff] %vm697, %v7552
      %7601 = vst.msk [vmem:[%s639 + $0xb8] sm:$0xff] %vm697, %v7553
      %7602 = vst.msk [vmem:[%s639 + $0xc0] sm:$0xff] %vm697, %v7554
      %7603 = vst.msk [vmem:[%s639 + $0xc8] sm:$0xff] %vm697, %v7555
      %7604 = vst.msk [vmem:[%s639 + $0xd0] sm:$0xff] %vm697, %v7556
      %7605 = vst.msk [vmem:[%s639 + $0xd8] sm:$0xff] %vm697, %v7557
      %7606 = vst.msk [vmem:[%s639 + $0xe0] sm:$0xff] %vm697, %v7558
      %7607 = vst.msk [vmem:[%s639 + $0xe8] sm:$0xff] %vm697, %v7559
      %7608 = vst.msk [vmem:[%s639 + $0xf0] sm:$0xff] %vm697, %v7560
      %7609 = vst.msk [vmem:[%s639 + $0xf8] sm:$0xff] %vm697, %v7561
      %7610 = vst.msk [vmem:[%s639 + $0x100] sm:$0xff] %vm697, %v7562
      %7611 = vst.msk [vmem:[%s639 + $0x108] sm:$0xff] %vm697, %v7563
      %7612 = vst.msk [vmem:[%s639 + $0x110] sm:$0xff] %vm697, %v7564
      %7613 = vst.msk [vmem:[%s639 + $0x118] sm:$0xff] %vm697, %v7565
      %7614 = vst.msk [vmem:[%s639 + $0x120] sm:$0xff] %vm697, %v7566
      %7615 = vst.msk [vmem:[%s639 + $0x128] sm:$0xff] %vm697, %v7567
      %7616 = vst.msk [vmem:[%s639 + $0x130] sm:$0xff] %vm697, %v7568
      %7617 = vst.msk [vmem:[%s639 + $0x138] sm:$0xff] %vm697, %v7569
      %7618 = vst.msk [vmem:[%s639 + $0x140] sm:$0xff] %vm697, %v7570
      %7619 = vst.msk [vmem:[%s639 + $0x148] sm:$0xff] %vm697, %v7571
      %7620 = vst.msk [vmem:[%s639 + $0x150] sm:$0xff] %vm697, %v7572
      %7621 = vst.msk [vmem:[%s639 + $0x158] sm:$0xff] %vm697, %v7573
      %7622 = vst.msk [vmem:[%s639 + $0x160] sm:$0xff] %vm697, %v7574
      %7623 = vst.msk [vmem:[%s639 + $0x168] sm:$0xff] %vm697, %v7575
      %7624 = vst.msk [vmem:[%s639 + $0x170] sm:$0xff] %vm697, %v7576
      %7625 = vst.msk [vmem:[%s639 + $0x178] sm:$0xff] %vm697, %v7577
      %s7626 = smul.u32 16, %s28
      %p7627 = scmp.lt.s32.totalorder %s27, 1
      %s7628 = scalar_select %p7627, %s27, 1
      %p7629 = scmp.lt.s32.totalorder %s7626, 15
      %s7630 = scalar_select %p7629, %s7626, 15
      %s7631 = smul.addr %s7630, 3
      %s7632 = smul.addr %s7628, 48
      %s7633 = sadd.s32 %s7631, %s7632
      %s7634 = smul.addr %s7633, 8
      %s7635 = scalar_lea.vmem %s12, %s7634
      // Predicated region
      $region77: #{tpu_custom_call.1} parent=67 // pred_check
        %p7636 = pneg %p351
      $region78: #{tpu_custom_call.1} parent=67 // pred_check_branch
        %7638 = sbr.rel (%p7636) target = $region80
      $region79: #{tpu_custom_call.1} parent=67 // pred_region
        %s7639 = smul.u32 16, %s28
      $region80: #{tpu_custom_call.1} parent=67 // pred_fallthru
        _
    $region68: #{tpu_custom_call.1} parent=5 // pred_fallthru
      _
    %p7640 = scmp.le.s32.totalorder 2, %s18
    // Predicated region
    $region81: #{tpu_custom_call.1} parent=5 // pred_check
      %p7641 = pneg %p7640
    $region82: #{tpu_custom_call.1} parent=5 // pred_check_branch
      %7643 = sbr.rel (%p7641) target = $region84
    $region83: #{tpu_custom_call.1} parent=5 // pred_region
      %s7644 = ssub.s32 %s18, 2
      // Predicated region
      $region85: #{tpu_custom_call.1} parent=83 // pred_check
        %p7645 = pneg %p357
      $region86: #{tpu_custom_call.1} parent=83 // pred_check_branch
        %7647 = sbr.rel (%p7645) target = $region88
      $region87: #{tpu_custom_call.1} parent=83 // pred_region
        %s7648 = smul.u32 16, %s30
        %p7649 = scmp.lt.s32.totalorder %s29, 1
        %s7650 = scalar_select %p7649, %s29, 1
        %p7651 = scmp.lt.s32.totalorder %s7648, 15
        %s7652 = scalar_select %p7651, %s7648, 15
        %s7653 = smul.addr %s7652, 3
        %s7654 = smul.addr %s7650, 48
        %s7655 = sadd.s32 %s7653, %s7654
        %s7656 = smul.addr %s7655, 8
        %s7657 = scalar_lea.vmem %s12, %s7656
      $region88: #{tpu_custom_call.1} parent=83 // pred_fallthru
        _
    $region84: #{tpu_custom_call.1} parent=5 // pred_fallthru
      _
  $region6: #{tpu_custom_call.1} parent=0 // loop_footer
    %s22 = sadd.s32 1, %s18
  $region7: #{tpu_custom_call.1} parent=0 // loop_footer_branch
    %17 = sbr.rel target = $region3
  $region8: #{tpu_custom_call.1} parent=0 // loop_exit
    _

</llo_original>
